<compile_context>
chip_gen: v6e
topology: v6e:2x2x1
jax: 0.10.0
libtpu: 0.0.40
codegen_flags: <defaults>
</compile_context>

<pallas_src>
import math
import functools

import jax
import jax.numpy as jnp
from jax.experimental import pallas as pl
from jax.experimental.pallas import tpu as pltpu

_VMEM = pl.BlockSpec(memory_space=pltpu.MemorySpace.VMEM)


# ------------------------------ Pallas kernels ------------------------------

def _emb_kernel(x_ref, w_ref, pe_ref, o_ref):
    # [R, K] @ [K, D] + pe[R, D]   (token conv taps + timeF weights stacked along K)
    o_ref[...] = (jnp.dot(x_ref[...], w_ref[...],
                          preferred_element_type=jnp.float32) + pe_ref[...])


def _gru_cell(gi, h, whh, bhh, H):
    """PyTorch GRU cell with the input-gate projection `gi` precomputed.

    Gate order (r, z, n); weights packed [*, 3H]."""
    gh = jnp.dot(h, whh, preferred_element_type=jnp.float32) + bhh     # [B, 3H]
    r = jax.nn.sigmoid(gi[:, :H] + gh[:, :H])
    z = jax.nn.sigmoid(gi[:, H:2 * H] + gh[:, H:2 * H])
    n = jnp.tanh(gi[:, 2 * H:] + r * gh[:, 2 * H:])
    return (1.0 - z) * n + z * h


def _enc_gru_kernel(emb_ref, wih_ref, whh_ref, bih_ref, bhh_ref,
                    eo_ref, hfin_ref, gi_ref):
    # grid axis 0 = direction.  emb_ref already holds the L-reversed sequence for the
    # backward direction, so all indices below are static.
    _, L, B, H = eo_ref.shape
    whh = whh_ref[0]            # [H, 3H]  (resident for the whole sequence)
    bhh = bhh_ref[0]            # [1, 3H]

    # Hoisted input-gate projection for the whole sequence: ONE MXU matmul instead of
    # L tiny ones inside the serial recurrence.
    gi_ref[...] = (jnp.dot(emb_ref[0], wih_ref[0],
                           preferred_element_type=jnp.float32) + bih_ref[0])   # [L*B, 3H]

    h = jnp.zeros((B, H), jnp.float32)
    for t in range(L):                               # static unroll (L is small)
        gi = gi_ref[pl.ds(t * B, B), :]              # static slice
        h = _gru_cell(gi, h, whh, bhh, H)
        eo_ref[0, t] = h                             # static store
    hfin_ref[0] = h


def _dec_kernel(y0_ref, h0_ref, marks_ref, eo_ref,
                wmg_ref, pegi_ref, wyg_ref,
                wh_ref, we_ref, ab_ref, av_ref,
                wihc_ref, whh_ref, bhh_ref,
                wouth_ref, woutc_ref, bout_ref,
                outs_ref, eop_ref):
    # y0:[B,C] h0:[B,H] marks:[T*B,M] eo:[B,L,H]  ->  outs:[T,B,C]
    T, B, C = outs_ref.shape
    H = h0_ref.shape[1]

    # ---- weights hoisted into values (vreg/VMEM resident for all steps) ----
    wh = wh_ref[...]
    av3 = av_ref[...][None]                  # [1, 1, H]
    wyg = wyg_ref[...]
    wihc = wihc_ref[...]
    whh = whh_ref[...]
    bhh = bhh_ref[...]
    wouth = wouth_ref[...]
    woutc = woutc_ref[...]
    bout = bout_ref[...]

    # ---- step-invariant precompute (done once, not per decode step) ----
    # GRU input-gate contribution of the (time-mark + positional + bias) part of the
    # decoder embedding, for all steps, as a single matmul.
    gi_const = (jnp.dot(marks_ref[...], wmg_ref[...],
                        preferred_element_type=jnp.float32) + pegi_ref[...])   # [T*B, 3H]
    # Encoder-side additive-attention projection: eo @ We + b  (hoisted out of the loop)
    we = we_ref[...]
    ab = ab_ref[...]
    for b in range(B):                               # B is tiny & static
        eop_ref[b] = jnp.dot(eo_ref[b], we, preferred_element_type=jnp.float32) + ab
    eo_proj = eop_ref[...]                           # [B, L, H]
    eo = eo_ref[...]                                 # [B, L, H]

    y = y0_ref[...]
    h = h0_ref[...]
    for t in range(T):                               # static unroll (pred_len is small)
        # additive attention, vectorized across batch:
        #   energy = relu(Wh h + We eo + b); score = v . energy; softmax over L
        hw = jnp.dot(h, wh, preferred_element_type=jnp.float32)         # [B, H]
        energy = jnp.maximum(eo_proj + hw[:, None, :], 0.0)             # [B, L, H]
        scores = jnp.sum(energy * av3, axis=-1, keepdims=True)          # [B, L, 1]
        m = jnp.max(scores, axis=1, keepdims=True)
        p = jnp.exp(scores - m)
        attn = p / jnp.sum(p, axis=1, keepdims=True)                    # softmax_L
        ctx = jnp.sum(attn * eo, axis=1)                                # [B, H]

        # decoder GRU cell on cat([emb, ctx]) — the embedding is linear, so its value
        # part is folded into wyg and its mark/pos/bias part into gi_const.
        gi = (jnp.dot(y, wyg, preferred_element_type=jnp.float32)
              + gi_const[t * B:(t + 1) * B, :]
              + jnp.dot(ctx, wihc, preferred_element_type=jnp.float32))        # [B, 3H]
        h = _gru_cell(gi, h, whh, bhh, H)                                       # [B, H]

        # output projection on cat([h, ctx]) (split weights -> no concat)
        y = (jnp.dot(h, wouth, preferred_element_type=jnp.float32)
             + jnp.dot(ctx, woutc, preferred_element_type=jnp.float32) + bout)  # [B, C]
        outs_ref[t] = y


# ------------------------------ model glue (JAX) -----------------------------

def positional_embedding(L, d_model):
    pos = jnp.arange(L, dtype=jnp.float32)[:, None]
    div = jnp.exp(jnp.arange(0, d_model, 2, dtype=jnp.float32)
                  * (-math.log(10000.0) / d_model))
    pe = jnp.zeros((L, d_model), jnp.float32)
    pe = pe.at[:, 0::2].set(jnp.sin(pos * div))
    pe = pe.at[:, 1::2].set(jnp.cos(pos * div))
    return pe


def encoder_embedding(x, x_mark, tok_w, time_w, d_model):
    """Fused Informer DataEmbedding for the full encoder sequence (one matmul)."""
    B, L, C = x.shape
    M = x_mark.shape[-1]
    # circular padding of 1 on the time axis; express the k=3 conv as one matmul
    xp = jnp.concatenate([x[:, -1:], x, x[:, :1]], axis=1)                       # [B,L+2,C]
    x3 = jnp.concatenate([xp[:, :L], xp[:, 1:L + 1], xp[:, 2:L + 2]], axis=-1)   # [B,L,3C]
    xcat = jnp.concatenate([x3, x_mark], axis=-1)                                # [B,L,3C+M]
    xcat_lb = jnp.transpose(xcat, (1, 0, 2)).reshape(L * B, 3 * C + M)           # seq-major
    w_emb = jnp.concatenate([tok_w, time_w], axis=0)                             # [3C+M, D]
    pe_lb = jnp.repeat(positional_embedding(L, d_model), B, axis=0)              # [L*B, D]
    emb2d = pl.pallas_call(
        _emb_kernel,
        out_shape=jax.ShapeDtypeStruct((L * B, d_model), jnp.float32),
        in_specs=[_VMEM, _VMEM, _VMEM],
        out_specs=_VMEM,
    )(xcat_lb, w_emb, pe_lb)
    return emb2d                                                                 # [L*B, D]


def encoder_bigru(emb2d, L, B, gru_f, gru_b):
    """Fused 1-layer bidirectional GRU; direction on a 'parallel' grid axis."""
    D = emb2d.shape[1]
    H = gru_f["whh"].shape[0]
    emb3 = emb2d.reshape(L, B, D)
    # pre-reverse the backward-direction input so the kernel loop uses static indices
    emb_stack = jnp.stack([emb3, jnp.flip(emb3, axis=0)], axis=0).reshape(2, L * B, D)
    wih_s = jnp.stack([gru_f["wih"], gru_b["wih"]])       # [2, D, 3H]
    whh_s = jnp.stack([gru_f["whh"], gru_b["whh"]])       # [2, H, 3H]
    bih_s = jnp.stack([gru_f["bih"], gru_b["bih"]])       # [2, 1, 3H]
    bhh_s = jnp.stack([gru_f["bhh"], gru_b["bhh"]])       # [2, 1, 3H]

    eo_dir, hfin = pl.pallas_call(
        _enc_gru_kernel,
        out_shape=(jax.ShapeDtypeStruct((2, L, B, H), jnp.float32),
                   jax.ShapeDtypeStruct((2, B, H), jnp.float32)),
        grid=(2,),
        in_specs=[
            pl.BlockSpec((1, L * B, D), lambda d: (d, 0, 0)),
            pl.BlockSpec((1, D, 3 * H), lambda d: (d, 0, 0)),
            pl.BlockSpec((1, H, 3 * H), lambda d: (d, 0, 0)),
            pl.BlockSpec((1, 1, 3 * H), lambda d: (d, 0, 0)),
            pl.BlockSpec((1, 1, 3 * H), lambda d: (d, 0, 0)),
        ],
        out_specs=(
            pl.BlockSpec((1, L, B, H), lambda d: (d, 0, 0, 0)),
            pl.BlockSpec((1, B, H), lambda d: (d, 0, 0)),
        ),
        scratch_shapes=[pltpu.VMEM((L * B, 3 * H), jnp.float32)],
        compiler_params=pltpu.CompilerParams(dimension_semantics=("parallel",)),
    )(emb_stack, wih_s, whh_s, bih_s, bhh_s)

    # outputs[...,:H] + outputs[...,H:]  (un-reverse the backward direction)
    enc_out = eo_dir[0] + jnp.flip(eo_dir[1], axis=0)     # [L, B, H]
    hidden = hfin[0]                                      # hidden[:n_layers] -> fwd final
    return enc_out, hidden


def init_params(key, *, enc_in, dec_in, c_out, d_model, mark_dim):
    H = d_model
    ks = iter(jax.random.split(key, 32))

    def u(shape, scale):
        return jax.random.uniform(next(ks), shape, jnp.float32, -scale, scale)

    def gru(in_size):
        s = 1.0 / math.sqrt(H)
        return dict(wih=u((in_size, 3 * H), s), whh=u((H, 3 * H), s),
                    bih=u((1, 3 * H), s), bhh=u((1, 3 * H), s))

    p = {}
    p["enc_tok_w"] = u((3 * enc_in, d_model), 1.0 / math.sqrt(3 * enc_in))
    p["enc_time_w"] = u((mark_dim, d_model), 1.0 / math.sqrt(mark_dim))
    p["dec_tok_w"] = u((3 * dec_in, d_model), 1.0 / math.sqrt(3 * dec_in))
    p["dec_time_w"] = u((mark_dim, d_model), 1.0 / math.sqrt(mark_dim))
    p["enc_gru_f"] = gru(d_model)            # bidirectional encoder GRU, forward dir
    p["enc_gru_b"] = gru(d_model)            # backward dir
    sa = 1.0 / math.sqrt(2 * H)
    p["attn_wh"] = u((H, H), sa)             # attn.weight[:, :H].T (acts on hidden)
    p["attn_we"] = u((H, H), sa)             # attn.weight[:, H:].T (acts on enc outputs)
    p["attn_b"] = u((1, H), sa)
    p["attn_v"] = u((1, H), 1.0 / math.sqrt(H))
    p["dec_gru"] = gru(d_model + H)          # GRU(hidden_size + embed_size, hidden_size)
    so = 1.0 / math.sqrt(2 * H)
    p["out_w"] = u((2 * H, c_out), so)
    p["out_b"] = u((1, c_out), so)
    return p


def model_forward(params, x_enc, x_mark_enc, x_dec, x_mark_dec,
                  label_len, pred_len, d_model):
    B, L, _ = x_enc.shape
    H = d_model
    c_out = params["out_w"].shape[1]
    dec_in = x_dec.shape[-1]
    assert c_out == dec_in, "decoder output is fed back as decoder input"

    # ---- encoder: fused embedding + fused bidirectional GRU ----
    emb2d = encoder_embedding(x_enc, x_mark_enc,
                              params["enc_tok_w"], params["enc_time_w"], d_model)
    enc_out, hidden0 = encoder_bigru(emb2d, L, B,
                                     params["enc_gru_f"], params["enc_gru_b"])
    enc_out_blh = jnp.transpose(enc_out, (1, 0, 2))                       # [B, L, H]

    # ---- decoder weight folds (tiny one-time XLA matmuls) ----
    dt = params["dec_tok_w"]
    # len-1 circular conv => all 3 taps see the same input => sum of taps
    wv = dt[:dec_in] + dt[dec_in:2 * dec_in] + dt[2 * dec_in:]            # [dec_in, D]
    g = params["dec_gru"]
    wih_emb = g["wih"][:d_model]                                          # [D, 3H]
    wih_ctx = g["wih"][d_model:]                                          # [H, 3H]
    w_y2g = wv @ wih_emb                                                  # [dec_in, 3H]
    w_m2g = params["dec_time_w"] @ wih_emb                                # [M, 3H]
    pe_gi = positional_embedding(1, d_model) @ wih_emb + g["bih"]         # [1, 3H]
    wout_h = params["out_w"][:H]                                          # [H, c_out]
    wout_c = params["out_w"][H:]                                          # [H, c_out]

    # time mark used at step t matches the reference loop: idx = label_len + max(t-1, 0)
    mark_idx = label_len + jnp.maximum(jnp.arange(pred_len) - 1, 0)
    marks = jnp.transpose(x_mark_dec[:, mark_idx, :], (1, 0, 2))          # [T, B, M]
    marks2 = marks.reshape(pred_len * B, marks.shape[-1])                 # [T*B, M]
    y0 = x_dec[:, label_len, :]                                           # [B, dec_in]

    # ---- decoder: one fused kernel over all pred_len steps ----
    outs = pl.pallas_call(
        _dec_kernel,
        out_shape=jax.ShapeDtypeStruct((pred_len, B, c_out), jnp.float32),
        in_specs=[_VMEM] * 17,
        out_specs=_VMEM,
        scratch_shapes=[pltpu.VMEM((B, L, H), jnp.float32)],
    )(y0, hidden0, marks2, enc_out_blh,
      w_m2g, pe_gi, w_y2g,
      params["attn_wh"], params["attn_we"], params["attn_b"], params["attn_v"],
      wih_ctx, g["whh"], g["bhh"],
      wout_h, wout_c, params["out_b"])

    return jnp.transpose(outs, (1, 0, 2))                                 # [B, T, c_out]


if __name__ == "__main__":
    # small config: e_layers = d_layers = 1, embed = 'timeF', 4 time features
    B, L = 2, 16
    label_len, pred_len = 8, 4
    enc_in = dec_in = c_out = 4        # c_out must equal dec_in (output is fed back)
    d_model = 32
    mark = 4

    key = jax.random.PRNGKey(0)
    kp, k1, k2, k3, k4 = jax.random.split(key, 5)
    params = init_params(kp, enc_in=enc_in, dec_in=dec_in, c_out=c_out,
                         d_model=d_model, mark_dim=mark)
    x_enc = jax.random.normal(k1, (B, L, enc_in), jnp.float32)
    x_mark_enc = jax.random.normal(k2, (B, L, mark), jnp.float32)
    x_dec = jax.random.normal(k3, (B, label_len + pred_len, dec_in), jnp.float32)
    x_mark_dec = jax.random.normal(k4, (B, label_len + pred_len, mark), jnp.float32)

    fwd = jax.jit(functools.partial(model_forward,
                                    label_len=label_len,
                                    pred_len=pred_len,
                                    d_model=d_model))
    out = fwd(params, x_enc, x_mark_enc, x_dec, x_mark_dec)
    jax.block_until_ready(out)
    assert out.shape == (B, pred_len, c_out), out.shape
    assert bool(jnp.all(jnp.isfinite(out)))
    print("KERNEL_OK")
</pallas_src>

<mosaic_0001>
module attributes {stable_mosaic.version = 11 : i64} {
  func.func @_emb_kernel(%arg0: memref<32x16xf32, #tpu.memory_space<vmem>>, %arg1: memref<16x32xf32, #tpu.memory_space<vmem>>, %arg2: memref<32x32xf32, #tpu.memory_space<vmem>>, %arg3: memref<32x32xf32, #tpu.memory_space<vmem>>) attributes {dimension_semantics = [], scalar_prefetch = 0 : i64, scratch_operands = 0 : i64, tpu.core_type = #tpu.core_type<tc>} {
    %c0 = arith.constant 0 : index
    %c0_0 = arith.constant 0 : index
    %0 = vector.load %arg0[%c0, %c0_0] : memref<32x16xf32, #tpu.memory_space<vmem>>, vector<32x16xf32>
    %c0_1 = arith.constant 0 : index
    %c0_2 = arith.constant 0 : index
    %1 = vector.load %arg1[%c0_1, %c0_2] : memref<16x32xf32, #tpu.memory_space<vmem>>, vector<16x32xf32>
    %cst = arith.constant dense<0.000000e+00> : vector<32x32xf32>
    %2 = tpu.matmul %0, %1, %cst {dimension_numbers = #tpu.dot_dimension_numbers<[1], [0], [0], [1], [0, 0, 1, 1], [], []>} : vector<32x16xf32>, vector<16x32xf32>, vector<32x32xf32> -> vector<32x32xf32>
    %c0_3 = arith.constant 0 : index
    %c0_4 = arith.constant 0 : index
    %3 = vector.load %arg2[%c0_3, %c0_4] : memref<32x32xf32, #tpu.memory_space<vmem>>, vector<32x32xf32>
    %4 = arith.addf %2, %3 : vector<32x32xf32>
    %c0_5 = arith.constant 0 : index
    %c0_6 = arith.constant 0 : index
    %5 = vector.load %arg3[%c0_5, %c0_6] : memref<32x32xf32, #tpu.memory_space<vmem>>, vector<32x32xf32>
    tpu.vector_store %arg3[%c0_5, %c0_6], %4 {strides = array<i32>} : memref<32x32xf32, #tpu.memory_space<vmem>>, vector<32x32xf32>,
    return
  }
}

module attributes {stable_mosaic.version = 11 : i64} {
  func.func @_enc_gru_kernel(%arg0: i32, %arg1: memref<1x32x32xf32, #tpu.memory_space<vmem>>, %arg2: memref<1x32x96xf32, #tpu.memory_space<vmem>>, %arg3: memref<1x32x96xf32, #tpu.memory_space<vmem>>, %arg4: memref<1x1x96xf32, #tpu.memory_space<vmem>>, %arg5: memref<1x1x96xf32, #tpu.memory_space<vmem>>, %arg6: memref<1x16x2x32xf32, #tpu.memory_space<vmem>>, %arg7: memref<1x2x32xf32, #tpu.memory_space<vmem>>, %arg8: memref<32x96xf32, #tpu.memory_space<vmem>>) attributes {dimension_semantics = [#tpu.dimension_semantics<parallel>], iteration_bounds = array<i64: 2>, scalar_prefetch = 0 : i64, scratch_operands = 1 : i64, tpu.core_type = #tpu.core_type<tc>, window_params = [{transform_indices = @transform_0, window_bounds = array<i64: 1, 32, 32>}, {transform_indices = @transform_1, window_bounds = array<i64: 1, 32, 96>}, {transform_indices = @transform_2, window_bounds = array<i64: 1, 32, 96>}, {transform_indices = @transform_3, window_bounds = array<i64: 1, 1, 96>}, {transform_indices = @transform_4, window_bounds = array<i64: 1, 1, 96>}, {transform_indices = @transform_5, window_bounds = array<i64: 1, 16, 2, 32>}, {transform_indices = @transform_6, window_bounds = array<i64: 1, 2, 32>}]} {
    %c0 = arith.constant 0 : index
    %c0_0 = arith.constant 0 : index
    %c0_1 = arith.constant 0 : index
    %0 = vector.load %arg3[%c0, %c0_0, %c0_1] : memref<1x32x96xf32, #tpu.memory_space<vmem>>, vector<1x32x96xf32>
    %1 = vector.shape_cast %0 : vector<1x32x96xf32> to vector<32x96xf32>
    %c0_2 = arith.constant 0 : index
    %c0_3 = arith.constant 0 : index
    %c0_4 = arith.constant 0 : index
    %2 = vector.load %arg5[%c0_2, %c0_3, %c0_4] : memref<1x1x96xf32, #tpu.memory_space<vmem>>, vector<1x1x96xf32>
    %3 = vector.shape_cast %2 : vector<1x1x96xf32> to vector<1x96xf32>
    %c0_5 = arith.constant 0 : index
    %c0_6 = arith.constant 0 : index
    %c0_7 = arith.constant 0 : index
    %4 = vector.load %arg1[%c0_5, %c0_6, %c0_7] : memref<1x32x32xf32, #tpu.memory_space<vmem>>, vector<1x32x32xf32>
    %5 = vector.shape_cast %4 : vector<1x32x32xf32> to vector<32x32xf32>
    %c0_8 = arith.constant 0 : index
    %c0_9 = arith.constant 0 : index
    %c0_10 = arith.constant 0 : index
    %6 = vector.load %arg2[%c0_8, %c0_9, %c0_10] : memref<1x32x96xf32, #tpu.memory_space<vmem>>, vector<1x32x96xf32>
    %7 = vector.shape_cast %6 : vector<1x32x96xf32> to vector<32x96xf32>
    %cst = arith.constant dense<0.000000e+00> : vector<32x96xf32>
    %8 = tpu.matmul %5, %7, %cst {dimension_numbers = #tpu.dot_dimension_numbers<[1], [0], [0], [1], [0, 0, 1, 1], [], []>} : vector<32x32xf32>, vector<32x96xf32>, vector<32x96xf32> -> vector<32x96xf32>
    %c0_11 = arith.constant 0 : index
    %c0_12 = arith.constant 0 : index
    %c0_13 = arith.constant 0 : index
    %9 = vector.load %arg4[%c0_11, %c0_12, %c0_13] : memref<1x1x96xf32, #tpu.memory_space<vmem>>, vector<1x1x96xf32>
    %10 = vector.shape_cast %9 : vector<1x1x96xf32> to vector<1x96xf32>
    %11 = vector.broadcast %10 : vector<1x96xf32> to vector<32x96xf32>
    %12 = arith.addf %8, %11 : vector<32x96xf32>
    %c0_14 = arith.constant 0 : index
    %c0_15 = arith.constant 0 : index
    %13 = vector.load %arg8[%c0_14, %c0_15] : memref<32x96xf32, #tpu.memory_space<vmem>>, vector<32x96xf32>
    tpu.vector_store %arg8[%c0_14, %c0_15], %12 {strides = array<i32>} : memref<32x96xf32, #tpu.memory_space<vmem>>, vector<32x96xf32>,
    %cst_16 = arith.constant 0.000000e+00 : f32
    %14 = vector.broadcast %cst_16 : f32 to vector<2x32xf32>
    %c0_17 = arith.constant 0 : index
    %c0_18 = arith.constant 0 : index
    %15 = vector.load %arg8[%c0_17, %c0_18] : memref<32x96xf32, #tpu.memory_space<vmem>>, vector<2x96xf32>
    %cst_19 = arith.constant dense<0.000000e+00> : vector<2x96xf32>
    %16 = tpu.matmul %14, %1, %cst_19 {dimension_numbers = #tpu.dot_dimension_numbers<[1], [0], [0], [1], [0, 0, 1, 1], [], []>} : vector<2x32xf32>, vector<32x96xf32>, vector<2x96xf32> -> vector<2x96xf32>
    %17 = vector.broadcast %3 : vector<1x96xf32> to vector<2x96xf32>
    %18 = arith.addf %16, %17 : vector<2x96xf32>
    %19 = vector.extract_strided_slice %15 {offsets = [0, 0], sizes = [2, 32], strides = [1, 1]} : vector<2x96xf32> to vector<2x32xf32>
    %20 = vector.extract_strided_slice %18 {offsets = [0, 0], sizes = [2, 32], strides = [1, 1]} : vector<2x96xf32> to vector<2x32xf32>
    %21 = arith.addf %19, %20 : vector<2x32xf32>
    %22 = arith.negf %21 : vector<2x32xf32>
    %23 = math.exp %22 : vector<2x32xf32>
    %cst_20 = arith.constant 1.000000e+00 : f32
    %24 = vector.broadcast %cst_20 : f32 to vector<2x32xf32>
    %25 = arith.addf %24, %23 : vector<2x32xf32>
    %26 = arith.divf %24, %25 : vector<2x32xf32>
    %27 = vector.extract_strided_slice %15 {offsets = [0, 32], sizes = [2, 32], strides = [1, 1]} : vector<2x96xf32> to vector<2x32xf32>
    %28 = vector.extract_strided_slice %18 {offsets = [0, 32], sizes = [2, 32], strides = [1, 1]} : vector<2x96xf32> to vector<2x32xf32>
    %29 = arith.addf %27, %28 : vector<2x32xf32>
    %30 = arith.negf %29 : vector<2x32xf32>
    %31 = math.exp %30 : vector<2x32xf32>
    %cst_21 = arith.constant 1.000000e+00 : f32
    %32 = vector.broadcast %cst_21 : f32 to vector<2x32xf32>
    %33 = arith.addf %32, %31 : vector<2x32xf32>
    %34 = arith.divf %32, %33 : vector<2x32xf32>
    %35 = vector.extract_strided_slice %15 {offsets = [0, 64], sizes = [2, 32], strides = [1, 1]} : vector<2x96xf32> to vector<2x32xf32>
    %36 = vector.extract_strided_slice %18 {offsets = [0, 64], sizes = [2, 32], strides = [1, 1]} : vector<2x96xf32> to vector<2x32xf32>
    %37 = arith.mulf %26, %36 : vector<2x32xf32>
    %38 = arith.addf %35, %37 : vector<2x32xf32>
    %39 = math.tanh %38 : vector<2x32xf32>
    %cst_22 = arith.constant 1.000000e+00 : f32
    %40 = vector.broadcast %cst_22 : f32 to vector<2x32xf32>
    %41 = arith.subf %40, %34 : vector<2x32xf32>
    %42 = arith.mulf %41, %39 : vector<2x32xf32>
    %43 = arith.mulf %34, %14 : vector<2x32xf32>
    %44 = arith.addf %42, %43 : vector<2x32xf32>
    %c0_23 = arith.constant 0 : index
    %c0_24 = arith.constant 0 : index
    %c0_25 = arith.constant 0 : index
    %c0_26 = arith.constant 0 : index
    %45 = vector.load %arg6[%c0_23, %c0_24, %c0_25, %c0_26] : memref<1x16x2x32xf32, #tpu.memory_space<vmem>>, vector<1x1x2x32xf32>
    %46 = vector.shape_cast %45 : vector<1x1x2x32xf32> to vector<2x32xf32>
    %47 = vector.shape_cast %44 : vector<2x32xf32> to vector<1x1x2x32xf32>
    tpu.vector_store %arg6[%c0_23, %c0_24, %c0_25, %c0_26], %47 {strides = array<i32>} : memref<1x16x2x32xf32, #tpu.memory_space<vmem>>, vector<1x1x2x32xf32>,
    %c2 = arith.constant 2 : index
    %c0_27 = arith.constant 0 : index
    %48 = vector.load %arg8[%c2, %c0_27] : memref<32x96xf32, #tpu.memory_space<vmem>>, vector<2x96xf32>
    %cst_28 = arith.constant dense<0.000000e+00> : vector<2x96xf32>
    %49 = tpu.matmul %44, %1, %cst_28 {dimension_numbers = #tpu.dot_dimension_numbers<[1], [0], [0], [1], [0, 0, 1, 1], [], []>} : vector<2x32xf32>, vector<32x96xf32>, vector<2x96xf32> -> vector<2x96xf32>
    %50 = vector.broadcast %3 : vector<1x96xf32> to vector<2x96xf32>
    %51 = arith.addf %49, %50 : vector<2x96xf32>
    %52 = vector.extract_strided_slice %48 {offsets = [0, 0], sizes = [2, 32], strides = [1, 1]} : vector<2x96xf32> to vector<2x32xf32>
    %53 = vector.extract_strided_slice %51 {offsets = [0, 0], sizes = [2, 32], strides = [1, 1]} : vector<2x96xf32> to vector<2x32xf32>
    %54 = arith.addf %52, %53 : vector<2x32xf32>
    %55 = arith.negf %54 : vector<2x32xf32>
    %56 = math.exp %55 : vector<2x32xf32>
    %cst_29 = arith.constant 1.000000e+00 : f32
    %57 = vector.broadcast %cst_29 : f32 to vector<2x32xf32>
    %58 = arith.addf %57, %56 : vector<2x32xf32>
    %59 = arith.divf %57, %58 : vector<2x32xf32>
    %60 = vector.extract_strided_slice %48 {offsets = [0, 32], sizes = [2, 32], strides = [1, 1]} : vector<2x96xf32> to vector<2x32xf32>
    %61 = vector.extract_strided_slice %51 {offsets = [0, 32], sizes = [2, 32], strides = [1, 1]} : vector<2x96xf32> to vector<2x32xf32>
    %62 = arith.addf %60, %61 : vector<2x32xf32>
    %63 = arith.negf %62 : vector<2x32xf32>
    %64 = math.exp %63 : vector<2x32xf32>
    %cst_30 = arith.constant 1.000000e+00 : f32
    %65 = vector.broadcast %cst_30 : f32 to vector<2x32xf32>
    %66 = arith.addf %65, %64 : vector<2x32xf32>
    %67 = arith.divf %65, %66 : vector<2x32xf32>
    %68 = vector.extract_strided_slice %48 {offsets = [0, 64], sizes = [2, 32], strides = [1, 1]} : vector<2x96xf32> to vector<2x32xf32>
    %69 = vector.extract_strided_slice %51 {offsets = [0, 64], sizes = [2, 32], strides = [1, 1]} : vector<2x96xf32> to vector<2x32xf32>
    %70 = arith.mulf %59, %69 : vector<2x32xf32>
    %71 = arith.addf %68, %70 : vector<2x32xf32>
    %72 = math.tanh %71 : vector<2x32xf32>
    %cst_31 = arith.constant 1.000000e+00 : f32
    %73 = vector.broadcast %cst_31 : f32 to vector<2x32xf32>
    %74 = arith.subf %73, %67 : vector<2x32xf32>
    %75 = arith.mulf %74, %72 : vector<2x32xf32>
    %76 = arith.mulf %67, %44 : vector<2x32xf32>
    %77 = arith.addf %75, %76 : vector<2x32xf32>
    %c0_32 = arith.constant 0 : index
    %c1 = arith.constant 1 : index
    %c0_33 = arith.constant 0 : index
    %c0_34 = arith.constant 0 : index
    %78 = vector.load %arg6[%c0_32, %c1, %c0_33, %c0_34] : memref<1x16x2x32xf32, #tpu.memory_space<vmem>>, vector<1x1x2x32xf32>
    %79 = vector.shape_cast %78 : vector<1x1x2x32xf32> to vector<2x32xf32>
    %80 = vector.shape_cast %77 : vector<2x32xf32> to vector<1x1x2x32xf32>
    tpu.vector_store %arg6[%c0_32, %c1, %c0_33, %c0_34], %80 {strides = array<i32>} : memref<1x16x2x32xf32, #tpu.memory_space<vmem>>, vector<1x1x2x32xf32>,
    %c4 = arith.constant 4 : index
    %c0_35 = arith.constant 0 : index
    %81 = vector.load %arg8[%c4, %c0_35] : memref<32x96xf32, #tpu.memory_space<vmem>>, vector<2x96xf32>
    %cst_36 = arith.constant dense<0.000000e+00> : vector<2x96xf32>
    %82 = tpu.matmul %77, %1, %cst_36 {dimension_numbers = #tpu.dot_dimension_numbers<[1], [0], [0], [1], [0, 0, 1, 1], [], []>} : vector<2x32xf32>, vector<32x96xf32>, vector<2x96xf32> -> vector<2x96xf32>
    %83 = vector.broadcast %3 : vector<1x96xf32> to vector<2x96xf32>
    %84 = arith.addf %82, %83 : vector<2x96xf32>
    %85 = vector.extract_strided_slice %81 {offsets = [0, 0], sizes = [2, 32], strides = [1, 1]} : vector<2x96xf32> to vector<2x32xf32>
    %86 = vector.extract_strided_slice %84 {offsets = [0, 0], sizes = [2, 32], strides = [1, 1]} : vector<2x96xf32> to vector<2x32xf32>
    %87 = arith.addf %85, %86 : vector<2x32xf32>
    %88 = arith.negf %87 : vector<2x32xf32>
    %89 = math.exp %88 : vector<2x32xf32>
    %cst_37 = arith.constant 1.000000e+00 : f32
    %90 = vector.broadcast %cst_37 : f32 to vector<2x32xf32>
    %91 = arith.addf %90, %89 : vector<2x32xf32>
    %92 = arith.divf %90, %91 : vector<2x32xf32>
    %93 = vector.extract_strided_slice %81 {offsets = [0, 32], sizes = [2, 32], strides = [1, 1]} : vector<2x96xf32> to vector<2x32xf32>
    %94 = vector.extract_strided_slice %84 {offsets = [0, 32], sizes = [2, 32], strides = [1, 1]} : vector<2x96xf32> to vector<2x32xf32>
    %95 = arith.addf %93, %94 : vector<2x32xf32>
    %96 = arith.negf %95 : vector<2x32xf32>
    %97 = math.exp %96 : vector<2x32xf32>
    %cst_38 = arith.constant 1.000000e+00 : f32
    %98 = vector.broadcast %cst_38 : f32 to vector<2x32xf32>
    %99 = arith.addf %98, %97 : vector<2x32xf32>
    %100 = arith.divf %98, %99 : vector<2x32xf32>
    %101 = vector.extract_strided_slice %81 {offsets = [0, 64], sizes = [2, 32], strides = [1, 1]} : vector<2x96xf32> to vector<2x32xf32>
    %102 = vector.extract_strided_slice %84 {offsets = [0, 64], sizes = [2, 32], strides = [1, 1]} : vector<2x96xf32> to vector<2x32xf32>
    %103 = arith.mulf %92, %102 : vector<2x32xf32>
    %104 = arith.addf %101, %103 : vector<2x32xf32>
    %105 = math.tanh %104 : vector<2x32xf32>
    %cst_39 = arith.constant 1.000000e+00 : f32
    %106 = vector.broadcast %cst_39 : f32 to vector<2x32xf32>
    %107 = arith.subf %106, %100 : vector<2x32xf32>
    %108 = arith.mulf %107, %105 : vector<2x32xf32>
    %109 = arith.mulf %100, %77 : vector<2x32xf32>
    %110 = arith.addf %108, %109 : vector<2x32xf32>
    %c0_40 = arith.constant 0 : index
    %c2_41 = arith.constant 2 : index
    %c0_42 = arith.constant 0 : index
    %c0_43 = arith.constant 0 : index
    %111 = vector.load %arg6[%c0_40, %c2_41, %c0_42, %c0_43] : memref<1x16x2x32xf32, #tpu.memory_space<vmem>>, vector<1x1x2x32xf32>
    %112 = vector.shape_cast %111 : vector<1x1x2x32xf32> to vector<2x32xf32>
    %113 = vector.shape_cast %110 : vector<2x32xf32> to vector<1x1x2x32xf32>
    tpu.vector_store %arg6[%c0_40, %c2_41, %c0_42, %c0_43], %113 {strides = array<i32>} : memref<1x16x2x32xf32, #tpu.memory_space<vmem>>, vector<1x1x2x32xf32>,
    %c6 = arith.constant 6 : index
    %c0_44 = arith.constant 0 : index
    %114 = vector.load %arg8[%c6, %c0_44] : memref<32x96xf32, #tpu.memory_space<vmem>>, vector<2x96xf32>
    %cst_45 = arith.constant dense<0.000000e+00> : vector<2x96xf32>
    %115 = tpu.matmul %110, %1, %cst_45 {dimension_numbers = #tpu.dot_dimension_numbers<[1], [0], [0], [1], [0, 0, 1, 1], [], []>} : vector<2x32xf32>, vector<32x96xf32>, vector<2x96xf32> -> vector<2x96xf32>
    %116 = vector.broadcast %3 : vector<1x96xf32> to vector<2x96xf32>
    %117 = arith.addf %115, %116 : vector<2x96xf32>
    %118 = vector.extract_strided_slice %114 {offsets = [0, 0], sizes = [2, 32], strides = [1, 1]} : vector<2x96xf32> to vector<2x32xf32>
    %119 = vector.extract_strided_slice %117 {offsets = [0, 0], sizes = [2, 32], strides = [1, 1]} : vector<2x96xf32> to vector<2x32xf32>
    %120 = arith.addf %118, %119 : vector<2x32xf32>
    %121 = arith.negf %120 : vector<2x32xf32>
    %122 = math.exp %121 : vector<2x32xf32>
    %cst_46 = arith.constant 1.000000e+00 : f32
    %123 = vector.broadcast %cst_46 : f32 to vector<2x32xf32>
    %124 = arith.addf %123, %122 : vector<2x32xf32>
    %125 = arith.divf %123, %124 : vector<2x32xf32>
    %126 = vector.extract_strided_slice %114 {offsets = [0, 32], sizes = [2, 32], strides = [1, 1]} : vector<2x96xf32> to vector<2x32xf32>
    %127 = vector.extract_strided_slice %117 {offsets = [0, 32], sizes = [2, 32], strides = [1, 1]} : vector<2x96xf32> to vector<2x32xf32>
    %128 = arith.addf %126, %127 : vector<2x32xf32>
    %129 = arith.negf %128 : vector<2x32xf32>
    %130 = math.exp %129 : vector<2x32xf32>
    %cst_47 = arith.constant 1.000000e+00 : f32
    %131 = vector.broadcast %cst_47 : f32 to vector<2x32xf32>
    %132 = arith.addf %131, %130 : vector<2x32xf32>
    %133 = arith.divf %131, %132 : vector<2x32xf32>
    %134 = vector.extract_strided_slice %114 {offsets = [0, 64], sizes = [2, 32], strides = [1, 1]} : vector<2x96xf32> to vector<2x32xf32>
    %135 = vector.extract_strided_slice %117 {offsets = [0, 64], sizes = [2, 32], strides = [1, 1]} : vector<2x96xf32> to vector<2x32xf32>
    %136 = arith.mulf %125, %135 : vector<2x32xf32>
    %137 = arith.addf %134, %136 : vector<2x32xf32>
    %138 = math.tanh %137 : vector<2x32xf32>
    %cst_48 = arith.constant 1.000000e+00 : f32
    %139 = vector.broadcast %cst_48 : f32 to vector<2x32xf32>
    %140 = arith.subf %139, %133 : vector<2x32xf32>
    %141 = arith.mulf %140, %138 : vector<2x32xf32>
    %142 = arith.mulf %133, %110 : vector<2x32xf32>
    %143 = arith.addf %141, %142 : vector<2x32xf32>
    %c0_49 = arith.constant 0 : index
    %c3 = arith.constant 3 : index
    %c0_50 = arith.constant 0 : index
    %c0_51 = arith.constant 0 : index
    %144 = vector.load %arg6[%c0_49, %c3, %c0_50, %c0_51] : memref<1x16x2x32xf32, #tpu.memory_space<vmem>>, vector<1x1x2x32xf32>
    %145 = vector.shape_cast %144 : vector<1x1x2x32xf32> to vector<2x32xf32>
    %146 = vector.shape_cast %143 : vector<2x32xf32> to vector<1x1x2x32xf32>
    tpu.vector_store %arg6[%c0_49, %c3, %c0_50, %c0_51], %146 {strides = array<i32>} : memref<1x16x2x32xf32, #tpu.memory_space<vmem>>, vector<1x1x2x32xf32>,
    %c8 = arith.constant 8 : index
    %c0_52 = arith.constant 0 : index
    %147 = vector.load %arg8[%c8, %c0_52] : memref<32x96xf32, #tpu.memory_space<vmem>>, vector<2x96xf32>
    %cst_53 = arith.constant dense<0.000000e+00> : vector<2x96xf32>
    %148 = tpu.matmul %143, %1, %cst_53 {dimension_numbers = #tpu.dot_dimension_numbers<[1], [0], [0], [1], [0, 0, 1, 1], [], []>} : vector<2x32xf32>, vector<32x96xf32>, vector<2x96xf32> -> vector<2x96xf32>
    %149 = vector.broadcast %3 : vector<1x96xf32> to vector<2x96xf32>
    %150 = arith.addf %148, %149 : vector<2x96xf32>
    %151 = vector.extract_strided_slice %147 {offsets = [0, 0], sizes = [2, 32], strides = [1, 1]} : vector<2x96xf32> to vector<2x32xf32>
    %152 = vector.extract_strided_slice %150 {offsets = [0, 0], sizes = [2, 32], strides = [1, 1]} : vector<2x96xf32> to vector<2x32xf32>
    %153 = arith.addf %151, %152 : vector<2x32xf32>
    %154 = arith.negf %153 : vector<2x32xf32>
    %155 = math.exp %154 : vector<2x32xf32>
    %cst_54 = arith.constant 1.000000e+00 : f32
    %156 = vector.broadcast %cst_54 : f32 to vector<2x32xf32>
    %157 = arith.addf %156, %155 : vector<2x32xf32>
    %158 = arith.divf %156, %157 : vector<2x32xf32>
    %159 = vector.extract_strided_slice %147 {offsets = [0, 32], sizes = [2, 32], strides = [1, 1]} : vector<2x96xf32> to vector<2x32xf32>
    %160 = vector.extract_strided_slice %150 {offsets = [0, 32], sizes = [2, 32], strides = [1, 1]} : vector<2x96xf32> to vector<2x32xf32>
    %161 = arith.addf %159, %160 : vector<2x32xf32>
    %162 = arith.negf %161 : vector<2x32xf32>
    %163 = math.exp %162 : vector<2x32xf32>
    %cst_55 = arith.constant 1.000000e+00 : f32
    %164 = vector.broadcast %cst_55 : f32 to vector<2x32xf32>
    %165 = arith.addf %164, %163 : vector<2x32xf32>
    %166 = arith.divf %164, %165 : vector<2x32xf32>
    %167 = vector.extract_strided_slice %147 {offsets = [0, 64], sizes = [2, 32], strides = [1, 1]} : vector<2x96xf32> to vector<2x32xf32>
    %168 = vector.extract_strided_slice %150 {offsets = [0, 64], sizes = [2, 32], strides = [1, 1]} : vector<2x96xf32> to vector<2x32xf32>
    %169 = arith.mulf %158, %168 : vector<2x32xf32>
    %170 = arith.addf %167, %169 : vector<2x32xf32>
    %171 = math.tanh %170 : vector<2x32xf32>
    %cst_56 = arith.constant 1.000000e+00 : f32
    %172 = vector.broadcast %cst_56 : f32 to vector<2x32xf32>
    %173 = arith.subf %172, %166 : vector<2x32xf32>
    %174 = arith.mulf %173, %171 : vector<2x32xf32>
    %175 = arith.mulf %166, %143 : vector<2x32xf32>
    %176 = arith.addf %174, %175 : vector<2x32xf32>
    %c0_57 = arith.constant 0 : index
    %c4_58 = arith.constant 4 : index
    %c0_59 = arith.constant 0 : index
    %c0_60 = arith.constant 0 : index
    %177 = vector.load %arg6[%c0_57, %c4_58, %c0_59, %c0_60] : memref<1x16x2x32xf32, #tpu.memory_space<vmem>>, vector<1x1x2x32xf32>
    %178 = vector.shape_cast %177 : vector<1x1x2x32xf32> to vector<2x32xf32>
    %179 = vector.shape_cast %176 : vector<2x32xf32> to vector<1x1x2x32xf32>
    tpu.vector_store %arg6[%c0_57, %c4_58, %c0_59, %c0_60], %179 {strides = array<i32>} : memref<1x16x2x32xf32, #tpu.memory_space<vmem>>, vector<1x1x2x32xf32>,
    %c10 = arith.constant 10 : index
    %c0_61 = arith.constant 0 : index
    %180 = vector.load %arg8[%c10, %c0_61] : memref<32x96xf32, #tpu.memory_space<vmem>>, vector<2x96xf32>
    %cst_62 = arith.constant dense<0.000000e+00> : vector<2x96xf32>
    %181 = tpu.matmul %176, %1, %cst_62 {dimension_numbers = #tpu.dot_dimension_numbers<[1], [0], [0], [1], [0, 0, 1, 1], [], []>} : vector<2x32xf32>, vector<32x96xf32>, vector<2x96xf32> -> vector<2x96xf32>
    %182 = vector.broadcast %3 : vector<1x96xf32> to vector<2x96xf32>
    %183 = arith.addf %181, %182 : vector<2x96xf32>
    %184 = vector.extract_strided_slice %180 {offsets = [0, 0], sizes = [2, 32], strides = [1, 1]} : vector<2x96xf32> to vector<2x32xf32>
    %185 = vector.extract_strided_slice %183 {offsets = [0, 0], sizes = [2, 32], strides = [1, 1]} : vector<2x96xf32> to vector<2x32xf32>
    %186 = arith.addf %184, %185 : vector<2x32xf32>
    %187 = arith.negf %186 : vector<2x32xf32>
    %188 = math.exp %187 : vector<2x32xf32>
    %cst_63 = arith.constant 1.000000e+00 : f32
    %189 = vector.broadcast %cst_63 : f32 to vector<2x32xf32>
    %190 = arith.addf %189, %188 : vector<2x32xf32>
    %191 = arith.divf %189, %190 : vector<2x32xf32>
    %192 = vector.extract_strided_slice %180 {offsets = [0, 32], sizes = [2, 32], strides = [1, 1]} : vector<2x96xf32> to vector<2x32xf32>
    %193 = vector.extract_strided_slice %183 {offsets = [0, 32], sizes = [2, 32], strides = [1, 1]} : vector<2x96xf32> to vector<2x32xf32>
    %194 = arith.addf %192, %193 : vector<2x32xf32>
    %195 = arith.negf %194 : vector<2x32xf32>
    %196 = math.exp %195 : vector<2x32xf32>
    %cst_64 = arith.constant 1.000000e+00 : f32
    %197 = vector.broadcast %cst_64 : f32 to vector<2x32xf32>
    %198 = arith.addf %197, %196 : vector<2x32xf32>
    %199 = arith.divf %197, %198 : vector<2x32xf32>
    %200 = vector.extract_strided_slice %180 {offsets = [0, 64], sizes = [2, 32], strides = [1, 1]} : vector<2x96xf32> to vector<2x32xf32>
    %201 = vector.extract_strided_slice %183 {offsets = [0, 64], sizes = [2, 32], strides = [1, 1]} : vector<2x96xf32> to vector<2x32xf32>
    %202 = arith.mulf %191, %201 : vector<2x32xf32>
    %203 = arith.addf %200, %202 : vector<2x32xf32>
    %204 = math.tanh %203 : vector<2x32xf32>
    %cst_65 = arith.constant 1.000000e+00 : f32
    %205 = vector.broadcast %cst_65 : f32 to vector<2x32xf32>
    %206 = arith.subf %205, %199 : vector<2x32xf32>
    %207 = arith.mulf %206, %204 : vector<2x32xf32>
    %208 = arith.mulf %199, %176 : vector<2x32xf32>
    %209 = arith.addf %207, %208 : vector<2x32xf32>
    %c0_66 = arith.constant 0 : index
    %c5 = arith.constant 5 : index
    %c0_67 = arith.constant 0 : index
    %c0_68 = arith.constant 0 : index
    %210 = vector.load %arg6[%c0_66, %c5, %c0_67, %c0_68] : memref<1x16x2x32xf32, #tpu.memory_space<vmem>>, vector<1x1x2x32xf32>
    %211 = vector.shape_cast %210 : vector<1x1x2x32xf32> to vector<2x32xf32>
    %212 = vector.shape_cast %209 : vector<2x32xf32> to vector<1x1x2x32xf32>
    tpu.vector_store %arg6[%c0_66, %c5, %c0_67, %c0_68], %212 {strides = array<i32>} : memref<1x16x2x32xf32, #tpu.memory_space<vmem>>, vector<1x1x2x32xf32>,
    %c12 = arith.constant 12 : index
    %c0_69 = arith.constant 0 : index
    %213 = vector.load %arg8[%c12, %c0_69] : memref<32x96xf32, #tpu.memory_space<vmem>>, vector<2x96xf32>
    %cst_70 = arith.constant dense<0.000000e+00> : vector<2x96xf32>
    %214 = tpu.matmul %209, %1, %cst_70 {dimension_numbers = #tpu.dot_dimension_numbers<[1], [0], [0], [1], [0, 0, 1, 1], [], []>} : vector<2x32xf32>, vector<32x96xf32>, vector<2x96xf32> -> vector<2x96xf32>
    %215 = vector.broadcast %3 : vector<1x96xf32> to vector<2x96xf32>
    %216 = arith.addf %214, %215 : vector<2x96xf32>
    %217 = vector.extract_strided_slice %213 {offsets = [0, 0], sizes = [2, 32], strides = [1, 1]} : vector<2x96xf32> to vector<2x32xf32>
    %218 = vector.extract_strided_slice %216 {offsets = [0, 0], sizes = [2, 32], strides = [1, 1]} : vector<2x96xf32> to vector<2x32xf32>
    %219 = arith.addf %217, %218 : vector<2x32xf32>
    %220 = arith.negf %219 : vector<2x32xf32>
    %221 = math.exp %220 : vector<2x32xf32>
    %cst_71 = arith.constant 1.000000e+00 : f32
    %222 = vector.broadcast %cst_71 : f32 to vector<2x32xf32>
    %223 = arith.addf %222, %221 : vector<2x32xf32>
    %224 = arith.divf %222, %223 : vector<2x32xf32>
    %225 = vector.extract_strided_slice %213 {offsets = [0, 32], sizes = [2, 32], strides = [1, 1]} : vector<2x96xf32> to vector<2x32xf32>
    %226 = vector.extract_strided_slice %216 {offsets = [0, 32], sizes = [2, 32], strides = [1, 1]} : vector<2x96xf32> to vector<2x32xf32>
    %227 = arith.addf %225, %226 : vector<2x32xf32>
    %228 = arith.negf %227 : vector<2x32xf32>
    %229 = math.exp %228 : vector<2x32xf32>
    %cst_72 = arith.constant 1.000000e+00 : f32
    %230 = vector.broadcast %cst_72 : f32 to vector<2x32xf32>
    %231 = arith.addf %230, %229 : vector<2x32xf32>
    %232 = arith.divf %230, %231 : vector<2x32xf32>
    %233 = vector.extract_strided_slice %213 {offsets = [0, 64], sizes = [2, 32], strides = [1, 1]} : vector<2x96xf32> to vector<2x32xf32>
    %234 = vector.extract_strided_slice %216 {offsets = [0, 64], sizes = [2, 32], strides = [1, 1]} : vector<2x96xf32> to vector<2x32xf32>
    %235 = arith.mulf %224, %234 : vector<2x32xf32>
    %236 = arith.addf %233, %235 : vector<2x32xf32>
    %237 = math.tanh %236 : vector<2x32xf32>
    %cst_73 = arith.constant 1.000000e+00 : f32
    %238 = vector.broadcast %cst_73 : f32 to vector<2x32xf32>
    %239 = arith.subf %238, %232 : vector<2x32xf32>
    %240 = arith.mulf %239, %237 : vector<2x32xf32>
    %241 = arith.mulf %232, %209 : vector<2x32xf32>
    %242 = arith.addf %240, %241 : vector<2x32xf32>
    %c0_74 = arith.constant 0 : index
    %c6_75 = arith.constant 6 : index
    %c0_76 = arith.constant 0 : index
    %c0_77 = arith.constant 0 : index
    %243 = vector.load %arg6[%c0_74, %c6_75, %c0_76, %c0_77] : memref<1x16x2x32xf32, #tpu.memory_space<vmem>>, vector<1x1x2x32xf32>
    %244 = vector.shape_cast %243 : vector<1x1x2x32xf32> to vector<2x32xf32>
    %245 = vector.shape_cast %242 : vector<2x32xf32> to vector<1x1x2x32xf32>
    tpu.vector_store %arg6[%c0_74, %c6_75, %c0_76, %c0_77], %245 {strides = array<i32>} : memref<1x16x2x32xf32, #tpu.memory_space<vmem>>, vector<1x1x2x32xf32>,
    %c14 = arith.constant 14 : index
    %c0_78 = arith.constant 0 : index
    %246 = vector.load %arg8[%c14, %c0_78] : memref<32x96xf32, #tpu.memory_space<vmem>>, vector<2x96xf32>
    %cst_79 = arith.constant dense<0.000000e+00> : vector<2x96xf32>
    %247 = tpu.matmul %242, %1, %cst_79 {dimension_numbers = #tpu.dot_dimension_numbers<[1], [0], [0], [1], [0, 0, 1, 1], [], []>} : vector<2x32xf32>, vector<32x96xf32>, vector<2x96xf32> -> vector<2x96xf32>
    %248 = vector.broadcast %3 : vector<1x96xf32> to vector<2x96xf32>
    %249 = arith.addf %247, %248 : vector<2x96xf32>
    %250 = vector.extract_strided_slice %246 {offsets = [0, 0], sizes = [2, 32], strides = [1, 1]} : vector<2x96xf32> to vector<2x32xf32>
    %251 = vector.extract_strided_slice %249 {offsets = [0, 0], sizes = [2, 32], strides = [1, 1]} : vector<2x96xf32> to vector<2x32xf32>
    %252 = arith.addf %250, %251 : vector<2x32xf32>
    %253 = arith.negf %252 : vector<2x32xf32>
    %254 = math.exp %253 : vector<2x32xf32>
    %cst_80 = arith.constant 1.000000e+00 : f32
    %255 = vector.broadcast %cst_80 : f32 to vector<2x32xf32>
    %256 = arith.addf %255, %254 : vector<2x32xf32>
    %257 = arith.divf %255, %256 : vector<2x32xf32>
    %258 = vector.extract_strided_slice %246 {offsets = [0, 32], sizes = [2, 32], strides = [1, 1]} : vector<2x96xf32> to vector<2x32xf32>
    %259 = vector.extract_strided_slice %249 {offsets = [0, 32], sizes = [2, 32], strides = [1, 1]} : vector<2x96xf32> to vector<2x32xf32>
    %260 = arith.addf %258, %259 : vector<2x32xf32>
    %261 = arith.negf %260 : vector<2x32xf32>
    %262 = math.exp %261 : vector<2x32xf32>
    %cst_81 = arith.constant 1.000000e+00 : f32
    %263 = vector.broadcast %cst_81 : f32 to vector<2x32xf32>
    %264 = arith.addf %263, %262 : vector<2x32xf32>
    %265 = arith.divf %263, %264 : vector<2x32xf32>
    %266 = vector.extract_strided_slice %246 {offsets = [0, 64], sizes = [2, 32], strides = [1, 1]} : vector<2x96xf32> to vector<2x32xf32>
    %267 = vector.extract_strided_slice %249 {offsets = [0, 64], sizes = [2, 32], strides = [1, 1]} : vector<2x96xf32> to vector<2x32xf32>
    %268 = arith.mulf %257, %267 : vector<2x32xf32>
    %269 = arith.addf %266, %268 : vector<2x32xf32>
    %270 = math.tanh %269 : vector<2x32xf32>
    %cst_82 = arith.constant 1.000000e+00 : f32
    %271 = vector.broadcast %cst_82 : f32 to vector<2x32xf32>
    %272 = arith.subf %271, %265 : vector<2x32xf32>
    %273 = arith.mulf %272, %270 : vector<2x32xf32>
    %274 = arith.mulf %265, %242 : vector<2x32xf32>
    %275 = arith.addf %273, %274 : vector<2x32xf32>
    %c0_83 = arith.constant 0 : index
    %c7 = arith.constant 7 : index
    %c0_84 = arith.constant 0 : index
    %c0_85 = arith.constant 0 : index
    %276 = vector.load %arg6[%c0_83, %c7, %c0_84, %c0_85] : memref<1x16x2x32xf32, #tpu.memory_space<vmem>>, vector<1x1x2x32xf32>
    %277 = vector.shape_cast %276 : vector<1x1x2x32xf32> to vector<2x32xf32>
    %278 = vector.shape_cast %275 : vector<2x32xf32> to vector<1x1x2x32xf32>
    tpu.vector_store %arg6[%c0_83, %c7, %c0_84, %c0_85], %278 {strides = array<i32>} : memref<1x16x2x32xf32, #tpu.memory_space<vmem>>, vector<1x1x2x32xf32>,
    %c16 = arith.constant 16 : index
    %c0_86 = arith.constant 0 : index
    %279 = vector.load %arg8[%c16, %c0_86] : memref<32x96xf32, #tpu.memory_space<vmem>>, vector<2x96xf32>
    %cst_87 = arith.constant dense<0.000000e+00> : vector<2x96xf32>
    %280 = tpu.matmul %275, %1, %cst_87 {dimension_numbers = #tpu.dot_dimension_numbers<[1], [0], [0], [1], [0, 0, 1, 1], [], []>} : vector<2x32xf32>, vector<32x96xf32>, vector<2x96xf32> -> vector<2x96xf32>
    %281 = vector.broadcast %3 : vector<1x96xf32> to vector<2x96xf32>
    %282 = arith.addf %280, %281 : vector<2x96xf32>
    %283 = vector.extract_strided_slice %279 {offsets = [0, 0], sizes = [2, 32], strides = [1, 1]} : vector<2x96xf32> to vector<2x32xf32>
    %284 = vector.extract_strided_slice %282 {offsets = [0, 0], sizes = [2, 32], strides = [1, 1]} : vector<2x96xf32> to vector<2x32xf32>
    %285 = arith.addf %283, %284 : vector<2x32xf32>
    %286 = arith.negf %285 : vector<2x32xf32>
    %287 = math.exp %286 : vector<2x32xf32>
    %cst_88 = arith.constant 1.000000e+00 : f32
    %288 = vector.broadcast %cst_88 : f32 to vector<2x32xf32>
    %289 = arith.addf %288, %287 : vector<2x32xf32>
    %290 = arith.divf %288, %289 : vector<2x32xf32>
    %291 = vector.extract_strided_slice %279 {offsets = [0, 32], sizes = [2, 32], strides = [1, 1]} : vector<2x96xf32> to vector<2x32xf32>
    %292 = vector.extract_strided_slice %282 {offsets = [0, 32], sizes = [2, 32], strides = [1, 1]} : vector<2x96xf32> to vector<2x32xf32>
    %293 = arith.addf %291, %292 : vector<2x32xf32>
    %294 = arith.negf %293 : vector<2x32xf32>
    %295 = math.exp %294 : vector<2x32xf32>
    %cst_89 = arith.constant 1.000000e+00 : f32
    %296 = vector.broadcast %cst_89 : f32 to vector<2x32xf32>
    %297 = arith.addf %296, %295 : vector<2x32xf32>
    %298 = arith.divf %296, %297 : vector<2x32xf32>
    %299 = vector.extract_strided_slice %279 {offsets = [0, 64], sizes = [2, 32], strides = [1, 1]} : vector<2x96xf32> to vector<2x32xf32>
    %300 = vector.extract_strided_slice %282 {offsets = [0, 64], sizes = [2, 32], strides = [1, 1]} : vector<2x96xf32> to vector<2x32xf32>
    %301 = arith.mulf %290, %300 : vector<2x32xf32>
    %302 = arith.addf %299, %301 : vector<2x32xf32>
    %303 = math.tanh %302 : vector<2x32xf32>
    %cst_90 = arith.constant 1.000000e+00 : f32
    %304 = vector.broadcast %cst_90 : f32 to vector<2x32xf32>
    %305 = arith.subf %304, %298 : vector<2x32xf32>
    %306 = arith.mulf %305, %303 : vector<2x32xf32>
    %307 = arith.mulf %298, %275 : vector<2x32xf32>
    %308 = arith.addf %306, %307 : vector<2x32xf32>
    %c0_91 = arith.constant 0 : index
    %c8_92 = arith.constant 8 : index
    %c0_93 = arith.constant 0 : index
    %c0_94 = arith.constant 0 : index
    %309 = vector.load %arg6[%c0_91, %c8_92, %c0_93, %c0_94] : memref<1x16x2x32xf32, #tpu.memory_space<vmem>>, vector<1x1x2x32xf32>
    %310 = vector.shape_cast %309 : vector<1x1x2x32xf32> to vector<2x32xf32>
    %311 = vector.shape_cast %308 : vector<2x32xf32> to vector<1x1x2x32xf32>
    tpu.vector_store %arg6[%c0_91, %c8_92, %c0_93, %c0_94], %311 {strides = array<i32>} : memref<1x16x2x32xf32, #tpu.memory_space<vmem>>, vector<1x1x2x32xf32>,
    %c18 = arith.constant 18 : index
    %c0_95 = arith.constant 0 : index
    %312 = vector.load %arg8[%c18, %c0_95] : memref<32x96xf32, #tpu.memory_space<vmem>>, vector<2x96xf32>
    %cst_96 = arith.constant dense<0.000000e+00> : vector<2x96xf32>
    %313 = tpu.matmul %308, %1, %cst_96 {dimension_numbers = #tpu.dot_dimension_numbers<[1], [0], [0], [1], [0, 0, 1, 1], [], []>} : vector<2x32xf32>, vector<32x96xf32>, vector<2x96xf32> -> vector<2x96xf32>
    %314 = vector.broadcast %3 : vector<1x96xf32> to vector<2x96xf32>
    %315 = arith.addf %313, %314 : vector<2x96xf32>
    %316 = vector.extract_strided_slice %312 {offsets = [0, 0], sizes = [2, 32], strides = [1, 1]} : vector<2x96xf32> to vector<2x32xf32>
    %317 = vector.extract_strided_slice %315 {offsets = [0, 0], sizes = [2, 32], strides = [1, 1]} : vector<2x96xf32> to vector<2x32xf32>
    %318 = arith.addf %316, %317 : vector<2x32xf32>
    %319 = arith.negf %318 : vector<2x32xf32>
    %320 = math.exp %319 : vector<2x32xf32>
    %cst_97 = arith.constant 1.000000e+00 : f32
    %321 = vector.broadcast %cst_97 : f32 to vector<2x32xf32>
    %322 = arith.addf %321, %320 : vector<2x32xf32>
    %323 = arith.divf %321, %322 : vector<2x32xf32>
    %324 = vector.extract_strided_slice %312 {offsets = [0, 32], sizes = [2, 32], strides = [1, 1]} : vector<2x96xf32> to vector<2x32xf32>
    %325 = vector.extract_strided_slice %315 {offsets = [0, 32], sizes = [2, 32], strides = [1, 1]} : vector<2x96xf32> to vector<2x32xf32>
    %326 = arith.addf %324, %325 : vector<2x32xf32>
    %327 = arith.negf %326 : vector<2x32xf32>
    %328 = math.exp %327 : vector<2x32xf32>
    %cst_98 = arith.constant 1.000000e+00 : f32
    %329 = vector.broadcast %cst_98 : f32 to vector<2x32xf32>
    %330 = arith.addf %329, %328 : vector<2x32xf32>
    %331 = arith.divf %329, %330 : vector<2x32xf32>
    %332 = vector.extract_strided_slice %312 {offsets = [0, 64], sizes = [2, 32], strides = [1, 1]} : vector<2x96xf32> to vector<2x32xf32>
    %333 = vector.extract_strided_slice %315 {offsets = [0, 64], sizes = [2, 32], strides = [1, 1]} : vector<2x96xf32> to vector<2x32xf32>
    %334 = arith.mulf %323, %333 : vector<2x32xf32>
    %335 = arith.addf %332, %334 : vector<2x32xf32>
    %336 = math.tanh %335 : vector<2x32xf32>
    %cst_99 = arith.constant 1.000000e+00 : f32
    %337 = vector.broadcast %cst_99 : f32 to vector<2x32xf32>
    %338 = arith.subf %337, %331 : vector<2x32xf32>
    %339 = arith.mulf %338, %336 : vector<2x32xf32>
    %340 = arith.mulf %331, %308 : vector<2x32xf32>
    %341 = arith.addf %339, %340 : vector<2x32xf32>
    %c0_100 = arith.constant 0 : index
    %c9 = arith.constant 9 : index
    %c0_101 = arith.constant 0 : index
    %c0_102 = arith.constant 0 : index
    %342 = vector.load %arg6[%c0_100, %c9, %c0_101, %c0_102] : memref<1x16x2x32xf32, #tpu.memory_space<vmem>>, vector<1x1x2x32xf32>
    %343 = vector.shape_cast %342 : vector<1x1x2x32xf32> to vector<2x32xf32>
    %344 = vector.shape_cast %341 : vector<2x32xf32> to vector<1x1x2x32xf32>
    tpu.vector_store %arg6[%c0_100, %c9, %c0_101, %c0_102], %344 {strides = array<i32>} : memref<1x16x2x32xf32, #tpu.memory_space<vmem>>, vector<1x1x2x32xf32>,
    %c20 = arith.constant 20 : index
    %c0_103 = arith.constant 0 : index
    %345 = vector.load %arg8[%c20, %c0_103] : memref<32x96xf32, #tpu.memory_space<vmem>>, vector<2x96xf32>
    %cst_104 = arith.constant dense<0.000000e+00> : vector<2x96xf32>
    %346 = tpu.matmul %341, %1, %cst_104 {dimension_numbers = #tpu.dot_dimension_numbers<[1], [0], [0], [1], [0, 0, 1, 1], [], []>} : vector<2x32xf32>, vector<32x96xf32>, vector<2x96xf32> -> vector<2x96xf32>
    %347 = vector.broadcast %3 : vector<1x96xf32> to vector<2x96xf32>
    %348 = arith.addf %346, %347 : vector<2x96xf32>
    %349 = vector.extract_strided_slice %345 {offsets = [0, 0], sizes = [2, 32], strides = [1, 1]} : vector<2x96xf32> to vector<2x32xf32>
    %350 = vector.extract_strided_slice %348 {offsets = [0, 0], sizes = [2, 32], strides = [1, 1]} : vector<2x96xf32> to vector<2x32xf32>
    %351 = arith.addf %349, %350 : vector<2x32xf32>
    %352 = arith.negf %351 : vector<2x32xf32>
    %353 = math.exp %352 : vector<2x32xf32>
    %cst_105 = arith.constant 1.000000e+00 : f32
    %354 = vector.broadcast %cst_105 : f32 to vector<2x32xf32>
    %355 = arith.addf %354, %353 : vector<2x32xf32>
    %356 = arith.divf %354, %355 : vector<2x32xf32>
    %357 = vector.extract_strided_slice %345 {offsets = [0, 32], sizes = [2, 32], strides = [1, 1]} : vector<2x96xf32> to vector<2x32xf32>
    %358 = vector.extract_strided_slice %348 {offsets = [0, 32], sizes = [2, 32], strides = [1, 1]} : vector<2x96xf32> to vector<2x32xf32>
    %359 = arith.addf %357, %358 : vector<2x32xf32>
    %360 = arith.negf %359 : vector<2x32xf32>
    %361 = math.exp %360 : vector<2x32xf32>
    %cst_106 = arith.constant 1.000000e+00 : f32
    %362 = vector.broadcast %cst_106 : f32 to vector<2x32xf32>
    %363 = arith.addf %362, %361 : vector<2x32xf32>
    %364 = arith.divf %362, %363 : vector<2x32xf32>
    %365 = vector.extract_strided_slice %345 {offsets = [0, 64], sizes = [2, 32], strides = [1, 1]} : vector<2x96xf32> to vector<2x32xf32>
    %366 = vector.extract_strided_slice %348 {offsets = [0, 64], sizes = [2, 32], strides = [1, 1]} : vector<2x96xf32> to vector<2x32xf32>
    %367 = arith.mulf %356, %366 : vector<2x32xf32>
    %368 = arith.addf %365, %367 : vector<2x32xf32>
    %369 = math.tanh %368 : vector<2x32xf32>
    %cst_107 = arith.constant 1.000000e+00 : f32
    %370 = vector.broadcast %cst_107 : f32 to vector<2x32xf32>
    %371 = arith.subf %370, %364 : vector<2x32xf32>
    %372 = arith.mulf %371, %369 : vector<2x32xf32>
    %373 = arith.mulf %364, %341 : vector<2x32xf32>
    %374 = arith.addf %372, %373 : vector<2x32xf32>
    %c0_108 = arith.constant 0 : index
    %c10_109 = arith.constant 10 : index
    %c0_110 = arith.constant 0 : index
    %c0_111 = arith.constant 0 : index
    %375 = vector.load %arg6[%c0_108, %c10_109, %c0_110, %c0_111] : memref<1x16x2x32xf32, #tpu.memory_space<vmem>>, vector<1x1x2x32xf32>
    %376 = vector.shape_cast %375 : vector<1x1x2x32xf32> to vector<2x32xf32>
    %377 = vector.shape_cast %374 : vector<2x32xf32> to vector<1x1x2x32xf32>
    tpu.vector_store %arg6[%c0_108, %c10_109, %c0_110, %c0_111], %377 {strides = array<i32>} : memref<1x16x2x32xf32, #tpu.memory_space<vmem>>, vector<1x1x2x32xf32>,
    %c22 = arith.constant 22 : index
    %c0_112 = arith.constant 0 : index
    %378 = vector.load %arg8[%c22, %c0_112] : memref<32x96xf32, #tpu.memory_space<vmem>>, vector<2x96xf32>
    %cst_113 = arith.constant dense<0.000000e+00> : vector<2x96xf32>
    %379 = tpu.matmul %374, %1, %cst_113 {dimension_numbers = #tpu.dot_dimension_numbers<[1], [0], [0], [1], [0, 0, 1, 1], [], []>} : vector<2x32xf32>, vector<32x96xf32>, vector<2x96xf32> -> vector<2x96xf32>
    %380 = vector.broadcast %3 : vector<1x96xf32> to vector<2x96xf32>
    %381 = arith.addf %379, %380 : vector<2x96xf32>
    %382 = vector.extract_strided_slice %378 {offsets = [0, 0], sizes = [2, 32], strides = [1, 1]} : vector<2x96xf32> to vector<2x32xf32>
    %383 = vector.extract_strided_slice %381 {offsets = [0, 0], sizes = [2, 32], strides = [1, 1]} : vector<2x96xf32> to vector<2x32xf32>
    %384 = arith.addf %382, %383 : vector<2x32xf32>
    %385 = arith.negf %384 : vector<2x32xf32>
    %386 = math.exp %385 : vector<2x32xf32>
    %cst_114 = arith.constant 1.000000e+00 : f32
    %387 = vector.broadcast %cst_114 : f32 to vector<2x32xf32>
    %388 = arith.addf %387, %386 : vector<2x32xf32>
    %389 = arith.divf %387, %388 : vector<2x32xf32>
    %390 = vector.extract_strided_slice %378 {offsets = [0, 32], sizes = [2, 32], strides = [1, 1]} : vector<2x96xf32> to vector<2x32xf32>
    %391 = vector.extract_strided_slice %381 {offsets = [0, 32], sizes = [2, 32], strides = [1, 1]} : vector<2x96xf32> to vector<2x32xf32>
    %392 = arith.addf %390, %391 : vector<2x32xf32>
    %393 = arith.negf %392 : vector<2x32xf32>
    %394 = math.exp %393 : vector<2x32xf32>
    %cst_115 = arith.constant 1.000000e+00 : f32
    %395 = vector.broadcast %cst_115 : f32 to vector<2x32xf32>
    %396 = arith.addf %395, %394 : vector<2x32xf32>
    %397 = arith.divf %395, %396 : vector<2x32xf32>
    %398 = vector.extract_strided_slice %378 {offsets = [0, 64], sizes = [2, 32], strides = [1, 1]} : vector<2x96xf32> to vector<2x32xf32>
    %399 = vector.extract_strided_slice %381 {offsets = [0, 64], sizes = [2, 32], strides = [1, 1]} : vector<2x96xf32> to vector<2x32xf32>
    %400 = arith.mulf %389, %399 : vector<2x32xf32>
    %401 = arith.addf %398, %400 : vector<2x32xf32>
    %402 = math.tanh %401 : vector<2x32xf32>
    %cst_116 = arith.constant 1.000000e+00 : f32
    %403 = vector.broadcast %cst_116 : f32 to vector<2x32xf32>
    %404 = arith.subf %403, %397 : vector<2x32xf32>
    %405 = arith.mulf %404, %402 : vector<2x32xf32>
    %406 = arith.mulf %397, %374 : vector<2x32xf32>
    %407 = arith.addf %405, %406 : vector<2x32xf32>
    %c0_117 = arith.constant 0 : index
    %c11 = arith.constant 11 : index
    %c0_118 = arith.constant 0 : index
    %c0_119 = arith.constant 0 : index
    %408 = vector.load %arg6[%c0_117, %c11, %c0_118, %c0_119] : memref<1x16x2x32xf32, #tpu.memory_space<vmem>>, vector<1x1x2x32xf32>
    %409 = vector.shape_cast %408 : vector<1x1x2x32xf32> to vector<2x32xf32>
    %410 = vector.shape_cast %407 : vector<2x32xf32> to vector<1x1x2x32xf32>
    tpu.vector_store %arg6[%c0_117, %c11, %c0_118, %c0_119], %410 {strides = array<i32>} : memref<1x16x2x32xf32, #tpu.memory_space<vmem>>, vector<1x1x2x32xf32>,
    %c24 = arith.constant 24 : index
    %c0_120 = arith.constant 0 : index
    %411 = vector.load %arg8[%c24, %c0_120] : memref<32x96xf32, #tpu.memory_space<vmem>>, vector<2x96xf32>
    %cst_121 = arith.constant dense<0.000000e+00> : vector<2x96xf32>
    %412 = tpu.matmul %407, %1, %cst_121 {dimension_numbers = #tpu.dot_dimension_numbers<[1], [0], [0], [1], [0, 0, 1, 1], [], []>} : vector<2x32xf32>, vector<32x96xf32>, vector<2x96xf32> -> vector<2x96xf32>
    %413 = vector.broadcast %3 : vector<1x96xf32> to vector<2x96xf32>
    %414 = arith.addf %412, %413 : vector<2x96xf32>
    %415 = vector.extract_strided_slice %411 {offsets = [0, 0], sizes = [2, 32], strides = [1, 1]} : vector<2x96xf32> to vector<2x32xf32>
    %416 = vector.extract_strided_slice %414 {offsets = [0, 0], sizes = [2, 32], strides = [1, 1]} : vector<2x96xf32> to vector<2x32xf32>
    %417 = arith.addf %415, %416 : vector<2x32xf32>
    %418 = arith.negf %417 : vector<2x32xf32>
    %419 = math.exp %418 : vector<2x32xf32>
    %cst_122 = arith.constant 1.000000e+00 : f32
    %420 = vector.broadcast %cst_122 : f32 to vector<2x32xf32>
    %421 = arith.addf %420, %419 : vector<2x32xf32>
    %422 = arith.divf %420, %421 : vector<2x32xf32>
    %423 = vector.extract_strided_slice %411 {offsets = [0, 32], sizes = [2, 32], strides = [1, 1]} : vector<2x96xf32> to vector<2x32xf32>
    %424 = vector.extract_strided_slice %414 {offsets = [0, 32], sizes = [2, 32], strides = [1, 1]} : vector<2x96xf32> to vector<2x32xf32>
    %425 = arith.addf %423, %424 : vector<2x32xf32>
    %426 = arith.negf %425 : vector<2x32xf32>
    %427 = math.exp %426 : vector<2x32xf32>
    %cst_123 = arith.constant 1.000000e+00 : f32
    %428 = vector.broadcast %cst_123 : f32 to vector<2x32xf32>
    %429 = arith.addf %428, %427 : vector<2x32xf32>
    %430 = arith.divf %428, %429 : vector<2x32xf32>
    %431 = vector.extract_strided_slice %411 {offsets = [0, 64], sizes = [2, 32], strides = [1, 1]} : vector<2x96xf32> to vector<2x32xf32>
    %432 = vector.extract_strided_slice %414 {offsets = [0, 64], sizes = [2, 32], strides = [1, 1]} : vector<2x96xf32> to vector<2x32xf32>
    %433 = arith.mulf %422, %432 : vector<2x32xf32>
    %434 = arith.addf %431, %433 : vector<2x32xf32>
    %435 = math.tanh %434 : vector<2x32xf32>
    %cst_124 = arith.constant 1.000000e+00 : f32
    %436 = vector.broadcast %cst_124 : f32 to vector<2x32xf32>
    %437 = arith.subf %436, %430 : vector<2x32xf32>
    %438 = arith.mulf %437, %435 : vector<2x32xf32>
    %439 = arith.mulf %430, %407 : vector<2x32xf32>
    %440 = arith.addf %438, %439 : vector<2x32xf32>
    %c0_125 = arith.constant 0 : index
    %c12_126 = arith.constant 12 : index
    %c0_127 = arith.constant 0 : index
    %c0_128 = arith.constant 0 : index
    %441 = vector.load %arg6[%c0_125, %c12_126, %c0_127, %c0_128] : memref<1x16x2x32xf32, #tpu.memory_space<vmem>>, vector<1x1x2x32xf32>
    %442 = vector.shape_cast %441 : vector<1x1x2x32xf32> to vector<2x32xf32>
    %443 = vector.shape_cast %440 : vector<2x32xf32> to vector<1x1x2x32xf32>
    tpu.vector_store %arg6[%c0_125, %c12_126, %c0_127, %c0_128], %443 {strides = array<i32>} : memref<1x16x2x32xf32, #tpu.memory_space<vmem>>, vector<1x1x2x32xf32>,
    %c26 = arith.constant 26 : index
    %c0_129 = arith.constant 0 : index
    %444 = vector.load %arg8[%c26, %c0_129] : memref<32x96xf32, #tpu.memory_space<vmem>>, vector<2x96xf32>
    %cst_130 = arith.constant dense<0.000000e+00> : vector<2x96xf32>
    %445 = tpu.matmul %440, %1, %cst_130 {dimension_numbers = #tpu.dot_dimension_numbers<[1], [0], [0], [1], [0, 0, 1, 1], [], []>} : vector<2x32xf32>, vector<32x96xf32>, vector<2x96xf32> -> vector<2x96xf32>
    %446 = vector.broadcast %3 : vector<1x96xf32> to vector<2x96xf32>
    %447 = arith.addf %445, %446 : vector<2x96xf32>
    %448 = vector.extract_strided_slice %444 {offsets = [0, 0], sizes = [2, 32], strides = [1, 1]} : vector<2x96xf32> to vector<2x32xf32>
    %449 = vector.extract_strided_slice %447 {offsets = [0, 0], sizes = [2, 32], strides = [1, 1]} : vector<2x96xf32> to vector<2x32xf32>
    %450 = arith.addf %448, %449 : vector<2x32xf32>
    %451 = arith.negf %450 : vector<2x32xf32>
    %452 = math.exp %451 : vector<2x32xf32>
    %cst_131 = arith.constant 1.000000e+00 : f32
    %453 = vector.broadcast %cst_131 : f32 to vector<2x32xf32>
    %454 = arith.addf %453, %452 : vector<2x32xf32>
    %455 = arith.divf %453, %454 : vector<2x32xf32>
    %456 = vector.extract_strided_slice %444 {offsets = [0, 32], sizes = [2, 32], strides = [1, 1]} : vector<2x96xf32> to vector<2x32xf32>
    %457 = vector.extract_strided_slice %447 {offsets = [0, 32], sizes = [2, 32], strides = [1, 1]} : vector<2x96xf32> to vector<2x32xf32>
    %458 = arith.addf %456, %457 : vector<2x32xf32>
    %459 = arith.negf %458 : vector<2x32xf32>
    %460 = math.exp %459 : vector<2x32xf32>
    %cst_132 = arith.constant 1.000000e+00 : f32
    %461 = vector.broadcast %cst_132 : f32 to vector<2x32xf32>
    %462 = arith.addf %461, %460 : vector<2x32xf32>
    %463 = arith.divf %461, %462 : vector<2x32xf32>
    %464 = vector.extract_strided_slice %444 {offsets = [0, 64], sizes = [2, 32], strides = [1, 1]} : vector<2x96xf32> to vector<2x32xf32>
    %465 = vector.extract_strided_slice %447 {offsets = [0, 64], sizes = [2, 32], strides = [1, 1]} : vector<2x96xf32> to vector<2x32xf32>
    %466 = arith.mulf %455, %465 : vector<2x32xf32>
    %467 = arith.addf %464, %466 : vector<2x32xf32>
    %468 = math.tanh %467 : vector<2x32xf32>
    %cst_133 = arith.constant 1.000000e+00 : f32
    %469 = vector.broadcast %cst_133 : f32 to vector<2x32xf32>
    %470 = arith.subf %469, %463 : vector<2x32xf32>
    %471 = arith.mulf %470, %468 : vector<2x32xf32>
    %472 = arith.mulf %463, %440 : vector<2x32xf32>
    %473 = arith.addf %471, %472 : vector<2x32xf32>
    %c0_134 = arith.constant 0 : index
    %c13 = arith.constant 13 : index
    %c0_135 = arith.constant 0 : index
    %c0_136 = arith.constant 0 : index
    %474 = vector.load %arg6[%c0_134, %c13, %c0_135, %c0_136] : memref<1x16x2x32xf32, #tpu.memory_space<vmem>>, vector<1x1x2x32xf32>
    %475 = vector.shape_cast %474 : vector<1x1x2x32xf32> to vector<2x32xf32>
    %476 = vector.shape_cast %473 : vector<2x32xf32> to vector<1x1x2x32xf32>
    tpu.vector_store %arg6[%c0_134, %c13, %c0_135, %c0_136], %476 {strides = array<i32>} : memref<1x16x2x32xf32, #tpu.memory_space<vmem>>, vector<1x1x2x32xf32>,
    %c28 = arith.constant 28 : index
    %c0_137 = arith.constant 0 : index
    %477 = vector.load %arg8[%c28, %c0_137] : memref<32x96xf32, #tpu.memory_space<vmem>>, vector<2x96xf32>
    %cst_138 = arith.constant dense<0.000000e+00> : vector<2x96xf32>
    %478 = tpu.matmul %473, %1, %cst_138 {dimension_numbers = #tpu.dot_dimension_numbers<[1], [0], [0], [1], [0, 0, 1, 1], [], []>} : vector<2x32xf32>, vector<32x96xf32>, vector<2x96xf32> -> vector<2x96xf32>
    %479 = vector.broadcast %3 : vector<1x96xf32> to vector<2x96xf32>
    %480 = arith.addf %478, %479 : vector<2x96xf32>
    %481 = vector.extract_strided_slice %477 {offsets = [0, 0], sizes = [2, 32], strides = [1, 1]} : vector<2x96xf32> to vector<2x32xf32>
    %482 = vector.extract_strided_slice %480 {offsets = [0, 0], sizes = [2, 32], strides = [1, 1]} : vector<2x96xf32> to vector<2x32xf32>
    %483 = arith.addf %481, %482 : vector<2x32xf32>
    %484 = arith.negf %483 : vector<2x32xf32>
    %485 = math.exp %484 : vector<2x32xf32>
    %cst_139 = arith.constant 1.000000e+00 : f32
    %486 = vector.broadcast %cst_139 : f32 to vector<2x32xf32>
    %487 = arith.addf %486, %485 : vector<2x32xf32>
    %488 = arith.divf %486, %487 : vector<2x32xf32>
    %489 = vector.extract_strided_slice %477 {offsets = [0, 32], sizes = [2, 32], strides = [1, 1]} : vector<2x96xf32> to vector<2x32xf32>
    %490 = vector.extract_strided_slice %480 {offsets = [0, 32], sizes = [2, 32], strides = [1, 1]} : vector<2x96xf32> to vector<2x32xf32>
    %491 = arith.addf %489, %490 : vector<2x32xf32>
    %492 = arith.negf %491 : vector<2x32xf32>
    %493 = math.exp %492 : vector<2x32xf32>
    %cst_140 = arith.constant 1.000000e+00 : f32
    %494 = vector.broadcast %cst_140 : f32 to vector<2x32xf32>
    %495 = arith.addf %494, %493 : vector<2x32xf32>
    %496 = arith.divf %494, %495 : vector<2x32xf32>
    %497 = vector.extract_strided_slice %477 {offsets = [0, 64], sizes = [2, 32], strides = [1, 1]} : vector<2x96xf32> to vector<2x32xf32>
    %498 = vector.extract_strided_slice %480 {offsets = [0, 64], sizes = [2, 32], strides = [1, 1]} : vector<2x96xf32> to vector<2x32xf32>
    %499 = arith.mulf %488, %498 : vector<2x32xf32>
    %500 = arith.addf %497, %499 : vector<2x32xf32>
    %501 = math.tanh %500 : vector<2x32xf32>
    %cst_141 = arith.constant 1.000000e+00 : f32
    %502 = vector.broadcast %cst_141 : f32 to vector<2x32xf32>
    %503 = arith.subf %502, %496 : vector<2x32xf32>
    %504 = arith.mulf %503, %501 : vector<2x32xf32>
    %505 = arith.mulf %496, %473 : vector<2x32xf32>
    %506 = arith.addf %504, %505 : vector<2x32xf32>
    %c0_142 = arith.constant 0 : index
    %c14_143 = arith.constant 14 : index
    %c0_144 = arith.constant 0 : index
    %c0_145 = arith.constant 0 : index
    %507 = vector.load %arg6[%c0_142, %c14_143, %c0_144, %c0_145] : memref<1x16x2x32xf32, #tpu.memory_space<vmem>>, vector<1x1x2x32xf32>
    %508 = vector.shape_cast %507 : vector<1x1x2x32xf32> to vector<2x32xf32>
    %509 = vector.shape_cast %506 : vector<2x32xf32> to vector<1x1x2x32xf32>
    tpu.vector_store %arg6[%c0_142, %c14_143, %c0_144, %c0_145], %509 {strides = array<i32>} : memref<1x16x2x32xf32, #tpu.memory_space<vmem>>, vector<1x1x2x32xf32>,
    %c30 = arith.constant 30 : index
    %c0_146 = arith.constant 0 : index
    %510 = vector.load %arg8[%c30, %c0_146] : memref<32x96xf32, #tpu.memory_space<vmem>>, vector<2x96xf32>
    %cst_147 = arith.constant dense<0.000000e+00> : vector<2x96xf32>
    %511 = tpu.matmul %506, %1, %cst_147 {dimension_numbers = #tpu.dot_dimension_numbers<[1], [0], [0], [1], [0, 0, 1, 1], [], []>} : vector<2x32xf32>, vector<32x96xf32>, vector<2x96xf32> -> vector<2x96xf32>
    %512 = vector.broadcast %3 : vector<1x96xf32> to vector<2x96xf32>
    %513 = arith.addf %511, %512 : vector<2x96xf32>
    %514 = vector.extract_strided_slice %510 {offsets = [0, 0], sizes = [2, 32], strides = [1, 1]} : vector<2x96xf32> to vector<2x32xf32>
    %515 = vector.extract_strided_slice %513 {offsets = [0, 0], sizes = [2, 32], strides = [1, 1]} : vector<2x96xf32> to vector<2x32xf32>
    %516 = arith.addf %514, %515 : vector<2x32xf32>
    %517 = arith.negf %516 : vector<2x32xf32>
    %518 = math.exp %517 : vector<2x32xf32>
    %cst_148 = arith.constant 1.000000e+00 : f32
    %519 = vector.broadcast %cst_148 : f32 to vector<2x32xf32>
    %520 = arith.addf %519, %518 : vector<2x32xf32>
    %521 = arith.divf %519, %520 : vector<2x32xf32>
    %522 = vector.extract_strided_slice %510 {offsets = [0, 32], sizes = [2, 32], strides = [1, 1]} : vector<2x96xf32> to vector<2x32xf32>
    %523 = vector.extract_strided_slice %513 {offsets = [0, 32], sizes = [2, 32], strides = [1, 1]} : vector<2x96xf32> to vector<2x32xf32>
    %524 = arith.addf %522, %523 : vector<2x32xf32>
    %525 = arith.negf %524 : vector<2x32xf32>
    %526 = math.exp %525 : vector<2x32xf32>
    %cst_149 = arith.constant 1.000000e+00 : f32
    %527 = vector.broadcast %cst_149 : f32 to vector<2x32xf32>
    %528 = arith.addf %527, %526 : vector<2x32xf32>
    %529 = arith.divf %527, %528 : vector<2x32xf32>
    %530 = vector.extract_strided_slice %510 {offsets = [0, 64], sizes = [2, 32], strides = [1, 1]} : vector<2x96xf32> to vector<2x32xf32>
    %531 = vector.extract_strided_slice %513 {offsets = [0, 64], sizes = [2, 32], strides = [1, 1]} : vector<2x96xf32> to vector<2x32xf32>
    %532 = arith.mulf %521, %531 : vector<2x32xf32>
    %533 = arith.addf %530, %532 : vector<2x32xf32>
    %534 = math.tanh %533 : vector<2x32xf32>
    %cst_150 = arith.constant 1.000000e+00 : f32
    %535 = vector.broadcast %cst_150 : f32 to vector<2x32xf32>
    %536 = arith.subf %535, %529 : vector<2x32xf32>
    %537 = arith.mulf %536, %534 : vector<2x32xf32>
    %538 = arith.mulf %529, %506 : vector<2x32xf32>
    %539 = arith.addf %537, %538 : vector<2x32xf32>
    %c0_151 = arith.constant 0 : index
    %c15 = arith.constant 15 : index
    %c0_152 = arith.constant 0 : index
    %c0_153 = arith.constant 0 : index
    %540 = vector.load %arg6[%c0_151, %c15, %c0_152, %c0_153] : memref<1x16x2x32xf32, #tpu.memory_space<vmem>>, vector<1x1x2x32xf32>
    %541 = vector.shape_cast %540 : vector<1x1x2x32xf32> to vector<2x32xf32>
    %542 = vector.shape_cast %539 : vector<2x32xf32> to vector<1x1x2x32xf32>
    tpu.vector_store %arg6[%c0_151, %c15, %c0_152, %c0_153], %542 {strides = array<i32>} : memref<1x16x2x32xf32, #tpu.memory_space<vmem>>, vector<1x1x2x32xf32>,
    %c0_154 = arith.constant 0 : index
    %c0_155 = arith.constant 0 : index
    %c0_156 = arith.constant 0 : index
    %543 = vector.load %arg7[%c0_154, %c0_155, %c0_156] : memref<1x2x32xf32, #tpu.memory_space<vmem>>, vector<1x2x32xf32>
    %544 = vector.shape_cast %543 : vector<1x2x32xf32> to vector<2x32xf32>
    %545 = vector.shape_cast %539 : vector<2x32xf32> to vector<1x2x32xf32>
    tpu.vector_store %arg7[%c0_154, %c0_155, %c0_156], %545 {strides = array<i32>} : memref<1x2x32xf32, #tpu.memory_space<vmem>>, vector<1x2x32xf32>,
    return
  }
  func.func @transform_0(%arg0: i32) -> (i32, i32, i32) {
    %c0_i32 = arith.constant 0 : i32
    %c0_i32_0 = arith.constant 0 : i32
    %c0_i32_1 = arith.constant 0 : i32
    return %arg0, %c0_i32, %c0_i32_0 : i32, i32, i32
  }
  func.func @transform_1(%arg0: i32) -> (i32, i32, i32) {
    %c0_i32 = arith.constant 0 : i32
    %c0_i32_0 = arith.constant 0 : i32
    %c0_i32_1 = arith.constant 0 : i32
    return %arg0, %c0_i32, %c0_i32_0 : i32, i32, i32
  }
  func.func @transform_2(%arg0: i32) -> (i32, i32, i32) {
    %c0_i32 = arith.constant 0 : i32
    %c0_i32_0 = arith.constant 0 : i32
    %c0_i32_1 = arith.constant 0 : i32
    return %arg0, %c0_i32, %c0_i32_0 : i32, i32, i32
  }
  func.func @transform_3(%arg0: i32) -> (i32, i32, i32) {
    %c0_i32 = arith.constant 0 : i32
    %c0_i32_0 = arith.constant 0 : i32
    %c0_i32_1 = arith.constant 0 : i32
    return %arg0, %c0_i32, %c0_i32_0 : i32, i32, i32
  }
  func.func @transform_4(%arg0: i32) -> (i32, i32, i32) {
    %c0_i32 = arith.constant 0 : i32
    %c0_i32_0 = arith.constant 0 : i32
    %c0_i32_1 = arith.constant 0 : i32
    return %arg0, %c0_i32, %c0_i32_0 : i32, i32, i32
  }
  func.func @transform_5(%arg0: i32) -> (i32, i32, i32, i32) {
    %c0_i32 = arith.constant 0 : i32
    %c0_i32_0 = arith.constant 0 : i32
    %c0_i32_1 = arith.constant 0 : i32
    %c0_i32_2 = arith.constant 0 : i32
    return %arg0, %c0_i32, %c0_i32_0, %c0_i32_1 : i32, i32, i32, i32
  }
  func.func @transform_6(%arg0: i32) -> (i32, i32, i32) {
    %c0_i32 = arith.constant 0 : i32
    %c0_i32_0 = arith.constant 0 : i32
    %c0_i32_1 = arith.constant 0 : i32
    return %arg0, %c0_i32, %c0_i32_0 : i32, i32, i32
  }
}

module attributes {stable_mosaic.version = 11 : i64} {
  func.func @_dec_kernel(%arg0: memref<2x4xf32, #tpu.memory_space<vmem>>, %arg1: memref<2x32xf32, #tpu.memory_space<vmem>>, %arg2: memref<8x4xf32, #tpu.memory_space<vmem>>, %arg3: memref<2x16x32xf32, #tpu.memory_space<vmem>>, %arg4: memref<4x96xf32, #tpu.memory_space<vmem>>, %arg5: memref<1x96xf32, #tpu.memory_space<vmem>>, %arg6: memref<4x96xf32, #tpu.memory_space<vmem>>, %arg7: memref<32x32xf32, #tpu.memory_space<vmem>>, %arg8: memref<32x32xf32, #tpu.memory_space<vmem>>, %arg9: memref<1x32xf32, #tpu.memory_space<vmem>>, %arg10: memref<1x32xf32, #tpu.memory_space<vmem>>, %arg11: memref<32x96xf32, #tpu.memory_space<vmem>>, %arg12: memref<32x96xf32, #tpu.memory_space<vmem>>, %arg13: memref<1x96xf32, #tpu.memory_space<vmem>>, %arg14: memref<32x4xf32, #tpu.memory_space<vmem>>, %arg15: memref<32x4xf32, #tpu.memory_space<vmem>>, %arg16: memref<1x4xf32, #tpu.memory_space<vmem>>, %arg17: memref<4x2x4xf32, #tpu.memory_space<vmem>>, %arg18: memref<2x16x32xf32, #tpu.memory_space<vmem>>) attributes {dimension_semantics = [], scalar_prefetch = 0 : i64, scratch_operands = 1 : i64, tpu.core_type = #tpu.core_type<tc>} {
    %c0 = arith.constant 0 : index
    %c0_0 = arith.constant 0 : index
    %0 = vector.load %arg7[%c0, %c0_0] : memref<32x32xf32, #tpu.memory_space<vmem>>, vector<32x32xf32>
    %c0_1 = arith.constant 0 : index
    %c0_2 = arith.constant 0 : index
    %1 = vector.load %arg10[%c0_1, %c0_2] : memref<1x32xf32, #tpu.memory_space<vmem>>, vector<1x32xf32>
    %2 = vector.shape_cast %1 : vector<1x32xf32> to vector<1x1x32xf32>
    %c0_3 = arith.constant 0 : index
    %c0_4 = arith.constant 0 : index
    %3 = vector.load %arg6[%c0_3, %c0_4] : memref<4x96xf32, #tpu.memory_space<vmem>>, vector<4x96xf32>
    %c0_5 = arith.constant 0 : index
    %c0_6 = arith.constant 0 : index
    %4 = vector.load %arg11[%c0_5, %c0_6] : memref<32x96xf32, #tpu.memory_space<vmem>>, vector<32x96xf32>
    %c0_7 = arith.constant 0 : index
    %c0_8 = arith.constant 0 : index
    %5 = vector.load %arg12[%c0_7, %c0_8] : memref<32x96xf32, #tpu.memory_space<vmem>>, vector<32x96xf32>
    %c0_9 = arith.constant 0 : index
    %c0_10 = arith.constant 0 : index
    %6 = vector.load %arg13[%c0_9, %c0_10] : memref<1x96xf32, #tpu.memory_space<vmem>>, vector<1x96xf32>
    %c0_11 = arith.constant 0 : index
    %c0_12 = arith.constant 0 : index
    %7 = vector.load %arg14[%c0_11, %c0_12] : memref<32x4xf32, #tpu.memory_space<vmem>>, vector<32x4xf32>
    %c0_13 = arith.constant 0 : index
    %c0_14 = arith.constant 0 : index
    %8 = vector.load %arg15[%c0_13, %c0_14] : memref<32x4xf32, #tpu.memory_space<vmem>>, vector<32x4xf32>
    %c0_15 = arith.constant 0 : index
    %c0_16 = arith.constant 0 : index
    %9 = vector.load %arg16[%c0_15, %c0_16] : memref<1x4xf32, #tpu.memory_space<vmem>>, vector<1x4xf32>
    %c0_17 = arith.constant 0 : index
    %c0_18 = arith.constant 0 : index
    %10 = vector.load %arg2[%c0_17, %c0_18] : memref<8x4xf32, #tpu.memory_space<vmem>>, vector<8x4xf32>
    %c0_19 = arith.constant 0 : index
    %c0_20 = arith.constant 0 : index
    %11 = vector.load %arg4[%c0_19, %c0_20] : memref<4x96xf32, #tpu.memory_space<vmem>>, vector<4x96xf32>
    %cst = arith.constant dense<0.000000e+00> : vector<8x96xf32>
    %12 = tpu.matmul %10, %11, %cst {dimension_numbers = #tpu.dot_dimension_numbers<[1], [0], [0], [1], [0, 0, 1, 1], [], []>} : vector<8x4xf32>, vector<4x96xf32>, vector<8x96xf32> -> vector<8x96xf32>
    %c0_21 = arith.constant 0 : index
    %c0_22 = arith.constant 0 : index
    %13 = vector.load %arg5[%c0_21, %c0_22] : memref<1x96xf32, #tpu.memory_space<vmem>>, vector<1x96xf32>
    %14 = vector.broadcast %13 : vector<1x96xf32> to vector<8x96xf32>
    %15 = arith.addf %12, %14 : vector<8x96xf32>
    %c0_23 = arith.constant 0 : index
    %c0_24 = arith.constant 0 : index
    %16 = vector.load %arg8[%c0_23, %c0_24] : memref<32x32xf32, #tpu.memory_space<vmem>>, vector<32x32xf32>
    %c0_25 = arith.constant 0 : index
    %c0_26 = arith.constant 0 : index
    %17 = vector.load %arg9[%c0_25, %c0_26] : memref<1x32xf32, #tpu.memory_space<vmem>>, vector<1x32xf32>
    %c0_27 = arith.constant 0 : index
    %c0_28 = arith.constant 0 : index
    %c0_29 = arith.constant 0 : index
    %18 = vector.load %arg3[%c0_27, %c0_28, %c0_29] : memref<2x16x32xf32, #tpu.memory_space<vmem>>, vector<1x16x32xf32>
    %19 = vector.shape_cast %18 : vector<1x16x32xf32> to vector<16x32xf32>
    %cst_30 = arith.constant dense<0.000000e+00> : vector<16x32xf32>
    %20 = tpu.matmul %19, %16, %cst_30 {dimension_numbers = #tpu.dot_dimension_numbers<[1], [0], [0], [1], [0, 0, 1, 1], [], []>} : vector<16x32xf32>, vector<32x32xf32>, vector<16x32xf32> -> vector<16x32xf32>
    %21 = vector.broadcast %17 : vector<1x32xf32> to vector<16x32xf32>
    %22 = arith.addf %20, %21 : vector<16x32xf32>
    %c0_31 = arith.constant 0 : index
    %c0_32 = arith.constant 0 : index
    %c0_33 = arith.constant 0 : index
    %23 = vector.load %arg18[%c0_31, %c0_32, %c0_33] : memref<2x16x32xf32, #tpu.memory_space<vmem>>, vector<1x16x32xf32>
    %24 = vector.shape_cast %23 : vector<1x16x32xf32> to vector<16x32xf32>
    %25 = vector.shape_cast %22 : vector<16x32xf32> to vector<1x16x32xf32>
    tpu.vector_store %arg18[%c0_31, %c0_32, %c0_33], %25 {strides = array<i32>} : memref<2x16x32xf32, #tpu.memory_space<vmem>>, vector<1x16x32xf32>,
    %c1 = arith.constant 1 : index
    %c0_34 = arith.constant 0 : index
    %c0_35 = arith.constant 0 : index
    %26 = vector.load %arg3[%c1, %c0_34, %c0_35] : memref<2x16x32xf32, #tpu.memory_space<vmem>>, vector<1x16x32xf32>
    %27 = vector.shape_cast %26 : vector<1x16x32xf32> to vector<16x32xf32>
    %cst_36 = arith.constant dense<0.000000e+00> : vector<16x32xf32>
    %28 = tpu.matmul %27, %16, %cst_36 {dimension_numbers = #tpu.dot_dimension_numbers<[1], [0], [0], [1], [0, 0, 1, 1], [], []>} : vector<16x32xf32>, vector<32x32xf32>, vector<16x32xf32> -> vector<16x32xf32>
    %29 = vector.broadcast %17 : vector<1x32xf32> to vector<16x32xf32>
    %30 = arith.addf %28, %29 : vector<16x32xf32>
    %c1_37 = arith.constant 1 : index
    %c0_38 = arith.constant 0 : index
    %c0_39 = arith.constant 0 : index
    %31 = vector.load %arg18[%c1_37, %c0_38, %c0_39] : memref<2x16x32xf32, #tpu.memory_space<vmem>>, vector<1x16x32xf32>
    %32 = vector.shape_cast %31 : vector<1x16x32xf32> to vector<16x32xf32>
    %33 = vector.shape_cast %30 : vector<16x32xf32> to vector<1x16x32xf32>
    tpu.vector_store %arg18[%c1_37, %c0_38, %c0_39], %33 {strides = array<i32>} : memref<2x16x32xf32, #tpu.memory_space<vmem>>, vector<1x16x32xf32>,
    %c0_40 = arith.constant 0 : index
    %c0_41 = arith.constant 0 : index
    %c0_42 = arith.constant 0 : index
    %34 = vector.load %arg18[%c0_40, %c0_41, %c0_42] : memref<2x16x32xf32, #tpu.memory_space<vmem>>, vector<2x16x32xf32>
    %c0_43 = arith.constant 0 : index
    %c0_44 = arith.constant 0 : index
    %c0_45 = arith.constant 0 : index
    %35 = vector.load %arg3[%c0_43, %c0_44, %c0_45] : memref<2x16x32xf32, #tpu.memory_space<vmem>>, vector<2x16x32xf32>
    %c0_46 = arith.constant 0 : index
    %c0_47 = arith.constant 0 : index
    %36 = vector.load %arg0[%c0_46, %c0_47] : memref<2x4xf32, #tpu.memory_space<vmem>>, vector<2x4xf32>
    %c0_48 = arith.constant 0 : index
    %c0_49 = arith.constant 0 : index
    %37 = vector.load %arg1[%c0_48, %c0_49] : memref<2x32xf32, #tpu.memory_space<vmem>>, vector<2x32xf32>
    %cst_50 = arith.constant dense<0.000000e+00> : vector<2x32xf32>
    %38 = tpu.matmul %37, %0, %cst_50 {dimension_numbers = #tpu.dot_dimension_numbers<[1], [0], [0], [1], [0, 0, 1, 1], [], []>} : vector<2x32xf32>, vector<32x32xf32>, vector<2x32xf32> -> vector<2x32xf32>
    %39 = vector.shape_cast %38 : vector<2x32xf32> to vector<2x1x32xf32>
    %40 = vector.broadcast %39 : vector<2x1x32xf32> to vector<2x16x32xf32>
    %41 = arith.addf %34, %40 : vector<2x16x32xf32>
    %cst_51 = arith.constant 0.000000e+00 : f32
    %42 = vector.broadcast %cst_51 : f32 to vector<2x16x32xf32>
    %43 = arith.maximumf %41, %42 : vector<2x16x32xf32>
    %44 = vector.broadcast %2 : vector<1x1x32xf32> to vector<2x16x32xf32>
    %45 = arith.mulf %43, %44 : vector<2x16x32xf32>
    %cst_52 = arith.constant dense<0.000000e+00> : vector<2x16xf32>
    %46 = vector.multi_reduction <add>, %45, %cst_52 [2] : vector<2x16x32xf32> to vector<2x16xf32>
    %47 = vector.shape_cast %46 : vector<2x16xf32> to vector<2x16x1xf32>
    %cst_53 = arith.constant dense<0xFF800000> : vector<2x1xf32>
    %48 = vector.multi_reduction <maximumf>, %47, %cst_53 [1] : vector<2x16x1xf32> to vector<2x1xf32>
    %49 = vector.shape_cast %48 : vector<2x1xf32> to vector<2x1x1xf32>
    %50 = vector.broadcast %49 : vector<2x1x1xf32> to vector<2x16x1xf32>
    %51 = arith.subf %47, %50 : vector<2x16x1xf32>
    %52 = math.exp %51 : vector<2x16x1xf32>
    %cst_54 = arith.constant dense<0.000000e+00> : vector<2x1xf32>
    %53 = vector.multi_reduction <add>, %52, %cst_54 [1] : vector<2x16x1xf32> to vector<2x1xf32>
    %54 = vector.shape_cast %53 : vector<2x1xf32> to vector<2x1x1xf32>
    %55 = vector.broadcast %54 : vector<2x1x1xf32> to vector<2x16x1xf32>
    %56 = arith.divf %52, %55 : vector<2x16x1xf32>
    %57 = vector.broadcast %56 : vector<2x16x1xf32> to vector<2x16x32xf32>
    %58 = arith.mulf %57, %35 : vector<2x16x32xf32>
    %cst_55 = arith.constant dense<0.000000e+00> : vector<2x32xf32>
    %59 = vector.multi_reduction <add>, %58, %cst_55 [1] : vector<2x16x32xf32> to vector<2x32xf32>
    %cst_56 = arith.constant dense<0.000000e+00> : vector<2x96xf32>
    %60 = tpu.matmul %36, %3, %cst_56 {dimension_numbers = #tpu.dot_dimension_numbers<[1], [0], [0], [1], [0, 0, 1, 1], [], []>} : vector<2x4xf32>, vector<4x96xf32>, vector<2x96xf32> -> vector<2x96xf32>
    %61 = vector.extract_strided_slice %15 {offsets = [0, 0], sizes = [2, 96], strides = [1, 1]} : vector<8x96xf32> to vector<2x96xf32>
    %62 = arith.addf %60, %61 : vector<2x96xf32>
    %cst_57 = arith.constant dense<0.000000e+00> : vector<2x96xf32>
    %63 = tpu.matmul %59, %4, %cst_57 {dimension_numbers = #tpu.dot_dimension_numbers<[1], [0], [0], [1], [0, 0, 1, 1], [], []>} : vector<2x32xf32>, vector<32x96xf32>, vector<2x96xf32> -> vector<2x96xf32>
    %64 = arith.addf %62, %63 : vector<2x96xf32>
    %cst_58 = arith.constant dense<0.000000e+00> : vector<2x96xf32>
    %65 = tpu.matmul %37, %5, %cst_58 {dimension_numbers = #tpu.dot_dimension_numbers<[1], [0], [0], [1], [0, 0, 1, 1], [], []>} : vector<2x32xf32>, vector<32x96xf32>, vector<2x96xf32> -> vector<2x96xf32>
    %66 = vector.broadcast %6 : vector<1x96xf32> to vector<2x96xf32>
    %67 = arith.addf %65, %66 : vector<2x96xf32>
    %68 = vector.extract_strided_slice %64 {offsets = [0, 0], sizes = [2, 32], strides = [1, 1]} : vector<2x96xf32> to vector<2x32xf32>
    %69 = vector.extract_strided_slice %67 {offsets = [0, 0], sizes = [2, 32], strides = [1, 1]} : vector<2x96xf32> to vector<2x32xf32>
    %70 = arith.addf %68, %69 : vector<2x32xf32>
    %71 = arith.negf %70 : vector<2x32xf32>
    %72 = math.exp %71 : vector<2x32xf32>
    %cst_59 = arith.constant 1.000000e+00 : f32
    %73 = vector.broadcast %cst_59 : f32 to vector<2x32xf32>
    %74 = arith.addf %73, %72 : vector<2x32xf32>
    %75 = arith.divf %73, %74 : vector<2x32xf32>
    %76 = vector.extract_strided_slice %64 {offsets = [0, 32], sizes = [2, 32], strides = [1, 1]} : vector<2x96xf32> to vector<2x32xf32>
    %77 = vector.extract_strided_slice %67 {offsets = [0, 32], sizes = [2, 32], strides = [1, 1]} : vector<2x96xf32> to vector<2x32xf32>
    %78 = arith.addf %76, %77 : vector<2x32xf32>
    %79 = arith.negf %78 : vector<2x32xf32>
    %80 = math.exp %79 : vector<2x32xf32>
    %cst_60 = arith.constant 1.000000e+00 : f32
    %81 = vector.broadcast %cst_60 : f32 to vector<2x32xf32>
    %82 = arith.addf %81, %80 : vector<2x32xf32>
    %83 = arith.divf %81, %82 : vector<2x32xf32>
    %84 = vector.extract_strided_slice %64 {offsets = [0, 64], sizes = [2, 32], strides = [1, 1]} : vector<2x96xf32> to vector<2x32xf32>
    %85 = vector.extract_strided_slice %67 {offsets = [0, 64], sizes = [2, 32], strides = [1, 1]} : vector<2x96xf32> to vector<2x32xf32>
    %86 = arith.mulf %75, %85 : vector<2x32xf32>
    %87 = arith.addf %84, %86 : vector<2x32xf32>
    %88 = math.tanh %87 : vector<2x32xf32>
    %cst_61 = arith.constant 1.000000e+00 : f32
    %89 = vector.broadcast %cst_61 : f32 to vector<2x32xf32>
    %90 = arith.subf %89, %83 : vector<2x32xf32>
    %91 = arith.mulf %90, %88 : vector<2x32xf32>
    %92 = arith.mulf %83, %37 : vector<2x32xf32>
    %93 = arith.addf %91, %92 : vector<2x32xf32>
    %cst_62 = arith.constant dense<0.000000e+00> : vector<2x4xf32>
    %94 = tpu.matmul %93, %7, %cst_62 {dimension_numbers = #tpu.dot_dimension_numbers<[1], [0], [0], [1], [0, 0, 1, 1], [], []>} : vector<2x32xf32>, vector<32x4xf32>, vector<2x4xf32> -> vector<2x4xf32>
    %cst_63 = arith.constant dense<0.000000e+00> : vector<2x4xf32>
    %95 = tpu.matmul %59, %8, %cst_63 {dimension_numbers = #tpu.dot_dimension_numbers<[1], [0], [0], [1], [0, 0, 1, 1], [], []>} : vector<2x32xf32>, vector<32x4xf32>, vector<2x4xf32> -> vector<2x4xf32>
    %96 = arith.addf %94, %95 : vector<2x4xf32>
    %97 = vector.broadcast %9 : vector<1x4xf32> to vector<2x4xf32>
    %98 = arith.addf %96, %97 : vector<2x4xf32>
    %c0_64 = arith.constant 0 : index
    %c0_65 = arith.constant 0 : index
    %c0_66 = arith.constant 0 : index
    %99 = vector.load %arg17[%c0_64, %c0_65, %c0_66] : memref<4x2x4xf32, #tpu.memory_space<vmem>>, vector<1x2x4xf32>
    %100 = vector.shape_cast %99 : vector<1x2x4xf32> to vector<2x4xf32>
    %101 = vector.shape_cast %98 : vector<2x4xf32> to vector<1x2x4xf32>
    tpu.vector_store %arg17[%c0_64, %c0_65, %c0_66], %101 {strides = array<i32>} : memref<4x2x4xf32, #tpu.memory_space<vmem>>, vector<1x2x4xf32>,
    %cst_67 = arith.constant dense<0.000000e+00> : vector<2x32xf32>
    %102 = tpu.matmul %93, %0, %cst_67 {dimension_numbers = #tpu.dot_dimension_numbers<[1], [0], [0], [1], [0, 0, 1, 1], [], []>} : vector<2x32xf32>, vector<32x32xf32>, vector<2x32xf32> -> vector<2x32xf32>
    %103 = vector.shape_cast %102 : vector<2x32xf32> to vector<2x1x32xf32>
    %104 = vector.broadcast %103 : vector<2x1x32xf32> to vector<2x16x32xf32>
    %105 = arith.addf %34, %104 : vector<2x16x32xf32>
    %cst_68 = arith.constant 0.000000e+00 : f32
    %106 = vector.broadcast %cst_68 : f32 to vector<2x16x32xf32>
    %107 = arith.maximumf %105, %106 : vector<2x16x32xf32>
    %108 = vector.broadcast %2 : vector<1x1x32xf32> to vector<2x16x32xf32>
    %109 = arith.mulf %107, %108 : vector<2x16x32xf32>
    %cst_69 = arith.constant dense<0.000000e+00> : vector<2x16xf32>
    %110 = vector.multi_reduction <add>, %109, %cst_69 [2] : vector<2x16x32xf32> to vector<2x16xf32>
    %111 = vector.shape_cast %110 : vector<2x16xf32> to vector<2x16x1xf32>
    %cst_70 = arith.constant dense<0xFF800000> : vector<2x1xf32>
    %112 = vector.multi_reduction <maximumf>, %111, %cst_70 [1] : vector<2x16x1xf32> to vector<2x1xf32>
    %113 = vector.shape_cast %112 : vector<2x1xf32> to vector<2x1x1xf32>
    %114 = vector.broadcast %113 : vector<2x1x1xf32> to vector<2x16x1xf32>
    %115 = arith.subf %111, %114 : vector<2x16x1xf32>
    %116 = math.exp %115 : vector<2x16x1xf32>
    %cst_71 = arith.constant dense<0.000000e+00> : vector<2x1xf32>
    %117 = vector.multi_reduction <add>, %116, %cst_71 [1] : vector<2x16x1xf32> to vector<2x1xf32>
    %118 = vector.shape_cast %117 : vector<2x1xf32> to vector<2x1x1xf32>
    %119 = vector.broadcast %118 : vector<2x1x1xf32> to vector<2x16x1xf32>
    %120 = arith.divf %116, %119 : vector<2x16x1xf32>
    %121 = vector.broadcast %120 : vector<2x16x1xf32> to vector<2x16x32xf32>
    %122 = arith.mulf %121, %35 : vector<2x16x32xf32>
    %cst_72 = arith.constant dense<0.000000e+00> : vector<2x32xf32>
    %123 = vector.multi_reduction <add>, %122, %cst_72 [1] : vector<2x16x32xf32> to vector<2x32xf32>
    %cst_73 = arith.constant dense<0.000000e+00> : vector<2x96xf32>
    %124 = tpu.matmul %98, %3, %cst_73 {dimension_numbers = #tpu.dot_dimension_numbers<[1], [0], [0], [1], [0, 0, 1, 1], [], []>} : vector<2x4xf32>, vector<4x96xf32>, vector<2x96xf32> -> vector<2x96xf32>
    %125 = vector.extract_strided_slice %15 {offsets = [2, 0], sizes = [2, 96], strides = [1, 1]} : vector<8x96xf32> to vector<2x96xf32>
    %126 = arith.addf %124, %125 : vector<2x96xf32>
    %cst_74 = arith.constant dense<0.000000e+00> : vector<2x96xf32>
    %127 = tpu.matmul %123, %4, %cst_74 {dimension_numbers = #tpu.dot_dimension_numbers<[1], [0], [0], [1], [0, 0, 1, 1], [], []>} : vector<2x32xf32>, vector<32x96xf32>, vector<2x96xf32> -> vector<2x96xf32>
    %128 = arith.addf %126, %127 : vector<2x96xf32>
    %cst_75 = arith.constant dense<0.000000e+00> : vector<2x96xf32>
    %129 = tpu.matmul %93, %5, %cst_75 {dimension_numbers = #tpu.dot_dimension_numbers<[1], [0], [0], [1], [0, 0, 1, 1], [], []>} : vector<2x32xf32>, vector<32x96xf32>, vector<2x96xf32> -> vector<2x96xf32>
    %130 = vector.broadcast %6 : vector<1x96xf32> to vector<2x96xf32>
    %131 = arith.addf %129, %130 : vector<2x96xf32>
    %132 = vector.extract_strided_slice %128 {offsets = [0, 0], sizes = [2, 32], strides = [1, 1]} : vector<2x96xf32> to vector<2x32xf32>
    %133 = vector.extract_strided_slice %131 {offsets = [0, 0], sizes = [2, 32], strides = [1, 1]} : vector<2x96xf32> to vector<2x32xf32>
    %134 = arith.addf %132, %133 : vector<2x32xf32>
    %135 = arith.negf %134 : vector<2x32xf32>
    %136 = math.exp %135 : vector<2x32xf32>
    %cst_76 = arith.constant 1.000000e+00 : f32
    %137 = vector.broadcast %cst_76 : f32 to vector<2x32xf32>
    %138 = arith.addf %137, %136 : vector<2x32xf32>
    %139 = arith.divf %137, %138 : vector<2x32xf32>
    %140 = vector.extract_strided_slice %128 {offsets = [0, 32], sizes = [2, 32], strides = [1, 1]} : vector<2x96xf32> to vector<2x32xf32>
    %141 = vector.extract_strided_slice %131 {offsets = [0, 32], sizes = [2, 32], strides = [1, 1]} : vector<2x96xf32> to vector<2x32xf32>
    %142 = arith.addf %140, %141 : vector<2x32xf32>
    %143 = arith.negf %142 : vector<2x32xf32>
    %144 = math.exp %143 : vector<2x32xf32>
    %cst_77 = arith.constant 1.000000e+00 : f32
    %145 = vector.broadcast %cst_77 : f32 to vector<2x32xf32>
    %146 = arith.addf %145, %144 : vector<2x32xf32>
    %147 = arith.divf %145, %146 : vector<2x32xf32>
    %148 = vector.extract_strided_slice %128 {offsets = [0, 64], sizes = [2, 32], strides = [1, 1]} : vector<2x96xf32> to vector<2x32xf32>
    %149 = vector.extract_strided_slice %131 {offsets = [0, 64], sizes = [2, 32], strides = [1, 1]} : vector<2x96xf32> to vector<2x32xf32>
    %150 = arith.mulf %139, %149 : vector<2x32xf32>
    %151 = arith.addf %148, %150 : vector<2x32xf32>
    %152 = math.tanh %151 : vector<2x32xf32>
    %cst_78 = arith.constant 1.000000e+00 : f32
    %153 = vector.broadcast %cst_78 : f32 to vector<2x32xf32>
    %154 = arith.subf %153, %147 : vector<2x32xf32>
    %155 = arith.mulf %154, %152 : vector<2x32xf32>
    %156 = arith.mulf %147, %93 : vector<2x32xf32>
    %157 = arith.addf %155, %156 : vector<2x32xf32>
    %cst_79 = arith.constant dense<0.000000e+00> : vector<2x4xf32>
    %158 = tpu.matmul %157, %7, %cst_79 {dimension_numbers = #tpu.dot_dimension_numbers<[1], [0], [0], [1], [0, 0, 1, 1], [], []>} : vector<2x32xf32>, vector<32x4xf32>, vector<2x4xf32> -> vector<2x4xf32>
    %cst_80 = arith.constant dense<0.000000e+00> : vector<2x4xf32>
    %159 = tpu.matmul %123, %8, %cst_80 {dimension_numbers = #tpu.dot_dimension_numbers<[1], [0], [0], [1], [0, 0, 1, 1], [], []>} : vector<2x32xf32>, vector<32x4xf32>, vector<2x4xf32> -> vector<2x4xf32>
    %160 = arith.addf %158, %159 : vector<2x4xf32>
    %161 = vector.broadcast %9 : vector<1x4xf32> to vector<2x4xf32>
    %162 = arith.addf %160, %161 : vector<2x4xf32>
    %c1_81 = arith.constant 1 : index
    %c0_82 = arith.constant 0 : index
    %c0_83 = arith.constant 0 : index
    %163 = vector.load %arg17[%c1_81, %c0_82, %c0_83] : memref<4x2x4xf32, #tpu.memory_space<vmem>>, vector<1x2x4xf32>
    %164 = vector.shape_cast %163 : vector<1x2x4xf32> to vector<2x4xf32>
    %165 = vector.shape_cast %162 : vector<2x4xf32> to vector<1x2x4xf32>
    tpu.vector_store %arg17[%c1_81, %c0_82, %c0_83], %165 {strides = array<i32>} : memref<4x2x4xf32, #tpu.memory_space<vmem>>, vector<1x2x4xf32>,
    %cst_84 = arith.constant dense<0.000000e+00> : vector<2x32xf32>
    %166 = tpu.matmul %157, %0, %cst_84 {dimension_numbers = #tpu.dot_dimension_numbers<[1], [0], [0], [1], [0, 0, 1, 1], [], []>} : vector<2x32xf32>, vector<32x32xf32>, vector<2x32xf32> -> vector<2x32xf32>
    %167 = vector.shape_cast %166 : vector<2x32xf32> to vector<2x1x32xf32>
    %168 = vector.broadcast %167 : vector<2x1x32xf32> to vector<2x16x32xf32>
    %169 = arith.addf %34, %168 : vector<2x16x32xf32>
    %cst_85 = arith.constant 0.000000e+00 : f32
    %170 = vector.broadcast %cst_85 : f32 to vector<2x16x32xf32>
    %171 = arith.maximumf %169, %170 : vector<2x16x32xf32>
    %172 = vector.broadcast %2 : vector<1x1x32xf32> to vector<2x16x32xf32>
    %173 = arith.mulf %171, %172 : vector<2x16x32xf32>
    %cst_86 = arith.constant dense<0.000000e+00> : vector<2x16xf32>
    %174 = vector.multi_reduction <add>, %173, %cst_86 [2] : vector<2x16x32xf32> to vector<2x16xf32>
    %175 = vector.shape_cast %174 : vector<2x16xf32> to vector<2x16x1xf32>
    %cst_87 = arith.constant dense<0xFF800000> : vector<2x1xf32>
    %176 = vector.multi_reduction <maximumf>, %175, %cst_87 [1] : vector<2x16x1xf32> to vector<2x1xf32>
    %177 = vector.shape_cast %176 : vector<2x1xf32> to vector<2x1x1xf32>
    %178 = vector.broadcast %177 : vector<2x1x1xf32> to vector<2x16x1xf32>
    %179 = arith.subf %175, %178 : vector<2x16x1xf32>
    %180 = math.exp %179 : vector<2x16x1xf32>
    %cst_88 = arith.constant dense<0.000000e+00> : vector<2x1xf32>
    %181 = vector.multi_reduction <add>, %180, %cst_88 [1] : vector<2x16x1xf32> to vector<2x1xf32>
    %182 = vector.shape_cast %181 : vector<2x1xf32> to vector<2x1x1xf32>
    %183 = vector.broadcast %182 : vector<2x1x1xf32> to vector<2x16x1xf32>
    %184 = arith.divf %180, %183 : vector<2x16x1xf32>
    %185 = vector.broadcast %184 : vector<2x16x1xf32> to vector<2x16x32xf32>
    %186 = arith.mulf %185, %35 : vector<2x16x32xf32>
    %cst_89 = arith.constant dense<0.000000e+00> : vector<2x32xf32>
    %187 = vector.multi_reduction <add>, %186, %cst_89 [1] : vector<2x16x32xf32> to vector<2x32xf32>
    %cst_90 = arith.constant dense<0.000000e+00> : vector<2x96xf32>
    %188 = tpu.matmul %162, %3, %cst_90 {dimension_numbers = #tpu.dot_dimension_numbers<[1], [0], [0], [1], [0, 0, 1, 1], [], []>} : vector<2x4xf32>, vector<4x96xf32>, vector<2x96xf32> -> vector<2x96xf32>
    %189 = vector.extract_strided_slice %15 {offsets = [4, 0], sizes = [2, 96], strides = [1, 1]} : vector<8x96xf32> to vector<2x96xf32>
    %190 = arith.addf %188, %189 : vector<2x96xf32>
    %cst_91 = arith.constant dense<0.000000e+00> : vector<2x96xf32>
    %191 = tpu.matmul %187, %4, %cst_91 {dimension_numbers = #tpu.dot_dimension_numbers<[1], [0], [0], [1], [0, 0, 1, 1], [], []>} : vector<2x32xf32>, vector<32x96xf32>, vector<2x96xf32> -> vector<2x96xf32>
    %192 = arith.addf %190, %191 : vector<2x96xf32>
    %cst_92 = arith.constant dense<0.000000e+00> : vector<2x96xf32>
    %193 = tpu.matmul %157, %5, %cst_92 {dimension_numbers = #tpu.dot_dimension_numbers<[1], [0], [0], [1], [0, 0, 1, 1], [], []>} : vector<2x32xf32>, vector<32x96xf32>, vector<2x96xf32> -> vector<2x96xf32>
    %194 = vector.broadcast %6 : vector<1x96xf32> to vector<2x96xf32>
    %195 = arith.addf %193, %194 : vector<2x96xf32>
    %196 = vector.extract_strided_slice %192 {offsets = [0, 0], sizes = [2, 32], strides = [1, 1]} : vector<2x96xf32> to vector<2x32xf32>
    %197 = vector.extract_strided_slice %195 {offsets = [0, 0], sizes = [2, 32], strides = [1, 1]} : vector<2x96xf32> to vector<2x32xf32>
    %198 = arith.addf %196, %197 : vector<2x32xf32>
    %199 = arith.negf %198 : vector<2x32xf32>
    %200 = math.exp %199 : vector<2x32xf32>
    %cst_93 = arith.constant 1.000000e+00 : f32
    %201 = vector.broadcast %cst_93 : f32 to vector<2x32xf32>
    %202 = arith.addf %201, %200 : vector<2x32xf32>
    %203 = arith.divf %201, %202 : vector<2x32xf32>
    %204 = vector.extract_strided_slice %192 {offsets = [0, 32], sizes = [2, 32], strides = [1, 1]} : vector<2x96xf32> to vector<2x32xf32>
    %205 = vector.extract_strided_slice %195 {offsets = [0, 32], sizes = [2, 32], strides = [1, 1]} : vector<2x96xf32> to vector<2x32xf32>
    %206 = arith.addf %204, %205 : vector<2x32xf32>
    %207 = arith.negf %206 : vector<2x32xf32>
    %208 = math.exp %207 : vector<2x32xf32>
    %cst_94 = arith.constant 1.000000e+00 : f32
    %209 = vector.broadcast %cst_94 : f32 to vector<2x32xf32>
    %210 = arith.addf %209, %208 : vector<2x32xf32>
    %211 = arith.divf %209, %210 : vector<2x32xf32>
    %212 = vector.extract_strided_slice %192 {offsets = [0, 64], sizes = [2, 32], strides = [1, 1]} : vector<2x96xf32> to vector<2x32xf32>
    %213 = vector.extract_strided_slice %195 {offsets = [0, 64], sizes = [2, 32], strides = [1, 1]} : vector<2x96xf32> to vector<2x32xf32>
    %214 = arith.mulf %203, %213 : vector<2x32xf32>
    %215 = arith.addf %212, %214 : vector<2x32xf32>
    %216 = math.tanh %215 : vector<2x32xf32>
    %cst_95 = arith.constant 1.000000e+00 : f32
    %217 = vector.broadcast %cst_95 : f32 to vector<2x32xf32>
    %218 = arith.subf %217, %211 : vector<2x32xf32>
    %219 = arith.mulf %218, %216 : vector<2x32xf32>
    %220 = arith.mulf %211, %157 : vector<2x32xf32>
    %221 = arith.addf %219, %220 : vector<2x32xf32>
    %cst_96 = arith.constant dense<0.000000e+00> : vector<2x4xf32>
    %222 = tpu.matmul %221, %7, %cst_96 {dimension_numbers = #tpu.dot_dimension_numbers<[1], [0], [0], [1], [0, 0, 1, 1], [], []>} : vector<2x32xf32>, vector<32x4xf32>, vector<2x4xf32> -> vector<2x4xf32>
    %cst_97 = arith.constant dense<0.000000e+00> : vector<2x4xf32>
    %223 = tpu.matmul %187, %8, %cst_97 {dimension_numbers = #tpu.dot_dimension_numbers<[1], [0], [0], [1], [0, 0, 1, 1], [], []>} : vector<2x32xf32>, vector<32x4xf32>, vector<2x4xf32> -> vector<2x4xf32>
    %224 = arith.addf %222, %223 : vector<2x4xf32>
    %225 = vector.broadcast %9 : vector<1x4xf32> to vector<2x4xf32>
    %226 = arith.addf %224, %225 : vector<2x4xf32>
    %c2 = arith.constant 2 : index
    %c0_98 = arith.constant 0 : index
    %c0_99 = arith.constant 0 : index
    %227 = vector.load %arg17[%c2, %c0_98, %c0_99] : memref<4x2x4xf32, #tpu.memory_space<vmem>>, vector<1x2x4xf32>
    %228 = vector.shape_cast %227 : vector<1x2x4xf32> to vector<2x4xf32>
    %229 = vector.shape_cast %226 : vector<2x4xf32> to vector<1x2x4xf32>
    tpu.vector_store %arg17[%c2, %c0_98, %c0_99], %229 {strides = array<i32>} : memref<4x2x4xf32, #tpu.memory_space<vmem>>, vector<1x2x4xf32>,
    %cst_100 = arith.constant dense<0.000000e+00> : vector<2x32xf32>
    %230 = tpu.matmul %221, %0, %cst_100 {dimension_numbers = #tpu.dot_dimension_numbers<[1], [0], [0], [1], [0, 0, 1, 1], [], []>} : vector<2x32xf32>, vector<32x32xf32>, vector<2x32xf32> -> vector<2x32xf32>
    %231 = vector.shape_cast %230 : vector<2x32xf32> to vector<2x1x32xf32>
    %232 = vector.broadcast %231 : vector<2x1x32xf32> to vector<2x16x32xf32>
    %233 = arith.addf %34, %232 : vector<2x16x32xf32>
    %cst_101 = arith.constant 0.000000e+00 : f32
    %234 = vector.broadcast %cst_101 : f32 to vector<2x16x32xf32>
    %235 = arith.maximumf %233, %234 : vector<2x16x32xf32>
    %236 = vector.broadcast %2 : vector<1x1x32xf32> to vector<2x16x32xf32>
    %237 = arith.mulf %235, %236 : vector<2x16x32xf32>
    %cst_102 = arith.constant dense<0.000000e+00> : vector<2x16xf32>
    %238 = vector.multi_reduction <add>, %237, %cst_102 [2] : vector<2x16x32xf32> to vector<2x16xf32>
    %239 = vector.shape_cast %238 : vector<2x16xf32> to vector<2x16x1xf32>
    %cst_103 = arith.constant dense<0xFF800000> : vector<2x1xf32>
    %240 = vector.multi_reduction <maximumf>, %239, %cst_103 [1] : vector<2x16x1xf32> to vector<2x1xf32>
    %241 = vector.shape_cast %240 : vector<2x1xf32> to vector<2x1x1xf32>
    %242 = vector.broadcast %241 : vector<2x1x1xf32> to vector<2x16x1xf32>
    %243 = arith.subf %239, %242 : vector<2x16x1xf32>
    %244 = math.exp %243 : vector<2x16x1xf32>
    %cst_104 = arith.constant dense<0.000000e+00> : vector<2x1xf32>
    %245 = vector.multi_reduction <add>, %244, %cst_104 [1] : vector<2x16x1xf32> to vector<2x1xf32>
    %246 = vector.shape_cast %245 : vector<2x1xf32> to vector<2x1x1xf32>
    %247 = vector.broadcast %246 : vector<2x1x1xf32> to vector<2x16x1xf32>
    %248 = arith.divf %244, %247 : vector<2x16x1xf32>
    %249 = vector.broadcast %248 : vector<2x16x1xf32> to vector<2x16x32xf32>
    %250 = arith.mulf %249, %35 : vector<2x16x32xf32>
    %cst_105 = arith.constant dense<0.000000e+00> : vector<2x32xf32>
    %251 = vector.multi_reduction <add>, %250, %cst_105 [1] : vector<2x16x32xf32> to vector<2x32xf32>
    %cst_106 = arith.constant dense<0.000000e+00> : vector<2x96xf32>
    %252 = tpu.matmul %226, %3, %cst_106 {dimension_numbers = #tpu.dot_dimension_numbers<[1], [0], [0], [1], [0, 0, 1, 1], [], []>} : vector<2x4xf32>, vector<4x96xf32>, vector<2x96xf32> -> vector<2x96xf32>
    %253 = vector.extract_strided_slice %15 {offsets = [6, 0], sizes = [2, 96], strides = [1, 1]} : vector<8x96xf32> to vector<2x96xf32>
    %254 = arith.addf %252, %253 : vector<2x96xf32>
    %cst_107 = arith.constant dense<0.000000e+00> : vector<2x96xf32>
    %255 = tpu.matmul %251, %4, %cst_107 {dimension_numbers = #tpu.dot_dimension_numbers<[1], [0], [0], [1], [0, 0, 1, 1], [], []>} : vector<2x32xf32>, vector<32x96xf32>, vector<2x96xf32> -> vector<2x96xf32>
    %256 = arith.addf %254, %255 : vector<2x96xf32>
    %cst_108 = arith.constant dense<0.000000e+00> : vector<2x96xf32>
    %257 = tpu.matmul %221, %5, %cst_108 {dimension_numbers = #tpu.dot_dimension_numbers<[1], [0], [0], [1], [0, 0, 1, 1], [], []>} : vector<2x32xf32>, vector<32x96xf32>, vector<2x96xf32> -> vector<2x96xf32>
    %258 = vector.broadcast %6 : vector<1x96xf32> to vector<2x96xf32>
    %259 = arith.addf %257, %258 : vector<2x96xf32>
    %260 = vector.extract_strided_slice %256 {offsets = [0, 0], sizes = [2, 32], strides = [1, 1]} : vector<2x96xf32> to vector<2x32xf32>
    %261 = vector.extract_strided_slice %259 {offsets = [0, 0], sizes = [2, 32], strides = [1, 1]} : vector<2x96xf32> to vector<2x32xf32>
    %262 = arith.addf %260, %261 : vector<2x32xf32>
    %263 = arith.negf %262 : vector<2x32xf32>
    %264 = math.exp %263 : vector<2x32xf32>
    %cst_109 = arith.constant 1.000000e+00 : f32
    %265 = vector.broadcast %cst_109 : f32 to vector<2x32xf32>
    %266 = arith.addf %265, %264 : vector<2x32xf32>
    %267 = arith.divf %265, %266 : vector<2x32xf32>
    %268 = vector.extract_strided_slice %256 {offsets = [0, 32], sizes = [2, 32], strides = [1, 1]} : vector<2x96xf32> to vector<2x32xf32>
    %269 = vector.extract_strided_slice %259 {offsets = [0, 32], sizes = [2, 32], strides = [1, 1]} : vector<2x96xf32> to vector<2x32xf32>
    %270 = arith.addf %268, %269 : vector<2x32xf32>
    %271 = arith.negf %270 : vector<2x32xf32>
    %272 = math.exp %271 : vector<2x32xf32>
    %cst_110 = arith.constant 1.000000e+00 : f32
    %273 = vector.broadcast %cst_110 : f32 to vector<2x32xf32>
    %274 = arith.addf %273, %272 : vector<2x32xf32>
    %275 = arith.divf %273, %274 : vector<2x32xf32>
    %276 = vector.extract_strided_slice %256 {offsets = [0, 64], sizes = [2, 32], strides = [1, 1]} : vector<2x96xf32> to vector<2x32xf32>
    %277 = vector.extract_strided_slice %259 {offsets = [0, 64], sizes = [2, 32], strides = [1, 1]} : vector<2x96xf32> to vector<2x32xf32>
    %278 = arith.mulf %267, %277 : vector<2x32xf32>
    %279 = arith.addf %276, %278 : vector<2x32xf32>
    %280 = math.tanh %279 : vector<2x32xf32>
    %cst_111 = arith.constant 1.000000e+00 : f32
    %281 = vector.broadcast %cst_111 : f32 to vector<2x32xf32>
    %282 = arith.subf %281, %275 : vector<2x32xf32>
    %283 = arith.mulf %282, %280 : vector<2x32xf32>
    %284 = arith.mulf %275, %221 : vector<2x32xf32>
    %285 = arith.addf %283, %284 : vector<2x32xf32>
    %cst_112 = arith.constant dense<0.000000e+00> : vector<2x4xf32>
    %286 = tpu.matmul %285, %7, %cst_112 {dimension_numbers = #tpu.dot_dimension_numbers<[1], [0], [0], [1], [0, 0, 1, 1], [], []>} : vector<2x32xf32>, vector<32x4xf32>, vector<2x4xf32> -> vector<2x4xf32>
    %cst_113 = arith.constant dense<0.000000e+00> : vector<2x4xf32>
    %287 = tpu.matmul %251, %8, %cst_113 {dimension_numbers = #tpu.dot_dimension_numbers<[1], [0], [0], [1], [0, 0, 1, 1], [], []>} : vector<2x32xf32>, vector<32x4xf32>, vector<2x4xf32> -> vector<2x4xf32>
    %288 = arith.addf %286, %287 : vector<2x4xf32>
    %289 = vector.broadcast %9 : vector<1x4xf32> to vector<2x4xf32>
    %290 = arith.addf %288, %289 : vector<2x4xf32>
    %c3 = arith.constant 3 : index
    %c0_114 = arith.constant 0 : index
    %c0_115 = arith.constant 0 : index
    %291 = vector.load %arg17[%c3, %c0_114, %c0_115] : memref<4x2x4xf32, #tpu.memory_space<vmem>>, vector<1x2x4xf32>
    %292 = vector.shape_cast %291 : vector<1x2x4xf32> to vector<2x4xf32>
    %293 = vector.shape_cast %290 : vector<2x4xf32> to vector<1x2x4xf32>
    tpu.vector_store %arg17[%c3, %c0_114, %c0_115], %293 {strides = array<i32>} : memref<4x2x4xf32, #tpu.memory_space<vmem>>, vector<1x2x4xf32>,
    return
  }
}

</mosaic_0001>

<llo_original>
// kernel: model_forward.3
$region0: #{model_forward.3}
  #allocation0 [shape = 'u32[]', space=smem, size = 0x4, offset = 0x4, fixed_abs, tag = 'smem constant byte address 0x4 - core index']
  #allocation1 [shape = 'u32[144,128]{1,0:T(1,128)}', space=vmem, size = 0x12000, scoped, tag = 'internal scratch']
  %s0 = inlined_call_operand.vmem [shape: f32[32,16], index: 0, kind: input, shape index: {}]
  %s1 = inlined_call_operand.vmem [shape: f32[16,32], index: 1, kind: input, shape index: {}]
  %s2 = inlined_call_operand.vmem [shape: f32[32,32], index: 2, kind: input, shape index: {}]
  %s3 = inlined_call_operand.vmem [shape: f32[32,32], index: 3, kind: output, shape index: {}]
  %s4 = sld [smem:[#allocation0]]
  $region22: #{model_forward.3} parent=0
    _
  %s6 = ssub.s32 1, %s4
  %s7 = scalar_select 0, %s6, %s4
  // Predicated region
  $region2: #{model_forward.3} parent=0 // pred_check
    _
  $region3: #{model_forward.3} parent=0 // pred_check_branch
    %9 = sbr.rel (0) target = $region5
  $region4: #{model_forward.3} parent=0 // pred_region
    _
  $region5: #{model_forward.3} parent=0 // pred_fallthru
    _
  // Predicated region
  $region6: #{model_forward.3} parent=0 // pred_check
    _
  $region7: #{model_forward.3} parent=0 // pred_check_branch
    %11 = sbr.rel (0) target = $region9
  $region8: #{model_forward.3} parent=0 // pred_region
    _
  $region9: #{model_forward.3} parent=0 // pred_fallthru
    _
  // Predicated region
  $region10: #{model_forward.3} parent=0 // pred_check
    _
  $region11: #{model_forward.3} parent=0 // pred_check_branch
    %13 = sbr.rel (0) target = $region13
  $region12: #{model_forward.3} parent=0 // pred_region
    _
  $region13: #{model_forward.3} parent=0 // pred_fallthru
    _
  %v14 = vld [vmem:[%s0] sm:$0xff]
  %v15 = vld [vmem:[%s0 + $0x8] sm:$0xff]
  %v16 = vld [vmem:[%s0 + $0x10] sm:$0xff]
  %v17 = vld [vmem:[%s0 + $0x18] sm:$0xff]
  %v18 = vld [vmem:[%s1] sm:$0xff]
  %v19 = vld [vmem:[%s1 + $0x8] sm:$0xff]
  %v20 = vld [vmem:[%s2] sm:$0xff]
  %v21 = vld [vmem:[%s2 + $0x8] sm:$0xff]
  %v22 = vld [vmem:[%s2 + $0x10] sm:$0xff]
  %v23 = vld [vmem:[%s2 + $0x18] sm:$0xff]
  %vm24 = vcmask 130048
  %v26 = vsel %vm24, %v14, 0
  %v29 = vsel %vm24, %v15, 0
  %v32 = vsel %vm24, %v16, 0
  %v35 = vsel %vm24, %v17, 0
  %37 = vmatprep.subr.mxu0 0.0
  %38 = vmatpush1.msra.mxu0 0.0
  %39 = vmatprep.subr.mxu0 0.0
  %40 = vmatpush1.msra.mxu0 0.0
  %41 = vmatprep.subr.mxu0 0.0
  %42 = vmatpush1.msra.mxu0 0.0
  %43 = vmatprep.subr.mxu0 0.0
  %44 = vmatpush1.msra.mxu0 0.0
  %45 = vmatprep.subr.mxu0 0.0
  %46 = vmatpush1.msra.mxu0 0.0
  %47 = vmatprep.subr.mxu0 0.0
  %48 = vmatpush1.msra.mxu0 0.0
  %49 = vmatprep.subr.mxu0 0.0
  %50 = vmatpush1.msra.mxu0 0.0
  %51 = vmatprep.subr.mxu0 0.0
  %52 = vmatpush1.msra.mxu0 0.0
  %53 = vmatprep.subr.mxu0 0.0
  %54 = vmatpush1.msra.mxu0 0.0
  %55 = vmatprep.subr.mxu0 0.0
  %56 = vmatpush1.msra.mxu0 0.0
  %57 = vmatprep.subr.mxu0 0.0
  %58 = vmatpush1.msra.mxu0 0.0
  %59 = vmatprep.subr.mxu0 0.0
  %60 = vmatpush1.msra.mxu0 0.0
  %61 = vmatprep.subr.mxu0 0.0
  %62 = vmatpush1.msra.mxu0 0.0
  %63 = vmatprep.subr.mxu0 0.0
  %64 = vmatpush1.msra.mxu0 0.0
  %65 = vmatprep.subr.mxu0 0.0
  %66 = vmatpush1.msra.mxu0 %v19
  %67 = vmatprep.subr.mxu0 0.0
  %68 = vmatpush1.msra.mxu0 %v18
  %69 = vmatprep.subr.mxu0 0.0
  %70 = vmatpush2.msra.mxu0 0.0
  %71 = vmatprep.subr.mxu0 0.0
  %72 = vmatpush2.msra.mxu0 0.0
  %73 = vmatprep.subr.mxu0 0.0
  %74 = vmatpush2.msra.mxu0 0.0
  %75 = vmatprep.subr.mxu0 0.0
  %76 = vmatpush2.msra.mxu0 0.0
  %77 = vmatprep.subr.mxu0 0.0
  %78 = vmatpush2.msra.mxu0 0.0
  %79 = vmatprep.subr.mxu0 0.0
  %80 = vmatpush2.msra.mxu0 0.0
  %81 = vmatprep.subr.mxu0 0.0
  %82 = vmatpush2.msra.mxu0 0.0
  %83 = vmatprep.subr.mxu0 0.0
  %84 = vmatpush2.msra.mxu0 0.0
  %85 = vmatprep.subr.mxu0 0.0
  %86 = vmatpush2.msra.mxu0 0.0
  %87 = vmatprep.subr.mxu0 0.0
  %88 = vmatpush2.msra.mxu0 0.0
  %89 = vmatprep.subr.mxu0 0.0
  %90 = vmatpush2.msra.mxu0 0.0
  %91 = vmatprep.subr.mxu0 0.0
  %92 = vmatpush2.msra.mxu0 0.0
  %93 = vmatprep.subr.mxu0 0.0
  %94 = vmatpush2.msra.mxu0 0.0
  %95 = vmatprep.subr.mxu0 0.0
  %96 = vmatpush2.msra.mxu0 0.0
  %97 = vmatprep.subr.mxu0 0.0
  %98 = vmatpush2.msra.mxu0 0.0
  %99 = vmatprep.subr.mxu0 0.0
  %100 = vmatpush2.msra.mxu0 0.0
  %101 = vmatprep.mubr.f32.mxu0 0.0
  %102 = vmatmul.mubr.f32.gmra.mxu0 %v26
  %v103 = vpop.f32.mrf.mxu0
  %v104 = vadd.f32 %v20, %v103
  %v105 = vpop.f32.mrf.mxu0
  %106 = vmatprep.mubr.f32.mxu0 0.0
  %107 = vmatmul.mubr.f32.gmra.mxu0 %v29
  %v108 = vpop.f32.mrf.mxu0
  %v109 = vadd.f32 %v21, %v108
  %v110 = vpop.f32.mrf.mxu0
  %111 = vmatprep.mubr.f32.mxu0 0.0
  %112 = vmatmul.mubr.f32.gmra.mxu0 %v32
  %v113 = vpop.f32.mrf.mxu0
  %v114 = vadd.f32 %v22, %v113
  %v115 = vpop.f32.mrf.mxu0
  %116 = vmatprep.mubr.f32.mxu0 0.0
  %117 = vmatmul.mubr.f32.gmra.mxu0 %v35
  %v118 = vpop.f32.mrf.mxu0
  %v119 = vadd.f32 %v23, %v118
  %v120 = vpop.f32.mrf.mxu0
  %121 = vdwg.mxu0
  %vm122 = vcmask 261120
  %123 = vst.msk [vmem:[%s3] sm:$0xff] %vm122, %v104
  %124 = vst.msk [vmem:[%s3 + $0x8] sm:$0xff] %vm122, %v109
  %125 = vst.msk [vmem:[%s3 + $0x10] sm:$0xff] %vm122, %v114
  %126 = vst.msk [vmem:[%s3 + $0x18] sm:$0xff] %vm122, %v119
  // Predicated region
  $region14: #{model_forward.3} parent=0 // pred_check
    _
  $region15: #{model_forward.3} parent=0 // pred_check_branch
    %128 = sbr.rel (0) target = $region17
  $region16: #{model_forward.3} parent=0 // pred_region
    _
  $region17: #{model_forward.3} parent=0 // pred_fallthru
    _
  // Predicated region
  $region18: #{model_forward.3} parent=0 // pred_check
    _
  $region19: #{model_forward.3} parent=0 // pred_check_branch
    %130 = sbr.rel (0) target = $region21
  $region20: #{model_forward.3} parent=0 // pred_region
    _
  $region21: #{model_forward.3} parent=0 // pred_fallthru
    _

// kernel: model_forward.4
$region0: #{model_forward.4}
  #allocation0 [shape = 'u32[]', space=smem, size = 0x4, offset = 0x4, fixed_abs, tag = 'smem constant byte address 0x4 - core index']
  #allocation1 [shape = 'u32[144,128]{1,0:T(1,128)}', space=vmem, size = 0x12000, scoped, tag = 'internal scratch']
  #allocation2 [shape = 'f32[32,96]{1,0:T(8,128)}', space=vmem, size = 0x4000, scoped, tag = 'scratch operand']
  %s0 = inlined_call_operand.vmem [shape: f32[2,32,32], index: 0, kind: input, shape index: {}]
  %s1 = inlined_call_operand.vmem [shape: f32[2,32,96], index: 1, kind: input, shape index: {}]
  %s2 = inlined_call_operand.vmem [shape: f32[2,32,96], index: 2, kind: input, shape index: {}]
  %s3 = inlined_call_operand.vmem [shape: f32[2,1,96], index: 3, kind: input, shape index: {}]
  %s4 = inlined_call_operand.vmem [shape: f32[2,1,96], index: 4, kind: input, shape index: {}]
  %s5 = inlined_call_operand.vmem [shape: f32[2,16,2,32], index: 5, kind: output, shape index: {0}]
  %s6 = inlined_call_operand.vmem [shape: f32[2,2,32], index: 6, kind: output, shape index: {1}]
  %7 = xla_tuple %s5, %s6
  %s8 = sld [smem:[#allocation0]]
  $region61: #{model_forward.4} parent=0
    _
  %s10 = ssub.s32 1, %s8
  %s11 = scalar_select 0, %s10, %s8
  loop: start=0, step=1, limit=4
  $region2: #{model_forward.4} parent=0 // loop_pre_header
    _
  $region3: #{model_forward.4} parent=0 // loop_header
    %s13 = sphi 0, %s17
    %p14 = scmp.ge.s32.totalorder %s13, 4
    %s23 = sphi 0, %s25
    %s26 = sphi 0, %s23
    %s27 = sphi 0, %s26
    %s43 = sphi 0, %s27
    %s49 = sphi 0, %s51
    %s52 = sphi 0, %s49
    %s53 = sphi 0, %s52
    %s69 = sphi 0, %s53
    %s75 = sphi 0, %s77
    %s78 = sphi 0, %s75
    %s79 = sphi 0, %s78
    %s95 = sphi 0, %s79
    %s101 = sphi 0, %s103
    %s104 = sphi 0, %s101
    %s105 = sphi 0, %s104
    %s121 = sphi 0, %s105
    %s127 = sphi 0, %s129
    %s130 = sphi 0, %s127
    %s131 = sphi 0, %s130
    %s147 = sphi 0, %s131
    %s153 = sphi 0, %s155
    %s156 = sphi 0, %s153
    %s157 = sphi 0, %s156
    %s173 = sphi 0, %s157
    %s179 = sphi 0, %s181
    %s182 = sphi 0, %s179
    %s183 = sphi 0, %s182
    %s199 = sphi 0, %s183
  $region4: #{model_forward.4} parent=0 // loop_header_branch
    %16 = sbr.rel (%p14) target = $region8
  $region5: #{model_forward.4} parent=0 // loop_body
    %s18 = ssub.s32 %s13, 1
    %s19 = ssub.s32 %s13, 2
    %s20 = sadd.s32 %s13, 1
    %s21 = ssub.s32 %s13, %s20
    %p22 = scmp.eq.s32.totalorder %s21, 0
    %s24 = sadd.s32 %s23, 1
    %s25 = scalar_select %p22, %s23, %s24
    %p28 = pneg %p22
    %p29 = scmp.eq.s32.totalorder %s13, 1
    %p30 = por %p28, %p29
    %p31 = scmp.ne.s32.totalorder %s23, %s26
    %p32 = scmp.eq.s32.totalorder %s13, 0
    %p33 = por %p31, %p32
    %p34 = scmp.ne.s32.totalorder %s23, %s26
    %p35 = scmp.eq.s32.totalorder %s18, 1
    %p36 = por %p34, %p35
    %p37 = scmp.ne.s32.totalorder %s26, %s27
    %p38 = scmp.eq.s32.totalorder %s18, 0
    %p39 = por %p37, %p38
    %p40 = scmp.ne.s32.totalorder %s26, %s27
    %p41 = scmp.eq.s32.totalorder %s19, 1
    %p42 = por %p40, %p41
    %p44 = scmp.ne.s32.totalorder %s27, %s43
    %p45 = scmp.eq.s32.totalorder %s19, 0
    %p46 = por %p44, %p45
    %s47 = ssub.s32 %s13, %s20
    %p48 = scmp.eq.s32.totalorder %s47, 0
    %s50 = sadd.s32 %s49, 1
    %s51 = scalar_select %p48, %s49, %s50
    %p54 = pneg %p48
    %p55 = scmp.eq.s32.totalorder %s13, 1
    %p56 = por %p54, %p55
    %p57 = scmp.ne.s32.totalorder %s49, %s52
    %p58 = scmp.eq.s32.totalorder %s13, 0
    %p59 = por %p57, %p58
    %p60 = scmp.ne.s32.totalorder %s49, %s52
    %p61 = scmp.eq.s32.totalorder %s18, 1
    %p62 = por %p60, %p61
    %p63 = scmp.ne.s32.totalorder %s52, %s53
    %p64 = scmp.eq.s32.totalorder %s18, 0
    %p65 = por %p63, %p64
    %p66 = scmp.ne.s32.totalorder %s52, %s53
    %p67 = scmp.eq.s32.totalorder %s19, 1
    %p68 = por %p66, %p67
    %p70 = scmp.ne.s32.totalorder %s53, %s69
    %p71 = scmp.eq.s32.totalorder %s19, 0
    %p72 = por %p70, %p71
    %s73 = ssub.s32 %s13, %s20
    %p74 = scmp.eq.s32.totalorder %s73, 0
    %s76 = sadd.s32 %s75, 1
    %s77 = scalar_select %p74, %s75, %s76
    %p80 = pneg %p74
    %p81 = scmp.eq.s32.totalorder %s13, 1
    %p82 = por %p80, %p81
    %p83 = scmp.ne.s32.totalorder %s75, %s78
    %p84 = scmp.eq.s32.totalorder %s13, 0
    %p85 = por %p83, %p84
    %p86 = scmp.ne.s32.totalorder %s75, %s78
    %p87 = scmp.eq.s32.totalorder %s18, 1
    %p88 = por %p86, %p87
    %p89 = scmp.ne.s32.totalorder %s78, %s79
    %p90 = scmp.eq.s32.totalorder %s18, 0
    %p91 = por %p89, %p90
    %p92 = scmp.ne.s32.totalorder %s78, %s79
    %p93 = scmp.eq.s32.totalorder %s19, 1
    %p94 = por %p92, %p93
    %p96 = scmp.ne.s32.totalorder %s79, %s95
    %p97 = scmp.eq.s32.totalorder %s19, 0
    %p98 = por %p96, %p97
    %s99 = ssub.s32 %s13, %s20
    %p100 = scmp.eq.s32.totalorder %s99, 0
    %s102 = sadd.s32 %s101, 1
    %s103 = scalar_select %p100, %s101, %s102
    %p106 = pneg %p100
    %p107 = scmp.eq.s32.totalorder %s13, 1
    %p108 = por %p106, %p107
    %p109 = scmp.ne.s32.totalorder %s101, %s104
    %p110 = scmp.eq.s32.totalorder %s13, 0
    %p111 = por %p109, %p110
    %p112 = scmp.ne.s32.totalorder %s101, %s104
    %p113 = scmp.eq.s32.totalorder %s18, 1
    %p114 = por %p112, %p113
    %p115 = scmp.ne.s32.totalorder %s104, %s105
    %p116 = scmp.eq.s32.totalorder %s18, 0
    %p117 = por %p115, %p116
    %p118 = scmp.ne.s32.totalorder %s104, %s105
    %p119 = scmp.eq.s32.totalorder %s19, 1
    %p120 = por %p118, %p119
    %p122 = scmp.ne.s32.totalorder %s105, %s121
    %p123 = scmp.eq.s32.totalorder %s19, 0
    %p124 = por %p122, %p123
    %s125 = ssub.s32 %s13, %s20
    %p126 = scmp.eq.s32.totalorder %s125, 0
    %s128 = sadd.s32 %s127, 1
    %s129 = scalar_select %p126, %s127, %s128
    %p132 = pneg %p126
    %p133 = scmp.eq.s32.totalorder %s13, 1
    %p134 = por %p132, %p133
    %p135 = scmp.ne.s32.totalorder %s127, %s130
    %p136 = scmp.eq.s32.totalorder %s13, 0
    %p137 = por %p135, %p136
    %p138 = scmp.ne.s32.totalorder %s127, %s130
    %p139 = scmp.eq.s32.totalorder %s18, 1
    %p140 = por %p138, %p139
    %p141 = scmp.ne.s32.totalorder %s130, %s131
    %p142 = scmp.eq.s32.totalorder %s18, 0
    %p143 = por %p141, %p142
    %p144 = scmp.ne.s32.totalorder %s130, %s131
    %p145 = scmp.eq.s32.totalorder %s19, 1
    %p146 = por %p144, %p145
    %p148 = scmp.ne.s32.totalorder %s131, %s147
    %p149 = scmp.eq.s32.totalorder %s19, 0
    %p150 = por %p148, %p149
    %s151 = ssub.s32 %s13, %s20
    %p152 = scmp.eq.s32.totalorder %s151, 0
    %s154 = sadd.s32 %s153, 1
    %s155 = scalar_select %p152, %s153, %s154
    %p158 = pneg %p152
    %p159 = scmp.eq.s32.totalorder %s13, 1
    %p160 = por %p158, %p159
    %p161 = scmp.ne.s32.totalorder %s153, %s156
    %p162 = scmp.eq.s32.totalorder %s13, 0
    %p163 = por %p161, %p162
    %p164 = scmp.ne.s32.totalorder %s153, %s156
    %p165 = scmp.eq.s32.totalorder %s18, 1
    %p166 = por %p164, %p165
    %p167 = scmp.ne.s32.totalorder %s156, %s157
    %p168 = scmp.eq.s32.totalorder %s18, 0
    %p169 = por %p167, %p168
    %p170 = scmp.ne.s32.totalorder %s156, %s157
    %p171 = scmp.eq.s32.totalorder %s19, 1
    %p172 = por %p170, %p171
    %p174 = scmp.ne.s32.totalorder %s157, %s173
    %p175 = scmp.eq.s32.totalorder %s19, 0
    %p176 = por %p174, %p175
    %s177 = ssub.s32 %s13, %s20
    %p178 = scmp.eq.s32.totalorder %s177, 0
    %s180 = sadd.s32 %s179, 1
    %s181 = scalar_select %p178, %s179, %s180
    %p184 = pneg %p178
    %p185 = scmp.eq.s32.totalorder %s13, 1
    %p186 = por %p184, %p185
    %p187 = scmp.ne.s32.totalorder %s179, %s182
    %p188 = scmp.eq.s32.totalorder %s13, 0
    %p189 = por %p187, %p188
    %p190 = scmp.ne.s32.totalorder %s179, %s182
    %p191 = scmp.eq.s32.totalorder %s18, 1
    %p192 = por %p190, %p191
    %p193 = scmp.ne.s32.totalorder %s182, %s183
    %p194 = scmp.eq.s32.totalorder %s18, 0
    %p195 = por %p193, %p194
    %p196 = scmp.ne.s32.totalorder %s182, %s183
    %p197 = scmp.eq.s32.totalorder %s19, 1
    %p198 = por %p196, %p197
    %p200 = scmp.ne.s32.totalorder %s183, %s199
    %p201 = scmp.eq.s32.totalorder %s19, 0
    %p202 = por %p200, %p201
    %p203 = scmp.le.s32.totalorder 1, %s13
    %p204 = scmp.lt.s32.totalorder %s13, 3
    %p205 = pnand %p203, %p204
    %p206 = pneg %p205
    // Predicated region
    $region9: #{model_forward.4} parent=5 // pred_check
      _
    $region10: #{model_forward.4} parent=5 // pred_check_branch
      %208 = sbr.rel (%p205) target = $region12
    $region11: #{model_forward.4} parent=5 // pred_region
      %s209 = ssub.s32 %s13, 1
    $region12: #{model_forward.4} parent=5 // pred_fallthru
      _
    %p210 = scmp.lt.s32.totalorder %s13, 2
    // Predicated region
    $region13: #{model_forward.4} parent=5 // pred_check
      %p211 = pneg %p210
    $region14: #{model_forward.4} parent=5 // pred_check_branch
      %213 = sbr.rel (%p211) target = $region16
    $region15: #{model_forward.4} parent=5 // pred_region
      // Predicated region
      $region17: #{model_forward.4} parent=15 // pred_check
        %p214 = pneg %p33
      $region18: #{model_forward.4} parent=15 // pred_check_branch
        %216 = sbr.rel (%p214) target = $region20
      $region19: #{model_forward.4} parent=15 // pred_region
        %p217 = scmp.lt.s32.totalorder %s13, 1
        %s218 = scalar_select %p217, %s13, 1
        %s219 = smul.addr %s218, 4
        %s220 = smul.addr %s219, 8
        %s221 = scalar_lea.vmem %s0, %s220
      $region20: #{model_forward.4} parent=15 // pred_fallthru
        _
      // Predicated region
      $region21: #{model_forward.4} parent=15 // pred_check
        %p222 = pneg %p59
      $region22: #{model_forward.4} parent=15 // pred_check_branch
        %224 = sbr.rel (%p222) target = $region24
      $region23: #{model_forward.4} parent=15 // pred_region
        %p225 = scmp.lt.s32.totalorder %s13, 1
        %s226 = scalar_select %p225, %s13, 1
        %s227 = smul.addr %s226, 4
        %s228 = smul.addr %s227, 8
        %s229 = scalar_lea.vmem %s1, %s228
      $region24: #{model_forward.4} parent=15 // pred_fallthru
        _
      // Predicated region
      $region25: #{model_forward.4} parent=15 // pred_check
        %p230 = pneg %p85
      $region26: #{model_forward.4} parent=15 // pred_check_branch
        %232 = sbr.rel (%p230) target = $region28
      $region27: #{model_forward.4} parent=15 // pred_region
        %p233 = scmp.lt.s32.totalorder %s13, 1
        %s234 = scalar_select %p233, %s13, 1
        %s235 = smul.addr %s234, 4
        %s236 = smul.addr %s235, 8
        %s237 = scalar_lea.vmem %s2, %s236
      $region28: #{model_forward.4} parent=15 // pred_fallthru
        _
      // Predicated region
      $region29: #{model_forward.4} parent=15 // pred_check
        %p238 = pneg %p111
      $region30: #{model_forward.4} parent=15 // pred_check_branch
        %240 = sbr.rel (%p238) target = $region32
      $region31: #{model_forward.4} parent=15 // pred_region
        %p241 = scmp.lt.s32.totalorder %s13, 1
        %s242 = scalar_select %p241, %s13, 1
        %s243 = scalar_lea.vmem %s3, %s242
      $region32: #{model_forward.4} parent=15 // pred_fallthru
        _
      // Predicated region
      $region33: #{model_forward.4} parent=15 // pred_check
        %p244 = pneg %p137
      $region34: #{model_forward.4} parent=15 // pred_check_branch
        %246 = sbr.rel (%p244) target = $region36
      $region35: #{model_forward.4} parent=15 // pred_region
        %p247 = scmp.lt.s32.totalorder %s13, 1
        %s248 = scalar_select %p247, %s13, 1
        %s249 = scalar_lea.vmem %s4, %s248
      $region36: #{model_forward.4} parent=15 // pred_fallthru
        _
    $region16: #{model_forward.4} parent=5 // pred_fallthru
      _
    %p250 = scmp.le.s32.totalorder 1, %s13
    %p251 = scmp.lt.s32.totalorder %s13, 3
    %p252 = pnand %p250, %p251
    %p253 = pneg %p252
    // Predicated region
    $region37: #{model_forward.4} parent=5 // pred_check
      _
    $region38: #{model_forward.4} parent=5 // pred_check_branch
      %255 = sbr.rel (%p252) target = $region40
    $region39: #{model_forward.4} parent=5 // pred_region
      %s256 = ssub.s32 %s13, 1
      %p257 = scmp.lt.s32.totalorder %s18, 1
      %s258 = scalar_select %p257, %s18, 1
      %s259 = smul.addr %s258, 4
      %s260 = smul.addr %s259, 8
      %s261 = scalar_lea.vmem %s0, %s260
      %p262 = pneg %p39
      %p263 = pneg %p36
      %p264 = scmp.lt.s32.totalorder %s18, 1
      %s265 = scalar_select %p264, %s18, 1
      %s266 = smul.addr %s265, 4
      %s267 = smul.addr %s266, 8
      %s268 = scalar_lea.vmem %s1, %s267
      %p269 = pneg %p65
      %p270 = pneg %p62
      %p271 = scmp.lt.s32.totalorder %s18, 1
      %s272 = scalar_select %p271, %s18, 1
      %s273 = smul.addr %s272, 4
      %s274 = smul.addr %s273, 8
      %s275 = scalar_lea.vmem %s2, %s274
      %p276 = pneg %p91
      %p277 = pneg %p88
      %p278 = scmp.lt.s32.totalorder %s18, 1
      %s279 = scalar_select %p278, %s18, 1
      %s280 = scalar_lea.vmem %s3, %s279
      %p281 = pneg %p117
      %p282 = pneg %p114
      %p283 = scmp.lt.s32.totalorder %s18, 1
      %s284 = scalar_select %p283, %s18, 1
      %s285 = scalar_lea.vmem %s4, %s284
      %p286 = pneg %p143
      %p287 = pneg %p140
      %p288 = pneg %p169
      %p289 = pneg %p166
      %p290 = scmp.lt.s32.totalorder %s18, 1
      %s291 = scalar_select %p290, %s18, 1
      %s292 = smul.addr %s291, 16
      %s293 = smul.addr %s292, 2
      %s294 = scalar_lea.vmem %s5, %s293
      %p295 = pneg %p195
      %p296 = pneg %p192
      %p297 = scmp.lt.s32.totalorder %s18, 1
      %s298 = scalar_select %p297, %s18, 1
      %s299 = smul.addr %s298, 2
      %s300 = scalar_lea.vmem %s6, %s299
      %p301 = scmp.lt.s32.totalorder %s18, 1
      %s302 = scalar_select %p301, %s18, 1
      %s303 = smul.addr %s302, 4
      %s304 = smul.addr %s303, 8
      %s305 = scalar_lea.vmem %s0, %s304
      %p306 = scmp.lt.s32.totalorder %s18, 1
      %s307 = scalar_select %p306, %s18, 1
      %s308 = smul.addr %s307, 4
      %s309 = smul.addr %s308, 8
      %s310 = scalar_lea.vmem %s1, %s309
      %p311 = scmp.lt.s32.totalorder %s18, 1
      %s312 = scalar_select %p311, %s18, 1
      %s313 = smul.addr %s312, 4
      %s314 = smul.addr %s313, 8
      %s315 = scalar_lea.vmem %s2, %s314
      %p316 = scmp.lt.s32.totalorder %s18, 1
      %s317 = scalar_select %p316, %s18, 1
      %s318 = scalar_lea.vmem %s3, %s317
      %p319 = scmp.lt.s32.totalorder %s18, 1
      %s320 = scalar_select %p319, %s18, 1
      %s321 = scalar_lea.vmem %s4, %s320
      %p322 = scmp.lt.s32.totalorder %s18, 1
      %s323 = scalar_select %p322, %s18, 1
      %s324 = smul.addr %s323, 16
      %s325 = smul.addr %s324, 2
      %s326 = scalar_lea.vmem %s5, %s325
      %p327 = scmp.lt.s32.totalorder %s18, 1
      %s328 = scalar_select %p327, %s18, 1
      %s329 = smul.addr %s328, 2
      %s330 = scalar_lea.vmem %s6, %s329
      %v331 = vld [vmem:[%s315] sm:$0xff]
      %v332 = vld [vmem:[%s315 + $0x8] sm:$0xff]
      %v333 = vld [vmem:[%s315 + $0x10] sm:$0xff]
      %v334 = vld [vmem:[%s315 + $0x18] sm:$0xff]
      %v335 = vld [vmem:[%s321] sm:$0x1]
      %v336 = vld [vmem:[%s305] sm:$0xff]
      %v337 = vld [vmem:[%s305 + $0x8] sm:$0xff]
      %v338 = vld [vmem:[%s305 + $0x10] sm:$0xff]
      %v339 = vld [vmem:[%s305 + $0x18] sm:$0xff]
      %v340 = vld [vmem:[%s310] sm:$0xff]
      %v341 = vld [vmem:[%s310 + $0x8] sm:$0xff]
      %v342 = vld [vmem:[%s310 + $0x10] sm:$0xff]
      %v343 = vld [vmem:[%s310 + $0x18] sm:$0xff]
      %v344 = vld [vmem:[%s318] sm:$0x1]
      %v346 = vlaneseq
      %v347 = vshrl.u32 %v346, 7
      %v348 = vsub.s32 0, %v347
      %v349 = vrot.slane %v344, %v348
      %vm351 = vcmask 261120
      %v353 = vsel %vm351, %v336, 0
      %v356 = vsel %vm351, %v337, 0
      %v359 = vsel %vm351, %v338, 0
      %v362 = vsel %vm351, %v339, 0
      %364 = vmatprep.subr.mxu0 0.0
      %365 = vmatpush1.msra.mxu0 0.0
      %366 = vmatprep.subr.mxu0 0.0
      %367 = vmatpush1.msra.mxu0 0.0
      %368 = vmatprep.subr.mxu0 0.0
      %369 = vmatpush1.msra.mxu0 0.0
      %370 = vmatprep.subr.mxu0 0.0
      %371 = vmatpush1.msra.mxu0 0.0
      %372 = vmatprep.subr.mxu0 0.0
      %373 = vmatpush1.msra.mxu0 0.0
      %374 = vmatprep.subr.mxu0 0.0
      %375 = vmatpush1.msra.mxu0 0.0
      %376 = vmatprep.subr.mxu0 0.0
      %377 = vmatpush1.msra.mxu0 0.0
      %378 = vmatprep.subr.mxu0 0.0
      %379 = vmatpush1.msra.mxu0 0.0
      %380 = vmatprep.subr.mxu0 0.0
      %381 = vmatpush1.msra.mxu0 0.0
      %382 = vmatprep.subr.mxu0 0.0
      %383 = vmatpush1.msra.mxu0 0.0
      %384 = vmatprep.subr.mxu0 0.0
      %385 = vmatpush1.msra.mxu0 0.0
      %386 = vmatprep.subr.mxu0 0.0
      %387 = vmatpush1.msra.mxu0 0.0
      %388 = vmatprep.subr.mxu0 0.0
      %389 = vmatpush1.msra.mxu0 %v343
      %390 = vmatprep.subr.mxu0 0.0
      %391 = vmatpush1.msra.mxu0 %v342
      %392 = vmatprep.subr.mxu0 0.0
      %393 = vmatpush1.msra.mxu0 %v341
      %394 = vmatprep.subr.mxu0 0.0
      %395 = vmatpush1.msra.mxu0 %v340
      %396 = vmatprep.subr.mxu0 0.0
      %397 = vmatpush2.msra.mxu0 0.0
      %398 = vmatprep.subr.mxu0 0.0
      %399 = vmatpush2.msra.mxu0 0.0
      %400 = vmatprep.subr.mxu0 0.0
      %401 = vmatpush2.msra.mxu0 0.0
      %402 = vmatprep.subr.mxu0 0.0
      %403 = vmatpush2.msra.mxu0 0.0
      %404 = vmatprep.subr.mxu0 0.0
      %405 = vmatpush2.msra.mxu0 0.0
      %406 = vmatprep.subr.mxu0 0.0
      %407 = vmatpush2.msra.mxu0 0.0
      %408 = vmatprep.subr.mxu0 0.0
      %409 = vmatpush2.msra.mxu0 0.0
      %410 = vmatprep.subr.mxu0 0.0
      %411 = vmatpush2.msra.mxu0 0.0
      %412 = vmatprep.subr.mxu0 0.0
      %413 = vmatpush2.msra.mxu0 0.0
      %414 = vmatprep.subr.mxu0 0.0
      %415 = vmatpush2.msra.mxu0 0.0
      %416 = vmatprep.subr.mxu0 0.0
      %417 = vmatpush2.msra.mxu0 0.0
      %418 = vmatprep.subr.mxu0 0.0
      %419 = vmatpush2.msra.mxu0 0.0
      %420 = vmatprep.subr.mxu0 0.0
      %421 = vmatpush2.msra.mxu0 0.0
      %422 = vmatprep.subr.mxu0 0.0
      %423 = vmatpush2.msra.mxu0 0.0
      %424 = vmatprep.subr.mxu0 0.0
      %425 = vmatpush2.msra.mxu0 0.0
      %426 = vmatprep.subr.mxu0 0.0
      %427 = vmatpush2.msra.mxu0 0.0
      %428 = vmatprep.mubr.f32.mxu0 0.0
      %429 = vmatmul.mubr.f32.gmra.mxu0 %v353
      %v430 = vpop.f32.mrf.mxu0
      %v431 = vadd.f32 %v349, %v430
      %v432 = vpop.f32.mrf.mxu0
      %433 = vmatprep.mubr.f32.mxu0 0.0
      %434 = vmatmul.mubr.f32.gmra.mxu0 %v356
      %v435 = vpop.f32.mrf.mxu0
      %v436 = vadd.f32 %v349, %v435
      %v437 = vpop.f32.mrf.mxu0
      %438 = vmatprep.mubr.f32.mxu0 0.0
      %439 = vmatmul.mubr.f32.gmra.mxu0 %v359
      %v440 = vpop.f32.mrf.mxu0
      %v441 = vadd.f32 %v349, %v440
      %v442 = vpop.f32.mrf.mxu0
      %443 = vmatprep.mubr.f32.mxu0 0.0
      %444 = vmatmul.mubr.f32.gmra.mxu0 %v362
      %v445 = vpop.f32.mrf.mxu0
      %v446 = vadd.f32 %v349, %v445
      %v447 = vpop.f32.mrf.mxu0
      %448 = vdwg.mxu0
      %vm449 = vcmask 785408
      %450 = vst.msk [vmem:[#allocation2] sm:$0xff] %vm449, %v431
      %451 = vst.msk [vmem:[#allocation2 + $0x8] sm:$0xff] %vm449, %v436
      %452 = vst.msk [vmem:[#allocation2 + $0x10] sm:$0xff] %vm449, %v441
      %453 = vst.msk [vmem:[#allocation2 + $0x18] sm:$0xff] %vm449, %v446
      %v454 = vld [vmem:[#allocation2] sm:$0x3]
      %v456 = vlaneseq
      %v457 = vshrl.u32 %v456, 7
      %v458 = vsub.s32 0, %v457
      %v459 = vrot.slane %v335, %v458
      %v462 = vsel %vm351, 0.0, 0
      %464 = vmatprep.subr.mxu0 0.0
      %465 = vmatpush1.msra.mxu0 0.0
      %466 = vmatprep.subr.mxu0 0.0
      %467 = vmatpush1.msra.mxu0 0.0
      %468 = vmatprep.subr.mxu0 0.0
      %469 = vmatpush1.msra.mxu0 0.0
      %470 = vmatprep.subr.mxu0 0.0
      %471 = vmatpush1.msra.mxu0 0.0
      %472 = vmatprep.subr.mxu0 0.0
      %473 = vmatpush1.msra.mxu0 0.0
      %474 = vmatprep.subr.mxu0 0.0
      %475 = vmatpush1.msra.mxu0 0.0
      %476 = vmatprep.subr.mxu0 0.0
      %477 = vmatpush1.msra.mxu0 0.0
      %478 = vmatprep.subr.mxu0 0.0
      %479 = vmatpush1.msra.mxu0 0.0
      %480 = vmatprep.subr.mxu0 0.0
      %481 = vmatpush1.msra.mxu0 0.0
      %482 = vmatprep.subr.mxu0 0.0
      %483 = vmatpush1.msra.mxu0 0.0
      %484 = vmatprep.subr.mxu0 0.0
      %485 = vmatpush1.msra.mxu0 0.0
      %486 = vmatprep.subr.mxu0 0.0
      %487 = vmatpush1.msra.mxu0 0.0
      %488 = vmatprep.subr.mxu0 0.0
      %489 = vmatpush1.msra.mxu0 %v334
      %490 = vmatprep.subr.mxu0 0.0
      %491 = vmatpush1.msra.mxu0 %v333
      %492 = vmatprep.subr.mxu0 0.0
      %493 = vmatpush1.msra.mxu0 %v332
      %494 = vmatprep.subr.mxu0 0.0
      %495 = vmatpush1.msra.mxu0 %v331
      %496 = vmatprep.subr.mxu0 0.0
      %497 = vmatpush2.msra.mxu0 0.0
      %498 = vmatprep.subr.mxu0 0.0
      %499 = vmatpush2.msra.mxu0 0.0
      %500 = vmatprep.subr.mxu0 0.0
      %501 = vmatpush2.msra.mxu0 0.0
      %502 = vmatprep.subr.mxu0 0.0
      %503 = vmatpush2.msra.mxu0 0.0
      %504 = vmatprep.subr.mxu0 0.0
      %505 = vmatpush2.msra.mxu0 0.0
      %506 = vmatprep.subr.mxu0 0.0
      %507 = vmatpush2.msra.mxu0 0.0
      %508 = vmatprep.subr.mxu0 0.0
      %509 = vmatpush2.msra.mxu0 0.0
      %510 = vmatprep.subr.mxu0 0.0
      %511 = vmatpush2.msra.mxu0 0.0
      %512 = vmatprep.subr.mxu0 0.0
      %513 = vmatpush2.msra.mxu0 0.0
      %514 = vmatprep.subr.mxu0 0.0
      %515 = vmatpush2.msra.mxu0 0.0
      %516 = vmatprep.subr.mxu0 0.0
      %517 = vmatpush2.msra.mxu0 0.0
      %518 = vmatprep.subr.mxu0 0.0
      %519 = vmatpush2.msra.mxu0 0.0
      %520 = vmatprep.subr.mxu0 0.0
      %521 = vmatpush2.msra.mxu0 0.0
      %522 = vmatprep.subr.mxu0 0.0
      %523 = vmatpush2.msra.mxu0 0.0
      %524 = vmatprep.subr.mxu0 0.0
      %525 = vmatpush2.msra.mxu0 0.0
      %526 = vmatprep.subr.mxu0 0.0
      %527 = vmatpush2.msra.mxu0 0.0
      %528 = vmatprep.mubr.f32.mxu0 0.0
      %529 = vmatmul.mubr.f32.gmra.mxu0 %v462
      %v530 = vpop.f32.mrf.mxu0
      %v531 = vadd.f32 %v459, %v530
      %v532 = vpop.f32.mrf.mxu0
      %533 = vdwg.mxu0
      %v534 = vadd.f32 %v454, %v531
      %v535 = vxor.u32 %v534, 2147483648
      %v536 = vmul.f32 %v535, 1.442695
      %v537 = vpow.pop %v536
      %v538 = vadd.f32 %v537, 1.0
      %v539 = vrcp.pop %v538
      %v540 = vmul.f32 1.0, %v539
      %542 = vrot.lane.b32.xlu0 %v531, 64
      %v543 = vpop.permute.xlu0 %542
      %v545 = vmul.f32 %v540, %v543
      %547 = vrot.lane.b32.xlu0 %v545, 64
      %v548 = vpop.permute.xlu0 %547
      %v550 = vadd.f32 %v454, %v548
      %v551 = vtanh.pop %v550
      %v552 = vsub.f32 1.0, %v540
      %554 = vrot.lane.b32.xlu0 %v551, 96
      %v555 = vpop.permute.xlu0 %554
      %v557 = vmul.f32 %v552, %v555
      %v558 = vmul.f32 %v540, 0.0
      %v559 = vadd.f32 %v557, %v558
      %561 = vrot.lane.b32.xlu0 %v559, 96
      %v562 = vpop.permute.xlu0 %561
      %vm564 = vcmask 254976
      %565 = vst.msk [vmem:[%s326] sm:$0x3] %vm564, %v562
      %v566 = vld [vmem:[#allocation2 + $0x2] sm:$0x3]
      %v567 = vsel %vm351, %v562, 0
      %569 = vmatprep.subr.mxu0 0.0
      %570 = vmatpush1.msra.mxu0 0.0
      %571 = vmatprep.subr.mxu0 0.0
      %572 = vmatpush1.msra.mxu0 0.0
      %573 = vmatprep.subr.mxu0 0.0
      %574 = vmatpush1.msra.mxu0 0.0
      %575 = vmatprep.subr.mxu0 0.0
      %576 = vmatpush1.msra.mxu0 0.0
      %577 = vmatprep.subr.mxu0 0.0
      %578 = vmatpush1.msra.mxu0 0.0
      %579 = vmatprep.subr.mxu0 0.0
      %580 = vmatpush1.msra.mxu0 0.0
      %581 = vmatprep.subr.mxu0 0.0
      %582 = vmatpush1.msra.mxu0 0.0
      %583 = vmatprep.subr.mxu0 0.0
      %584 = vmatpush1.msra.mxu0 0.0
      %585 = vmatprep.subr.mxu0 0.0
      %586 = vmatpush1.msra.mxu0 0.0
      %587 = vmatprep.subr.mxu0 0.0
      %588 = vmatpush1.msra.mxu0 0.0
      %589 = vmatprep.subr.mxu0 0.0
      %590 = vmatpush1.msra.mxu0 0.0
      %591 = vmatprep.subr.mxu0 0.0
      %592 = vmatpush1.msra.mxu0 0.0
      %593 = vmatprep.subr.mxu0 0.0
      %594 = vmatpush1.msra.mxu0 %v334
      %595 = vmatprep.subr.mxu0 0.0
      %596 = vmatpush1.msra.mxu0 %v333
      %597 = vmatprep.subr.mxu0 0.0
      %598 = vmatpush1.msra.mxu0 %v332
      %599 = vmatprep.subr.mxu0 0.0
      %600 = vmatpush1.msra.mxu0 %v331
      %601 = vmatprep.subr.mxu0 0.0
      %602 = vmatpush2.msra.mxu0 0.0
      %603 = vmatprep.subr.mxu0 0.0
      %604 = vmatpush2.msra.mxu0 0.0
      %605 = vmatprep.subr.mxu0 0.0
      %606 = vmatpush2.msra.mxu0 0.0
      %607 = vmatprep.subr.mxu0 0.0
      %608 = vmatpush2.msra.mxu0 0.0
      %609 = vmatprep.subr.mxu0 0.0
      %610 = vmatpush2.msra.mxu0 0.0
      %611 = vmatprep.subr.mxu0 0.0
      %612 = vmatpush2.msra.mxu0 0.0
      %613 = vmatprep.subr.mxu0 0.0
      %614 = vmatpush2.msra.mxu0 0.0
      %615 = vmatprep.subr.mxu0 0.0
      %616 = vmatpush2.msra.mxu0 0.0
      %617 = vmatprep.subr.mxu0 0.0
      %618 = vmatpush2.msra.mxu0 0.0
      %619 = vmatprep.subr.mxu0 0.0
      %620 = vmatpush2.msra.mxu0 0.0
      %621 = vmatprep.subr.mxu0 0.0
      %622 = vmatpush2.msra.mxu0 0.0
      %623 = vmatprep.subr.mxu0 0.0
      %624 = vmatpush2.msra.mxu0 0.0
      %625 = vmatprep.subr.mxu0 0.0
      %626 = vmatpush2.msra.mxu0 0.0
      %627 = vmatprep.subr.mxu0 0.0
      %628 = vmatpush2.msra.mxu0 0.0
      %629 = vmatprep.subr.mxu0 0.0
      %630 = vmatpush2.msra.mxu0 0.0
      %631 = vmatprep.subr.mxu0 0.0
      %632 = vmatpush2.msra.mxu0 0.0
      %633 = vmatprep.mubr.f32.mxu0 0.0
      %634 = vmatmul.mubr.f32.gmra.mxu0 %v567
      %v635 = vpop.f32.mrf.mxu0
      %v636 = vadd.f32 %v459, %v635
      %v637 = vpop.f32.mrf.mxu0
      %638 = vdwg.mxu0
      %v639 = vadd.f32 %v566, %v636
      %v640 = vxor.u32 %v639, 2147483648
      %v641 = vmul.f32 %v640, 1.442695
      %v642 = vpow.pop %v641
      %v643 = vadd.f32 %v642, 1.0
      %v644 = vrcp.pop %v643
      %v645 = vmul.f32 1.0, %v644
      %647 = vrot.lane.b32.xlu0 %v636, 64
      %v648 = vpop.permute.xlu0 %647
      %v650 = vmul.f32 %v645, %v648
      %652 = vrot.lane.b32.xlu0 %v650, 64
      %v653 = vpop.permute.xlu0 %652
      %v655 = vadd.f32 %v566, %v653
      %v656 = vtanh.pop %v655
      %v657 = vsub.f32 1.0, %v645
      %659 = vrot.lane.b32.xlu0 %v656, 96
      %v660 = vpop.permute.xlu0 %659
      %v662 = vmul.f32 %v657, %v660
      %v663 = vmul.f32 %v645, %v559
      %v664 = vadd.f32 %v662, %v663
      %666 = vrot.lane.b32.xlu0 %v664, 96
      %v667 = vpop.permute.xlu0 %666
      %s669 = scalar_lea.vmem %s326, 2
      %670 = vst.msk [vmem:[%s669] sm:$0x3] %vm564, %v667
      %v671 = vld [vmem:[#allocation2 + $0x4] sm:$0x3]
      %v672 = vsel %vm351, %v667, 0
      %674 = vmatprep.subr.mxu0 0.0
      %675 = vmatpush1.msra.mxu0 0.0
      %676 = vmatprep.subr.mxu0 0.0
      %677 = vmatpush1.msra.mxu0 0.0
      %678 = vmatprep.subr.mxu0 0.0
      %679 = vmatpush1.msra.mxu0 0.0
      %680 = vmatprep.subr.mxu0 0.0
      %681 = vmatpush1.msra.mxu0 0.0
      %682 = vmatprep.subr.mxu0 0.0
      %683 = vmatpush1.msra.mxu0 0.0
      %684 = vmatprep.subr.mxu0 0.0
      %685 = vmatpush1.msra.mxu0 0.0
      %686 = vmatprep.subr.mxu0 0.0
      %687 = vmatpush1.msra.mxu0 0.0
      %688 = vmatprep.subr.mxu0 0.0
      %689 = vmatpush1.msra.mxu0 0.0
      %690 = vmatprep.subr.mxu0 0.0
      %691 = vmatpush1.msra.mxu0 0.0
      %692 = vmatprep.subr.mxu0 0.0
      %693 = vmatpush1.msra.mxu0 0.0
      %694 = vmatprep.subr.mxu0 0.0
      %695 = vmatpush1.msra.mxu0 0.0
      %696 = vmatprep.subr.mxu0 0.0
      %697 = vmatpush1.msra.mxu0 0.0
      %698 = vmatprep.subr.mxu0 0.0
      %699 = vmatpush1.msra.mxu0 %v334
      %700 = vmatprep.subr.mxu0 0.0
      %701 = vmatpush1.msra.mxu0 %v333
      %702 = vmatprep.subr.mxu0 0.0
      %703 = vmatpush1.msra.mxu0 %v332
      %704 = vmatprep.subr.mxu0 0.0
      %705 = vmatpush1.msra.mxu0 %v331
      %706 = vmatprep.subr.mxu0 0.0
      %707 = vmatpush2.msra.mxu0 0.0
      %708 = vmatprep.subr.mxu0 0.0
      %709 = vmatpush2.msra.mxu0 0.0
      %710 = vmatprep.subr.mxu0 0.0
      %711 = vmatpush2.msra.mxu0 0.0
      %712 = vmatprep.subr.mxu0 0.0
      %713 = vmatpush2.msra.mxu0 0.0
      %714 = vmatprep.subr.mxu0 0.0
      %715 = vmatpush2.msra.mxu0 0.0
      %716 = vmatprep.subr.mxu0 0.0
      %717 = vmatpush2.msra.mxu0 0.0
      %718 = vmatprep.subr.mxu0 0.0
      %719 = vmatpush2.msra.mxu0 0.0
      %720 = vmatprep.subr.mxu0 0.0
      %721 = vmatpush2.msra.mxu0 0.0
      %722 = vmatprep.subr.mxu0 0.0
      %723 = vmatpush2.msra.mxu0 0.0
      %724 = vmatprep.subr.mxu0 0.0
      %725 = vmatpush2.msra.mxu0 0.0
      %726 = vmatprep.subr.mxu0 0.0
      %727 = vmatpush2.msra.mxu0 0.0
      %728 = vmatprep.subr.mxu0 0.0
      %729 = vmatpush2.msra.mxu0 0.0
      %730 = vmatprep.subr.mxu0 0.0
      %731 = vmatpush2.msra.mxu0 0.0
      %732 = vmatprep.subr.mxu0 0.0
      %733 = vmatpush2.msra.mxu0 0.0
      %734 = vmatprep.subr.mxu0 0.0
      %735 = vmatpush2.msra.mxu0 0.0
      %736 = vmatprep.subr.mxu0 0.0
      %737 = vmatpush2.msra.mxu0 0.0
      %738 = vmatprep.mubr.f32.mxu0 0.0
      %739 = vmatmul.mubr.f32.gmra.mxu0 %v672
      %v740 = vpop.f32.mrf.mxu0
      %v741 = vadd.f32 %v459, %v740
      %v742 = vpop.f32.mrf.mxu0
      %743 = vdwg.mxu0
      %v744 = vadd.f32 %v671, %v741
      %v745 = vxor.u32 %v744, 2147483648
      %v746 = vmul.f32 %v745, 1.442695
      %v747 = vpow.pop %v746
      %v748 = vadd.f32 %v747, 1.0
      %v749 = vrcp.pop %v748
      %v750 = vmul.f32 1.0, %v749
      %752 = vrot.lane.b32.xlu0 %v741, 64
      %v753 = vpop.permute.xlu0 %752
      %v755 = vmul.f32 %v750, %v753
      %757 = vrot.lane.b32.xlu0 %v755, 64
      %v758 = vpop.permute.xlu0 %757
      %v760 = vadd.f32 %v671, %v758
      %v761 = vtanh.pop %v760
      %v762 = vsub.f32 1.0, %v750
      %764 = vrot.lane.b32.xlu0 %v761, 96
      %v765 = vpop.permute.xlu0 %764
      %v767 = vmul.f32 %v762, %v765
      %v768 = vmul.f32 %v750, %v664
      %v769 = vadd.f32 %v767, %v768
      %771 = vrot.lane.b32.xlu0 %v769, 96
      %v772 = vpop.permute.xlu0 %771
      %s774 = scalar_lea.vmem %s326, 4
      %775 = vst.msk [vmem:[%s774] sm:$0x3] %vm564, %v772
      %v776 = vld [vmem:[#allocation2 + $0x6] sm:$0x3]
      %v777 = vsel %vm351, %v772, 0
      %779 = vmatprep.subr.mxu0 0.0
      %780 = vmatpush1.msra.mxu0 0.0
      %781 = vmatprep.subr.mxu0 0.0
      %782 = vmatpush1.msra.mxu0 0.0
      %783 = vmatprep.subr.mxu0 0.0
      %784 = vmatpush1.msra.mxu0 0.0
      %785 = vmatprep.subr.mxu0 0.0
      %786 = vmatpush1.msra.mxu0 0.0
      %787 = vmatprep.subr.mxu0 0.0
      %788 = vmatpush1.msra.mxu0 0.0
      %789 = vmatprep.subr.mxu0 0.0
      %790 = vmatpush1.msra.mxu0 0.0
      %791 = vmatprep.subr.mxu0 0.0
      %792 = vmatpush1.msra.mxu0 0.0
      %793 = vmatprep.subr.mxu0 0.0
      %794 = vmatpush1.msra.mxu0 0.0
      %795 = vmatprep.subr.mxu0 0.0
      %796 = vmatpush1.msra.mxu0 0.0
      %797 = vmatprep.subr.mxu0 0.0
      %798 = vmatpush1.msra.mxu0 0.0
      %799 = vmatprep.subr.mxu0 0.0
      %800 = vmatpush1.msra.mxu0 0.0
      %801 = vmatprep.subr.mxu0 0.0
      %802 = vmatpush1.msra.mxu0 0.0
      %803 = vmatprep.subr.mxu0 0.0
      %804 = vmatpush1.msra.mxu0 %v334
      %805 = vmatprep.subr.mxu0 0.0
      %806 = vmatpush1.msra.mxu0 %v333
      %807 = vmatprep.subr.mxu0 0.0
      %808 = vmatpush1.msra.mxu0 %v332
      %809 = vmatprep.subr.mxu0 0.0
      %810 = vmatpush1.msra.mxu0 %v331
      %811 = vmatprep.subr.mxu0 0.0
      %812 = vmatpush2.msra.mxu0 0.0
      %813 = vmatprep.subr.mxu0 0.0
      %814 = vmatpush2.msra.mxu0 0.0
      %815 = vmatprep.subr.mxu0 0.0
      %816 = vmatpush2.msra.mxu0 0.0
      %817 = vmatprep.subr.mxu0 0.0
      %818 = vmatpush2.msra.mxu0 0.0
      %819 = vmatprep.subr.mxu0 0.0
      %820 = vmatpush2.msra.mxu0 0.0
      %821 = vmatprep.subr.mxu0 0.0
      %822 = vmatpush2.msra.mxu0 0.0
      %823 = vmatprep.subr.mxu0 0.0
      %824 = vmatpush2.msra.mxu0 0.0
      %825 = vmatprep.subr.mxu0 0.0
      %826 = vmatpush2.msra.mxu0 0.0
      %827 = vmatprep.subr.mxu0 0.0
      %828 = vmatpush2.msra.mxu0 0.0
      %829 = vmatprep.subr.mxu0 0.0
      %830 = vmatpush2.msra.mxu0 0.0
      %831 = vmatprep.subr.mxu0 0.0
      %832 = vmatpush2.msra.mxu0 0.0
      %833 = vmatprep.subr.mxu0 0.0
      %834 = vmatpush2.msra.mxu0 0.0
      %835 = vmatprep.subr.mxu0 0.0
      %836 = vmatpush2.msra.mxu0 0.0
      %837 = vmatprep.subr.mxu0 0.0
      %838 = vmatpush2.msra.mxu0 0.0
      %839 = vmatprep.subr.mxu0 0.0
      %840 = vmatpush2.msra.mxu0 0.0
      %841 = vmatprep.subr.mxu0 0.0
      %842 = vmatpush2.msra.mxu0 0.0
      %843 = vmatprep.mubr.f32.mxu0 0.0
      %844 = vmatmul.mubr.f32.gmra.mxu0 %v777
      %v845 = vpop.f32.mrf.mxu0
      %v846 = vadd.f32 %v459, %v845
      %v847 = vpop.f32.mrf.mxu0
      %848 = vdwg.mxu0
      %v849 = vadd.f32 %v776, %v846
      %v850 = vxor.u32 %v849, 2147483648
      %v851 = vmul.f32 %v850, 1.442695
      %v852 = vpow.pop %v851
      %v853 = vadd.f32 %v852, 1.0
      %v854 = vrcp.pop %v853
      %v855 = vmul.f32 1.0, %v854
      %857 = vrot.lane.b32.xlu0 %v846, 64
      %v858 = vpop.permute.xlu0 %857
      %v860 = vmul.f32 %v855, %v858
      %862 = vrot.lane.b32.xlu0 %v860, 64
      %v863 = vpop.permute.xlu0 %862
      %v865 = vadd.f32 %v776, %v863
      %v866 = vtanh.pop %v865
      %v867 = vsub.f32 1.0, %v855
      %869 = vrot.lane.b32.xlu0 %v866, 96
      %v870 = vpop.permute.xlu0 %869
      %v872 = vmul.f32 %v867, %v870
      %v873 = vmul.f32 %v855, %v769
      %v874 = vadd.f32 %v872, %v873
      %876 = vrot.lane.b32.xlu0 %v874, 96
      %v877 = vpop.permute.xlu0 %876
      %s879 = scalar_lea.vmem %s326, 6
      %880 = vst.msk [vmem:[%s879] sm:$0x3] %vm564, %v877
      %v881 = vld [vmem:[#allocation2 + $0x8] sm:$0x3]
      %v882 = vsel %vm351, %v877, 0
      %884 = vmatprep.subr.mxu0 0.0
      %885 = vmatpush1.msra.mxu0 0.0
      %886 = vmatprep.subr.mxu0 0.0
      %887 = vmatpush1.msra.mxu0 0.0
      %888 = vmatprep.subr.mxu0 0.0
      %889 = vmatpush1.msra.mxu0 0.0
      %890 = vmatprep.subr.mxu0 0.0
      %891 = vmatpush1.msra.mxu0 0.0
      %892 = vmatprep.subr.mxu0 0.0
      %893 = vmatpush1.msra.mxu0 0.0
      %894 = vmatprep.subr.mxu0 0.0
      %895 = vmatpush1.msra.mxu0 0.0
      %896 = vmatprep.subr.mxu0 0.0
      %897 = vmatpush1.msra.mxu0 0.0
      %898 = vmatprep.subr.mxu0 0.0
      %899 = vmatpush1.msra.mxu0 0.0
      %900 = vmatprep.subr.mxu0 0.0
      %901 = vmatpush1.msra.mxu0 0.0
      %902 = vmatprep.subr.mxu0 0.0
      %903 = vmatpush1.msra.mxu0 0.0
      %904 = vmatprep.subr.mxu0 0.0
      %905 = vmatpush1.msra.mxu0 0.0
      %906 = vmatprep.subr.mxu0 0.0
      %907 = vmatpush1.msra.mxu0 0.0
      %908 = vmatprep.subr.mxu0 0.0
      %909 = vmatpush1.msra.mxu0 %v334
      %910 = vmatprep.subr.mxu0 0.0
      %911 = vmatpush1.msra.mxu0 %v333
      %912 = vmatprep.subr.mxu0 0.0
      %913 = vmatpush1.msra.mxu0 %v332
      %914 = vmatprep.subr.mxu0 0.0
      %915 = vmatpush1.msra.mxu0 %v331
      %916 = vmatprep.subr.mxu0 0.0
      %917 = vmatpush2.msra.mxu0 0.0
      %918 = vmatprep.subr.mxu0 0.0
      %919 = vmatpush2.msra.mxu0 0.0
      %920 = vmatprep.subr.mxu0 0.0
      %921 = vmatpush2.msra.mxu0 0.0
      %922 = vmatprep.subr.mxu0 0.0
      %923 = vmatpush2.msra.mxu0 0.0
      %924 = vmatprep.subr.mxu0 0.0
      %925 = vmatpush2.msra.mxu0 0.0
      %926 = vmatprep.subr.mxu0 0.0
      %927 = vmatpush2.msra.mxu0 0.0
      %928 = vmatprep.subr.mxu0 0.0
      %929 = vmatpush2.msra.mxu0 0.0
      %930 = vmatprep.subr.mxu0 0.0
      %931 = vmatpush2.msra.mxu0 0.0
      %932 = vmatprep.subr.mxu0 0.0
      %933 = vmatpush2.msra.mxu0 0.0
      %934 = vmatprep.subr.mxu0 0.0
      %935 = vmatpush2.msra.mxu0 0.0
      %936 = vmatprep.subr.mxu0 0.0
      %937 = vmatpush2.msra.mxu0 0.0
      %938 = vmatprep.subr.mxu0 0.0
      %939 = vmatpush2.msra.mxu0 0.0
      %940 = vmatprep.subr.mxu0 0.0
      %941 = vmatpush2.msra.mxu0 0.0
      %942 = vmatprep.subr.mxu0 0.0
      %943 = vmatpush2.msra.mxu0 0.0
      %944 = vmatprep.subr.mxu0 0.0
      %945 = vmatpush2.msra.mxu0 0.0
      %946 = vmatprep.subr.mxu0 0.0
      %947 = vmatpush2.msra.mxu0 0.0
      %948 = vmatprep.mubr.f32.mxu0 0.0
      %949 = vmatmul.mubr.f32.gmra.mxu0 %v882
      %v950 = vpop.f32.mrf.mxu0
      %v951 = vadd.f32 %v459, %v950
      %v952 = vpop.f32.mrf.mxu0
      %953 = vdwg.mxu0
      %v954 = vadd.f32 %v881, %v951
      %v955 = vxor.u32 %v954, 2147483648
      %v956 = vmul.f32 %v955, 1.442695
      %v957 = vpow.pop %v956
      %v958 = vadd.f32 %v957, 1.0
      %v959 = vrcp.pop %v958
      %v960 = vmul.f32 1.0, %v959
      %962 = vrot.lane.b32.xlu0 %v951, 64
      %v963 = vpop.permute.xlu0 %962
      %v965 = vmul.f32 %v960, %v963
      %967 = vrot.lane.b32.xlu0 %v965, 64
      %v968 = vpop.permute.xlu0 %967
      %v970 = vadd.f32 %v881, %v968
      %v971 = vtanh.pop %v970
      %v972 = vsub.f32 1.0, %v960
      %974 = vrot.lane.b32.xlu0 %v971, 96
      %v975 = vpop.permute.xlu0 %974
      %v977 = vmul.f32 %v972, %v975
      %v978 = vmul.f32 %v960, %v874
      %v979 = vadd.f32 %v977, %v978
      %981 = vrot.lane.b32.xlu0 %v979, 96
      %v982 = vpop.permute.xlu0 %981
      %s984 = scalar_lea.vmem %s326, 8
      %985 = vst.msk [vmem:[%s984] sm:$0x3] %vm564, %v982
      %v986 = vld [vmem:[#allocation2 + $0xa] sm:$0x3]
      %v987 = vsel %vm351, %v982, 0
      %989 = vmatprep.subr.mxu0 0.0
      %990 = vmatpush1.msra.mxu0 0.0
      %991 = vmatprep.subr.mxu0 0.0
      %992 = vmatpush1.msra.mxu0 0.0
      %993 = vmatprep.subr.mxu0 0.0
      %994 = vmatpush1.msra.mxu0 0.0
      %995 = vmatprep.subr.mxu0 0.0
      %996 = vmatpush1.msra.mxu0 0.0
      %997 = vmatprep.subr.mxu0 0.0
      %998 = vmatpush1.msra.mxu0 0.0
      %999 = vmatprep.subr.mxu0 0.0
      %1000 = vmatpush1.msra.mxu0 0.0
      %1001 = vmatprep.subr.mxu0 0.0
      %1002 = vmatpush1.msra.mxu0 0.0
      %1003 = vmatprep.subr.mxu0 0.0
      %1004 = vmatpush1.msra.mxu0 0.0
      %1005 = vmatprep.subr.mxu0 0.0
      %1006 = vmatpush1.msra.mxu0 0.0
      %1007 = vmatprep.subr.mxu0 0.0
      %1008 = vmatpush1.msra.mxu0 0.0
      %1009 = vmatprep.subr.mxu0 0.0
      %1010 = vmatpush1.msra.mxu0 0.0
      %1011 = vmatprep.subr.mxu0 0.0
      %1012 = vmatpush1.msra.mxu0 0.0
      %1013 = vmatprep.subr.mxu0 0.0
      %1014 = vmatpush1.msra.mxu0 %v334
      %1015 = vmatprep.subr.mxu0 0.0
      %1016 = vmatpush1.msra.mxu0 %v333
      %1017 = vmatprep.subr.mxu0 0.0
      %1018 = vmatpush1.msra.mxu0 %v332
      %1019 = vmatprep.subr.mxu0 0.0
      %1020 = vmatpush1.msra.mxu0 %v331
      %1021 = vmatprep.subr.mxu0 0.0
      %1022 = vmatpush2.msra.mxu0 0.0
      %1023 = vmatprep.subr.mxu0 0.0
      %1024 = vmatpush2.msra.mxu0 0.0
      %1025 = vmatprep.subr.mxu0 0.0
      %1026 = vmatpush2.msra.mxu0 0.0
      %1027 = vmatprep.subr.mxu0 0.0
      %1028 = vmatpush2.msra.mxu0 0.0
      %1029 = vmatprep.subr.mxu0 0.0
      %1030 = vmatpush2.msra.mxu0 0.0
      %1031 = vmatprep.subr.mxu0 0.0
      %1032 = vmatpush2.msra.mxu0 0.0
      %1033 = vmatprep.subr.mxu0 0.0
      %1034 = vmatpush2.msra.mxu0 0.0
      %1035 = vmatprep.subr.mxu0 0.0
      %1036 = vmatpush2.msra.mxu0 0.0
      %1037 = vmatprep.subr.mxu0 0.0
      %1038 = vmatpush2.msra.mxu0 0.0
      %1039 = vmatprep.subr.mxu0 0.0
      %1040 = vmatpush2.msra.mxu0 0.0
      %1041 = vmatprep.subr.mxu0 0.0
      %1042 = vmatpush2.msra.mxu0 0.0
      %1043 = vmatprep.subr.mxu0 0.0
      %1044 = vmatpush2.msra.mxu0 0.0
      %1045 = vmatprep.subr.mxu0 0.0
      %1046 = vmatpush2.msra.mxu0 0.0
      %1047 = vmatprep.subr.mxu0 0.0
      %1048 = vmatpush2.msra.mxu0 0.0
      %1049 = vmatprep.subr.mxu0 0.0
      %1050 = vmatpush2.msra.mxu0 0.0
      %1051 = vmatprep.subr.mxu0 0.0
      %1052 = vmatpush2.msra.mxu0 0.0
      %1053 = vmatprep.mubr.f32.mxu0 0.0
      %1054 = vmatmul.mubr.f32.gmra.mxu0 %v987
      %v1055 = vpop.f32.mrf.mxu0
      %v1056 = vadd.f32 %v459, %v1055
      %v1057 = vpop.f32.mrf.mxu0
      %1058 = vdwg.mxu0
      %v1059 = vadd.f32 %v986, %v1056
      %v1060 = vxor.u32 %v1059, 2147483648
      %v1061 = vmul.f32 %v1060, 1.442695
      %v1062 = vpow.pop %v1061
      %v1063 = vadd.f32 %v1062, 1.0
      %v1064 = vrcp.pop %v1063
      %v1065 = vmul.f32 1.0, %v1064
      %1067 = vrot.lane.b32.xlu0 %v1056, 64
      %v1068 = vpop.permute.xlu0 %1067
      %v1070 = vmul.f32 %v1065, %v1068
      %1072 = vrot.lane.b32.xlu0 %v1070, 64
      %v1073 = vpop.permute.xlu0 %1072
      %v1075 = vadd.f32 %v986, %v1073
      %v1076 = vtanh.pop %v1075
      %v1077 = vsub.f32 1.0, %v1065
      %1079 = vrot.lane.b32.xlu0 %v1076, 96
      %v1080 = vpop.permute.xlu0 %1079
      %v1082 = vmul.f32 %v1077, %v1080
      %v1083 = vmul.f32 %v1065, %v979
      %v1084 = vadd.f32 %v1082, %v1083
      %1086 = vrot.lane.b32.xlu0 %v1084, 96
      %v1087 = vpop.permute.xlu0 %1086
      %s1089 = scalar_lea.vmem %s326, 10
      %1090 = vst.msk [vmem:[%s1089] sm:$0x3] %vm564, %v1087
      %v1091 = vld [vmem:[#allocation2 + $0xc] sm:$0x3]
      %v1092 = vsel %vm351, %v1087, 0
      %1094 = vmatprep.subr.mxu0 0.0
      %1095 = vmatpush1.msra.mxu0 0.0
      %1096 = vmatprep.subr.mxu0 0.0
      %1097 = vmatpush1.msra.mxu0 0.0
      %1098 = vmatprep.subr.mxu0 0.0
      %1099 = vmatpush1.msra.mxu0 0.0
      %1100 = vmatprep.subr.mxu0 0.0
      %1101 = vmatpush1.msra.mxu0 0.0
      %1102 = vmatprep.subr.mxu0 0.0
      %1103 = vmatpush1.msra.mxu0 0.0
      %1104 = vmatprep.subr.mxu0 0.0
      %1105 = vmatpush1.msra.mxu0 0.0
      %1106 = vmatprep.subr.mxu0 0.0
      %1107 = vmatpush1.msra.mxu0 0.0
      %1108 = vmatprep.subr.mxu0 0.0
      %1109 = vmatpush1.msra.mxu0 0.0
      %1110 = vmatprep.subr.mxu0 0.0
      %1111 = vmatpush1.msra.mxu0 0.0
      %1112 = vmatprep.subr.mxu0 0.0
      %1113 = vmatpush1.msra.mxu0 0.0
      %1114 = vmatprep.subr.mxu0 0.0
      %1115 = vmatpush1.msra.mxu0 0.0
      %1116 = vmatprep.subr.mxu0 0.0
      %1117 = vmatpush1.msra.mxu0 0.0
      %1118 = vmatprep.subr.mxu0 0.0
      %1119 = vmatpush1.msra.mxu0 %v334
      %1120 = vmatprep.subr.mxu0 0.0
      %1121 = vmatpush1.msra.mxu0 %v333
      %1122 = vmatprep.subr.mxu0 0.0
      %1123 = vmatpush1.msra.mxu0 %v332
      %1124 = vmatprep.subr.mxu0 0.0
      %1125 = vmatpush1.msra.mxu0 %v331
      %1126 = vmatprep.subr.mxu0 0.0
      %1127 = vmatpush2.msra.mxu0 0.0
      %1128 = vmatprep.subr.mxu0 0.0
      %1129 = vmatpush2.msra.mxu0 0.0
      %1130 = vmatprep.subr.mxu0 0.0
      %1131 = vmatpush2.msra.mxu0 0.0
      %1132 = vmatprep.subr.mxu0 0.0
      %1133 = vmatpush2.msra.mxu0 0.0
      %1134 = vmatprep.subr.mxu0 0.0
      %1135 = vmatpush2.msra.mxu0 0.0
      %1136 = vmatprep.subr.mxu0 0.0
      %1137 = vmatpush2.msra.mxu0 0.0
      %1138 = vmatprep.subr.mxu0 0.0
      %1139 = vmatpush2.msra.mxu0 0.0
      %1140 = vmatprep.subr.mxu0 0.0
      %1141 = vmatpush2.msra.mxu0 0.0
      %1142 = vmatprep.subr.mxu0 0.0
      %1143 = vmatpush2.msra.mxu0 0.0
      %1144 = vmatprep.subr.mxu0 0.0
      %1145 = vmatpush2.msra.mxu0 0.0
      %1146 = vmatprep.subr.mxu0 0.0
      %1147 = vmatpush2.msra.mxu0 0.0
      %1148 = vmatprep.subr.mxu0 0.0
      %1149 = vmatpush2.msra.mxu0 0.0
      %1150 = vmatprep.subr.mxu0 0.0
      %1151 = vmatpush2.msra.mxu0 0.0
      %1152 = vmatprep.subr.mxu0 0.0
      %1153 = vmatpush2.msra.mxu0 0.0
      %1154 = vmatprep.subr.mxu0 0.0
      %1155 = vmatpush2.msra.mxu0 0.0
      %1156 = vmatprep.subr.mxu0 0.0
      %1157 = vmatpush2.msra.mxu0 0.0
      %1158 = vmatprep.mubr.f32.mxu0 0.0
      %1159 = vmatmul.mubr.f32.gmra.mxu0 %v1092
      %v1160 = vpop.f32.mrf.mxu0
      %v1161 = vadd.f32 %v459, %v1160
      %v1162 = vpop.f32.mrf.mxu0
      %1163 = vdwg.mxu0
      %v1164 = vadd.f32 %v1091, %v1161
      %v1165 = vxor.u32 %v1164, 2147483648
      %v1166 = vmul.f32 %v1165, 1.442695
      %v1167 = vpow.pop %v1166
      %v1168 = vadd.f32 %v1167, 1.0
      %v1169 = vrcp.pop %v1168
      %v1170 = vmul.f32 1.0, %v1169
      %1172 = vrot.lane.b32.xlu0 %v1161, 64
      %v1173 = vpop.permute.xlu0 %1172
      %v1175 = vmul.f32 %v1170, %v1173
      %1177 = vrot.lane.b32.xlu0 %v1175, 64
      %v1178 = vpop.permute.xlu0 %1177
      %v1180 = vadd.f32 %v1091, %v1178
      %v1181 = vtanh.pop %v1180
      %v1182 = vsub.f32 1.0, %v1170
      %1184 = vrot.lane.b32.xlu0 %v1181, 96
      %v1185 = vpop.permute.xlu0 %1184
      %v1187 = vmul.f32 %v1182, %v1185
      %v1188 = vmul.f32 %v1170, %v1084
      %v1189 = vadd.f32 %v1187, %v1188
      %1191 = vrot.lane.b32.xlu0 %v1189, 96
      %v1192 = vpop.permute.xlu0 %1191
      %s1194 = scalar_lea.vmem %s326, 12
      %1195 = vst.msk [vmem:[%s1194] sm:$0x3] %vm564, %v1192
      %v1196 = vld [vmem:[#allocation2 + $0xe] sm:$0x3]
      %v1197 = vsel %vm351, %v1192, 0
      %1199 = vmatprep.subr.mxu0 0.0
      %1200 = vmatpush1.msra.mxu0 0.0
      %1201 = vmatprep.subr.mxu0 0.0
      %1202 = vmatpush1.msra.mxu0 0.0
      %1203 = vmatprep.subr.mxu0 0.0
      %1204 = vmatpush1.msra.mxu0 0.0
      %1205 = vmatprep.subr.mxu0 0.0
      %1206 = vmatpush1.msra.mxu0 0.0
      %1207 = vmatprep.subr.mxu0 0.0
      %1208 = vmatpush1.msra.mxu0 0.0
      %1209 = vmatprep.subr.mxu0 0.0
      %1210 = vmatpush1.msra.mxu0 0.0
      %1211 = vmatprep.subr.mxu0 0.0
      %1212 = vmatpush1.msra.mxu0 0.0
      %1213 = vmatprep.subr.mxu0 0.0
      %1214 = vmatpush1.msra.mxu0 0.0
      %1215 = vmatprep.subr.mxu0 0.0
      %1216 = vmatpush1.msra.mxu0 0.0
      %1217 = vmatprep.subr.mxu0 0.0
      %1218 = vmatpush1.msra.mxu0 0.0
      %1219 = vmatprep.subr.mxu0 0.0
      %1220 = vmatpush1.msra.mxu0 0.0
      %1221 = vmatprep.subr.mxu0 0.0
      %1222 = vmatpush1.msra.mxu0 0.0
      %1223 = vmatprep.subr.mxu0 0.0
      %1224 = vmatpush1.msra.mxu0 %v334
      %1225 = vmatprep.subr.mxu0 0.0
      %1226 = vmatpush1.msra.mxu0 %v333
      %1227 = vmatprep.subr.mxu0 0.0
      %1228 = vmatpush1.msra.mxu0 %v332
      %1229 = vmatprep.subr.mxu0 0.0
      %1230 = vmatpush1.msra.mxu0 %v331
      %1231 = vmatprep.subr.mxu0 0.0
      %1232 = vmatpush2.msra.mxu0 0.0
      %1233 = vmatprep.subr.mxu0 0.0
      %1234 = vmatpush2.msra.mxu0 0.0
      %1235 = vmatprep.subr.mxu0 0.0
      %1236 = vmatpush2.msra.mxu0 0.0
      %1237 = vmatprep.subr.mxu0 0.0
      %1238 = vmatpush2.msra.mxu0 0.0
      %1239 = vmatprep.subr.mxu0 0.0
      %1240 = vmatpush2.msra.mxu0 0.0
      %1241 = vmatprep.subr.mxu0 0.0
      %1242 = vmatpush2.msra.mxu0 0.0
      %1243 = vmatprep.subr.mxu0 0.0
      %1244 = vmatpush2.msra.mxu0 0.0
      %1245 = vmatprep.subr.mxu0 0.0
      %1246 = vmatpush2.msra.mxu0 0.0
      %1247 = vmatprep.subr.mxu0 0.0
      %1248 = vmatpush2.msra.mxu0 0.0
      %1249 = vmatprep.subr.mxu0 0.0
      %1250 = vmatpush2.msra.mxu0 0.0
      %1251 = vmatprep.subr.mxu0 0.0
      %1252 = vmatpush2.msra.mxu0 0.0
      %1253 = vmatprep.subr.mxu0 0.0
      %1254 = vmatpush2.msra.mxu0 0.0
      %1255 = vmatprep.subr.mxu0 0.0
      %1256 = vmatpush2.msra.mxu0 0.0
      %1257 = vmatprep.subr.mxu0 0.0
      %1258 = vmatpush2.msra.mxu0 0.0
      %1259 = vmatprep.subr.mxu0 0.0
      %1260 = vmatpush2.msra.mxu0 0.0
      %1261 = vmatprep.subr.mxu0 0.0
      %1262 = vmatpush2.msra.mxu0 0.0
      %1263 = vmatprep.mubr.f32.mxu0 0.0
      %1264 = vmatmul.mubr.f32.gmra.mxu0 %v1197
      %v1265 = vpop.f32.mrf.mxu0
      %v1266 = vadd.f32 %v459, %v1265
      %v1267 = vpop.f32.mrf.mxu0
      %1268 = vdwg.mxu0
      %v1269 = vadd.f32 %v1196, %v1266
      %v1270 = vxor.u32 %v1269, 2147483648
      %v1271 = vmul.f32 %v1270, 1.442695
      %v1272 = vpow.pop %v1271
      %v1273 = vadd.f32 %v1272, 1.0
      %v1274 = vrcp.pop %v1273
      %v1275 = vmul.f32 1.0, %v1274
      %1277 = vrot.lane.b32.xlu0 %v1266, 64
      %v1278 = vpop.permute.xlu0 %1277
      %v1280 = vmul.f32 %v1275, %v1278
      %1282 = vrot.lane.b32.xlu0 %v1280, 64
      %v1283 = vpop.permute.xlu0 %1282
      %v1285 = vadd.f32 %v1196, %v1283
      %v1286 = vtanh.pop %v1285
      %v1287 = vsub.f32 1.0, %v1275
      %1289 = vrot.lane.b32.xlu0 %v1286, 96
      %v1290 = vpop.permute.xlu0 %1289
      %v1292 = vmul.f32 %v1287, %v1290
      %v1293 = vmul.f32 %v1275, %v1189
      %v1294 = vadd.f32 %v1292, %v1293
      %1296 = vrot.lane.b32.xlu0 %v1294, 96
      %v1297 = vpop.permute.xlu0 %1296
      %s1299 = scalar_lea.vmem %s326, 14
      %1300 = vst.msk [vmem:[%s1299] sm:$0x3] %vm564, %v1297
      %v1301 = vld [vmem:[#allocation2 + $0x10] sm:$0x3]
      %v1302 = vsel %vm351, %v1297, 0
      %1304 = vmatprep.subr.mxu0 0.0
      %1305 = vmatpush1.msra.mxu0 0.0
      %1306 = vmatprep.subr.mxu0 0.0
      %1307 = vmatpush1.msra.mxu0 0.0
      %1308 = vmatprep.subr.mxu0 0.0
      %1309 = vmatpush1.msra.mxu0 0.0
      %1310 = vmatprep.subr.mxu0 0.0
      %1311 = vmatpush1.msra.mxu0 0.0
      %1312 = vmatprep.subr.mxu0 0.0
      %1313 = vmatpush1.msra.mxu0 0.0
      %1314 = vmatprep.subr.mxu0 0.0
      %1315 = vmatpush1.msra.mxu0 0.0
      %1316 = vmatprep.subr.mxu0 0.0
      %1317 = vmatpush1.msra.mxu0 0.0
      %1318 = vmatprep.subr.mxu0 0.0
      %1319 = vmatpush1.msra.mxu0 0.0
      %1320 = vmatprep.subr.mxu0 0.0
      %1321 = vmatpush1.msra.mxu0 0.0
      %1322 = vmatprep.subr.mxu0 0.0
      %1323 = vmatpush1.msra.mxu0 0.0
      %1324 = vmatprep.subr.mxu0 0.0
      %1325 = vmatpush1.msra.mxu0 0.0
      %1326 = vmatprep.subr.mxu0 0.0
      %1327 = vmatpush1.msra.mxu0 0.0
      %1328 = vmatprep.subr.mxu0 0.0
      %1329 = vmatpush1.msra.mxu0 %v334
      %1330 = vmatprep.subr.mxu0 0.0
      %1331 = vmatpush1.msra.mxu0 %v333
      %1332 = vmatprep.subr.mxu0 0.0
      %1333 = vmatpush1.msra.mxu0 %v332
      %1334 = vmatprep.subr.mxu0 0.0
      %1335 = vmatpush1.msra.mxu0 %v331
      %1336 = vmatprep.subr.mxu0 0.0
      %1337 = vmatpush2.msra.mxu0 0.0
      %1338 = vmatprep.subr.mxu0 0.0
      %1339 = vmatpush2.msra.mxu0 0.0
      %1340 = vmatprep.subr.mxu0 0.0
      %1341 = vmatpush2.msra.mxu0 0.0
      %1342 = vmatprep.subr.mxu0 0.0
      %1343 = vmatpush2.msra.mxu0 0.0
      %1344 = vmatprep.subr.mxu0 0.0
      %1345 = vmatpush2.msra.mxu0 0.0
      %1346 = vmatprep.subr.mxu0 0.0
      %1347 = vmatpush2.msra.mxu0 0.0
      %1348 = vmatprep.subr.mxu0 0.0
      %1349 = vmatpush2.msra.mxu0 0.0
      %1350 = vmatprep.subr.mxu0 0.0
      %1351 = vmatpush2.msra.mxu0 0.0
      %1352 = vmatprep.subr.mxu0 0.0
      %1353 = vmatpush2.msra.mxu0 0.0
      %1354 = vmatprep.subr.mxu0 0.0
      %1355 = vmatpush2.msra.mxu0 0.0
      %1356 = vmatprep.subr.mxu0 0.0
      %1357 = vmatpush2.msra.mxu0 0.0
      %1358 = vmatprep.subr.mxu0 0.0
      %1359 = vmatpush2.msra.mxu0 0.0
      %1360 = vmatprep.subr.mxu0 0.0
      %1361 = vmatpush2.msra.mxu0 0.0
      %1362 = vmatprep.subr.mxu0 0.0
      %1363 = vmatpush2.msra.mxu0 0.0
      %1364 = vmatprep.subr.mxu0 0.0
      %1365 = vmatpush2.msra.mxu0 0.0
      %1366 = vmatprep.subr.mxu0 0.0
      %1367 = vmatpush2.msra.mxu0 0.0
      %1368 = vmatprep.mubr.f32.mxu0 0.0
      %1369 = vmatmul.mubr.f32.gmra.mxu0 %v1302
      %v1370 = vpop.f32.mrf.mxu0
      %v1371 = vadd.f32 %v459, %v1370
      %v1372 = vpop.f32.mrf.mxu0
      %1373 = vdwg.mxu0
      %v1374 = vadd.f32 %v1301, %v1371
      %v1375 = vxor.u32 %v1374, 2147483648
      %v1376 = vmul.f32 %v1375, 1.442695
      %v1377 = vpow.pop %v1376
      %v1378 = vadd.f32 %v1377, 1.0
      %v1379 = vrcp.pop %v1378
      %v1380 = vmul.f32 1.0, %v1379
      %1382 = vrot.lane.b32.xlu0 %v1371, 64
      %v1383 = vpop.permute.xlu0 %1382
      %v1385 = vmul.f32 %v1380, %v1383
      %1387 = vrot.lane.b32.xlu0 %v1385, 64
      %v1388 = vpop.permute.xlu0 %1387
      %v1390 = vadd.f32 %v1301, %v1388
      %v1391 = vtanh.pop %v1390
      %v1392 = vsub.f32 1.0, %v1380
      %1394 = vrot.lane.b32.xlu0 %v1391, 96
      %v1395 = vpop.permute.xlu0 %1394
      %v1397 = vmul.f32 %v1392, %v1395
      %v1398 = vmul.f32 %v1380, %v1294
      %v1399 = vadd.f32 %v1397, %v1398
      %1401 = vrot.lane.b32.xlu0 %v1399, 96
      %v1402 = vpop.permute.xlu0 %1401
      %s1404 = scalar_lea.vmem %s326, 16
      %1405 = vst.msk [vmem:[%s1404] sm:$0x3] %vm564, %v1402
      %v1406 = vld [vmem:[#allocation2 + $0x12] sm:$0x3]
      %v1407 = vsel %vm351, %v1402, 0
      %1409 = vmatprep.subr.mxu0 0.0
      %1410 = vmatpush1.msra.mxu0 0.0
      %1411 = vmatprep.subr.mxu0 0.0
      %1412 = vmatpush1.msra.mxu0 0.0
      %1413 = vmatprep.subr.mxu0 0.0
      %1414 = vmatpush1.msra.mxu0 0.0
      %1415 = vmatprep.subr.mxu0 0.0
      %1416 = vmatpush1.msra.mxu0 0.0
      %1417 = vmatprep.subr.mxu0 0.0
      %1418 = vmatpush1.msra.mxu0 0.0
      %1419 = vmatprep.subr.mxu0 0.0
      %1420 = vmatpush1.msra.mxu0 0.0
      %1421 = vmatprep.subr.mxu0 0.0
      %1422 = vmatpush1.msra.mxu0 0.0
      %1423 = vmatprep.subr.mxu0 0.0
      %1424 = vmatpush1.msra.mxu0 0.0
      %1425 = vmatprep.subr.mxu0 0.0
      %1426 = vmatpush1.msra.mxu0 0.0
      %1427 = vmatprep.subr.mxu0 0.0
      %1428 = vmatpush1.msra.mxu0 0.0
      %1429 = vmatprep.subr.mxu0 0.0
      %1430 = vmatpush1.msra.mxu0 0.0
      %1431 = vmatprep.subr.mxu0 0.0
      %1432 = vmatpush1.msra.mxu0 0.0
      %1433 = vmatprep.subr.mxu0 0.0
      %1434 = vmatpush1.msra.mxu0 %v334
      %1435 = vmatprep.subr.mxu0 0.0
      %1436 = vmatpush1.msra.mxu0 %v333
      %1437 = vmatprep.subr.mxu0 0.0
      %1438 = vmatpush1.msra.mxu0 %v332
      %1439 = vmatprep.subr.mxu0 0.0
      %1440 = vmatpush1.msra.mxu0 %v331
      %1441 = vmatprep.subr.mxu0 0.0
      %1442 = vmatpush2.msra.mxu0 0.0
      %1443 = vmatprep.subr.mxu0 0.0
      %1444 = vmatpush2.msra.mxu0 0.0
      %1445 = vmatprep.subr.mxu0 0.0
      %1446 = vmatpush2.msra.mxu0 0.0
      %1447 = vmatprep.subr.mxu0 0.0
      %1448 = vmatpush2.msra.mxu0 0.0
      %1449 = vmatprep.subr.mxu0 0.0
      %1450 = vmatpush2.msra.mxu0 0.0
      %1451 = vmatprep.subr.mxu0 0.0
      %1452 = vmatpush2.msra.mxu0 0.0
      %1453 = vmatprep.subr.mxu0 0.0
      %1454 = vmatpush2.msra.mxu0 0.0
      %1455 = vmatprep.subr.mxu0 0.0
      %1456 = vmatpush2.msra.mxu0 0.0
      %1457 = vmatprep.subr.mxu0 0.0
      %1458 = vmatpush2.msra.mxu0 0.0
      %1459 = vmatprep.subr.mxu0 0.0
      %1460 = vmatpush2.msra.mxu0 0.0
      %1461 = vmatprep.subr.mxu0 0.0
      %1462 = vmatpush2.msra.mxu0 0.0
      %1463 = vmatprep.subr.mxu0 0.0
      %1464 = vmatpush2.msra.mxu0 0.0
      %1465 = vmatprep.subr.mxu0 0.0
      %1466 = vmatpush2.msra.mxu0 0.0
      %1467 = vmatprep.subr.mxu0 0.0
      %1468 = vmatpush2.msra.mxu0 0.0
      %1469 = vmatprep.subr.mxu0 0.0
      %1470 = vmatpush2.msra.mxu0 0.0
      %1471 = vmatprep.subr.mxu0 0.0
      %1472 = vmatpush2.msra.mxu0 0.0
      %1473 = vmatprep.mubr.f32.mxu0 0.0
      %1474 = vmatmul.mubr.f32.gmra.mxu0 %v1407
      %v1475 = vpop.f32.mrf.mxu0
      %v1476 = vadd.f32 %v459, %v1475
      %v1477 = vpop.f32.mrf.mxu0
      %1478 = vdwg.mxu0
      %v1479 = vadd.f32 %v1406, %v1476
      %v1480 = vxor.u32 %v1479, 2147483648
      %v1481 = vmul.f32 %v1480, 1.442695
      %v1482 = vpow.pop %v1481
      %v1483 = vadd.f32 %v1482, 1.0
      %v1484 = vrcp.pop %v1483
      %v1485 = vmul.f32 1.0, %v1484
      %1487 = vrot.lane.b32.xlu0 %v1476, 64
      %v1488 = vpop.permute.xlu0 %1487
      %v1490 = vmul.f32 %v1485, %v1488
      %1492 = vrot.lane.b32.xlu0 %v1490, 64
      %v1493 = vpop.permute.xlu0 %1492
      %v1495 = vadd.f32 %v1406, %v1493
      %v1496 = vtanh.pop %v1495
      %v1497 = vsub.f32 1.0, %v1485
      %1499 = vrot.lane.b32.xlu0 %v1496, 96
      %v1500 = vpop.permute.xlu0 %1499
      %v1502 = vmul.f32 %v1497, %v1500
      %v1503 = vmul.f32 %v1485, %v1399
      %v1504 = vadd.f32 %v1502, %v1503
      %1506 = vrot.lane.b32.xlu0 %v1504, 96
      %v1507 = vpop.permute.xlu0 %1506
      %s1509 = scalar_lea.vmem %s326, 18
      %1510 = vst.msk [vmem:[%s1509] sm:$0x3] %vm564, %v1507
      %v1511 = vld [vmem:[#allocation2 + $0x14] sm:$0x3]
      %v1512 = vsel %vm351, %v1507, 0
      %1514 = vmatprep.subr.mxu0 0.0
      %1515 = vmatpush1.msra.mxu0 0.0
      %1516 = vmatprep.subr.mxu0 0.0
      %1517 = vmatpush1.msra.mxu0 0.0
      %1518 = vmatprep.subr.mxu0 0.0
      %1519 = vmatpush1.msra.mxu0 0.0
      %1520 = vmatprep.subr.mxu0 0.0
      %1521 = vmatpush1.msra.mxu0 0.0
      %1522 = vmatprep.subr.mxu0 0.0
      %1523 = vmatpush1.msra.mxu0 0.0
      %1524 = vmatprep.subr.mxu0 0.0
      %1525 = vmatpush1.msra.mxu0 0.0
      %1526 = vmatprep.subr.mxu0 0.0
      %1527 = vmatpush1.msra.mxu0 0.0
      %1528 = vmatprep.subr.mxu0 0.0
      %1529 = vmatpush1.msra.mxu0 0.0
      %1530 = vmatprep.subr.mxu0 0.0
      %1531 = vmatpush1.msra.mxu0 0.0
      %1532 = vmatprep.subr.mxu0 0.0
      %1533 = vmatpush1.msra.mxu0 0.0
      %1534 = vmatprep.subr.mxu0 0.0
      %1535 = vmatpush1.msra.mxu0 0.0
      %1536 = vmatprep.subr.mxu0 0.0
      %1537 = vmatpush1.msra.mxu0 0.0
      %1538 = vmatprep.subr.mxu0 0.0
      %1539 = vmatpush1.msra.mxu0 %v334
      %1540 = vmatprep.subr.mxu0 0.0
      %1541 = vmatpush1.msra.mxu0 %v333
      %1542 = vmatprep.subr.mxu0 0.0
      %1543 = vmatpush1.msra.mxu0 %v332
      %1544 = vmatprep.subr.mxu0 0.0
      %1545 = vmatpush1.msra.mxu0 %v331
      %1546 = vmatprep.subr.mxu0 0.0
      %1547 = vmatpush2.msra.mxu0 0.0
      %1548 = vmatprep.subr.mxu0 0.0
      %1549 = vmatpush2.msra.mxu0 0.0
      %1550 = vmatprep.subr.mxu0 0.0
      %1551 = vmatpush2.msra.mxu0 0.0
      %1552 = vmatprep.subr.mxu0 0.0
      %1553 = vmatpush2.msra.mxu0 0.0
      %1554 = vmatprep.subr.mxu0 0.0
      %1555 = vmatpush2.msra.mxu0 0.0
      %1556 = vmatprep.subr.mxu0 0.0
      %1557 = vmatpush2.msra.mxu0 0.0
      %1558 = vmatprep.subr.mxu0 0.0
      %1559 = vmatpush2.msra.mxu0 0.0
      %1560 = vmatprep.subr.mxu0 0.0
      %1561 = vmatpush2.msra.mxu0 0.0
      %1562 = vmatprep.subr.mxu0 0.0
      %1563 = vmatpush2.msra.mxu0 0.0
      %1564 = vmatprep.subr.mxu0 0.0
      %1565 = vmatpush2.msra.mxu0 0.0
      %1566 = vmatprep.subr.mxu0 0.0
      %1567 = vmatpush2.msra.mxu0 0.0
      %1568 = vmatprep.subr.mxu0 0.0
      %1569 = vmatpush2.msra.mxu0 0.0
      %1570 = vmatprep.subr.mxu0 0.0
      %1571 = vmatpush2.msra.mxu0 0.0
      %1572 = vmatprep.subr.mxu0 0.0
      %1573 = vmatpush2.msra.mxu0 0.0
      %1574 = vmatprep.subr.mxu0 0.0
      %1575 = vmatpush2.msra.mxu0 0.0
      %1576 = vmatprep.subr.mxu0 0.0
      %1577 = vmatpush2.msra.mxu0 0.0
      %1578 = vmatprep.mubr.f32.mxu0 0.0
      %1579 = vmatmul.mubr.f32.gmra.mxu0 %v1512
      %v1580 = vpop.f32.mrf.mxu0
      %v1581 = vadd.f32 %v459, %v1580
      %v1582 = vpop.f32.mrf.mxu0
      %1583 = vdwg.mxu0
      %v1584 = vadd.f32 %v1511, %v1581
      %v1585 = vxor.u32 %v1584, 2147483648
      %v1586 = vmul.f32 %v1585, 1.442695
      %v1587 = vpow.pop %v1586
      %v1588 = vadd.f32 %v1587, 1.0
      %v1589 = vrcp.pop %v1588
      %v1590 = vmul.f32 1.0, %v1589
      %1592 = vrot.lane.b32.xlu0 %v1581, 64
      %v1593 = vpop.permute.xlu0 %1592
      %v1595 = vmul.f32 %v1590, %v1593
      %1597 = vrot.lane.b32.xlu0 %v1595, 64
      %v1598 = vpop.permute.xlu0 %1597
      %v1600 = vadd.f32 %v1511, %v1598
      %v1601 = vtanh.pop %v1600
      %v1602 = vsub.f32 1.0, %v1590
      %1604 = vrot.lane.b32.xlu0 %v1601, 96
      %v1605 = vpop.permute.xlu0 %1604
      %v1607 = vmul.f32 %v1602, %v1605
      %v1608 = vmul.f32 %v1590, %v1504
      %v1609 = vadd.f32 %v1607, %v1608
      %1611 = vrot.lane.b32.xlu0 %v1609, 96
      %v1612 = vpop.permute.xlu0 %1611
      %s1614 = scalar_lea.vmem %s326, 20
      %1615 = vst.msk [vmem:[%s1614] sm:$0x3] %vm564, %v1612
      %v1616 = vld [vmem:[#allocation2 + $0x16] sm:$0x3]
      %v1617 = vsel %vm351, %v1612, 0
      %1619 = vmatprep.subr.mxu0 0.0
      %1620 = vmatpush1.msra.mxu0 0.0
      %1621 = vmatprep.subr.mxu0 0.0
      %1622 = vmatpush1.msra.mxu0 0.0
      %1623 = vmatprep.subr.mxu0 0.0
      %1624 = vmatpush1.msra.mxu0 0.0
      %1625 = vmatprep.subr.mxu0 0.0
      %1626 = vmatpush1.msra.mxu0 0.0
      %1627 = vmatprep.subr.mxu0 0.0
      %1628 = vmatpush1.msra.mxu0 0.0
      %1629 = vmatprep.subr.mxu0 0.0
      %1630 = vmatpush1.msra.mxu0 0.0
      %1631 = vmatprep.subr.mxu0 0.0
      %1632 = vmatpush1.msra.mxu0 0.0
      %1633 = vmatprep.subr.mxu0 0.0
      %1634 = vmatpush1.msra.mxu0 0.0
      %1635 = vmatprep.subr.mxu0 0.0
      %1636 = vmatpush1.msra.mxu0 0.0
      %1637 = vmatprep.subr.mxu0 0.0
      %1638 = vmatpush1.msra.mxu0 0.0
      %1639 = vmatprep.subr.mxu0 0.0
      %1640 = vmatpush1.msra.mxu0 0.0
      %1641 = vmatprep.subr.mxu0 0.0
      %1642 = vmatpush1.msra.mxu0 0.0
      %1643 = vmatprep.subr.mxu0 0.0
      %1644 = vmatpush1.msra.mxu0 %v334
      %1645 = vmatprep.subr.mxu0 0.0
      %1646 = vmatpush1.msra.mxu0 %v333
      %1647 = vmatprep.subr.mxu0 0.0
      %1648 = vmatpush1.msra.mxu0 %v332
      %1649 = vmatprep.subr.mxu0 0.0
      %1650 = vmatpush1.msra.mxu0 %v331
      %1651 = vmatprep.subr.mxu0 0.0
      %1652 = vmatpush2.msra.mxu0 0.0
      %1653 = vmatprep.subr.mxu0 0.0
      %1654 = vmatpush2.msra.mxu0 0.0
      %1655 = vmatprep.subr.mxu0 0.0
      %1656 = vmatpush2.msra.mxu0 0.0
      %1657 = vmatprep.subr.mxu0 0.0
      %1658 = vmatpush2.msra.mxu0 0.0
      %1659 = vmatprep.subr.mxu0 0.0
      %1660 = vmatpush2.msra.mxu0 0.0
      %1661 = vmatprep.subr.mxu0 0.0
      %1662 = vmatpush2.msra.mxu0 0.0
      %1663 = vmatprep.subr.mxu0 0.0
      %1664 = vmatpush2.msra.mxu0 0.0
      %1665 = vmatprep.subr.mxu0 0.0
      %1666 = vmatpush2.msra.mxu0 0.0
      %1667 = vmatprep.subr.mxu0 0.0
      %1668 = vmatpush2.msra.mxu0 0.0
      %1669 = vmatprep.subr.mxu0 0.0
      %1670 = vmatpush2.msra.mxu0 0.0
      %1671 = vmatprep.subr.mxu0 0.0
      %1672 = vmatpush2.msra.mxu0 0.0
      %1673 = vmatprep.subr.mxu0 0.0
      %1674 = vmatpush2.msra.mxu0 0.0
      %1675 = vmatprep.subr.mxu0 0.0
      %1676 = vmatpush2.msra.mxu0 0.0
      %1677 = vmatprep.subr.mxu0 0.0
      %1678 = vmatpush2.msra.mxu0 0.0
      %1679 = vmatprep.subr.mxu0 0.0
      %1680 = vmatpush2.msra.mxu0 0.0
      %1681 = vmatprep.subr.mxu0 0.0
      %1682 = vmatpush2.msra.mxu0 0.0
      %1683 = vmatprep.mubr.f32.mxu0 0.0
      %1684 = vmatmul.mubr.f32.gmra.mxu0 %v1617
      %v1685 = vpop.f32.mrf.mxu0
      %v1686 = vadd.f32 %v459, %v1685
      %v1687 = vpop.f32.mrf.mxu0
      %1688 = vdwg.mxu0
      %v1689 = vadd.f32 %v1616, %v1686
      %v1690 = vxor.u32 %v1689, 2147483648
      %v1691 = vmul.f32 %v1690, 1.442695
      %v1692 = vpow.pop %v1691
      %v1693 = vadd.f32 %v1692, 1.0
      %v1694 = vrcp.pop %v1693
      %v1695 = vmul.f32 1.0, %v1694
      %1697 = vrot.lane.b32.xlu0 %v1686, 64
      %v1698 = vpop.permute.xlu0 %1697
      %v1700 = vmul.f32 %v1695, %v1698
      %1702 = vrot.lane.b32.xlu0 %v1700, 64
      %v1703 = vpop.permute.xlu0 %1702
      %v1705 = vadd.f32 %v1616, %v1703
      %v1706 = vtanh.pop %v1705
      %v1707 = vsub.f32 1.0, %v1695
      %1709 = vrot.lane.b32.xlu0 %v1706, 96
      %v1710 = vpop.permute.xlu0 %1709
      %v1712 = vmul.f32 %v1707, %v1710
      %v1713 = vmul.f32 %v1695, %v1609
      %v1714 = vadd.f32 %v1712, %v1713
      %1716 = vrot.lane.b32.xlu0 %v1714, 96
      %v1717 = vpop.permute.xlu0 %1716
      %s1719 = scalar_lea.vmem %s326, 22
      %1720 = vst.msk [vmem:[%s1719] sm:$0x3] %vm564, %v1717
      %v1721 = vld [vmem:[#allocation2 + $0x18] sm:$0x3]
      %v1722 = vsel %vm351, %v1717, 0
      %1724 = vmatprep.subr.mxu0 0.0
      %1725 = vmatpush1.msra.mxu0 0.0
      %1726 = vmatprep.subr.mxu0 0.0
      %1727 = vmatpush1.msra.mxu0 0.0
      %1728 = vmatprep.subr.mxu0 0.0
      %1729 = vmatpush1.msra.mxu0 0.0
      %1730 = vmatprep.subr.mxu0 0.0
      %1731 = vmatpush1.msra.mxu0 0.0
      %1732 = vmatprep.subr.mxu0 0.0
      %1733 = vmatpush1.msra.mxu0 0.0
      %1734 = vmatprep.subr.mxu0 0.0
      %1735 = vmatpush1.msra.mxu0 0.0
      %1736 = vmatprep.subr.mxu0 0.0
      %1737 = vmatpush1.msra.mxu0 0.0
      %1738 = vmatprep.subr.mxu0 0.0
      %1739 = vmatpush1.msra.mxu0 0.0
      %1740 = vmatprep.subr.mxu0 0.0
      %1741 = vmatpush1.msra.mxu0 0.0
      %1742 = vmatprep.subr.mxu0 0.0
      %1743 = vmatpush1.msra.mxu0 0.0
      %1744 = vmatprep.subr.mxu0 0.0
      %1745 = vmatpush1.msra.mxu0 0.0
      %1746 = vmatprep.subr.mxu0 0.0
      %1747 = vmatpush1.msra.mxu0 0.0
      %1748 = vmatprep.subr.mxu0 0.0
      %1749 = vmatpush1.msra.mxu0 %v334
      %1750 = vmatprep.subr.mxu0 0.0
      %1751 = vmatpush1.msra.mxu0 %v333
      %1752 = vmatprep.subr.mxu0 0.0
      %1753 = vmatpush1.msra.mxu0 %v332
      %1754 = vmatprep.subr.mxu0 0.0
      %1755 = vmatpush1.msra.mxu0 %v331
      %1756 = vmatprep.subr.mxu0 0.0
      %1757 = vmatpush2.msra.mxu0 0.0
      %1758 = vmatprep.subr.mxu0 0.0
      %1759 = vmatpush2.msra.mxu0 0.0
      %1760 = vmatprep.subr.mxu0 0.0
      %1761 = vmatpush2.msra.mxu0 0.0
      %1762 = vmatprep.subr.mxu0 0.0
      %1763 = vmatpush2.msra.mxu0 0.0
      %1764 = vmatprep.subr.mxu0 0.0
      %1765 = vmatpush2.msra.mxu0 0.0
      %1766 = vmatprep.subr.mxu0 0.0
      %1767 = vmatpush2.msra.mxu0 0.0
      %1768 = vmatprep.subr.mxu0 0.0
      %1769 = vmatpush2.msra.mxu0 0.0
      %1770 = vmatprep.subr.mxu0 0.0
      %1771 = vmatpush2.msra.mxu0 0.0
      %1772 = vmatprep.subr.mxu0 0.0
      %1773 = vmatpush2.msra.mxu0 0.0
      %1774 = vmatprep.subr.mxu0 0.0
      %1775 = vmatpush2.msra.mxu0 0.0
      %1776 = vmatprep.subr.mxu0 0.0
      %1777 = vmatpush2.msra.mxu0 0.0
      %1778 = vmatprep.subr.mxu0 0.0
      %1779 = vmatpush2.msra.mxu0 0.0
      %1780 = vmatprep.subr.mxu0 0.0
      %1781 = vmatpush2.msra.mxu0 0.0
      %1782 = vmatprep.subr.mxu0 0.0
      %1783 = vmatpush2.msra.mxu0 0.0
      %1784 = vmatprep.subr.mxu0 0.0
      %1785 = vmatpush2.msra.mxu0 0.0
      %1786 = vmatprep.subr.mxu0 0.0
      %1787 = vmatpush2.msra.mxu0 0.0
      %1788 = vmatprep.mubr.f32.mxu0 0.0
      %1789 = vmatmul.mubr.f32.gmra.mxu0 %v1722
      %v1790 = vpop.f32.mrf.mxu0
      %v1791 = vadd.f32 %v459, %v1790
      %v1792 = vpop.f32.mrf.mxu0
      %1793 = vdwg.mxu0
      %v1794 = vadd.f32 %v1721, %v1791
      %v1795 = vxor.u32 %v1794, 2147483648
      %v1796 = vmul.f32 %v1795, 1.442695
      %v1797 = vpow.pop %v1796
      %v1798 = vadd.f32 %v1797, 1.0
      %v1799 = vrcp.pop %v1798
      %v1800 = vmul.f32 1.0, %v1799
      %1802 = vrot.lane.b32.xlu0 %v1791, 64
      %v1803 = vpop.permute.xlu0 %1802
      %v1805 = vmul.f32 %v1800, %v1803
      %1807 = vrot.lane.b32.xlu0 %v1805, 64
      %v1808 = vpop.permute.xlu0 %1807
      %v1810 = vadd.f32 %v1721, %v1808
      %v1811 = vtanh.pop %v1810
      %v1812 = vsub.f32 1.0, %v1800
      %1814 = vrot.lane.b32.xlu0 %v1811, 96
      %v1815 = vpop.permute.xlu0 %1814
      %v1817 = vmul.f32 %v1812, %v1815
      %v1818 = vmul.f32 %v1800, %v1714
      %v1819 = vadd.f32 %v1817, %v1818
      %1821 = vrot.lane.b32.xlu0 %v1819, 96
      %v1822 = vpop.permute.xlu0 %1821
      %s1824 = scalar_lea.vmem %s326, 24
      %1825 = vst.msk [vmem:[%s1824] sm:$0x3] %vm564, %v1822
      %v1826 = vld [vmem:[#allocation2 + $0x1a] sm:$0x3]
      %v1827 = vsel %vm351, %v1822, 0
      %1829 = vmatprep.subr.mxu0 0.0
      %1830 = vmatpush1.msra.mxu0 0.0
      %1831 = vmatprep.subr.mxu0 0.0
      %1832 = vmatpush1.msra.mxu0 0.0
      %1833 = vmatprep.subr.mxu0 0.0
      %1834 = vmatpush1.msra.mxu0 0.0
      %1835 = vmatprep.subr.mxu0 0.0
      %1836 = vmatpush1.msra.mxu0 0.0
      %1837 = vmatprep.subr.mxu0 0.0
      %1838 = vmatpush1.msra.mxu0 0.0
      %1839 = vmatprep.subr.mxu0 0.0
      %1840 = vmatpush1.msra.mxu0 0.0
      %1841 = vmatprep.subr.mxu0 0.0
      %1842 = vmatpush1.msra.mxu0 0.0
      %1843 = vmatprep.subr.mxu0 0.0
      %1844 = vmatpush1.msra.mxu0 0.0
      %1845 = vmatprep.subr.mxu0 0.0
      %1846 = vmatpush1.msra.mxu0 0.0
      %1847 = vmatprep.subr.mxu0 0.0
      %1848 = vmatpush1.msra.mxu0 0.0
      %1849 = vmatprep.subr.mxu0 0.0
      %1850 = vmatpush1.msra.mxu0 0.0
      %1851 = vmatprep.subr.mxu0 0.0
      %1852 = vmatpush1.msra.mxu0 0.0
      %1853 = vmatprep.subr.mxu0 0.0
      %1854 = vmatpush1.msra.mxu0 %v334
      %1855 = vmatprep.subr.mxu0 0.0
      %1856 = vmatpush1.msra.mxu0 %v333
      %1857 = vmatprep.subr.mxu0 0.0
      %1858 = vmatpush1.msra.mxu0 %v332
      %1859 = vmatprep.subr.mxu0 0.0
      %1860 = vmatpush1.msra.mxu0 %v331
      %1861 = vmatprep.subr.mxu0 0.0
      %1862 = vmatpush2.msra.mxu0 0.0
      %1863 = vmatprep.subr.mxu0 0.0
      %1864 = vmatpush2.msra.mxu0 0.0
      %1865 = vmatprep.subr.mxu0 0.0
      %1866 = vmatpush2.msra.mxu0 0.0
      %1867 = vmatprep.subr.mxu0 0.0
      %1868 = vmatpush2.msra.mxu0 0.0
      %1869 = vmatprep.subr.mxu0 0.0
      %1870 = vmatpush2.msra.mxu0 0.0
      %1871 = vmatprep.subr.mxu0 0.0
      %1872 = vmatpush2.msra.mxu0 0.0
      %1873 = vmatprep.subr.mxu0 0.0
      %1874 = vmatpush2.msra.mxu0 0.0
      %1875 = vmatprep.subr.mxu0 0.0
      %1876 = vmatpush2.msra.mxu0 0.0
      %1877 = vmatprep.subr.mxu0 0.0
      %1878 = vmatpush2.msra.mxu0 0.0
      %1879 = vmatprep.subr.mxu0 0.0
      %1880 = vmatpush2.msra.mxu0 0.0
      %1881 = vmatprep.subr.mxu0 0.0
      %1882 = vmatpush2.msra.mxu0 0.0
      %1883 = vmatprep.subr.mxu0 0.0
      %1884 = vmatpush2.msra.mxu0 0.0
      %1885 = vmatprep.subr.mxu0 0.0
      %1886 = vmatpush2.msra.mxu0 0.0
      %1887 = vmatprep.subr.mxu0 0.0
      %1888 = vmatpush2.msra.mxu0 0.0
      %1889 = vmatprep.subr.mxu0 0.0
      %1890 = vmatpush2.msra.mxu0 0.0
      %1891 = vmatprep.subr.mxu0 0.0
      %1892 = vmatpush2.msra.mxu0 0.0
      %1893 = vmatprep.mubr.f32.mxu0 0.0
      %1894 = vmatmul.mubr.f32.gmra.mxu0 %v1827
      %v1895 = vpop.f32.mrf.mxu0
      %v1896 = vadd.f32 %v459, %v1895
      %v1897 = vpop.f32.mrf.mxu0
      %1898 = vdwg.mxu0
      %v1899 = vadd.f32 %v1826, %v1896
      %v1900 = vxor.u32 %v1899, 2147483648
      %v1901 = vmul.f32 %v1900, 1.442695
      %v1902 = vpow.pop %v1901
      %v1903 = vadd.f32 %v1902, 1.0
      %v1904 = vrcp.pop %v1903
      %v1905 = vmul.f32 1.0, %v1904
      %1907 = vrot.lane.b32.xlu0 %v1896, 64
      %v1908 = vpop.permute.xlu0 %1907
      %v1910 = vmul.f32 %v1905, %v1908
      %1912 = vrot.lane.b32.xlu0 %v1910, 64
      %v1913 = vpop.permute.xlu0 %1912
      %v1915 = vadd.f32 %v1826, %v1913
      %v1916 = vtanh.pop %v1915
      %v1917 = vsub.f32 1.0, %v1905
      %1919 = vrot.lane.b32.xlu0 %v1916, 96
      %v1920 = vpop.permute.xlu0 %1919
      %v1922 = vmul.f32 %v1917, %v1920
      %v1923 = vmul.f32 %v1905, %v1819
      %v1924 = vadd.f32 %v1922, %v1923
      %1926 = vrot.lane.b32.xlu0 %v1924, 96
      %v1927 = vpop.permute.xlu0 %1926
      %s1929 = scalar_lea.vmem %s326, 26
      %1930 = vst.msk [vmem:[%s1929] sm:$0x3] %vm564, %v1927
      %v1931 = vld [vmem:[#allocation2 + $0x1c] sm:$0x3]
      %v1932 = vsel %vm351, %v1927, 0
      %1934 = vmatprep.subr.mxu0 0.0
      %1935 = vmatpush1.msra.mxu0 0.0
      %1936 = vmatprep.subr.mxu0 0.0
      %1937 = vmatpush1.msra.mxu0 0.0
      %1938 = vmatprep.subr.mxu0 0.0
      %1939 = vmatpush1.msra.mxu0 0.0
      %1940 = vmatprep.subr.mxu0 0.0
      %1941 = vmatpush1.msra.mxu0 0.0
      %1942 = vmatprep.subr.mxu0 0.0
      %1943 = vmatpush1.msra.mxu0 0.0
      %1944 = vmatprep.subr.mxu0 0.0
      %1945 = vmatpush1.msra.mxu0 0.0
      %1946 = vmatprep.subr.mxu0 0.0
      %1947 = vmatpush1.msra.mxu0 0.0
      %1948 = vmatprep.subr.mxu0 0.0
      %1949 = vmatpush1.msra.mxu0 0.0
      %1950 = vmatprep.subr.mxu0 0.0
      %1951 = vmatpush1.msra.mxu0 0.0
      %1952 = vmatprep.subr.mxu0 0.0
      %1953 = vmatpush1.msra.mxu0 0.0
      %1954 = vmatprep.subr.mxu0 0.0
      %1955 = vmatpush1.msra.mxu0 0.0
      %1956 = vmatprep.subr.mxu0 0.0
      %1957 = vmatpush1.msra.mxu0 0.0
      %1958 = vmatprep.subr.mxu0 0.0
      %1959 = vmatpush1.msra.mxu0 %v334
      %1960 = vmatprep.subr.mxu0 0.0
      %1961 = vmatpush1.msra.mxu0 %v333
      %1962 = vmatprep.subr.mxu0 0.0
      %1963 = vmatpush1.msra.mxu0 %v332
      %1964 = vmatprep.subr.mxu0 0.0
      %1965 = vmatpush1.msra.mxu0 %v331
      %1966 = vmatprep.subr.mxu0 0.0
      %1967 = vmatpush2.msra.mxu0 0.0
      %1968 = vmatprep.subr.mxu0 0.0
      %1969 = vmatpush2.msra.mxu0 0.0
      %1970 = vmatprep.subr.mxu0 0.0
      %1971 = vmatpush2.msra.mxu0 0.0
      %1972 = vmatprep.subr.mxu0 0.0
      %1973 = vmatpush2.msra.mxu0 0.0
      %1974 = vmatprep.subr.mxu0 0.0
      %1975 = vmatpush2.msra.mxu0 0.0
      %1976 = vmatprep.subr.mxu0 0.0
      %1977 = vmatpush2.msra.mxu0 0.0
      %1978 = vmatprep.subr.mxu0 0.0
      %1979 = vmatpush2.msra.mxu0 0.0
      %1980 = vmatprep.subr.mxu0 0.0
      %1981 = vmatpush2.msra.mxu0 0.0
      %1982 = vmatprep.subr.mxu0 0.0
      %1983 = vmatpush2.msra.mxu0 0.0
      %1984 = vmatprep.subr.mxu0 0.0
      %1985 = vmatpush2.msra.mxu0 0.0
      %1986 = vmatprep.subr.mxu0 0.0
      %1987 = vmatpush2.msra.mxu0 0.0
      %1988 = vmatprep.subr.mxu0 0.0
      %1989 = vmatpush2.msra.mxu0 0.0
      %1990 = vmatprep.subr.mxu0 0.0
      %1991 = vmatpush2.msra.mxu0 0.0
      %1992 = vmatprep.subr.mxu0 0.0
      %1993 = vmatpush2.msra.mxu0 0.0
      %1994 = vmatprep.subr.mxu0 0.0
      %1995 = vmatpush2.msra.mxu0 0.0
      %1996 = vmatprep.subr.mxu0 0.0
      %1997 = vmatpush2.msra.mxu0 0.0
      %1998 = vmatprep.mubr.f32.mxu0 0.0
      %1999 = vmatmul.mubr.f32.gmra.mxu0 %v1932
      %v2000 = vpop.f32.mrf.mxu0
      %v2001 = vadd.f32 %v459, %v2000
      %v2002 = vpop.f32.mrf.mxu0
      %2003 = vdwg.mxu0
      %v2004 = vadd.f32 %v1931, %v2001
      %v2005 = vxor.u32 %v2004, 2147483648
      %v2006 = vmul.f32 %v2005, 1.442695
      %v2007 = vpow.pop %v2006
      %v2008 = vadd.f32 %v2007, 1.0
      %v2009 = vrcp.pop %v2008
      %v2010 = vmul.f32 1.0, %v2009
      %2012 = vrot.lane.b32.xlu0 %v2001, 64
      %v2013 = vpop.permute.xlu0 %2012
      %v2015 = vmul.f32 %v2010, %v2013
      %2017 = vrot.lane.b32.xlu0 %v2015, 64
      %v2018 = vpop.permute.xlu0 %2017
      %v2020 = vadd.f32 %v1931, %v2018
      %v2021 = vtanh.pop %v2020
      %v2022 = vsub.f32 1.0, %v2010
      %2024 = vrot.lane.b32.xlu0 %v2021, 96
      %v2025 = vpop.permute.xlu0 %2024
      %v2027 = vmul.f32 %v2022, %v2025
      %v2028 = vmul.f32 %v2010, %v1924
      %v2029 = vadd.f32 %v2027, %v2028
      %2031 = vrot.lane.b32.xlu0 %v2029, 96
      %v2032 = vpop.permute.xlu0 %2031
      %s2034 = scalar_lea.vmem %s326, 28
      %2035 = vst.msk [vmem:[%s2034] sm:$0x3] %vm564, %v2032
      %v2036 = vld [vmem:[#allocation2 + $0x1e] sm:$0x3]
      %v2037 = vsel %vm351, %v2032, 0
      %2039 = vmatprep.subr.mxu0 0.0
      %2040 = vmatpush1.msra.mxu0 0.0
      %2041 = vmatprep.subr.mxu0 0.0
      %2042 = vmatpush1.msra.mxu0 0.0
      %2043 = vmatprep.subr.mxu0 0.0
      %2044 = vmatpush1.msra.mxu0 0.0
      %2045 = vmatprep.subr.mxu0 0.0
      %2046 = vmatpush1.msra.mxu0 0.0
      %2047 = vmatprep.subr.mxu0 0.0
      %2048 = vmatpush1.msra.mxu0 0.0
      %2049 = vmatprep.subr.mxu0 0.0
      %2050 = vmatpush1.msra.mxu0 0.0
      %2051 = vmatprep.subr.mxu0 0.0
      %2052 = vmatpush1.msra.mxu0 0.0
      %2053 = vmatprep.subr.mxu0 0.0
      %2054 = vmatpush1.msra.mxu0 0.0
      %2055 = vmatprep.subr.mxu0 0.0
      %2056 = vmatpush1.msra.mxu0 0.0
      %2057 = vmatprep.subr.mxu0 0.0
      %2058 = vmatpush1.msra.mxu0 0.0
      %2059 = vmatprep.subr.mxu0 0.0
      %2060 = vmatpush1.msra.mxu0 0.0
      %2061 = vmatprep.subr.mxu0 0.0
      %2062 = vmatpush1.msra.mxu0 0.0
      %2063 = vmatprep.subr.mxu0 0.0
      %2064 = vmatpush1.msra.mxu0 %v334
      %2065 = vmatprep.subr.mxu0 0.0
      %2066 = vmatpush1.msra.mxu0 %v333
      %2067 = vmatprep.subr.mxu0 0.0
      %2068 = vmatpush1.msra.mxu0 %v332
      %2069 = vmatprep.subr.mxu0 0.0
      %2070 = vmatpush1.msra.mxu0 %v331
      %2071 = vmatprep.subr.mxu0 0.0
      %2072 = vmatpush2.msra.mxu0 0.0
      %2073 = vmatprep.subr.mxu0 0.0
      %2074 = vmatpush2.msra.mxu0 0.0
      %2075 = vmatprep.subr.mxu0 0.0
      %2076 = vmatpush2.msra.mxu0 0.0
      %2077 = vmatprep.subr.mxu0 0.0
      %2078 = vmatpush2.msra.mxu0 0.0
      %2079 = vmatprep.subr.mxu0 0.0
      %2080 = vmatpush2.msra.mxu0 0.0
      %2081 = vmatprep.subr.mxu0 0.0
      %2082 = vmatpush2.msra.mxu0 0.0
      %2083 = vmatprep.subr.mxu0 0.0
      %2084 = vmatpush2.msra.mxu0 0.0
      %2085 = vmatprep.subr.mxu0 0.0
      %2086 = vmatpush2.msra.mxu0 0.0
      %2087 = vmatprep.subr.mxu0 0.0
      %2088 = vmatpush2.msra.mxu0 0.0
      %2089 = vmatprep.subr.mxu0 0.0
      %2090 = vmatpush2.msra.mxu0 0.0
      %2091 = vmatprep.subr.mxu0 0.0
      %2092 = vmatpush2.msra.mxu0 0.0
      %2093 = vmatprep.subr.mxu0 0.0
      %2094 = vmatpush2.msra.mxu0 0.0
      %2095 = vmatprep.subr.mxu0 0.0
      %2096 = vmatpush2.msra.mxu0 0.0
      %2097 = vmatprep.subr.mxu0 0.0
      %2098 = vmatpush2.msra.mxu0 0.0
      %2099 = vmatprep.subr.mxu0 0.0
      %2100 = vmatpush2.msra.mxu0 0.0
      %2101 = vmatprep.subr.mxu0 0.0
      %2102 = vmatpush2.msra.mxu0 0.0
      %2103 = vmatprep.mubr.f32.mxu0 0.0
      %2104 = vmatmul.mubr.f32.gmra.mxu0 %v2037
      %v2105 = vpop.f32.mrf.mxu0
      %v2106 = vadd.f32 %v459, %v2105
      %v2107 = vpop.f32.mrf.mxu0
      %2108 = vdwg.mxu0
      %v2109 = vadd.f32 %v2036, %v2106
      %v2110 = vxor.u32 %v2109, 2147483648
      %v2111 = vmul.f32 %v2110, 1.442695
      %v2112 = vpow.pop %v2111
      %v2113 = vadd.f32 %v2112, 1.0
      %v2114 = vrcp.pop %v2113
      %v2115 = vmul.f32 1.0, %v2114
      %2117 = vrot.lane.b32.xlu0 %v2106, 64
      %v2118 = vpop.permute.xlu0 %2117
      %v2120 = vmul.f32 %v2115, %v2118
      %2122 = vrot.lane.b32.xlu0 %v2120, 64
      %v2123 = vpop.permute.xlu0 %2122
      %v2125 = vadd.f32 %v2036, %v2123
      %v2126 = vtanh.pop %v2125
      %v2127 = vsub.f32 1.0, %v2115
      %2129 = vrot.lane.b32.xlu0 %v2126, 96
      %v2130 = vpop.permute.xlu0 %2129
      %v2132 = vmul.f32 %v2127, %v2130
      %v2133 = vmul.f32 %v2115, %v2029
      %v2134 = vadd.f32 %v2132, %v2133
      %2136 = vrot.lane.b32.xlu0 %v2134, 96
      %v2137 = vpop.permute.xlu0 %2136
      %s2139 = scalar_lea.vmem %s326, 30
      %2140 = vst.msk [vmem:[%s2139] sm:$0x3] %vm564, %v2137
      %2141 = vst.msk [vmem:[%s330] sm:$0x3] %vm564, %v2137
      %p2142 = scmp.lt.s32.totalorder %s18, 1
      %s2143 = scalar_select %p2142, %s18, 1
      %s2144 = smul.addr %s2143, 16
      %s2145 = smul.addr %s2144, 2
      %s2146 = scalar_lea.vmem %s5, %s2145
      %p2147 = scmp.lt.s32.totalorder %s18, 1
      %s2148 = scalar_select %p2147, %s18, 1
      %s2149 = smul.addr %s2148, 2
      %s2150 = scalar_lea.vmem %s6, %s2149
      // Predicated region
      $region41: #{model_forward.4} parent=39 // pred_check
        %p2151 = pneg %p166
      $region42: #{model_forward.4} parent=39 // pred_check_branch
        %2153 = sbr.rel (%p2151) target = $region44
      $region43: #{model_forward.4} parent=39 // pred_region
        _
      $region44: #{model_forward.4} parent=39 // pred_fallthru
        _
      // Predicated region
      $region45: #{model_forward.4} parent=39 // pred_check
        %p2154 = pneg %p192
      $region46: #{model_forward.4} parent=39 // pred_check_branch
        %2156 = sbr.rel (%p2154) target = $region48
      $region47: #{model_forward.4} parent=39 // pred_region
        _
      $region48: #{model_forward.4} parent=39 // pred_fallthru
        _
    $region40: #{model_forward.4} parent=5 // pred_fallthru
      _
    %p2157 = scmp.le.s32.totalorder 2, %s13
    // Predicated region
    $region49: #{model_forward.4} parent=5 // pred_check
      %p2158 = pneg %p2157
    $region50: #{model_forward.4} parent=5 // pred_check_branch
      %2160 = sbr.rel (%p2158) target = $region52
    $region51: #{model_forward.4} parent=5 // pred_region
      %s2161 = ssub.s32 %s13, 2
      // Predicated region
      $region53: #{model_forward.4} parent=51 // pred_check
        %p2162 = pneg %p172
      $region54: #{model_forward.4} parent=51 // pred_check_branch
        %2164 = sbr.rel (%p2162) target = $region56
      $region55: #{model_forward.4} parent=51 // pred_region
        %p2165 = scmp.lt.s32.totalorder %s19, 1
        %s2166 = scalar_select %p2165, %s19, 1
        %s2167 = smul.addr %s2166, 16
        %s2168 = smul.addr %s2167, 2
        %s2169 = scalar_lea.vmem %s5, %s2168
      $region56: #{model_forward.4} parent=51 // pred_fallthru
        _
      // Predicated region
      $region57: #{model_forward.4} parent=51 // pred_check
        %p2170 = pneg %p198
      $region58: #{model_forward.4} parent=51 // pred_check_branch
        %2172 = sbr.rel (%p2170) target = $region60
      $region59: #{model_forward.4} parent=51 // pred_region
        %p2173 = scmp.lt.s32.totalorder %s19, 1
        %s2174 = scalar_select %p2173, %s19, 1
        %s2175 = smul.addr %s2174, 2
        %s2176 = scalar_lea.vmem %s6, %s2175
      $region60: #{model_forward.4} parent=51 // pred_fallthru
        _
    $region52: #{model_forward.4} parent=5 // pred_fallthru
      _
  $region6: #{model_forward.4} parent=0 // loop_footer
    %s17 = sadd.s32 1, %s13
  $region7: #{model_forward.4} parent=0 // loop_footer_branch
    %12 = sbr.rel target = $region3
  $region8: #{model_forward.4} parent=0 // loop_exit
    _

// kernel: model_forward.5
$region0: #{model_forward.5}
  #allocation0 [shape = 'u32[]', space=smem, size = 0x4, offset = 0x4, fixed_abs, tag = 'smem constant byte address 0x4 - core index']
  #allocation1 [shape = 'u32[144,128]{1,0:T(1,128)}', space=vmem, size = 0x12000, scoped, tag = 'internal scratch']
  #allocation2 [shape = 'f32[2,16,32]{2,1,0:T(8,128)}', space=vmem, size = 0x4000, scoped, tag = 'scratch operand']
  %s0 = inlined_call_operand.vmem [shape: f32[2,4], index: 0, kind: input, shape index: {}]
  %s1 = inlined_call_operand.vmem [shape: f32[2,32], index: 1, kind: input, shape index: {}]
  %s2 = inlined_call_operand.vmem [shape: f32[8,4], index: 2, kind: input, shape index: {}]
  %s3 = inlined_call_operand.vmem [shape: f32[2,16,32], index: 3, kind: input, shape index: {}]
  %s4 = inlined_call_operand.vmem [shape: f32[4,96], index: 4, kind: input, shape index: {}]
  %s5 = inlined_call_operand.vmem [shape: f32[1,96], index: 5, kind: input, shape index: {}]
  %s6 = inlined_call_operand.vmem [shape: f32[4,96], index: 6, kind: input, shape index: {}]
  %s7 = inlined_call_operand.vmem [shape: f32[32,32], index: 7, kind: input, shape index: {}]
  %s8 = inlined_call_operand.vmem [shape: f32[32,32], index: 8, kind: input, shape index: {}]
  %s9 = inlined_call_operand.vmem [shape: f32[1,32], index: 9, kind: input, shape index: {}]
  %s10 = inlined_call_operand.vmem [shape: f32[1,32], index: 10, kind: input, shape index: {}]
  %s11 = inlined_call_operand.vmem [shape: f32[32,96], index: 11, kind: input, shape index: {}]
  %s12 = inlined_call_operand.vmem [shape: f32[32,96], index: 12, kind: input, shape index: {}]
  %s13 = inlined_call_operand.vmem [shape: f32[1,96], index: 13, kind: input, shape index: {}]
  %s14 = inlined_call_operand.vmem [shape: f32[32,4], index: 14, kind: input, shape index: {}]
  %s15 = inlined_call_operand.vmem [shape: f32[32,4], index: 15, kind: input, shape index: {}]
  %s16 = inlined_call_operand.vmem [shape: f32[1,4], index: 16, kind: input, shape index: {}]
  %s17 = inlined_call_operand.vmem [shape: f32[4,2,4], index: 17, kind: output, shape index: {}]
  %s18 = sld [smem:[#allocation0]]
  $region78: #{model_forward.5} parent=0
    _
  %s20 = ssub.s32 1, %s18
  %s21 = scalar_select 0, %s20, %s18
  // Predicated region
  $region2: #{model_forward.5} parent=0 // pred_check
    _
  $region3: #{model_forward.5} parent=0 // pred_check_branch
    %23 = sbr.rel (0) target = $region5
  $region4: #{model_forward.5} parent=0 // pred_region
    _
  $region5: #{model_forward.5} parent=0 // pred_fallthru
    _
  // Predicated region
  $region6: #{model_forward.5} parent=0 // pred_check
    _
  $region7: #{model_forward.5} parent=0 // pred_check_branch
    %25 = sbr.rel (0) target = $region9
  $region8: #{model_forward.5} parent=0 // pred_region
    _
  $region9: #{model_forward.5} parent=0 // pred_fallthru
    _
  // Predicated region
  $region10: #{model_forward.5} parent=0 // pred_check
    _
  $region11: #{model_forward.5} parent=0 // pred_check_branch
    %27 = sbr.rel (0) target = $region13
  $region12: #{model_forward.5} parent=0 // pred_region
    _
  $region13: #{model_forward.5} parent=0 // pred_fallthru
    _
  // Predicated region
  $region14: #{model_forward.5} parent=0 // pred_check
    _
  $region15: #{model_forward.5} parent=0 // pred_check_branch
    %29 = sbr.rel (0) target = $region17
  $region16: #{model_forward.5} parent=0 // pred_region
    _
  $region17: #{model_forward.5} parent=0 // pred_fallthru
    _
  // Predicated region
  $region18: #{model_forward.5} parent=0 // pred_check
    _
  $region19: #{model_forward.5} parent=0 // pred_check_branch
    %31 = sbr.rel (0) target = $region21
  $region20: #{model_forward.5} parent=0 // pred_region
    _
  $region21: #{model_forward.5} parent=0 // pred_fallthru
    _
  // Predicated region
  $region22: #{model_forward.5} parent=0 // pred_check
    _
  $region23: #{model_forward.5} parent=0 // pred_check_branch
    %33 = sbr.rel (0) target = $region25
  $region24: #{model_forward.5} parent=0 // pred_region
    _
  $region25: #{model_forward.5} parent=0 // pred_fallthru
    _
  // Predicated region
  $region26: #{model_forward.5} parent=0 // pred_check
    _
  $region27: #{model_forward.5} parent=0 // pred_check_branch
    %35 = sbr.rel (0) target = $region29
  $region28: #{model_forward.5} parent=0 // pred_region
    _
  $region29: #{model_forward.5} parent=0 // pred_fallthru
    _
  // Predicated region
  $region30: #{model_forward.5} parent=0 // pred_check
    _
  $region31: #{model_forward.5} parent=0 // pred_check_branch
    %37 = sbr.rel (0) target = $region33
  $region32: #{model_forward.5} parent=0 // pred_region
    _
  $region33: #{model_forward.5} parent=0 // pred_fallthru
    _
  // Predicated region
  $region34: #{model_forward.5} parent=0 // pred_check
    _
  $region35: #{model_forward.5} parent=0 // pred_check_branch
    %39 = sbr.rel (0) target = $region37
  $region36: #{model_forward.5} parent=0 // pred_region
    _
  $region37: #{model_forward.5} parent=0 // pred_fallthru
    _
  // Predicated region
  $region38: #{model_forward.5} parent=0 // pred_check
    _
  $region39: #{model_forward.5} parent=0 // pred_check_branch
    %41 = sbr.rel (0) target = $region41
  $region40: #{model_forward.5} parent=0 // pred_region
    _
  $region41: #{model_forward.5} parent=0 // pred_fallthru
    _
  // Predicated region
  $region42: #{model_forward.5} parent=0 // pred_check
    _
  $region43: #{model_forward.5} parent=0 // pred_check_branch
    %43 = sbr.rel (0) target = $region45
  $region44: #{model_forward.5} parent=0 // pred_region
    _
  $region45: #{model_forward.5} parent=0 // pred_fallthru
    _
  // Predicated region
  $region46: #{model_forward.5} parent=0 // pred_check
    _
  $region47: #{model_forward.5} parent=0 // pred_check_branch
    %45 = sbr.rel (0) target = $region49
  $region48: #{model_forward.5} parent=0 // pred_region
    _
  $region49: #{model_forward.5} parent=0 // pred_fallthru
    _
  // Predicated region
  $region50: #{model_forward.5} parent=0 // pred_check
    _
  $region51: #{model_forward.5} parent=0 // pred_check_branch
    %47 = sbr.rel (0) target = $region53
  $region52: #{model_forward.5} parent=0 // pred_region
    _
  $region53: #{model_forward.5} parent=0 // pred_fallthru
    _
  // Predicated region
  $region54: #{model_forward.5} parent=0 // pred_check
    _
  $region55: #{model_forward.5} parent=0 // pred_check_branch
    %49 = sbr.rel (0) target = $region57
  $region56: #{model_forward.5} parent=0 // pred_region
    _
  $region57: #{model_forward.5} parent=0 // pred_fallthru
    _
  // Predicated region
  $region58: #{model_forward.5} parent=0 // pred_check
    _
  $region59: #{model_forward.5} parent=0 // pred_check_branch
    %51 = sbr.rel (0) target = $region61
  $region60: #{model_forward.5} parent=0 // pred_region
    _
  $region61: #{model_forward.5} parent=0 // pred_fallthru
    _
  // Predicated region
  $region62: #{model_forward.5} parent=0 // pred_check
    _
  $region63: #{model_forward.5} parent=0 // pred_check_branch
    %53 = sbr.rel (0) target = $region65
  $region64: #{model_forward.5} parent=0 // pred_region
    _
  $region65: #{model_forward.5} parent=0 // pred_fallthru
    _
  // Predicated region
  $region66: #{model_forward.5} parent=0 // pred_check
    _
  $region67: #{model_forward.5} parent=0 // pred_check_branch
    %55 = sbr.rel (0) target = $region69
  $region68: #{model_forward.5} parent=0 // pred_region
    _
  $region69: #{model_forward.5} parent=0 // pred_fallthru
    _
  %v56 = vld [vmem:[%s7] sm:$0xff]
  %v57 = vld [vmem:[%s7 + $0x8] sm:$0xff]
  %v58 = vld [vmem:[%s7 + $0x10] sm:$0xff]
  %v59 = vld [vmem:[%s7 + $0x18] sm:$0xff]
  %v60 = vld [vmem:[%s10] sm:$0x1]
  %v61 = vld [vmem:[%s6] sm:$0xf]
  %v62 = vld [vmem:[%s11] sm:$0xff]
  %v63 = vld [vmem:[%s11 + $0x8] sm:$0xff]
  %v64 = vld [vmem:[%s11 + $0x10] sm:$0xff]
  %v65 = vld [vmem:[%s11 + $0x18] sm:$0xff]
  %v66 = vld [vmem:[%s12] sm:$0xff]
  %v67 = vld [vmem:[%s12 + $0x8] sm:$0xff]
  %v68 = vld [vmem:[%s12 + $0x10] sm:$0xff]
  %v69 = vld [vmem:[%s12 + $0x18] sm:$0xff]
  %v70 = vld [vmem:[%s13] sm:$0x1]
  %v71 = vld [vmem:[%s14] sm:$0xff]
  %v72 = vld [vmem:[%s14 + $0x8] sm:$0xff]
  %v73 = vld [vmem:[%s14 + $0x10] sm:$0xff]
  %v74 = vld [vmem:[%s14 + $0x18] sm:$0xff]
  %v75 = vld [vmem:[%s15] sm:$0xff]
  %v76 = vld [vmem:[%s15 + $0x8] sm:$0xff]
  %v77 = vld [vmem:[%s15 + $0x10] sm:$0xff]
  %v78 = vld [vmem:[%s15 + $0x18] sm:$0xff]
  %v79 = vld [vmem:[%s16] sm:$0x1]
  %v80 = vld [vmem:[%s2] sm:$0xff]
  %v81 = vld [vmem:[%s4] sm:$0xf]
  %v82 = vld [vmem:[%s5] sm:$0x1]
  %v84 = vlaneseq
  %v85 = vshrl.u32 %v84, 7
  %v86 = vsub.s32 0, %v85
  %v87 = vrot.slane %v82, %v86
  %vm89 = vcmask 31744
  %v91 = vsel %vm89, %v80, 0
  %vm93 = vcmask 1043456
  %v95 = vsel %vm93, %v81, 0
  %97 = vmatprep.subr.mxu0 0.0
  %98 = vmatpush1.msra.mxu0 0.0
  %99 = vmatprep.subr.mxu0 0.0
  %100 = vmatpush1.msra.mxu0 0.0
  %101 = vmatprep.subr.mxu0 0.0
  %102 = vmatpush1.msra.mxu0 0.0
  %103 = vmatprep.subr.mxu0 0.0
  %104 = vmatpush1.msra.mxu0 0.0
  %105 = vmatprep.subr.mxu0 0.0
  %106 = vmatpush1.msra.mxu0 0.0
  %107 = vmatprep.subr.mxu0 0.0
  %108 = vmatpush1.msra.mxu0 0.0
  %109 = vmatprep.subr.mxu0 0.0
  %110 = vmatpush1.msra.mxu0 0.0
  %111 = vmatprep.subr.mxu0 0.0
  %112 = vmatpush1.msra.mxu0 0.0
  %113 = vmatprep.subr.mxu0 0.0
  %114 = vmatpush1.msra.mxu0 0.0
  %115 = vmatprep.subr.mxu0 0.0
  %116 = vmatpush1.msra.mxu0 0.0
  %117 = vmatprep.subr.mxu0 0.0
  %118 = vmatpush1.msra.mxu0 0.0
  %119 = vmatprep.subr.mxu0 0.0
  %120 = vmatpush1.msra.mxu0 0.0
  %121 = vmatprep.subr.mxu0 0.0
  %122 = vmatpush1.msra.mxu0 0.0
  %123 = vmatprep.subr.mxu0 0.0
  %124 = vmatpush1.msra.mxu0 0.0
  %125 = vmatprep.subr.mxu0 0.0
  %126 = vmatpush1.msra.mxu0 0.0
  %127 = vmatprep.subr.mxu0 0.0
  %128 = vmatpush1.msra.mxu0 %v95
  %129 = vmatprep.subr.mxu0 0.0
  %130 = vmatpush2.msra.mxu0 0.0
  %131 = vmatprep.subr.mxu0 0.0
  %132 = vmatpush2.msra.mxu0 0.0
  %133 = vmatprep.subr.mxu0 0.0
  %134 = vmatpush2.msra.mxu0 0.0
  %135 = vmatprep.subr.mxu0 0.0
  %136 = vmatpush2.msra.mxu0 0.0
  %137 = vmatprep.subr.mxu0 0.0
  %138 = vmatpush2.msra.mxu0 0.0
  %139 = vmatprep.subr.mxu0 0.0
  %140 = vmatpush2.msra.mxu0 0.0
  %141 = vmatprep.subr.mxu0 0.0
  %142 = vmatpush2.msra.mxu0 0.0
  %143 = vmatprep.subr.mxu0 0.0
  %144 = vmatpush2.msra.mxu0 0.0
  %145 = vmatprep.subr.mxu0 0.0
  %146 = vmatpush2.msra.mxu0 0.0
  %147 = vmatprep.subr.mxu0 0.0
  %148 = vmatpush2.msra.mxu0 0.0
  %149 = vmatprep.subr.mxu0 0.0
  %150 = vmatpush2.msra.mxu0 0.0
  %151 = vmatprep.subr.mxu0 0.0
  %152 = vmatpush2.msra.mxu0 0.0
  %153 = vmatprep.subr.mxu0 0.0
  %154 = vmatpush2.msra.mxu0 0.0
  %155 = vmatprep.subr.mxu0 0.0
  %156 = vmatpush2.msra.mxu0 0.0
  %157 = vmatprep.subr.mxu0 0.0
  %158 = vmatpush2.msra.mxu0 0.0
  %159 = vmatprep.subr.mxu0 0.0
  %160 = vmatpush2.msra.mxu0 0.0
  %161 = vmatprep.mubr.f32.mxu0 0.0
  %162 = vmatmul.mubr.f32.gmra.mxu0 %v91
  %v163 = vpop.f32.mrf.mxu0
  %v164 = vadd.f32 %v87, %v163
  %v165 = vpop.f32.mrf.mxu0
  %166 = vdwg.mxu0
  %v167 = vld [vmem:[%s8] sm:$0xff]
  %v168 = vld [vmem:[%s8 + $0x8] sm:$0xff]
  %v169 = vld [vmem:[%s8 + $0x10] sm:$0xff]
  %v170 = vld [vmem:[%s8 + $0x18] sm:$0xff]
  %v171 = vld [vmem:[%s9] sm:$0x1]
  %v172 = vld [vmem:[%s3] sm:$0xff]
  %v173 = vld [vmem:[%s3 + $0x8] sm:$0xff]
  %v175 = vlaneseq
  %v176 = vshrl.u32 %v175, 7
  %v177 = vsub.s32 0, %v176
  %v178 = vrot.slane %v171, %v177
  %vm180 = vcmask 261120
  %v182 = vsel %vm180, %v172, 0
  %v185 = vsel %vm180, %v173, 0
  %187 = vmatprep.subr.mxu0 0.0
  %188 = vmatpush1.msra.mxu0 0.0
  %189 = vmatprep.subr.mxu0 0.0
  %190 = vmatpush1.msra.mxu0 0.0
  %191 = vmatprep.subr.mxu0 0.0
  %192 = vmatpush1.msra.mxu0 0.0
  %193 = vmatprep.subr.mxu0 0.0
  %194 = vmatpush1.msra.mxu0 0.0
  %195 = vmatprep.subr.mxu0 0.0
  %196 = vmatpush1.msra.mxu0 0.0
  %197 = vmatprep.subr.mxu0 0.0
  %198 = vmatpush1.msra.mxu0 0.0
  %199 = vmatprep.subr.mxu0 0.0
  %200 = vmatpush1.msra.mxu0 0.0
  %201 = vmatprep.subr.mxu0 0.0
  %202 = vmatpush1.msra.mxu0 0.0
  %203 = vmatprep.subr.mxu0 0.0
  %204 = vmatpush1.msra.mxu0 0.0
  %205 = vmatprep.subr.mxu0 0.0
  %206 = vmatpush1.msra.mxu0 0.0
  %207 = vmatprep.subr.mxu0 0.0
  %208 = vmatpush1.msra.mxu0 0.0
  %209 = vmatprep.subr.mxu0 0.0
  %210 = vmatpush1.msra.mxu0 0.0
  %211 = vmatprep.subr.mxu0 0.0
  %212 = vmatpush1.msra.mxu0 %v170
  %213 = vmatprep.subr.mxu0 0.0
  %214 = vmatpush1.msra.mxu0 %v169
  %215 = vmatprep.subr.mxu0 0.0
  %216 = vmatpush1.msra.mxu0 %v168
  %217 = vmatprep.subr.mxu0 0.0
  %218 = vmatpush1.msra.mxu0 %v167
  %219 = vmatprep.subr.mxu0 0.0
  %220 = vmatpush2.msra.mxu0 0.0
  %221 = vmatprep.subr.mxu0 0.0
  %222 = vmatpush2.msra.mxu0 0.0
  %223 = vmatprep.subr.mxu0 0.0
  %224 = vmatpush2.msra.mxu0 0.0
  %225 = vmatprep.subr.mxu0 0.0
  %226 = vmatpush2.msra.mxu0 0.0
  %227 = vmatprep.subr.mxu0 0.0
  %228 = vmatpush2.msra.mxu0 0.0
  %229 = vmatprep.subr.mxu0 0.0
  %230 = vmatpush2.msra.mxu0 0.0
  %231 = vmatprep.subr.mxu0 0.0
  %232 = vmatpush2.msra.mxu0 0.0
  %233 = vmatprep.subr.mxu0 0.0
  %234 = vmatpush2.msra.mxu0 0.0
  %235 = vmatprep.subr.mxu0 0.0
  %236 = vmatpush2.msra.mxu0 0.0
  %237 = vmatprep.subr.mxu0 0.0
  %238 = vmatpush2.msra.mxu0 0.0
  %239 = vmatprep.subr.mxu0 0.0
  %240 = vmatpush2.msra.mxu0 0.0
  %241 = vmatprep.subr.mxu0 0.0
  %242 = vmatpush2.msra.mxu0 0.0
  %243 = vmatprep.subr.mxu0 0.0
  %244 = vmatpush2.msra.mxu0 0.0
  %245 = vmatprep.subr.mxu0 0.0
  %246 = vmatpush2.msra.mxu0 0.0
  %247 = vmatprep.subr.mxu0 0.0
  %248 = vmatpush2.msra.mxu0 0.0
  %249 = vmatprep.subr.mxu0 0.0
  %250 = vmatpush2.msra.mxu0 0.0
  %251 = vmatprep.mubr.f32.mxu0 0.0
  %252 = vmatmul.mubr.f32.gmra.mxu0 %v182
  %v253 = vpop.f32.mrf.mxu0
  %v254 = vadd.f32 %v178, %v253
  %v255 = vpop.f32.mrf.mxu0
  %256 = vmatprep.mubr.f32.mxu0 0.0
  %257 = vmatmul.mubr.f32.gmra.mxu0 %v185
  %v258 = vpop.f32.mrf.mxu0
  %v259 = vadd.f32 %v178, %v258
  %v260 = vpop.f32.mrf.mxu0
  %261 = vdwg.mxu0
  %262 = vst.msk [vmem:[#allocation2] sm:$0xff] %vm180, %v254
  %263 = vst.msk [vmem:[#allocation2 + $0x8] sm:$0xff] %vm180, %v259
  %s264 = scalar_lea.vmem %s3, 16
  %v265 = vld [vmem:[%s264] sm:$0xff]
  %v266 = vld [vmem:[%s264 + $0x8] sm:$0xff]
  %v268 = vsel %vm180, %v265, 0
  %v271 = vsel %vm180, %v266, 0
  %273 = vmatprep.subr.mxu0 0.0
  %274 = vmatpush1.msra.mxu0 0.0
  %275 = vmatprep.subr.mxu0 0.0
  %276 = vmatpush1.msra.mxu0 0.0
  %277 = vmatprep.subr.mxu0 0.0
  %278 = vmatpush1.msra.mxu0 0.0
  %279 = vmatprep.subr.mxu0 0.0
  %280 = vmatpush1.msra.mxu0 0.0
  %281 = vmatprep.subr.mxu0 0.0
  %282 = vmatpush1.msra.mxu0 0.0
  %283 = vmatprep.subr.mxu0 0.0
  %284 = vmatpush1.msra.mxu0 0.0
  %285 = vmatprep.subr.mxu0 0.0
  %286 = vmatpush1.msra.mxu0 0.0
  %287 = vmatprep.subr.mxu0 0.0
  %288 = vmatpush1.msra.mxu0 0.0
  %289 = vmatprep.subr.mxu0 0.0
  %290 = vmatpush1.msra.mxu0 0.0
  %291 = vmatprep.subr.mxu0 0.0
  %292 = vmatpush1.msra.mxu0 0.0
  %293 = vmatprep.subr.mxu0 0.0
  %294 = vmatpush1.msra.mxu0 0.0
  %295 = vmatprep.subr.mxu0 0.0
  %296 = vmatpush1.msra.mxu0 0.0
  %297 = vmatprep.subr.mxu0 0.0
  %298 = vmatpush1.msra.mxu0 %v170
  %299 = vmatprep.subr.mxu0 0.0
  %300 = vmatpush1.msra.mxu0 %v169
  %301 = vmatprep.subr.mxu0 0.0
  %302 = vmatpush1.msra.mxu0 %v168
  %303 = vmatprep.subr.mxu0 0.0
  %304 = vmatpush1.msra.mxu0 %v167
  %305 = vmatprep.subr.mxu0 0.0
  %306 = vmatpush2.msra.mxu0 0.0
  %307 = vmatprep.subr.mxu0 0.0
  %308 = vmatpush2.msra.mxu0 0.0
  %309 = vmatprep.subr.mxu0 0.0
  %310 = vmatpush2.msra.mxu0 0.0
  %311 = vmatprep.subr.mxu0 0.0
  %312 = vmatpush2.msra.mxu0 0.0
  %313 = vmatprep.subr.mxu0 0.0
  %314 = vmatpush2.msra.mxu0 0.0
  %315 = vmatprep.subr.mxu0 0.0
  %316 = vmatpush2.msra.mxu0 0.0
  %317 = vmatprep.subr.mxu0 0.0
  %318 = vmatpush2.msra.mxu0 0.0
  %319 = vmatprep.subr.mxu0 0.0
  %320 = vmatpush2.msra.mxu0 0.0
  %321 = vmatprep.subr.mxu0 0.0
  %322 = vmatpush2.msra.mxu0 0.0
  %323 = vmatprep.subr.mxu0 0.0
  %324 = vmatpush2.msra.mxu0 0.0
  %325 = vmatprep.subr.mxu0 0.0
  %326 = vmatpush2.msra.mxu0 0.0
  %327 = vmatprep.subr.mxu0 0.0
  %328 = vmatpush2.msra.mxu0 0.0
  %329 = vmatprep.subr.mxu0 0.0
  %330 = vmatpush2.msra.mxu0 0.0
  %331 = vmatprep.subr.mxu0 0.0
  %332 = vmatpush2.msra.mxu0 0.0
  %333 = vmatprep.subr.mxu0 0.0
  %334 = vmatpush2.msra.mxu0 0.0
  %335 = vmatprep.subr.mxu0 0.0
  %336 = vmatpush2.msra.mxu0 0.0
  %337 = vmatprep.mubr.f32.mxu0 0.0
  %338 = vmatmul.mubr.f32.gmra.mxu0 %v268
  %v339 = vpop.f32.mrf.mxu0
  %v340 = vadd.f32 %v178, %v339
  %v341 = vpop.f32.mrf.mxu0
  %342 = vmatprep.mubr.f32.mxu0 0.0
  %343 = vmatmul.mubr.f32.gmra.mxu0 %v271
  %v344 = vpop.f32.mrf.mxu0
  %v345 = vadd.f32 %v178, %v344
  %v346 = vpop.f32.mrf.mxu0
  %347 = vdwg.mxu0
  %s348 = scalar_lea.vmem [#allocation2], 16
  %349 = vst.msk [vmem:[%s348] sm:$0xff] %vm180, %v340
  %350 = vst.msk [vmem:[%s348 + $0x8] sm:$0xff] %vm180, %v345
  %v351 = vld [vmem:[#allocation2] sm:$0xff]
  %v352 = vld [vmem:[#allocation2 + $0x8] sm:$0xff]
  %v353 = vld [vmem:[#allocation2 + $0x10] sm:$0xff]
  %v354 = vld [vmem:[#allocation2 + $0x18] sm:$0xff]
  %v355 = vld [vmem:[%s3] sm:$0xff]
  %v356 = vld [vmem:[%s3 + $0x8] sm:$0xff]
  %v357 = vld [vmem:[%s3 + $0x10] sm:$0xff]
  %v358 = vld [vmem:[%s3 + $0x18] sm:$0xff]
  %v359 = vld [vmem:[%s0] sm:$0x3]
  %v360 = vld [vmem:[%s1] sm:$0x3]
  %v362 = vsel %vm180, %v360, 0
  %364 = vmatprep.subr.mxu0 0.0
  %365 = vmatpush1.msra.mxu0 0.0
  %366 = vmatprep.subr.mxu0 0.0
  %367 = vmatpush1.msra.mxu0 0.0
  %368 = vmatprep.subr.mxu0 0.0
  %369 = vmatpush1.msra.mxu0 0.0
  %370 = vmatprep.subr.mxu0 0.0
  %371 = vmatpush1.msra.mxu0 0.0
  %372 = vmatprep.subr.mxu0 0.0
  %373 = vmatpush1.msra.mxu0 0.0
  %374 = vmatprep.subr.mxu0 0.0
  %375 = vmatpush1.msra.mxu0 0.0
  %376 = vmatprep.subr.mxu0 0.0
  %377 = vmatpush1.msra.mxu0 0.0
  %378 = vmatprep.subr.mxu0 0.0
  %379 = vmatpush1.msra.mxu0 0.0
  %380 = vmatprep.subr.mxu0 0.0
  %381 = vmatpush1.msra.mxu0 0.0
  %382 = vmatprep.subr.mxu0 0.0
  %383 = vmatpush1.msra.mxu0 0.0
  %384 = vmatprep.subr.mxu0 0.0
  %385 = vmatpush1.msra.mxu0 0.0
  %386 = vmatprep.subr.mxu0 0.0
  %387 = vmatpush1.msra.mxu0 0.0
  %388 = vmatprep.subr.mxu0 0.0
  %389 = vmatpush1.msra.mxu0 %v59
  %390 = vmatprep.subr.mxu0 0.0
  %391 = vmatpush1.msra.mxu0 %v58
  %392 = vmatprep.subr.mxu0 0.0
  %393 = vmatpush1.msra.mxu0 %v57
  %394 = vmatprep.subr.mxu0 0.0
  %395 = vmatpush1.msra.mxu0 %v56
  %396 = vmatprep.subr.mxu0 0.0
  %397 = vmatpush2.msra.mxu0 0.0
  %398 = vmatprep.subr.mxu0 0.0
  %399 = vmatpush2.msra.mxu0 0.0
  %400 = vmatprep.subr.mxu0 0.0
  %401 = vmatpush2.msra.mxu0 0.0
  %402 = vmatprep.subr.mxu0 0.0
  %403 = vmatpush2.msra.mxu0 0.0
  %404 = vmatprep.subr.mxu0 0.0
  %405 = vmatpush2.msra.mxu0 0.0
  %406 = vmatprep.subr.mxu0 0.0
  %407 = vmatpush2.msra.mxu0 0.0
  %408 = vmatprep.subr.mxu0 0.0
  %409 = vmatpush2.msra.mxu0 0.0
  %410 = vmatprep.subr.mxu0 0.0
  %411 = vmatpush2.msra.mxu0 0.0
  %412 = vmatprep.subr.mxu0 0.0
  %413 = vmatpush2.msra.mxu0 0.0
  %414 = vmatprep.subr.mxu0 0.0
  %415 = vmatpush2.msra.mxu0 0.0
  %416 = vmatprep.subr.mxu0 0.0
  %417 = vmatpush2.msra.mxu0 0.0
  %418 = vmatprep.subr.mxu0 0.0
  %419 = vmatpush2.msra.mxu0 0.0
  %420 = vmatprep.subr.mxu0 0.0
  %421 = vmatpush2.msra.mxu0 0.0
  %422 = vmatprep.subr.mxu0 0.0
  %423 = vmatpush2.msra.mxu0 0.0
  %424 = vmatprep.subr.mxu0 0.0
  %425 = vmatpush2.msra.mxu0 0.0
  %426 = vmatprep.subr.mxu0 0.0
  %427 = vmatpush2.msra.mxu0 0.0
  %428 = vmatprep.mubr.f32.mxu0 0.0
  %429 = vmatmul.mubr.f32.gmra.mxu0 %v362
  %v430 = vpop.f32.mrf.mxu0
  %v431 = vadd.f32 0.0, %v430
  %v432 = vpop.f32.mrf.mxu0
  %433 = vdwg.mxu0
  %v436 = vunpack.c.l.s4 1966171168
  %v437 = vunpack.c.0.s8 %v436
  %v438 = vlaneseq
  %v439 = vshrl.u32 %v438, 7
  %v440 = vsub.s32 %v437, %v439
  %v441 = vrot.slane %v431, %v440
  %v442 = vcombine.high %v441, %v441
  %v444 = vunpack.c.l.s4 1966171168
  %v445 = vunpack.c.0.s8 %v444
  %v446 = vlaneseq
  %v447 = vshrl.u32 %v446, 7
  %v448 = vsub.s32 %v445, %v447
  %v449 = vrot.slane %v441, %v448
  %v451 = vunpack.c.l.s4 1966171168
  %v452 = vunpack.c.0.s8 %v451
  %v453 = vlaneseq
  %v454 = vshrl.u32 %v453, 7
  %v455 = vsub.s32 %v452, %v454
  %v456 = vrot.slane %v442, %v455
  %v457 = vlaneseq
  %v458 = vshrl.u32 %v457, 7
  %v459 = vsub.s32 0, %v458
  %v460 = vrot.slane %v449, %v459
  %v461 = vlaneseq
  %v462 = vshrl.u32 %v461, 7
  %v463 = vsub.s32 0, %v462
  %v464 = vrot.slane %v456, %v463
  %v467 = vadd.f32 %v351, %v460
  %v468 = vadd.f32 %v352, %v460
  %v469 = vadd.f32 %v353, %v464
  %v470 = vadd.f32 %v354, %v464
  %v471 = vmax.f32 %v467, 0.0
  %v472 = vmax.f32 %v468, 0.0
  %v473 = vmax.f32 %v469, 0.0
  %v474 = vmax.f32 %v470, 0.0
  %v476 = vlaneseq
  %v477 = vshrl.u32 %v476, 7
  %v478 = vsub.s32 0, %v477
  %v479 = vrot.slane %v60, %v478
  %v481 = vmul.f32 %v471, %v479
  %v482 = vmul.f32 %v472, %v479
  %v483 = vmul.f32 %v473, %v479
  %v484 = vmul.f32 %v474, %v479
  %v485 = vsel %vm180, %v481, 0.0
  %486 = vadd.xlane.f32.xlu0 %v485
  %v487 = vpop.xlane.xlu0 %486
  %v488 = vsel %vm180, %v482, 0.0
  %489 = vadd.xlane.f32.xlu0 %v488
  %v490 = vpop.xlane.xlu0 %489
  %v491 = vsel %vm180, %v483, 0.0
  %492 = vadd.xlane.f32.xlu0 %v491
  %v493 = vpop.xlane.xlu0 %492
  %v494 = vsel %vm180, %v484, 0.0
  %495 = vadd.xlane.f32.xlu0 %v494
  %v496 = vpop.xlane.xlu0 %495
  %v497 = vmax.f32 %v487, %v490
  %v498 = vrot.slane %v497, 4
  %v499 = vmax.f32 %v497, %v498
  %v500 = vrot.slane %v499, 2
  %v501 = vmax.f32 %v499, %v500
  %v502 = vrot.slane %v501, 1
  %v503 = vmax.f32 %v501, %v502
  %v504 = vmax.f32 %v493, %v496
  %v505 = vrot.slane %v504, 4
  %v506 = vmax.f32 %v504, %v505
  %v507 = vrot.slane %v506, 2
  %v508 = vmax.f32 %v506, %v507
  %v509 = vrot.slane %v508, 1
  %v510 = vmax.f32 %v508, %v509
  %v511 = vsub.f32 %v487, %v503
  %v512 = vsub.f32 %v490, %v503
  %v513 = vsub.f32 %v493, %v510
  %v514 = vsub.f32 %v496, %v510
  %v515 = vmul.f32 %v511, 1.442695
  %v516 = vpow.pop %v515
  %v517 = vmul.f32 %v512, 1.442695
  %v518 = vpow.pop %v517
  %v519 = vmul.f32 %v513, 1.442695
  %v520 = vpow.pop %v519
  %v521 = vmul.f32 %v514, 1.442695
  %v522 = vpow.pop %v521
  %v523 = vadd.f32 %v516, %v518
  %v524 = vrot.slane %v523, 4
  %v525 = vadd.f32 %v523, %v524
  %v526 = vrot.slane %v525, 2
  %v527 = vadd.f32 %v525, %v526
  %v528 = vrot.slane %v527, 1
  %v529 = vadd.f32 %v527, %v528
  %v530 = vadd.f32 %v520, %v522
  %v531 = vrot.slane %v530, 4
  %v532 = vadd.f32 %v530, %v531
  %v533 = vrot.slane %v532, 2
  %v534 = vadd.f32 %v532, %v533
  %v535 = vrot.slane %v534, 1
  %v536 = vadd.f32 %v534, %v535
  %v537 = vrcp.pop %v529
  %v538 = vmul.f32 %v516, %v537
  %v539 = vmul.f32 %v518, %v537
  %v540 = vrcp.pop %v536
  %v541 = vmul.f32 %v520, %v540
  %v542 = vmul.f32 %v522, %v540
  %v543 = vmul.f32 %v538, %v355
  %v544 = vmul.f32 %v539, %v356
  %v545 = vmul.f32 %v541, %v357
  %v546 = vmul.f32 %v542, %v358
  %v547 = vsel %vm180, %v543, 0.0
  %v548 = vsel %vm180, %v544, 0.0
  %v549 = vadd.f32 %v547, %v548
  %v550 = vrot.slane %v549, 4
  %v551 = vadd.f32 %v549, %v550
  %v552 = vrot.slane %v551, 2
  %v553 = vadd.f32 %v551, %v552
  %v554 = vrot.slane %v553, 1
  %v555 = vadd.f32 %v553, %v554
  %v556 = vsel %vm180, %v545, 0.0
  %v557 = vsel %vm180, %v546, 0.0
  %v558 = vadd.f32 %v556, %v557
  %v559 = vrot.slane %v558, 4
  %v560 = vadd.f32 %v558, %v559
  %v561 = vrot.slane %v560, 2
  %v562 = vadd.f32 %v560, %v561
  %v563 = vrot.slane %v562, 1
  %v564 = vadd.f32 %v562, %v563
  %v566 = vsel %vm89, %v359, 0
  %v569 = vsel %vm93, %v61, 0
  %571 = vmatprep.subr.mxu0 0.0
  %572 = vmatpush1.msra.mxu0 0.0
  %573 = vmatprep.subr.mxu0 0.0
  %574 = vmatpush1.msra.mxu0 0.0
  %575 = vmatprep.subr.mxu0 0.0
  %576 = vmatpush1.msra.mxu0 0.0
  %577 = vmatprep.subr.mxu0 0.0
  %578 = vmatpush1.msra.mxu0 0.0
  %579 = vmatprep.subr.mxu0 0.0
  %580 = vmatpush1.msra.mxu0 0.0
  %581 = vmatprep.subr.mxu0 0.0
  %582 = vmatpush1.msra.mxu0 0.0
  %583 = vmatprep.subr.mxu0 0.0
  %584 = vmatpush1.msra.mxu0 0.0
  %585 = vmatprep.subr.mxu0 0.0
  %586 = vmatpush1.msra.mxu0 0.0
  %587 = vmatprep.subr.mxu0 0.0
  %588 = vmatpush1.msra.mxu0 0.0
  %589 = vmatprep.subr.mxu0 0.0
  %590 = vmatpush1.msra.mxu0 0.0
  %591 = vmatprep.subr.mxu0 0.0
  %592 = vmatpush1.msra.mxu0 0.0
  %593 = vmatprep.subr.mxu0 0.0
  %594 = vmatpush1.msra.mxu0 0.0
  %595 = vmatprep.subr.mxu0 0.0
  %596 = vmatpush1.msra.mxu0 0.0
  %597 = vmatprep.subr.mxu0 0.0
  %598 = vmatpush1.msra.mxu0 0.0
  %599 = vmatprep.subr.mxu0 0.0
  %600 = vmatpush1.msra.mxu0 0.0
  %601 = vmatprep.subr.mxu0 0.0
  %602 = vmatpush1.msra.mxu0 %v569
  %603 = vmatprep.subr.mxu0 0.0
  %604 = vmatpush2.msra.mxu0 0.0
  %605 = vmatprep.subr.mxu0 0.0
  %606 = vmatpush2.msra.mxu0 0.0
  %607 = vmatprep.subr.mxu0 0.0
  %608 = vmatpush2.msra.mxu0 0.0
  %609 = vmatprep.subr.mxu0 0.0
  %610 = vmatpush2.msra.mxu0 0.0
  %611 = vmatprep.subr.mxu0 0.0
  %612 = vmatpush2.msra.mxu0 0.0
  %613 = vmatprep.subr.mxu0 0.0
  %614 = vmatpush2.msra.mxu0 0.0
  %615 = vmatprep.subr.mxu0 0.0
  %616 = vmatpush2.msra.mxu0 0.0
  %617 = vmatprep.subr.mxu0 0.0
  %618 = vmatpush2.msra.mxu0 0.0
  %619 = vmatprep.subr.mxu0 0.0
  %620 = vmatpush2.msra.mxu0 0.0
  %621 = vmatprep.subr.mxu0 0.0
  %622 = vmatpush2.msra.mxu0 0.0
  %623 = vmatprep.subr.mxu0 0.0
  %624 = vmatpush2.msra.mxu0 0.0
  %625 = vmatprep.subr.mxu0 0.0
  %626 = vmatpush2.msra.mxu0 0.0
  %627 = vmatprep.subr.mxu0 0.0
  %628 = vmatpush2.msra.mxu0 0.0
  %629 = vmatprep.subr.mxu0 0.0
  %630 = vmatpush2.msra.mxu0 0.0
  %631 = vmatprep.subr.mxu0 0.0
  %632 = vmatpush2.msra.mxu0 0.0
  %633 = vmatprep.subr.mxu0 0.0
  %634 = vmatpush2.msra.mxu0 0.0
  %635 = vmatprep.mubr.f32.mxu0 0.0
  %636 = vmatmul.mubr.f32.gmra.mxu0 %v566
  %v637 = vpop.f32.mrf.mxu0
  %v638 = vadd.f32 %v164, %v637
  %v639 = vpop.f32.mrf.mxu0
  %640 = vdwg.mxu0
  %vm643 = vcmask 1041409
  %v644 = vsel %vm643, %v564, %v555
  %v645 = vsel %vm180, %v644, 0
  %647 = vmatprep.subr.mxu0 0.0
  %648 = vmatpush1.msra.mxu0 0.0
  %649 = vmatprep.subr.mxu0 0.0
  %650 = vmatpush1.msra.mxu0 0.0
  %651 = vmatprep.subr.mxu0 0.0
  %652 = vmatpush1.msra.mxu0 0.0
  %653 = vmatprep.subr.mxu0 0.0
  %654 = vmatpush1.msra.mxu0 0.0
  %655 = vmatprep.subr.mxu0 0.0
  %656 = vmatpush1.msra.mxu0 0.0
  %657 = vmatprep.subr.mxu0 0.0
  %658 = vmatpush1.msra.mxu0 0.0
  %659 = vmatprep.subr.mxu0 0.0
  %660 = vmatpush1.msra.mxu0 0.0
  %661 = vmatprep.subr.mxu0 0.0
  %662 = vmatpush1.msra.mxu0 0.0
  %663 = vmatprep.subr.mxu0 0.0
  %664 = vmatpush1.msra.mxu0 0.0
  %665 = vmatprep.subr.mxu0 0.0
  %666 = vmatpush1.msra.mxu0 0.0
  %667 = vmatprep.subr.mxu0 0.0
  %668 = vmatpush1.msra.mxu0 0.0
  %669 = vmatprep.subr.mxu0 0.0
  %670 = vmatpush1.msra.mxu0 0.0
  %671 = vmatprep.subr.mxu0 0.0
  %672 = vmatpush1.msra.mxu0 %v65
  %673 = vmatprep.subr.mxu0 0.0
  %674 = vmatpush1.msra.mxu0 %v64
  %675 = vmatprep.subr.mxu0 0.0
  %676 = vmatpush1.msra.mxu0 %v63
  %677 = vmatprep.subr.mxu0 0.0
  %678 = vmatpush1.msra.mxu0 %v62
  %679 = vmatprep.subr.mxu0 0.0
  %680 = vmatpush2.msra.mxu0 0.0
  %681 = vmatprep.subr.mxu0 0.0
  %682 = vmatpush2.msra.mxu0 0.0
  %683 = vmatprep.subr.mxu0 0.0
  %684 = vmatpush2.msra.mxu0 0.0
  %685 = vmatprep.subr.mxu0 0.0
  %686 = vmatpush2.msra.mxu0 0.0
  %687 = vmatprep.subr.mxu0 0.0
  %688 = vmatpush2.msra.mxu0 0.0
  %689 = vmatprep.subr.mxu0 0.0
  %690 = vmatpush2.msra.mxu0 0.0
  %691 = vmatprep.subr.mxu0 0.0
  %692 = vmatpush2.msra.mxu0 0.0
  %693 = vmatprep.subr.mxu0 0.0
  %694 = vmatpush2.msra.mxu0 0.0
  %695 = vmatprep.subr.mxu0 0.0
  %696 = vmatpush2.msra.mxu0 0.0
  %697 = vmatprep.subr.mxu0 0.0
  %698 = vmatpush2.msra.mxu0 0.0
  %699 = vmatprep.subr.mxu0 0.0
  %700 = vmatpush2.msra.mxu0 0.0
  %701 = vmatprep.subr.mxu0 0.0
  %702 = vmatpush2.msra.mxu0 0.0
  %703 = vmatprep.subr.mxu0 0.0
  %704 = vmatpush2.msra.mxu0 0.0
  %705 = vmatprep.subr.mxu0 0.0
  %706 = vmatpush2.msra.mxu0 0.0
  %707 = vmatprep.subr.mxu0 0.0
  %708 = vmatpush2.msra.mxu0 0.0
  %709 = vmatprep.subr.mxu0 0.0
  %710 = vmatpush2.msra.mxu0 0.0
  %711 = vmatprep.mubr.f32.mxu0 0.0
  %712 = vmatmul.mubr.f32.gmra.mxu0 %v645
  %v713 = vpop.f32.mrf.mxu0
  %v714 = vadd.f32 0.0, %v713
  %v715 = vpop.f32.mrf.mxu0
  %716 = vdwg.mxu0
  %v717 = vadd.f32 %v638, %v714
  %v719 = vlaneseq
  %v720 = vshrl.u32 %v719, 7
  %v721 = vsub.s32 0, %v720
  %v722 = vrot.slane %v70, %v721
  %724 = vmatprep.subr.mxu0 0.0
  %725 = vmatpush1.msra.mxu0 0.0
  %726 = vmatprep.subr.mxu0 0.0
  %727 = vmatpush1.msra.mxu0 0.0
  %728 = vmatprep.subr.mxu0 0.0
  %729 = vmatpush1.msra.mxu0 0.0
  %730 = vmatprep.subr.mxu0 0.0
  %731 = vmatpush1.msra.mxu0 0.0
  %732 = vmatprep.subr.mxu0 0.0
  %733 = vmatpush1.msra.mxu0 0.0
  %734 = vmatprep.subr.mxu0 0.0
  %735 = vmatpush1.msra.mxu0 0.0
  %736 = vmatprep.subr.mxu0 0.0
  %737 = vmatpush1.msra.mxu0 0.0
  %738 = vmatprep.subr.mxu0 0.0
  %739 = vmatpush1.msra.mxu0 0.0
  %740 = vmatprep.subr.mxu0 0.0
  %741 = vmatpush1.msra.mxu0 0.0
  %742 = vmatprep.subr.mxu0 0.0
  %743 = vmatpush1.msra.mxu0 0.0
  %744 = vmatprep.subr.mxu0 0.0
  %745 = vmatpush1.msra.mxu0 0.0
  %746 = vmatprep.subr.mxu0 0.0
  %747 = vmatpush1.msra.mxu0 0.0
  %748 = vmatprep.subr.mxu0 0.0
  %749 = vmatpush1.msra.mxu0 %v69
  %750 = vmatprep.subr.mxu0 0.0
  %751 = vmatpush1.msra.mxu0 %v68
  %752 = vmatprep.subr.mxu0 0.0
  %753 = vmatpush1.msra.mxu0 %v67
  %754 = vmatprep.subr.mxu0 0.0
  %755 = vmatpush1.msra.mxu0 %v66
  %756 = vmatprep.subr.mxu0 0.0
  %757 = vmatpush2.msra.mxu0 0.0
  %758 = vmatprep.subr.mxu0 0.0
  %759 = vmatpush2.msra.mxu0 0.0
  %760 = vmatprep.subr.mxu0 0.0
  %761 = vmatpush2.msra.mxu0 0.0
  %762 = vmatprep.subr.mxu0 0.0
  %763 = vmatpush2.msra.mxu0 0.0
  %764 = vmatprep.subr.mxu0 0.0
  %765 = vmatpush2.msra.mxu0 0.0
  %766 = vmatprep.subr.mxu0 0.0
  %767 = vmatpush2.msra.mxu0 0.0
  %768 = vmatprep.subr.mxu0 0.0
  %769 = vmatpush2.msra.mxu0 0.0
  %770 = vmatprep.subr.mxu0 0.0
  %771 = vmatpush2.msra.mxu0 0.0
  %772 = vmatprep.subr.mxu0 0.0
  %773 = vmatpush2.msra.mxu0 0.0
  %774 = vmatprep.subr.mxu0 0.0
  %775 = vmatpush2.msra.mxu0 0.0
  %776 = vmatprep.subr.mxu0 0.0
  %777 = vmatpush2.msra.mxu0 0.0
  %778 = vmatprep.subr.mxu0 0.0
  %779 = vmatpush2.msra.mxu0 0.0
  %780 = vmatprep.subr.mxu0 0.0
  %781 = vmatpush2.msra.mxu0 0.0
  %782 = vmatprep.subr.mxu0 0.0
  %783 = vmatpush2.msra.mxu0 0.0
  %784 = vmatprep.subr.mxu0 0.0
  %785 = vmatpush2.msra.mxu0 0.0
  %786 = vmatprep.subr.mxu0 0.0
  %787 = vmatpush2.msra.mxu0 0.0
  %788 = vmatprep.mubr.f32.mxu0 0.0
  %789 = vmatmul.mubr.f32.gmra.mxu0 %v362
  %v790 = vpop.f32.mrf.mxu0
  %v791 = vadd.f32 %v722, %v790
  %v792 = vpop.f32.mrf.mxu0
  %793 = vdwg.mxu0
  %v794 = vadd.f32 %v717, %v791
  %v795 = vxor.u32 %v794, 2147483648
  %v796 = vmul.f32 %v795, 1.442695
  %v797 = vpow.pop %v796
  %v798 = vadd.f32 %v797, 1.0
  %v799 = vrcp.pop %v798
  %v800 = vmul.f32 1.0, %v799
  %802 = vrot.lane.b32.xlu0 %v791, 64
  %v803 = vpop.permute.xlu0 %802
  %v805 = vmul.f32 %v800, %v803
  %807 = vrot.lane.b32.xlu0 %v805, 64
  %v808 = vpop.permute.xlu0 %807
  %v810 = vadd.f32 %v717, %v808
  %v811 = vtanh.pop %v810
  %v812 = vsub.f32 1.0, %v800
  %814 = vrot.lane.b32.xlu0 %v811, 96
  %v815 = vpop.permute.xlu0 %814
  %v817 = vmul.f32 %v812, %v815
  %818 = vrot.lane.b32.xlu0 %v360, 32
  %v819 = vpop.permute.xlu0 %818
  %v821 = vmul.f32 %v800, %v819
  %v822 = vadd.f32 %v817, %v821
  %823 = vmatprep.subr.mxu0 0.0
  %824 = vmatpush1.msra.mxu0 0.0
  %825 = vmatprep.subr.mxu0 0.0
  %826 = vmatpush1.msra.mxu0 0.0
  %827 = vmatprep.subr.mxu0 0.0
  %828 = vmatpush1.msra.mxu0 0.0
  %829 = vmatprep.subr.mxu0 0.0
  %830 = vmatpush1.msra.mxu0 0.0
  %831 = vmatprep.subr.mxu0 0.0
  %832 = vmatpush1.msra.mxu0 0.0
  %833 = vmatprep.subr.mxu0 0.0
  %834 = vmatpush1.msra.mxu0 0.0
  %835 = vmatprep.subr.mxu0 0.0
  %836 = vmatpush1.msra.mxu0 0.0
  %837 = vmatprep.subr.mxu0 0.0
  %838 = vmatpush1.msra.mxu0 0.0
  %839 = vmatprep.subr.mxu0 0.0
  %840 = vmatpush1.msra.mxu0 0.0
  %841 = vmatprep.subr.mxu0 0.0
  %842 = vmatpush1.msra.mxu0 0.0
  %843 = vmatprep.subr.mxu0 0.0
  %844 = vmatpush1.msra.mxu0 0.0
  %845 = vmatprep.subr.mxu0 0.0
  %846 = vmatpush1.msra.mxu0 0.0
  %847 = vmatprep.subr.mxu0 0.0
  %848 = vmatpush1.msra.mxu0 %v78
  %849 = vmatprep.subr.mxu0 0.0
  %850 = vmatpush1.msra.mxu0 %v77
  %851 = vmatprep.subr.mxu0 0.0
  %852 = vmatpush1.msra.mxu0 %v76
  %853 = vmatprep.subr.mxu0 0.0
  %854 = vmatpush1.msra.mxu0 %v75
  %855 = vmatprep.subr.mxu0 0.0
  %856 = vmatpush2.msra.mxu0 0.0
  %857 = vmatprep.subr.mxu0 0.0
  %858 = vmatpush2.msra.mxu0 0.0
  %859 = vmatprep.subr.mxu0 0.0
  %860 = vmatpush2.msra.mxu0 0.0
  %861 = vmatprep.subr.mxu0 0.0
  %862 = vmatpush2.msra.mxu0 0.0
  %863 = vmatprep.subr.mxu0 0.0
  %864 = vmatpush2.msra.mxu0 0.0
  %865 = vmatprep.subr.mxu0 0.0
  %866 = vmatpush2.msra.mxu0 0.0
  %867 = vmatprep.subr.mxu0 0.0
  %868 = vmatpush2.msra.mxu0 0.0
  %869 = vmatprep.subr.mxu0 0.0
  %870 = vmatpush2.msra.mxu0 0.0
  %871 = vmatprep.subr.mxu0 0.0
  %872 = vmatpush2.msra.mxu0 0.0
  %873 = vmatprep.subr.mxu0 0.0
  %874 = vmatpush2.msra.mxu0 0.0
  %875 = vmatprep.subr.mxu0 0.0
  %876 = vmatpush2.msra.mxu0 0.0
  %877 = vmatprep.subr.mxu0 0.0
  %878 = vmatpush2.msra.mxu0 0.0
  %879 = vmatprep.subr.mxu0 0.0
  %880 = vmatpush2.msra.mxu0 0.0
  %881 = vmatprep.subr.mxu0 0.0
  %882 = vmatpush2.msra.mxu0 0.0
  %883 = vmatprep.subr.mxu0 0.0
  %884 = vmatpush2.msra.mxu0 0.0
  %885 = vmatprep.subr.mxu0 0.0
  %886 = vmatpush2.msra.mxu0 0.0
  %887 = vmatprep.mubr.f32.mxu0 0.0
  %888 = vmatmul.mubr.f32.gmra.mxu0 %v645
  %v889 = vpop.f32.mrf.mxu0
  %v890 = vadd.f32 0.0, %v889
  %v891 = vpop.f32.mrf.mxu0
  %892 = vdwg.mxu0
  %894 = vrot.lane.b32.xlu0 %v822, 96
  %v895 = vpop.permute.xlu0 %894
  %v896 = vsel %vm180, %v895, 0
  %898 = vmatprep.subr.mxu0 0.0
  %899 = vmatpush1.msra.mxu0 0.0
  %900 = vmatprep.subr.mxu0 0.0
  %901 = vmatpush1.msra.mxu0 0.0
  %902 = vmatprep.subr.mxu0 0.0
  %903 = vmatpush1.msra.mxu0 0.0
  %904 = vmatprep.subr.mxu0 0.0
  %905 = vmatpush1.msra.mxu0 0.0
  %906 = vmatprep.subr.mxu0 0.0
  %907 = vmatpush1.msra.mxu0 0.0
  %908 = vmatprep.subr.mxu0 0.0
  %909 = vmatpush1.msra.mxu0 0.0
  %910 = vmatprep.subr.mxu0 0.0
  %911 = vmatpush1.msra.mxu0 0.0
  %912 = vmatprep.subr.mxu0 0.0
  %913 = vmatpush1.msra.mxu0 0.0
  %914 = vmatprep.subr.mxu0 0.0
  %915 = vmatpush1.msra.mxu0 0.0
  %916 = vmatprep.subr.mxu0 0.0
  %917 = vmatpush1.msra.mxu0 0.0
  %918 = vmatprep.subr.mxu0 0.0
  %919 = vmatpush1.msra.mxu0 0.0
  %920 = vmatprep.subr.mxu0 0.0
  %921 = vmatpush1.msra.mxu0 0.0
  %922 = vmatprep.subr.mxu0 0.0
  %923 = vmatpush1.msra.mxu0 %v74
  %924 = vmatprep.subr.mxu0 0.0
  %925 = vmatpush1.msra.mxu0 %v73
  %926 = vmatprep.subr.mxu0 0.0
  %927 = vmatpush1.msra.mxu0 %v72
  %928 = vmatprep.subr.mxu0 0.0
  %929 = vmatpush1.msra.mxu0 %v71
  %930 = vmatprep.subr.mxu0 0.0
  %931 = vmatpush2.msra.mxu0 0.0
  %932 = vmatprep.subr.mxu0 0.0
  %933 = vmatpush2.msra.mxu0 0.0
  %934 = vmatprep.subr.mxu0 0.0
  %935 = vmatpush2.msra.mxu0 0.0
  %936 = vmatprep.subr.mxu0 0.0
  %937 = vmatpush2.msra.mxu0 0.0
  %938 = vmatprep.subr.mxu0 0.0
  %939 = vmatpush2.msra.mxu0 0.0
  %940 = vmatprep.subr.mxu0 0.0
  %941 = vmatpush2.msra.mxu0 0.0
  %942 = vmatprep.subr.mxu0 0.0
  %943 = vmatpush2.msra.mxu0 0.0
  %944 = vmatprep.subr.mxu0 0.0
  %945 = vmatpush2.msra.mxu0 0.0
  %946 = vmatprep.subr.mxu0 0.0
  %947 = vmatpush2.msra.mxu0 0.0
  %948 = vmatprep.subr.mxu0 0.0
  %949 = vmatpush2.msra.mxu0 0.0
  %950 = vmatprep.subr.mxu0 0.0
  %951 = vmatpush2.msra.mxu0 0.0
  %952 = vmatprep.subr.mxu0 0.0
  %953 = vmatpush2.msra.mxu0 0.0
  %954 = vmatprep.subr.mxu0 0.0
  %955 = vmatpush2.msra.mxu0 0.0
  %956 = vmatprep.subr.mxu0 0.0
  %957 = vmatpush2.msra.mxu0 0.0
  %958 = vmatprep.subr.mxu0 0.0
  %959 = vmatpush2.msra.mxu0 0.0
  %960 = vmatprep.subr.mxu0 0.0
  %961 = vmatpush2.msra.mxu0 0.0
  %962 = vmatprep.mubr.f32.mxu0 0.0
  %963 = vmatmul.mubr.f32.gmra.mxu0 %v896
  %v964 = vpop.f32.mrf.mxu0
  %v965 = vadd.f32 %v890, %v964
  %v966 = vpop.f32.mrf.mxu0
  %967 = vdwg.mxu0
  %v969 = vlaneseq
  %v970 = vshrl.u32 %v969, 7
  %v971 = vsub.s32 0, %v970
  %v972 = vrot.slane %v79, %v971
  %v974 = vadd.f32 %v965, %v972
  %vm975 = vcmask 25600
  %976 = vst.msk [vmem:[%s17] sm:$0x3] %vm975, %v974
  %977 = vmatprep.subr.mxu0 0.0
  %978 = vmatpush1.msra.mxu0 0.0
  %979 = vmatprep.subr.mxu0 0.0
  %980 = vmatpush1.msra.mxu0 0.0
  %981 = vmatprep.subr.mxu0 0.0
  %982 = vmatpush1.msra.mxu0 0.0
  %983 = vmatprep.subr.mxu0 0.0
  %984 = vmatpush1.msra.mxu0 0.0
  %985 = vmatprep.subr.mxu0 0.0
  %986 = vmatpush1.msra.mxu0 0.0
  %987 = vmatprep.subr.mxu0 0.0
  %988 = vmatpush1.msra.mxu0 0.0
  %989 = vmatprep.subr.mxu0 0.0
  %990 = vmatpush1.msra.mxu0 0.0
  %991 = vmatprep.subr.mxu0 0.0
  %992 = vmatpush1.msra.mxu0 0.0
  %993 = vmatprep.subr.mxu0 0.0
  %994 = vmatpush1.msra.mxu0 0.0
  %995 = vmatprep.subr.mxu0 0.0
  %996 = vmatpush1.msra.mxu0 0.0
  %997 = vmatprep.subr.mxu0 0.0
  %998 = vmatpush1.msra.mxu0 0.0
  %999 = vmatprep.subr.mxu0 0.0
  %1000 = vmatpush1.msra.mxu0 0.0
  %1001 = vmatprep.subr.mxu0 0.0
  %1002 = vmatpush1.msra.mxu0 %v59
  %1003 = vmatprep.subr.mxu0 0.0
  %1004 = vmatpush1.msra.mxu0 %v58
  %1005 = vmatprep.subr.mxu0 0.0
  %1006 = vmatpush1.msra.mxu0 %v57
  %1007 = vmatprep.subr.mxu0 0.0
  %1008 = vmatpush1.msra.mxu0 %v56
  %1009 = vmatprep.subr.mxu0 0.0
  %1010 = vmatpush2.msra.mxu0 0.0
  %1011 = vmatprep.subr.mxu0 0.0
  %1012 = vmatpush2.msra.mxu0 0.0
  %1013 = vmatprep.subr.mxu0 0.0
  %1014 = vmatpush2.msra.mxu0 0.0
  %1015 = vmatprep.subr.mxu0 0.0
  %1016 = vmatpush2.msra.mxu0 0.0
  %1017 = vmatprep.subr.mxu0 0.0
  %1018 = vmatpush2.msra.mxu0 0.0
  %1019 = vmatprep.subr.mxu0 0.0
  %1020 = vmatpush2.msra.mxu0 0.0
  %1021 = vmatprep.subr.mxu0 0.0
  %1022 = vmatpush2.msra.mxu0 0.0
  %1023 = vmatprep.subr.mxu0 0.0
  %1024 = vmatpush2.msra.mxu0 0.0
  %1025 = vmatprep.subr.mxu0 0.0
  %1026 = vmatpush2.msra.mxu0 0.0
  %1027 = vmatprep.subr.mxu0 0.0
  %1028 = vmatpush2.msra.mxu0 0.0
  %1029 = vmatprep.subr.mxu0 0.0
  %1030 = vmatpush2.msra.mxu0 0.0
  %1031 = vmatprep.subr.mxu0 0.0
  %1032 = vmatpush2.msra.mxu0 0.0
  %1033 = vmatprep.subr.mxu0 0.0
  %1034 = vmatpush2.msra.mxu0 0.0
  %1035 = vmatprep.subr.mxu0 0.0
  %1036 = vmatpush2.msra.mxu0 0.0
  %1037 = vmatprep.subr.mxu0 0.0
  %1038 = vmatpush2.msra.mxu0 0.0
  %1039 = vmatprep.subr.mxu0 0.0
  %1040 = vmatpush2.msra.mxu0 0.0
  %1041 = vmatprep.mubr.f32.mxu0 0.0
  %1042 = vmatmul.mubr.f32.gmra.mxu0 %v896
  %v1043 = vpop.f32.mrf.mxu0
  %v1044 = vadd.f32 0.0, %v1043
  %v1045 = vpop.f32.mrf.mxu0
  %1046 = vdwg.mxu0
  %v1049 = vunpack.c.l.s4 1966171168
  %v1050 = vunpack.c.0.s8 %v1049
  %v1051 = vlaneseq
  %v1052 = vshrl.u32 %v1051, 7
  %v1053 = vsub.s32 %v1050, %v1052
  %v1054 = vrot.slane %v1044, %v1053
  %v1055 = vcombine.high %v1054, %v1054
  %v1057 = vunpack.c.l.s4 1966171168
  %v1058 = vunpack.c.0.s8 %v1057
  %v1059 = vlaneseq
  %v1060 = vshrl.u32 %v1059, 7
  %v1061 = vsub.s32 %v1058, %v1060
  %v1062 = vrot.slane %v1054, %v1061
  %v1064 = vunpack.c.l.s4 1966171168
  %v1065 = vunpack.c.0.s8 %v1064
  %v1066 = vlaneseq
  %v1067 = vshrl.u32 %v1066, 7
  %v1068 = vsub.s32 %v1065, %v1067
  %v1069 = vrot.slane %v1055, %v1068
  %v1070 = vlaneseq
  %v1071 = vshrl.u32 %v1070, 7
  %v1072 = vsub.s32 0, %v1071
  %v1073 = vrot.slane %v1062, %v1072
  %v1074 = vlaneseq
  %v1075 = vshrl.u32 %v1074, 7
  %v1076 = vsub.s32 0, %v1075
  %v1077 = vrot.slane %v1069, %v1076
  %v1080 = vadd.f32 %v351, %v1073
  %v1081 = vadd.f32 %v352, %v1073
  %v1082 = vadd.f32 %v353, %v1077
  %v1083 = vadd.f32 %v354, %v1077
  %v1084 = vmax.f32 %v1080, 0.0
  %v1085 = vmax.f32 %v1081, 0.0
  %v1086 = vmax.f32 %v1082, 0.0
  %v1087 = vmax.f32 %v1083, 0.0
  %v1088 = vmul.f32 %v1084, %v479
  %v1089 = vmul.f32 %v1085, %v479
  %v1090 = vmul.f32 %v1086, %v479
  %v1091 = vmul.f32 %v1087, %v479
  %v1092 = vsel %vm180, %v1088, 0.0
  %1093 = vadd.xlane.f32.xlu0 %v1092
  %v1094 = vpop.xlane.xlu0 %1093
  %v1095 = vsel %vm180, %v1089, 0.0
  %1096 = vadd.xlane.f32.xlu0 %v1095
  %v1097 = vpop.xlane.xlu0 %1096
  %v1098 = vsel %vm180, %v1090, 0.0
  %1099 = vadd.xlane.f32.xlu0 %v1098
  %v1100 = vpop.xlane.xlu0 %1099
  %v1101 = vsel %vm180, %v1091, 0.0
  %1102 = vadd.xlane.f32.xlu0 %v1101
  %v1103 = vpop.xlane.xlu0 %1102
  %v1104 = vmax.f32 %v1094, %v1097
  %v1105 = vrot.slane %v1104, 4
  %v1106 = vmax.f32 %v1104, %v1105
  %v1107 = vrot.slane %v1106, 2
  %v1108 = vmax.f32 %v1106, %v1107
  %v1109 = vrot.slane %v1108, 1
  %v1110 = vmax.f32 %v1108, %v1109
  %v1111 = vmax.f32 %v1100, %v1103
  %v1112 = vrot.slane %v1111, 4
  %v1113 = vmax.f32 %v1111, %v1112
  %v1114 = vrot.slane %v1113, 2
  %v1115 = vmax.f32 %v1113, %v1114
  %v1116 = vrot.slane %v1115, 1
  %v1117 = vmax.f32 %v1115, %v1116
  %v1118 = vsub.f32 %v1094, %v1110
  %v1119 = vsub.f32 %v1097, %v1110
  %v1120 = vsub.f32 %v1100, %v1117
  %v1121 = vsub.f32 %v1103, %v1117
  %v1122 = vmul.f32 %v1118, 1.442695
  %v1123 = vpow.pop %v1122
  %v1124 = vmul.f32 %v1119, 1.442695
  %v1125 = vpow.pop %v1124
  %v1126 = vmul.f32 %v1120, 1.442695
  %v1127 = vpow.pop %v1126
  %v1128 = vmul.f32 %v1121, 1.442695
  %v1129 = vpow.pop %v1128
  %v1130 = vadd.f32 %v1123, %v1125
  %v1131 = vrot.slane %v1130, 4
  %v1132 = vadd.f32 %v1130, %v1131
  %v1133 = vrot.slane %v1132, 2
  %v1134 = vadd.f32 %v1132, %v1133
  %v1135 = vrot.slane %v1134, 1
  %v1136 = vadd.f32 %v1134, %v1135
  %v1137 = vadd.f32 %v1127, %v1129
  %v1138 = vrot.slane %v1137, 4
  %v1139 = vadd.f32 %v1137, %v1138
  %v1140 = vrot.slane %v1139, 2
  %v1141 = vadd.f32 %v1139, %v1140
  %v1142 = vrot.slane %v1141, 1
  %v1143 = vadd.f32 %v1141, %v1142
  %v1144 = vrcp.pop %v1136
  %v1145 = vmul.f32 %v1123, %v1144
  %v1146 = vmul.f32 %v1125, %v1144
  %v1147 = vrcp.pop %v1143
  %v1148 = vmul.f32 %v1127, %v1147
  %v1149 = vmul.f32 %v1129, %v1147
  %v1150 = vmul.f32 %v1145, %v355
  %v1151 = vmul.f32 %v1146, %v356
  %v1152 = vmul.f32 %v1148, %v357
  %v1153 = vmul.f32 %v1149, %v358
  %v1154 = vsel %vm180, %v1150, 0.0
  %v1155 = vsel %vm180, %v1151, 0.0
  %v1156 = vadd.f32 %v1154, %v1155
  %v1157 = vrot.slane %v1156, 4
  %v1158 = vadd.f32 %v1156, %v1157
  %v1159 = vrot.slane %v1158, 2
  %v1160 = vadd.f32 %v1158, %v1159
  %v1161 = vrot.slane %v1160, 1
  %v1162 = vadd.f32 %v1160, %v1161
  %v1163 = vsel %vm180, %v1152, 0.0
  %v1164 = vsel %vm180, %v1153, 0.0
  %v1165 = vadd.f32 %v1163, %v1164
  %v1166 = vrot.slane %v1165, 4
  %v1167 = vadd.f32 %v1165, %v1166
  %v1168 = vrot.slane %v1167, 2
  %v1169 = vadd.f32 %v1167, %v1168
  %v1170 = vrot.slane %v1169, 1
  %v1171 = vadd.f32 %v1169, %v1170
  %v1173 = vrot.slane %v164, 2
  %v1176 = vsel %vm89, %v974, 0
  %1178 = vmatprep.subr.mxu0 0.0
  %1179 = vmatpush1.msra.mxu0 0.0
  %1180 = vmatprep.subr.mxu0 0.0
  %1181 = vmatpush1.msra.mxu0 0.0
  %1182 = vmatprep.subr.mxu0 0.0
  %1183 = vmatpush1.msra.mxu0 0.0
  %1184 = vmatprep.subr.mxu0 0.0
  %1185 = vmatpush1.msra.mxu0 0.0
  %1186 = vmatprep.subr.mxu0 0.0
  %1187 = vmatpush1.msra.mxu0 0.0
  %1188 = vmatprep.subr.mxu0 0.0
  %1189 = vmatpush1.msra.mxu0 0.0
  %1190 = vmatprep.subr.mxu0 0.0
  %1191 = vmatpush1.msra.mxu0 0.0
  %1192 = vmatprep.subr.mxu0 0.0
  %1193 = vmatpush1.msra.mxu0 0.0
  %1194 = vmatprep.subr.mxu0 0.0
  %1195 = vmatpush1.msra.mxu0 0.0
  %1196 = vmatprep.subr.mxu0 0.0
  %1197 = vmatpush1.msra.mxu0 0.0
  %1198 = vmatprep.subr.mxu0 0.0
  %1199 = vmatpush1.msra.mxu0 0.0
  %1200 = vmatprep.subr.mxu0 0.0
  %1201 = vmatpush1.msra.mxu0 0.0
  %1202 = vmatprep.subr.mxu0 0.0
  %1203 = vmatpush1.msra.mxu0 0.0
  %1204 = vmatprep.subr.mxu0 0.0
  %1205 = vmatpush1.msra.mxu0 0.0
  %1206 = vmatprep.subr.mxu0 0.0
  %1207 = vmatpush1.msra.mxu0 0.0
  %1208 = vmatprep.subr.mxu0 0.0
  %1209 = vmatpush1.msra.mxu0 %v569
  %1210 = vmatprep.subr.mxu0 0.0
  %1211 = vmatpush2.msra.mxu0 0.0
  %1212 = vmatprep.subr.mxu0 0.0
  %1213 = vmatpush2.msra.mxu0 0.0
  %1214 = vmatprep.subr.mxu0 0.0
  %1215 = vmatpush2.msra.mxu0 0.0
  %1216 = vmatprep.subr.mxu0 0.0
  %1217 = vmatpush2.msra.mxu0 0.0
  %1218 = vmatprep.subr.mxu0 0.0
  %1219 = vmatpush2.msra.mxu0 0.0
  %1220 = vmatprep.subr.mxu0 0.0
  %1221 = vmatpush2.msra.mxu0 0.0
  %1222 = vmatprep.subr.mxu0 0.0
  %1223 = vmatpush2.msra.mxu0 0.0
  %1224 = vmatprep.subr.mxu0 0.0
  %1225 = vmatpush2.msra.mxu0 0.0
  %1226 = vmatprep.subr.mxu0 0.0
  %1227 = vmatpush2.msra.mxu0 0.0
  %1228 = vmatprep.subr.mxu0 0.0
  %1229 = vmatpush2.msra.mxu0 0.0
  %1230 = vmatprep.subr.mxu0 0.0
  %1231 = vmatpush2.msra.mxu0 0.0
  %1232 = vmatprep.subr.mxu0 0.0
  %1233 = vmatpush2.msra.mxu0 0.0
  %1234 = vmatprep.subr.mxu0 0.0
  %1235 = vmatpush2.msra.mxu0 0.0
  %1236 = vmatprep.subr.mxu0 0.0
  %1237 = vmatpush2.msra.mxu0 0.0
  %1238 = vmatprep.subr.mxu0 0.0
  %1239 = vmatpush2.msra.mxu0 0.0
  %1240 = vmatprep.subr.mxu0 0.0
  %1241 = vmatpush2.msra.mxu0 0.0
  %1242 = vmatprep.mubr.f32.mxu0 0.0
  %1243 = vmatmul.mubr.f32.gmra.mxu0 %v1176
  %v1244 = vpop.f32.mrf.mxu0
  %v1245 = vadd.f32 %v1173, %v1244
  %v1246 = vpop.f32.mrf.mxu0
  %1247 = vdwg.mxu0
  %v1250 = vsel %vm643, %v1171, %v1162
  %v1251 = vsel %vm180, %v1250, 0
  %1253 = vmatprep.subr.mxu0 0.0
  %1254 = vmatpush1.msra.mxu0 0.0
  %1255 = vmatprep.subr.mxu0 0.0
  %1256 = vmatpush1.msra.mxu0 0.0
  %1257 = vmatprep.subr.mxu0 0.0
  %1258 = vmatpush1.msra.mxu0 0.0
  %1259 = vmatprep.subr.mxu0 0.0
  %1260 = vmatpush1.msra.mxu0 0.0
  %1261 = vmatprep.subr.mxu0 0.0
  %1262 = vmatpush1.msra.mxu0 0.0
  %1263 = vmatprep.subr.mxu0 0.0
  %1264 = vmatpush1.msra.mxu0 0.0
  %1265 = vmatprep.subr.mxu0 0.0
  %1266 = vmatpush1.msra.mxu0 0.0
  %1267 = vmatprep.subr.mxu0 0.0
  %1268 = vmatpush1.msra.mxu0 0.0
  %1269 = vmatprep.subr.mxu0 0.0
  %1270 = vmatpush1.msra.mxu0 0.0
  %1271 = vmatprep.subr.mxu0 0.0
  %1272 = vmatpush1.msra.mxu0 0.0
  %1273 = vmatprep.subr.mxu0 0.0
  %1274 = vmatpush1.msra.mxu0 0.0
  %1275 = vmatprep.subr.mxu0 0.0
  %1276 = vmatpush1.msra.mxu0 0.0
  %1277 = vmatprep.subr.mxu0 0.0
  %1278 = vmatpush1.msra.mxu0 %v65
  %1279 = vmatprep.subr.mxu0 0.0
  %1280 = vmatpush1.msra.mxu0 %v64
  %1281 = vmatprep.subr.mxu0 0.0
  %1282 = vmatpush1.msra.mxu0 %v63
  %1283 = vmatprep.subr.mxu0 0.0
  %1284 = vmatpush1.msra.mxu0 %v62
  %1285 = vmatprep.subr.mxu0 0.0
  %1286 = vmatpush2.msra.mxu0 0.0
  %1287 = vmatprep.subr.mxu0 0.0
  %1288 = vmatpush2.msra.mxu0 0.0
  %1289 = vmatprep.subr.mxu0 0.0
  %1290 = vmatpush2.msra.mxu0 0.0
  %1291 = vmatprep.subr.mxu0 0.0
  %1292 = vmatpush2.msra.mxu0 0.0
  %1293 = vmatprep.subr.mxu0 0.0
  %1294 = vmatpush2.msra.mxu0 0.0
  %1295 = vmatprep.subr.mxu0 0.0
  %1296 = vmatpush2.msra.mxu0 0.0
  %1297 = vmatprep.subr.mxu0 0.0
  %1298 = vmatpush2.msra.mxu0 0.0
  %1299 = vmatprep.subr.mxu0 0.0
  %1300 = vmatpush2.msra.mxu0 0.0
  %1301 = vmatprep.subr.mxu0 0.0
  %1302 = vmatpush2.msra.mxu0 0.0
  %1303 = vmatprep.subr.mxu0 0.0
  %1304 = vmatpush2.msra.mxu0 0.0
  %1305 = vmatprep.subr.mxu0 0.0
  %1306 = vmatpush2.msra.mxu0 0.0
  %1307 = vmatprep.subr.mxu0 0.0
  %1308 = vmatpush2.msra.mxu0 0.0
  %1309 = vmatprep.subr.mxu0 0.0
  %1310 = vmatpush2.msra.mxu0 0.0
  %1311 = vmatprep.subr.mxu0 0.0
  %1312 = vmatpush2.msra.mxu0 0.0
  %1313 = vmatprep.subr.mxu0 0.0
  %1314 = vmatpush2.msra.mxu0 0.0
  %1315 = vmatprep.subr.mxu0 0.0
  %1316 = vmatpush2.msra.mxu0 0.0
  %1317 = vmatprep.mubr.f32.mxu0 0.0
  %1318 = vmatmul.mubr.f32.gmra.mxu0 %v1251
  %v1319 = vpop.f32.mrf.mxu0
  %v1320 = vadd.f32 0.0, %v1319
  %v1321 = vpop.f32.mrf.mxu0
  %1322 = vdwg.mxu0
  %v1323 = vadd.f32 %v1245, %v1320
  %1324 = vmatprep.subr.mxu0 0.0
  %1325 = vmatpush1.msra.mxu0 0.0
  %1326 = vmatprep.subr.mxu0 0.0
  %1327 = vmatpush1.msra.mxu0 0.0
  %1328 = vmatprep.subr.mxu0 0.0
  %1329 = vmatpush1.msra.mxu0 0.0
  %1330 = vmatprep.subr.mxu0 0.0
  %1331 = vmatpush1.msra.mxu0 0.0
  %1332 = vmatprep.subr.mxu0 0.0
  %1333 = vmatpush1.msra.mxu0 0.0
  %1334 = vmatprep.subr.mxu0 0.0
  %1335 = vmatpush1.msra.mxu0 0.0
  %1336 = vmatprep.subr.mxu0 0.0
  %1337 = vmatpush1.msra.mxu0 0.0
  %1338 = vmatprep.subr.mxu0 0.0
  %1339 = vmatpush1.msra.mxu0 0.0
  %1340 = vmatprep.subr.mxu0 0.0
  %1341 = vmatpush1.msra.mxu0 0.0
  %1342 = vmatprep.subr.mxu0 0.0
  %1343 = vmatpush1.msra.mxu0 0.0
  %1344 = vmatprep.subr.mxu0 0.0
  %1345 = vmatpush1.msra.mxu0 0.0
  %1346 = vmatprep.subr.mxu0 0.0
  %1347 = vmatpush1.msra.mxu0 0.0
  %1348 = vmatprep.subr.mxu0 0.0
  %1349 = vmatpush1.msra.mxu0 %v69
  %1350 = vmatprep.subr.mxu0 0.0
  %1351 = vmatpush1.msra.mxu0 %v68
  %1352 = vmatprep.subr.mxu0 0.0
  %1353 = vmatpush1.msra.mxu0 %v67
  %1354 = vmatprep.subr.mxu0 0.0
  %1355 = vmatpush1.msra.mxu0 %v66
  %1356 = vmatprep.subr.mxu0 0.0
  %1357 = vmatpush2.msra.mxu0 0.0
  %1358 = vmatprep.subr.mxu0 0.0
  %1359 = vmatpush2.msra.mxu0 0.0
  %1360 = vmatprep.subr.mxu0 0.0
  %1361 = vmatpush2.msra.mxu0 0.0
  %1362 = vmatprep.subr.mxu0 0.0
  %1363 = vmatpush2.msra.mxu0 0.0
  %1364 = vmatprep.subr.mxu0 0.0
  %1365 = vmatpush2.msra.mxu0 0.0
  %1366 = vmatprep.subr.mxu0 0.0
  %1367 = vmatpush2.msra.mxu0 0.0
  %1368 = vmatprep.subr.mxu0 0.0
  %1369 = vmatpush2.msra.mxu0 0.0
  %1370 = vmatprep.subr.mxu0 0.0
  %1371 = vmatpush2.msra.mxu0 0.0
  %1372 = vmatprep.subr.mxu0 0.0
  %1373 = vmatpush2.msra.mxu0 0.0
  %1374 = vmatprep.subr.mxu0 0.0
  %1375 = vmatpush2.msra.mxu0 0.0
  %1376 = vmatprep.subr.mxu0 0.0
  %1377 = vmatpush2.msra.mxu0 0.0
  %1378 = vmatprep.subr.mxu0 0.0
  %1379 = vmatpush2.msra.mxu0 0.0
  %1380 = vmatprep.subr.mxu0 0.0
  %1381 = vmatpush2.msra.mxu0 0.0
  %1382 = vmatprep.subr.mxu0 0.0
  %1383 = vmatpush2.msra.mxu0 0.0
  %1384 = vmatprep.subr.mxu0 0.0
  %1385 = vmatpush2.msra.mxu0 0.0
  %1386 = vmatprep.subr.mxu0 0.0
  %1387 = vmatpush2.msra.mxu0 0.0
  %1388 = vmatprep.mubr.f32.mxu0 0.0
  %1389 = vmatmul.mubr.f32.gmra.mxu0 %v896
  %v1390 = vpop.f32.mrf.mxu0
  %v1391 = vadd.f32 %v722, %v1390
  %v1392 = vpop.f32.mrf.mxu0
  %1393 = vdwg.mxu0
  %v1394 = vadd.f32 %v1323, %v1391
  %v1395 = vxor.u32 %v1394, 2147483648
  %v1396 = vmul.f32 %v1395, 1.442695
  %v1397 = vpow.pop %v1396
  %v1398 = vadd.f32 %v1397, 1.0
  %v1399 = vrcp.pop %v1398
  %v1400 = vmul.f32 1.0, %v1399
  %1402 = vrot.lane.b32.xlu0 %v1391, 64
  %v1403 = vpop.permute.xlu0 %1402
  %v1405 = vmul.f32 %v1400, %v1403
  %1407 = vrot.lane.b32.xlu0 %v1405, 64
  %v1408 = vpop.permute.xlu0 %1407
  %v1410 = vadd.f32 %v1323, %v1408
  %v1411 = vtanh.pop %v1410
  %v1412 = vsub.f32 1.0, %v1400
  %1414 = vrot.lane.b32.xlu0 %v1411, 96
  %v1415 = vpop.permute.xlu0 %1414
  %v1417 = vmul.f32 %v1412, %v1415
  %v1418 = vmul.f32 %v1400, %v822
  %v1419 = vadd.f32 %v1417, %v1418
  %1420 = vmatprep.subr.mxu0 0.0
  %1421 = vmatpush1.msra.mxu0 0.0
  %1422 = vmatprep.subr.mxu0 0.0
  %1423 = vmatpush1.msra.mxu0 0.0
  %1424 = vmatprep.subr.mxu0 0.0
  %1425 = vmatpush1.msra.mxu0 0.0
  %1426 = vmatprep.subr.mxu0 0.0
  %1427 = vmatpush1.msra.mxu0 0.0
  %1428 = vmatprep.subr.mxu0 0.0
  %1429 = vmatpush1.msra.mxu0 0.0
  %1430 = vmatprep.subr.mxu0 0.0
  %1431 = vmatpush1.msra.mxu0 0.0
  %1432 = vmatprep.subr.mxu0 0.0
  %1433 = vmatpush1.msra.mxu0 0.0
  %1434 = vmatprep.subr.mxu0 0.0
  %1435 = vmatpush1.msra.mxu0 0.0
  %1436 = vmatprep.subr.mxu0 0.0
  %1437 = vmatpush1.msra.mxu0 0.0
  %1438 = vmatprep.subr.mxu0 0.0
  %1439 = vmatpush1.msra.mxu0 0.0
  %1440 = vmatprep.subr.mxu0 0.0
  %1441 = vmatpush1.msra.mxu0 0.0
  %1442 = vmatprep.subr.mxu0 0.0
  %1443 = vmatpush1.msra.mxu0 0.0
  %1444 = vmatprep.subr.mxu0 0.0
  %1445 = vmatpush1.msra.mxu0 %v78
  %1446 = vmatprep.subr.mxu0 0.0
  %1447 = vmatpush1.msra.mxu0 %v77
  %1448 = vmatprep.subr.mxu0 0.0
  %1449 = vmatpush1.msra.mxu0 %v76
  %1450 = vmatprep.subr.mxu0 0.0
  %1451 = vmatpush1.msra.mxu0 %v75
  %1452 = vmatprep.subr.mxu0 0.0
  %1453 = vmatpush2.msra.mxu0 0.0
  %1454 = vmatprep.subr.mxu0 0.0
  %1455 = vmatpush2.msra.mxu0 0.0
  %1456 = vmatprep.subr.mxu0 0.0
  %1457 = vmatpush2.msra.mxu0 0.0
  %1458 = vmatprep.subr.mxu0 0.0
  %1459 = vmatpush2.msra.mxu0 0.0
  %1460 = vmatprep.subr.mxu0 0.0
  %1461 = vmatpush2.msra.mxu0 0.0
  %1462 = vmatprep.subr.mxu0 0.0
  %1463 = vmatpush2.msra.mxu0 0.0
  %1464 = vmatprep.subr.mxu0 0.0
  %1465 = vmatpush2.msra.mxu0 0.0
  %1466 = vmatprep.subr.mxu0 0.0
  %1467 = vmatpush2.msra.mxu0 0.0
  %1468 = vmatprep.subr.mxu0 0.0
  %1469 = vmatpush2.msra.mxu0 0.0
  %1470 = vmatprep.subr.mxu0 0.0
  %1471 = vmatpush2.msra.mxu0 0.0
  %1472 = vmatprep.subr.mxu0 0.0
  %1473 = vmatpush2.msra.mxu0 0.0
  %1474 = vmatprep.subr.mxu0 0.0
  %1475 = vmatpush2.msra.mxu0 0.0
  %1476 = vmatprep.subr.mxu0 0.0
  %1477 = vmatpush2.msra.mxu0 0.0
  %1478 = vmatprep.subr.mxu0 0.0
  %1479 = vmatpush2.msra.mxu0 0.0
  %1480 = vmatprep.subr.mxu0 0.0
  %1481 = vmatpush2.msra.mxu0 0.0
  %1482 = vmatprep.subr.mxu0 0.0
  %1483 = vmatpush2.msra.mxu0 0.0
  %1484 = vmatprep.mubr.f32.mxu0 0.0
  %1485 = vmatmul.mubr.f32.gmra.mxu0 %v1251
  %v1486 = vpop.f32.mrf.mxu0
  %v1487 = vadd.f32 0.0, %v1486
  %v1488 = vpop.f32.mrf.mxu0
  %1489 = vdwg.mxu0
  %1491 = vrot.lane.b32.xlu0 %v1419, 96
  %v1492 = vpop.permute.xlu0 %1491
  %v1493 = vsel %vm180, %v1492, 0
  %1495 = vmatprep.subr.mxu0 0.0
  %1496 = vmatpush1.msra.mxu0 0.0
  %1497 = vmatprep.subr.mxu0 0.0
  %1498 = vmatpush1.msra.mxu0 0.0
  %1499 = vmatprep.subr.mxu0 0.0
  %1500 = vmatpush1.msra.mxu0 0.0
  %1501 = vmatprep.subr.mxu0 0.0
  %1502 = vmatpush1.msra.mxu0 0.0
  %1503 = vmatprep.subr.mxu0 0.0
  %1504 = vmatpush1.msra.mxu0 0.0
  %1505 = vmatprep.subr.mxu0 0.0
  %1506 = vmatpush1.msra.mxu0 0.0
  %1507 = vmatprep.subr.mxu0 0.0
  %1508 = vmatpush1.msra.mxu0 0.0
  %1509 = vmatprep.subr.mxu0 0.0
  %1510 = vmatpush1.msra.mxu0 0.0
  %1511 = vmatprep.subr.mxu0 0.0
  %1512 = vmatpush1.msra.mxu0 0.0
  %1513 = vmatprep.subr.mxu0 0.0
  %1514 = vmatpush1.msra.mxu0 0.0
  %1515 = vmatprep.subr.mxu0 0.0
  %1516 = vmatpush1.msra.mxu0 0.0
  %1517 = vmatprep.subr.mxu0 0.0
  %1518 = vmatpush1.msra.mxu0 0.0
  %1519 = vmatprep.subr.mxu0 0.0
  %1520 = vmatpush1.msra.mxu0 %v74
  %1521 = vmatprep.subr.mxu0 0.0
  %1522 = vmatpush1.msra.mxu0 %v73
  %1523 = vmatprep.subr.mxu0 0.0
  %1524 = vmatpush1.msra.mxu0 %v72
  %1525 = vmatprep.subr.mxu0 0.0
  %1526 = vmatpush1.msra.mxu0 %v71
  %1527 = vmatprep.subr.mxu0 0.0
  %1528 = vmatpush2.msra.mxu0 0.0
  %1529 = vmatprep.subr.mxu0 0.0
  %1530 = vmatpush2.msra.mxu0 0.0
  %1531 = vmatprep.subr.mxu0 0.0
  %1532 = vmatpush2.msra.mxu0 0.0
  %1533 = vmatprep.subr.mxu0 0.0
  %1534 = vmatpush2.msra.mxu0 0.0
  %1535 = vmatprep.subr.mxu0 0.0
  %1536 = vmatpush2.msra.mxu0 0.0
  %1537 = vmatprep.subr.mxu0 0.0
  %1538 = vmatpush2.msra.mxu0 0.0
  %1539 = vmatprep.subr.mxu0 0.0
  %1540 = vmatpush2.msra.mxu0 0.0
  %1541 = vmatprep.subr.mxu0 0.0
  %1542 = vmatpush2.msra.mxu0 0.0
  %1543 = vmatprep.subr.mxu0 0.0
  %1544 = vmatpush2.msra.mxu0 0.0
  %1545 = vmatprep.subr.mxu0 0.0
  %1546 = vmatpush2.msra.mxu0 0.0
  %1547 = vmatprep.subr.mxu0 0.0
  %1548 = vmatpush2.msra.mxu0 0.0
  %1549 = vmatprep.subr.mxu0 0.0
  %1550 = vmatpush2.msra.mxu0 0.0
  %1551 = vmatprep.subr.mxu0 0.0
  %1552 = vmatpush2.msra.mxu0 0.0
  %1553 = vmatprep.subr.mxu0 0.0
  %1554 = vmatpush2.msra.mxu0 0.0
  %1555 = vmatprep.subr.mxu0 0.0
  %1556 = vmatpush2.msra.mxu0 0.0
  %1557 = vmatprep.subr.mxu0 0.0
  %1558 = vmatpush2.msra.mxu0 0.0
  %1559 = vmatprep.mubr.f32.mxu0 0.0
  %1560 = vmatmul.mubr.f32.gmra.mxu0 %v1493
  %v1561 = vpop.f32.mrf.mxu0
  %v1562 = vadd.f32 %v1487, %v1561
  %v1563 = vpop.f32.mrf.mxu0
  %1564 = vdwg.mxu0
  %v1565 = vadd.f32 %v1562, %v972
  %s1566 = scalar_lea.vmem %s17, 2
  %1567 = vst.msk [vmem:[%s1566] sm:$0x3] %vm975, %v1565
  %1568 = vmatprep.subr.mxu0 0.0
  %1569 = vmatpush1.msra.mxu0 0.0
  %1570 = vmatprep.subr.mxu0 0.0
  %1571 = vmatpush1.msra.mxu0 0.0
  %1572 = vmatprep.subr.mxu0 0.0
  %1573 = vmatpush1.msra.mxu0 0.0
  %1574 = vmatprep.subr.mxu0 0.0
  %1575 = vmatpush1.msra.mxu0 0.0
  %1576 = vmatprep.subr.mxu0 0.0
  %1577 = vmatpush1.msra.mxu0 0.0
  %1578 = vmatprep.subr.mxu0 0.0
  %1579 = vmatpush1.msra.mxu0 0.0
  %1580 = vmatprep.subr.mxu0 0.0
  %1581 = vmatpush1.msra.mxu0 0.0
  %1582 = vmatprep.subr.mxu0 0.0
  %1583 = vmatpush1.msra.mxu0 0.0
  %1584 = vmatprep.subr.mxu0 0.0
  %1585 = vmatpush1.msra.mxu0 0.0
  %1586 = vmatprep.subr.mxu0 0.0
  %1587 = vmatpush1.msra.mxu0 0.0
  %1588 = vmatprep.subr.mxu0 0.0
  %1589 = vmatpush1.msra.mxu0 0.0
  %1590 = vmatprep.subr.mxu0 0.0
  %1591 = vmatpush1.msra.mxu0 0.0
  %1592 = vmatprep.subr.mxu0 0.0
  %1593 = vmatpush1.msra.mxu0 %v59
  %1594 = vmatprep.subr.mxu0 0.0
  %1595 = vmatpush1.msra.mxu0 %v58
  %1596 = vmatprep.subr.mxu0 0.0
  %1597 = vmatpush1.msra.mxu0 %v57
  %1598 = vmatprep.subr.mxu0 0.0
  %1599 = vmatpush1.msra.mxu0 %v56
  %1600 = vmatprep.subr.mxu0 0.0
  %1601 = vmatpush2.msra.mxu0 0.0
  %1602 = vmatprep.subr.mxu0 0.0
  %1603 = vmatpush2.msra.mxu0 0.0
  %1604 = vmatprep.subr.mxu0 0.0
  %1605 = vmatpush2.msra.mxu0 0.0
  %1606 = vmatprep.subr.mxu0 0.0
  %1607 = vmatpush2.msra.mxu0 0.0
  %1608 = vmatprep.subr.mxu0 0.0
  %1609 = vmatpush2.msra.mxu0 0.0
  %1610 = vmatprep.subr.mxu0 0.0
  %1611 = vmatpush2.msra.mxu0 0.0
  %1612 = vmatprep.subr.mxu0 0.0
  %1613 = vmatpush2.msra.mxu0 0.0
  %1614 = vmatprep.subr.mxu0 0.0
  %1615 = vmatpush2.msra.mxu0 0.0
  %1616 = vmatprep.subr.mxu0 0.0
  %1617 = vmatpush2.msra.mxu0 0.0
  %1618 = vmatprep.subr.mxu0 0.0
  %1619 = vmatpush2.msra.mxu0 0.0
  %1620 = vmatprep.subr.mxu0 0.0
  %1621 = vmatpush2.msra.mxu0 0.0
  %1622 = vmatprep.subr.mxu0 0.0
  %1623 = vmatpush2.msra.mxu0 0.0
  %1624 = vmatprep.subr.mxu0 0.0
  %1625 = vmatpush2.msra.mxu0 0.0
  %1626 = vmatprep.subr.mxu0 0.0
  %1627 = vmatpush2.msra.mxu0 0.0
  %1628 = vmatprep.subr.mxu0 0.0
  %1629 = vmatpush2.msra.mxu0 0.0
  %1630 = vmatprep.subr.mxu0 0.0
  %1631 = vmatpush2.msra.mxu0 0.0
  %1632 = vmatprep.mubr.f32.mxu0 0.0
  %1633 = vmatmul.mubr.f32.gmra.mxu0 %v1493
  %v1634 = vpop.f32.mrf.mxu0
  %v1635 = vadd.f32 0.0, %v1634
  %v1636 = vpop.f32.mrf.mxu0
  %1637 = vdwg.mxu0
  %v1640 = vunpack.c.l.s4 1966171168
  %v1641 = vunpack.c.0.s8 %v1640
  %v1642 = vlaneseq
  %v1643 = vshrl.u32 %v1642, 7
  %v1644 = vsub.s32 %v1641, %v1643
  %v1645 = vrot.slane %v1635, %v1644
  %v1646 = vcombine.high %v1645, %v1645
  %v1648 = vunpack.c.l.s4 1966171168
  %v1649 = vunpack.c.0.s8 %v1648
  %v1650 = vlaneseq
  %v1651 = vshrl.u32 %v1650, 7
  %v1652 = vsub.s32 %v1649, %v1651
  %v1653 = vrot.slane %v1645, %v1652
  %v1655 = vunpack.c.l.s4 1966171168
  %v1656 = vunpack.c.0.s8 %v1655
  %v1657 = vlaneseq
  %v1658 = vshrl.u32 %v1657, 7
  %v1659 = vsub.s32 %v1656, %v1658
  %v1660 = vrot.slane %v1646, %v1659
  %v1661 = vlaneseq
  %v1662 = vshrl.u32 %v1661, 7
  %v1663 = vsub.s32 0, %v1662
  %v1664 = vrot.slane %v1653, %v1663
  %v1665 = vlaneseq
  %v1666 = vshrl.u32 %v1665, 7
  %v1667 = vsub.s32 0, %v1666
  %v1668 = vrot.slane %v1660, %v1667
  %v1671 = vadd.f32 %v351, %v1664
  %v1672 = vadd.f32 %v352, %v1664
  %v1673 = vadd.f32 %v353, %v1668
  %v1674 = vadd.f32 %v354, %v1668
  %v1675 = vmax.f32 %v1671, 0.0
  %v1676 = vmax.f32 %v1672, 0.0
  %v1677 = vmax.f32 %v1673, 0.0
  %v1678 = vmax.f32 %v1674, 0.0
  %v1679 = vmul.f32 %v1675, %v479
  %v1680 = vmul.f32 %v1676, %v479
  %v1681 = vmul.f32 %v1677, %v479
  %v1682 = vmul.f32 %v1678, %v479
  %v1683 = vsel %vm180, %v1679, 0.0
  %1684 = vadd.xlane.f32.xlu0 %v1683
  %v1685 = vpop.xlane.xlu0 %1684
  %v1686 = vsel %vm180, %v1680, 0.0
  %1687 = vadd.xlane.f32.xlu0 %v1686
  %v1688 = vpop.xlane.xlu0 %1687
  %v1689 = vsel %vm180, %v1681, 0.0
  %1690 = vadd.xlane.f32.xlu0 %v1689
  %v1691 = vpop.xlane.xlu0 %1690
  %v1692 = vsel %vm180, %v1682, 0.0
  %1693 = vadd.xlane.f32.xlu0 %v1692
  %v1694 = vpop.xlane.xlu0 %1693
  %v1695 = vmax.f32 %v1685, %v1688
  %v1696 = vrot.slane %v1695, 4
  %v1697 = vmax.f32 %v1695, %v1696
  %v1698 = vrot.slane %v1697, 2
  %v1699 = vmax.f32 %v1697, %v1698
  %v1700 = vrot.slane %v1699, 1
  %v1701 = vmax.f32 %v1699, %v1700
  %v1702 = vmax.f32 %v1691, %v1694
  %v1703 = vrot.slane %v1702, 4
  %v1704 = vmax.f32 %v1702, %v1703
  %v1705 = vrot.slane %v1704, 2
  %v1706 = vmax.f32 %v1704, %v1705
  %v1707 = vrot.slane %v1706, 1
  %v1708 = vmax.f32 %v1706, %v1707
  %v1709 = vsub.f32 %v1685, %v1701
  %v1710 = vsub.f32 %v1688, %v1701
  %v1711 = vsub.f32 %v1691, %v1708
  %v1712 = vsub.f32 %v1694, %v1708
  %v1713 = vmul.f32 %v1709, 1.442695
  %v1714 = vpow.pop %v1713
  %v1715 = vmul.f32 %v1710, 1.442695
  %v1716 = vpow.pop %v1715
  %v1717 = vmul.f32 %v1711, 1.442695
  %v1718 = vpow.pop %v1717
  %v1719 = vmul.f32 %v1712, 1.442695
  %v1720 = vpow.pop %v1719
  %v1721 = vadd.f32 %v1714, %v1716
  %v1722 = vrot.slane %v1721, 4
  %v1723 = vadd.f32 %v1721, %v1722
  %v1724 = vrot.slane %v1723, 2
  %v1725 = vadd.f32 %v1723, %v1724
  %v1726 = vrot.slane %v1725, 1
  %v1727 = vadd.f32 %v1725, %v1726
  %v1728 = vadd.f32 %v1718, %v1720
  %v1729 = vrot.slane %v1728, 4
  %v1730 = vadd.f32 %v1728, %v1729
  %v1731 = vrot.slane %v1730, 2
  %v1732 = vadd.f32 %v1730, %v1731
  %v1733 = vrot.slane %v1732, 1
  %v1734 = vadd.f32 %v1732, %v1733
  %v1735 = vrcp.pop %v1727
  %v1736 = vmul.f32 %v1714, %v1735
  %v1737 = vmul.f32 %v1716, %v1735
  %v1738 = vrcp.pop %v1734
  %v1739 = vmul.f32 %v1718, %v1738
  %v1740 = vmul.f32 %v1720, %v1738
  %v1741 = vmul.f32 %v1736, %v355
  %v1742 = vmul.f32 %v1737, %v356
  %v1743 = vmul.f32 %v1739, %v357
  %v1744 = vmul.f32 %v1740, %v358
  %v1745 = vsel %vm180, %v1741, 0.0
  %v1746 = vsel %vm180, %v1742, 0.0
  %v1747 = vadd.f32 %v1745, %v1746
  %v1748 = vrot.slane %v1747, 4
  %v1749 = vadd.f32 %v1747, %v1748
  %v1750 = vrot.slane %v1749, 2
  %v1751 = vadd.f32 %v1749, %v1750
  %v1752 = vrot.slane %v1751, 1
  %v1753 = vadd.f32 %v1751, %v1752
  %v1754 = vsel %vm180, %v1743, 0.0
  %v1755 = vsel %vm180, %v1744, 0.0
  %v1756 = vadd.f32 %v1754, %v1755
  %v1757 = vrot.slane %v1756, 4
  %v1758 = vadd.f32 %v1756, %v1757
  %v1759 = vrot.slane %v1758, 2
  %v1760 = vadd.f32 %v1758, %v1759
  %v1761 = vrot.slane %v1760, 1
  %v1762 = vadd.f32 %v1760, %v1761
  %v1763 = vrot.slane %v164, 4
  %v1766 = vsel %vm89, %v1565, 0
  %1768 = vmatprep.subr.mxu0 0.0
  %1769 = vmatpush1.msra.mxu0 0.0
  %1770 = vmatprep.subr.mxu0 0.0
  %1771 = vmatpush1.msra.mxu0 0.0
  %1772 = vmatprep.subr.mxu0 0.0
  %1773 = vmatpush1.msra.mxu0 0.0
  %1774 = vmatprep.subr.mxu0 0.0
  %1775 = vmatpush1.msra.mxu0 0.0
  %1776 = vmatprep.subr.mxu0 0.0
  %1777 = vmatpush1.msra.mxu0 0.0
  %1778 = vmatprep.subr.mxu0 0.0
  %1779 = vmatpush1.msra.mxu0 0.0
  %1780 = vmatprep.subr.mxu0 0.0
  %1781 = vmatpush1.msra.mxu0 0.0
  %1782 = vmatprep.subr.mxu0 0.0
  %1783 = vmatpush1.msra.mxu0 0.0
  %1784 = vmatprep.subr.mxu0 0.0
  %1785 = vmatpush1.msra.mxu0 0.0
  %1786 = vmatprep.subr.mxu0 0.0
  %1787 = vmatpush1.msra.mxu0 0.0
  %1788 = vmatprep.subr.mxu0 0.0
  %1789 = vmatpush1.msra.mxu0 0.0
  %1790 = vmatprep.subr.mxu0 0.0
  %1791 = vmatpush1.msra.mxu0 0.0
  %1792 = vmatprep.subr.mxu0 0.0
  %1793 = vmatpush1.msra.mxu0 0.0
  %1794 = vmatprep.subr.mxu0 0.0
  %1795 = vmatpush1.msra.mxu0 0.0
  %1796 = vmatprep.subr.mxu0 0.0
  %1797 = vmatpush1.msra.mxu0 0.0
  %1798 = vmatprep.subr.mxu0 0.0
  %1799 = vmatpush1.msra.mxu0 %v569
  %1800 = vmatprep.subr.mxu0 0.0
  %1801 = vmatpush2.msra.mxu0 0.0
  %1802 = vmatprep.subr.mxu0 0.0
  %1803 = vmatpush2.msra.mxu0 0.0
  %1804 = vmatprep.subr.mxu0 0.0
  %1805 = vmatpush2.msra.mxu0 0.0
  %1806 = vmatprep.subr.mxu0 0.0
  %1807 = vmatpush2.msra.mxu0 0.0
  %1808 = vmatprep.subr.mxu0 0.0
  %1809 = vmatpush2.msra.mxu0 0.0
  %1810 = vmatprep.subr.mxu0 0.0
  %1811 = vmatpush2.msra.mxu0 0.0
  %1812 = vmatprep.subr.mxu0 0.0
  %1813 = vmatpush2.msra.mxu0 0.0
  %1814 = vmatprep.subr.mxu0 0.0
  %1815 = vmatpush2.msra.mxu0 0.0
  %1816 = vmatprep.subr.mxu0 0.0
  %1817 = vmatpush2.msra.mxu0 0.0
  %1818 = vmatprep.subr.mxu0 0.0
  %1819 = vmatpush2.msra.mxu0 0.0
  %1820 = vmatprep.subr.mxu0 0.0
  %1821 = vmatpush2.msra.mxu0 0.0
  %1822 = vmatprep.subr.mxu0 0.0
  %1823 = vmatpush2.msra.mxu0 0.0
  %1824 = vmatprep.subr.mxu0 0.0
  %1825 = vmatpush2.msra.mxu0 0.0
  %1826 = vmatprep.subr.mxu0 0.0
  %1827 = vmatpush2.msra.mxu0 0.0
  %1828 = vmatprep.subr.mxu0 0.0
  %1829 = vmatpush2.msra.mxu0 0.0
  %1830 = vmatprep.subr.mxu0 0.0
  %1831 = vmatpush2.msra.mxu0 0.0
  %1832 = vmatprep.mubr.f32.mxu0 0.0
  %1833 = vmatmul.mubr.f32.gmra.mxu0 %v1766
  %v1834 = vpop.f32.mrf.mxu0
  %v1835 = vadd.f32 %v1763, %v1834
  %v1836 = vpop.f32.mrf.mxu0
  %1837 = vdwg.mxu0
  %v1840 = vsel %vm643, %v1762, %v1753
  %v1841 = vsel %vm180, %v1840, 0
  %1843 = vmatprep.subr.mxu0 0.0
  %1844 = vmatpush1.msra.mxu0 0.0
  %1845 = vmatprep.subr.mxu0 0.0
  %1846 = vmatpush1.msra.mxu0 0.0
  %1847 = vmatprep.subr.mxu0 0.0
  %1848 = vmatpush1.msra.mxu0 0.0
  %1849 = vmatprep.subr.mxu0 0.0
  %1850 = vmatpush1.msra.mxu0 0.0
  %1851 = vmatprep.subr.mxu0 0.0
  %1852 = vmatpush1.msra.mxu0 0.0
  %1853 = vmatprep.subr.mxu0 0.0
  %1854 = vmatpush1.msra.mxu0 0.0
  %1855 = vmatprep.subr.mxu0 0.0
  %1856 = vmatpush1.msra.mxu0 0.0
  %1857 = vmatprep.subr.mxu0 0.0
  %1858 = vmatpush1.msra.mxu0 0.0
  %1859 = vmatprep.subr.mxu0 0.0
  %1860 = vmatpush1.msra.mxu0 0.0
  %1861 = vmatprep.subr.mxu0 0.0
  %1862 = vmatpush1.msra.mxu0 0.0
  %1863 = vmatprep.subr.mxu0 0.0
  %1864 = vmatpush1.msra.mxu0 0.0
  %1865 = vmatprep.subr.mxu0 0.0
  %1866 = vmatpush1.msra.mxu0 0.0
  %1867 = vmatprep.subr.mxu0 0.0
  %1868 = vmatpush1.msra.mxu0 %v65
  %1869 = vmatprep.subr.mxu0 0.0
  %1870 = vmatpush1.msra.mxu0 %v64
  %1871 = vmatprep.subr.mxu0 0.0
  %1872 = vmatpush1.msra.mxu0 %v63
  %1873 = vmatprep.subr.mxu0 0.0
  %1874 = vmatpush1.msra.mxu0 %v62
  %1875 = vmatprep.subr.mxu0 0.0
  %1876 = vmatpush2.msra.mxu0 0.0
  %1877 = vmatprep.subr.mxu0 0.0
  %1878 = vmatpush2.msra.mxu0 0.0
  %1879 = vmatprep.subr.mxu0 0.0
  %1880 = vmatpush2.msra.mxu0 0.0
  %1881 = vmatprep.subr.mxu0 0.0
  %1882 = vmatpush2.msra.mxu0 0.0
  %1883 = vmatprep.subr.mxu0 0.0
  %1884 = vmatpush2.msra.mxu0 0.0
  %1885 = vmatprep.subr.mxu0 0.0
  %1886 = vmatpush2.msra.mxu0 0.0
  %1887 = vmatprep.subr.mxu0 0.0
  %1888 = vmatpush2.msra.mxu0 0.0
  %1889 = vmatprep.subr.mxu0 0.0
  %1890 = vmatpush2.msra.mxu0 0.0
  %1891 = vmatprep.subr.mxu0 0.0
  %1892 = vmatpush2.msra.mxu0 0.0
  %1893 = vmatprep.subr.mxu0 0.0
  %1894 = vmatpush2.msra.mxu0 0.0
  %1895 = vmatprep.subr.mxu0 0.0
  %1896 = vmatpush2.msra.mxu0 0.0
  %1897 = vmatprep.subr.mxu0 0.0
  %1898 = vmatpush2.msra.mxu0 0.0
  %1899 = vmatprep.subr.mxu0 0.0
  %1900 = vmatpush2.msra.mxu0 0.0
  %1901 = vmatprep.subr.mxu0 0.0
  %1902 = vmatpush2.msra.mxu0 0.0
  %1903 = vmatprep.subr.mxu0 0.0
  %1904 = vmatpush2.msra.mxu0 0.0
  %1905 = vmatprep.subr.mxu0 0.0
  %1906 = vmatpush2.msra.mxu0 0.0
  %1907 = vmatprep.mubr.f32.mxu0 0.0
  %1908 = vmatmul.mubr.f32.gmra.mxu0 %v1841
  %v1909 = vpop.f32.mrf.mxu0
  %v1910 = vadd.f32 0.0, %v1909
  %v1911 = vpop.f32.mrf.mxu0
  %1912 = vdwg.mxu0
  %v1913 = vadd.f32 %v1835, %v1910
  %1914 = vmatprep.subr.mxu0 0.0
  %1915 = vmatpush1.msra.mxu0 0.0
  %1916 = vmatprep.subr.mxu0 0.0
  %1917 = vmatpush1.msra.mxu0 0.0
  %1918 = vmatprep.subr.mxu0 0.0
  %1919 = vmatpush1.msra.mxu0 0.0
  %1920 = vmatprep.subr.mxu0 0.0
  %1921 = vmatpush1.msra.mxu0 0.0
  %1922 = vmatprep.subr.mxu0 0.0
  %1923 = vmatpush1.msra.mxu0 0.0
  %1924 = vmatprep.subr.mxu0 0.0
  %1925 = vmatpush1.msra.mxu0 0.0
  %1926 = vmatprep.subr.mxu0 0.0
  %1927 = vmatpush1.msra.mxu0 0.0
  %1928 = vmatprep.subr.mxu0 0.0
  %1929 = vmatpush1.msra.mxu0 0.0
  %1930 = vmatprep.subr.mxu0 0.0
  %1931 = vmatpush1.msra.mxu0 0.0
  %1932 = vmatprep.subr.mxu0 0.0
  %1933 = vmatpush1.msra.mxu0 0.0
  %1934 = vmatprep.subr.mxu0 0.0
  %1935 = vmatpush1.msra.mxu0 0.0
  %1936 = vmatprep.subr.mxu0 0.0
  %1937 = vmatpush1.msra.mxu0 0.0
  %1938 = vmatprep.subr.mxu0 0.0
  %1939 = vmatpush1.msra.mxu0 %v69
  %1940 = vmatprep.subr.mxu0 0.0
  %1941 = vmatpush1.msra.mxu0 %v68
  %1942 = vmatprep.subr.mxu0 0.0
  %1943 = vmatpush1.msra.mxu0 %v67
  %1944 = vmatprep.subr.mxu0 0.0
  %1945 = vmatpush1.msra.mxu0 %v66
  %1946 = vmatprep.subr.mxu0 0.0
  %1947 = vmatpush2.msra.mxu0 0.0
  %1948 = vmatprep.subr.mxu0 0.0
  %1949 = vmatpush2.msra.mxu0 0.0
  %1950 = vmatprep.subr.mxu0 0.0
  %1951 = vmatpush2.msra.mxu0 0.0
  %1952 = vmatprep.subr.mxu0 0.0
  %1953 = vmatpush2.msra.mxu0 0.0
  %1954 = vmatprep.subr.mxu0 0.0
  %1955 = vmatpush2.msra.mxu0 0.0
  %1956 = vmatprep.subr.mxu0 0.0
  %1957 = vmatpush2.msra.mxu0 0.0
  %1958 = vmatprep.subr.mxu0 0.0
  %1959 = vmatpush2.msra.mxu0 0.0
  %1960 = vmatprep.subr.mxu0 0.0
  %1961 = vmatpush2.msra.mxu0 0.0
  %1962 = vmatprep.subr.mxu0 0.0
  %1963 = vmatpush2.msra.mxu0 0.0
  %1964 = vmatprep.subr.mxu0 0.0
  %1965 = vmatpush2.msra.mxu0 0.0
  %1966 = vmatprep.subr.mxu0 0.0
  %1967 = vmatpush2.msra.mxu0 0.0
  %1968 = vmatprep.subr.mxu0 0.0
  %1969 = vmatpush2.msra.mxu0 0.0
  %1970 = vmatprep.subr.mxu0 0.0
  %1971 = vmatpush2.msra.mxu0 0.0
  %1972 = vmatprep.subr.mxu0 0.0
  %1973 = vmatpush2.msra.mxu0 0.0
  %1974 = vmatprep.subr.mxu0 0.0
  %1975 = vmatpush2.msra.mxu0 0.0
  %1976 = vmatprep.subr.mxu0 0.0
  %1977 = vmatpush2.msra.mxu0 0.0
  %1978 = vmatprep.mubr.f32.mxu0 0.0
  %1979 = vmatmul.mubr.f32.gmra.mxu0 %v1493
  %v1980 = vpop.f32.mrf.mxu0
  %v1981 = vadd.f32 %v722, %v1980
  %v1982 = vpop.f32.mrf.mxu0
  %1983 = vdwg.mxu0
  %v1984 = vadd.f32 %v1913, %v1981
  %v1985 = vxor.u32 %v1984, 2147483648
  %v1986 = vmul.f32 %v1985, 1.442695
  %v1987 = vpow.pop %v1986
  %v1988 = vadd.f32 %v1987, 1.0
  %v1989 = vrcp.pop %v1988
  %v1990 = vmul.f32 1.0, %v1989
  %1992 = vrot.lane.b32.xlu0 %v1981, 64
  %v1993 = vpop.permute.xlu0 %1992
  %v1995 = vmul.f32 %v1990, %v1993
  %1997 = vrot.lane.b32.xlu0 %v1995, 64
  %v1998 = vpop.permute.xlu0 %1997
  %v2000 = vadd.f32 %v1913, %v1998
  %v2001 = vtanh.pop %v2000
  %v2002 = vsub.f32 1.0, %v1990
  %2004 = vrot.lane.b32.xlu0 %v2001, 96
  %v2005 = vpop.permute.xlu0 %2004
  %v2007 = vmul.f32 %v2002, %v2005
  %v2008 = vmul.f32 %v1990, %v1419
  %v2009 = vadd.f32 %v2007, %v2008
  %2010 = vmatprep.subr.mxu0 0.0
  %2011 = vmatpush1.msra.mxu0 0.0
  %2012 = vmatprep.subr.mxu0 0.0
  %2013 = vmatpush1.msra.mxu0 0.0
  %2014 = vmatprep.subr.mxu0 0.0
  %2015 = vmatpush1.msra.mxu0 0.0
  %2016 = vmatprep.subr.mxu0 0.0
  %2017 = vmatpush1.msra.mxu0 0.0
  %2018 = vmatprep.subr.mxu0 0.0
  %2019 = vmatpush1.msra.mxu0 0.0
  %2020 = vmatprep.subr.mxu0 0.0
  %2021 = vmatpush1.msra.mxu0 0.0
  %2022 = vmatprep.subr.mxu0 0.0
  %2023 = vmatpush1.msra.mxu0 0.0
  %2024 = vmatprep.subr.mxu0 0.0
  %2025 = vmatpush1.msra.mxu0 0.0
  %2026 = vmatprep.subr.mxu0 0.0
  %2027 = vmatpush1.msra.mxu0 0.0
  %2028 = vmatprep.subr.mxu0 0.0
  %2029 = vmatpush1.msra.mxu0 0.0
  %2030 = vmatprep.subr.mxu0 0.0
  %2031 = vmatpush1.msra.mxu0 0.0
  %2032 = vmatprep.subr.mxu0 0.0
  %2033 = vmatpush1.msra.mxu0 0.0
  %2034 = vmatprep.subr.mxu0 0.0
  %2035 = vmatpush1.msra.mxu0 %v78
  %2036 = vmatprep.subr.mxu0 0.0
  %2037 = vmatpush1.msra.mxu0 %v77
  %2038 = vmatprep.subr.mxu0 0.0
  %2039 = vmatpush1.msra.mxu0 %v76
  %2040 = vmatprep.subr.mxu0 0.0
  %2041 = vmatpush1.msra.mxu0 %v75
  %2042 = vmatprep.subr.mxu0 0.0
  %2043 = vmatpush2.msra.mxu0 0.0
  %2044 = vmatprep.subr.mxu0 0.0
  %2045 = vmatpush2.msra.mxu0 0.0
  %2046 = vmatprep.subr.mxu0 0.0
  %2047 = vmatpush2.msra.mxu0 0.0
  %2048 = vmatprep.subr.mxu0 0.0
  %2049 = vmatpush2.msra.mxu0 0.0
  %2050 = vmatprep.subr.mxu0 0.0
  %2051 = vmatpush2.msra.mxu0 0.0
  %2052 = vmatprep.subr.mxu0 0.0
  %2053 = vmatpush2.msra.mxu0 0.0
  %2054 = vmatprep.subr.mxu0 0.0
  %2055 = vmatpush2.msra.mxu0 0.0
  %2056 = vmatprep.subr.mxu0 0.0
  %2057 = vmatpush2.msra.mxu0 0.0
  %2058 = vmatprep.subr.mxu0 0.0
  %2059 = vmatpush2.msra.mxu0 0.0
  %2060 = vmatprep.subr.mxu0 0.0
  %2061 = vmatpush2.msra.mxu0 0.0
  %2062 = vmatprep.subr.mxu0 0.0
  %2063 = vmatpush2.msra.mxu0 0.0
  %2064 = vmatprep.subr.mxu0 0.0
  %2065 = vmatpush2.msra.mxu0 0.0
  %2066 = vmatprep.subr.mxu0 0.0
  %2067 = vmatpush2.msra.mxu0 0.0
  %2068 = vmatprep.subr.mxu0 0.0
  %2069 = vmatpush2.msra.mxu0 0.0
  %2070 = vmatprep.subr.mxu0 0.0
  %2071 = vmatpush2.msra.mxu0 0.0
  %2072 = vmatprep.subr.mxu0 0.0
  %2073 = vmatpush2.msra.mxu0 0.0
  %2074 = vmatprep.mubr.f32.mxu0 0.0
  %2075 = vmatmul.mubr.f32.gmra.mxu0 %v1841
  %v2076 = vpop.f32.mrf.mxu0
  %v2077 = vadd.f32 0.0, %v2076
  %v2078 = vpop.f32.mrf.mxu0
  %2079 = vdwg.mxu0
  %2081 = vrot.lane.b32.xlu0 %v2009, 96
  %v2082 = vpop.permute.xlu0 %2081
  %v2083 = vsel %vm180, %v2082, 0
  %2085 = vmatprep.subr.mxu0 0.0
  %2086 = vmatpush1.msra.mxu0 0.0
  %2087 = vmatprep.subr.mxu0 0.0
  %2088 = vmatpush1.msra.mxu0 0.0
  %2089 = vmatprep.subr.mxu0 0.0
  %2090 = vmatpush1.msra.mxu0 0.0
  %2091 = vmatprep.subr.mxu0 0.0
  %2092 = vmatpush1.msra.mxu0 0.0
  %2093 = vmatprep.subr.mxu0 0.0
  %2094 = vmatpush1.msra.mxu0 0.0
  %2095 = vmatprep.subr.mxu0 0.0
  %2096 = vmatpush1.msra.mxu0 0.0
  %2097 = vmatprep.subr.mxu0 0.0
  %2098 = vmatpush1.msra.mxu0 0.0
  %2099 = vmatprep.subr.mxu0 0.0
  %2100 = vmatpush1.msra.mxu0 0.0
  %2101 = vmatprep.subr.mxu0 0.0
  %2102 = vmatpush1.msra.mxu0 0.0
  %2103 = vmatprep.subr.mxu0 0.0
  %2104 = vmatpush1.msra.mxu0 0.0
  %2105 = vmatprep.subr.mxu0 0.0
  %2106 = vmatpush1.msra.mxu0 0.0
  %2107 = vmatprep.subr.mxu0 0.0
  %2108 = vmatpush1.msra.mxu0 0.0
  %2109 = vmatprep.subr.mxu0 0.0
  %2110 = vmatpush1.msra.mxu0 %v74
  %2111 = vmatprep.subr.mxu0 0.0
  %2112 = vmatpush1.msra.mxu0 %v73
  %2113 = vmatprep.subr.mxu0 0.0
  %2114 = vmatpush1.msra.mxu0 %v72
  %2115 = vmatprep.subr.mxu0 0.0
  %2116 = vmatpush1.msra.mxu0 %v71
  %2117 = vmatprep.subr.mxu0 0.0
  %2118 = vmatpush2.msra.mxu0 0.0
  %2119 = vmatprep.subr.mxu0 0.0
  %2120 = vmatpush2.msra.mxu0 0.0
  %2121 = vmatprep.subr.mxu0 0.0
  %2122 = vmatpush2.msra.mxu0 0.0
  %2123 = vmatprep.subr.mxu0 0.0
  %2124 = vmatpush2.msra.mxu0 0.0
  %2125 = vmatprep.subr.mxu0 0.0
  %2126 = vmatpush2.msra.mxu0 0.0
  %2127 = vmatprep.subr.mxu0 0.0
  %2128 = vmatpush2.msra.mxu0 0.0
  %2129 = vmatprep.subr.mxu0 0.0
  %2130 = vmatpush2.msra.mxu0 0.0
  %2131 = vmatprep.subr.mxu0 0.0
  %2132 = vmatpush2.msra.mxu0 0.0
  %2133 = vmatprep.subr.mxu0 0.0
  %2134 = vmatpush2.msra.mxu0 0.0
  %2135 = vmatprep.subr.mxu0 0.0
  %2136 = vmatpush2.msra.mxu0 0.0
  %2137 = vmatprep.subr.mxu0 0.0
  %2138 = vmatpush2.msra.mxu0 0.0
  %2139 = vmatprep.subr.mxu0 0.0
  %2140 = vmatpush2.msra.mxu0 0.0
  %2141 = vmatprep.subr.mxu0 0.0
  %2142 = vmatpush2.msra.mxu0 0.0
  %2143 = vmatprep.subr.mxu0 0.0
  %2144 = vmatpush2.msra.mxu0 0.0
  %2145 = vmatprep.subr.mxu0 0.0
  %2146 = vmatpush2.msra.mxu0 0.0
  %2147 = vmatprep.subr.mxu0 0.0
  %2148 = vmatpush2.msra.mxu0 0.0
  %2149 = vmatprep.mubr.f32.mxu0 0.0
  %2150 = vmatmul.mubr.f32.gmra.mxu0 %v2083
  %v2151 = vpop.f32.mrf.mxu0
  %v2152 = vadd.f32 %v2077, %v2151
  %v2153 = vpop.f32.mrf.mxu0
  %2154 = vdwg.mxu0
  %v2155 = vadd.f32 %v2152, %v972
  %s2156 = scalar_lea.vmem %s17, 4
  %2157 = vst.msk [vmem:[%s2156] sm:$0x3] %vm975, %v2155
  %2158 = vmatprep.subr.mxu0 0.0
  %2159 = vmatpush1.msra.mxu0 0.0
  %2160 = vmatprep.subr.mxu0 0.0
  %2161 = vmatpush1.msra.mxu0 0.0
  %2162 = vmatprep.subr.mxu0 0.0
  %2163 = vmatpush1.msra.mxu0 0.0
  %2164 = vmatprep.subr.mxu0 0.0
  %2165 = vmatpush1.msra.mxu0 0.0
  %2166 = vmatprep.subr.mxu0 0.0
  %2167 = vmatpush1.msra.mxu0 0.0
  %2168 = vmatprep.subr.mxu0 0.0
  %2169 = vmatpush1.msra.mxu0 0.0
  %2170 = vmatprep.subr.mxu0 0.0
  %2171 = vmatpush1.msra.mxu0 0.0
  %2172 = vmatprep.subr.mxu0 0.0
  %2173 = vmatpush1.msra.mxu0 0.0
  %2174 = vmatprep.subr.mxu0 0.0
  %2175 = vmatpush1.msra.mxu0 0.0
  %2176 = vmatprep.subr.mxu0 0.0
  %2177 = vmatpush1.msra.mxu0 0.0
  %2178 = vmatprep.subr.mxu0 0.0
  %2179 = vmatpush1.msra.mxu0 0.0
  %2180 = vmatprep.subr.mxu0 0.0
  %2181 = vmatpush1.msra.mxu0 0.0
  %2182 = vmatprep.subr.mxu0 0.0
  %2183 = vmatpush1.msra.mxu0 %v59
  %2184 = vmatprep.subr.mxu0 0.0
  %2185 = vmatpush1.msra.mxu0 %v58
  %2186 = vmatprep.subr.mxu0 0.0
  %2187 = vmatpush1.msra.mxu0 %v57
  %2188 = vmatprep.subr.mxu0 0.0
  %2189 = vmatpush1.msra.mxu0 %v56
  %2190 = vmatprep.subr.mxu0 0.0
  %2191 = vmatpush2.msra.mxu0 0.0
  %2192 = vmatprep.subr.mxu0 0.0
  %2193 = vmatpush2.msra.mxu0 0.0
  %2194 = vmatprep.subr.mxu0 0.0
  %2195 = vmatpush2.msra.mxu0 0.0
  %2196 = vmatprep.subr.mxu0 0.0
  %2197 = vmatpush2.msra.mxu0 0.0
  %2198 = vmatprep.subr.mxu0 0.0
  %2199 = vmatpush2.msra.mxu0 0.0
  %2200 = vmatprep.subr.mxu0 0.0
  %2201 = vmatpush2.msra.mxu0 0.0
  %2202 = vmatprep.subr.mxu0 0.0
  %2203 = vmatpush2.msra.mxu0 0.0
  %2204 = vmatprep.subr.mxu0 0.0
  %2205 = vmatpush2.msra.mxu0 0.0
  %2206 = vmatprep.subr.mxu0 0.0
  %2207 = vmatpush2.msra.mxu0 0.0
  %2208 = vmatprep.subr.mxu0 0.0
  %2209 = vmatpush2.msra.mxu0 0.0
  %2210 = vmatprep.subr.mxu0 0.0
  %2211 = vmatpush2.msra.mxu0 0.0
  %2212 = vmatprep.subr.mxu0 0.0
  %2213 = vmatpush2.msra.mxu0 0.0
  %2214 = vmatprep.subr.mxu0 0.0
  %2215 = vmatpush2.msra.mxu0 0.0
  %2216 = vmatprep.subr.mxu0 0.0
  %2217 = vmatpush2.msra.mxu0 0.0
  %2218 = vmatprep.subr.mxu0 0.0
  %2219 = vmatpush2.msra.mxu0 0.0
  %2220 = vmatprep.subr.mxu0 0.0
  %2221 = vmatpush2.msra.mxu0 0.0
  %2222 = vmatprep.mubr.f32.mxu0 0.0
  %2223 = vmatmul.mubr.f32.gmra.mxu0 %v2083
  %v2224 = vpop.f32.mrf.mxu0
  %v2225 = vadd.f32 0.0, %v2224
  %v2226 = vpop.f32.mrf.mxu0
  %2227 = vdwg.mxu0
  %v2230 = vunpack.c.l.s4 1966171168
  %v2231 = vunpack.c.0.s8 %v2230
  %v2232 = vlaneseq
  %v2233 = vshrl.u32 %v2232, 7
  %v2234 = vsub.s32 %v2231, %v2233
  %v2235 = vrot.slane %v2225, %v2234
  %v2236 = vcombine.high %v2235, %v2235
  %v2238 = vunpack.c.l.s4 1966171168
  %v2239 = vunpack.c.0.s8 %v2238
  %v2240 = vlaneseq
  %v2241 = vshrl.u32 %v2240, 7
  %v2242 = vsub.s32 %v2239, %v2241
  %v2243 = vrot.slane %v2235, %v2242
  %v2245 = vunpack.c.l.s4 1966171168
  %v2246 = vunpack.c.0.s8 %v2245
  %v2247 = vlaneseq
  %v2248 = vshrl.u32 %v2247, 7
  %v2249 = vsub.s32 %v2246, %v2248
  %v2250 = vrot.slane %v2236, %v2249
  %v2251 = vlaneseq
  %v2252 = vshrl.u32 %v2251, 7
  %v2253 = vsub.s32 0, %v2252
  %v2254 = vrot.slane %v2243, %v2253
  %v2255 = vlaneseq
  %v2256 = vshrl.u32 %v2255, 7
  %v2257 = vsub.s32 0, %v2256
  %v2258 = vrot.slane %v2250, %v2257
  %v2261 = vadd.f32 %v351, %v2254
  %v2262 = vadd.f32 %v352, %v2254
  %v2263 = vadd.f32 %v353, %v2258
  %v2264 = vadd.f32 %v354, %v2258
  %v2265 = vmax.f32 %v2261, 0.0
  %v2266 = vmax.f32 %v2262, 0.0
  %v2267 = vmax.f32 %v2263, 0.0
  %v2268 = vmax.f32 %v2264, 0.0
  %v2269 = vmul.f32 %v2265, %v479
  %v2270 = vmul.f32 %v2266, %v479
  %v2271 = vmul.f32 %v2267, %v479
  %v2272 = vmul.f32 %v2268, %v479
  %v2273 = vsel %vm180, %v2269, 0.0
  %2274 = vadd.xlane.f32.xlu0 %v2273
  %v2275 = vpop.xlane.xlu0 %2274
  %v2276 = vsel %vm180, %v2270, 0.0
  %2277 = vadd.xlane.f32.xlu0 %v2276
  %v2278 = vpop.xlane.xlu0 %2277
  %v2279 = vsel %vm180, %v2271, 0.0
  %2280 = vadd.xlane.f32.xlu0 %v2279
  %v2281 = vpop.xlane.xlu0 %2280
  %v2282 = vsel %vm180, %v2272, 0.0
  %2283 = vadd.xlane.f32.xlu0 %v2282
  %v2284 = vpop.xlane.xlu0 %2283
  %v2285 = vmax.f32 %v2275, %v2278
  %v2286 = vrot.slane %v2285, 4
  %v2287 = vmax.f32 %v2285, %v2286
  %v2288 = vrot.slane %v2287, 2
  %v2289 = vmax.f32 %v2287, %v2288
  %v2290 = vrot.slane %v2289, 1
  %v2291 = vmax.f32 %v2289, %v2290
  %v2292 = vmax.f32 %v2281, %v2284
  %v2293 = vrot.slane %v2292, 4
  %v2294 = vmax.f32 %v2292, %v2293
  %v2295 = vrot.slane %v2294, 2
  %v2296 = vmax.f32 %v2294, %v2295
  %v2297 = vrot.slane %v2296, 1
  %v2298 = vmax.f32 %v2296, %v2297
  %v2299 = vsub.f32 %v2275, %v2291
  %v2300 = vsub.f32 %v2278, %v2291
  %v2301 = vsub.f32 %v2281, %v2298
  %v2302 = vsub.f32 %v2284, %v2298
  %v2303 = vmul.f32 %v2299, 1.442695
  %v2304 = vpow.pop %v2303
  %v2305 = vmul.f32 %v2300, 1.442695
  %v2306 = vpow.pop %v2305
  %v2307 = vmul.f32 %v2301, 1.442695
  %v2308 = vpow.pop %v2307
  %v2309 = vmul.f32 %v2302, 1.442695
  %v2310 = vpow.pop %v2309
  %v2311 = vadd.f32 %v2304, %v2306
  %v2312 = vrot.slane %v2311, 4
  %v2313 = vadd.f32 %v2311, %v2312
  %v2314 = vrot.slane %v2313, 2
  %v2315 = vadd.f32 %v2313, %v2314
  %v2316 = vrot.slane %v2315, 1
  %v2317 = vadd.f32 %v2315, %v2316
  %v2318 = vadd.f32 %v2308, %v2310
  %v2319 = vrot.slane %v2318, 4
  %v2320 = vadd.f32 %v2318, %v2319
  %v2321 = vrot.slane %v2320, 2
  %v2322 = vadd.f32 %v2320, %v2321
  %v2323 = vrot.slane %v2322, 1
  %v2324 = vadd.f32 %v2322, %v2323
  %v2325 = vrcp.pop %v2317
  %v2326 = vmul.f32 %v2304, %v2325
  %v2327 = vmul.f32 %v2306, %v2325
  %v2328 = vrcp.pop %v2324
  %v2329 = vmul.f32 %v2308, %v2328
  %v2330 = vmul.f32 %v2310, %v2328
  %v2331 = vmul.f32 %v2326, %v355
  %v2332 = vmul.f32 %v2327, %v356
  %v2333 = vmul.f32 %v2329, %v357
  %v2334 = vmul.f32 %v2330, %v358
  %v2335 = vsel %vm180, %v2331, 0.0
  %v2336 = vsel %vm180, %v2332, 0.0
  %v2337 = vadd.f32 %v2335, %v2336
  %v2338 = vrot.slane %v2337, 4
  %v2339 = vadd.f32 %v2337, %v2338
  %v2340 = vrot.slane %v2339, 2
  %v2341 = vadd.f32 %v2339, %v2340
  %v2342 = vrot.slane %v2341, 1
  %v2343 = vadd.f32 %v2341, %v2342
  %v2344 = vsel %vm180, %v2333, 0.0
  %v2345 = vsel %vm180, %v2334, 0.0
  %v2346 = vadd.f32 %v2344, %v2345
  %v2347 = vrot.slane %v2346, 4
  %v2348 = vadd.f32 %v2346, %v2347
  %v2349 = vrot.slane %v2348, 2
  %v2350 = vadd.f32 %v2348, %v2349
  %v2351 = vrot.slane %v2350, 1
  %v2352 = vadd.f32 %v2350, %v2351
  %v2353 = vrot.slane %v164, 6
  %v2356 = vsel %vm89, %v2155, 0
  %2358 = vmatprep.subr.mxu0 0.0
  %2359 = vmatpush1.msra.mxu0 0.0
  %2360 = vmatprep.subr.mxu0 0.0
  %2361 = vmatpush1.msra.mxu0 0.0
  %2362 = vmatprep.subr.mxu0 0.0
  %2363 = vmatpush1.msra.mxu0 0.0
  %2364 = vmatprep.subr.mxu0 0.0
  %2365 = vmatpush1.msra.mxu0 0.0
  %2366 = vmatprep.subr.mxu0 0.0
  %2367 = vmatpush1.msra.mxu0 0.0
  %2368 = vmatprep.subr.mxu0 0.0
  %2369 = vmatpush1.msra.mxu0 0.0
  %2370 = vmatprep.subr.mxu0 0.0
  %2371 = vmatpush1.msra.mxu0 0.0
  %2372 = vmatprep.subr.mxu0 0.0
  %2373 = vmatpush1.msra.mxu0 0.0
  %2374 = vmatprep.subr.mxu0 0.0
  %2375 = vmatpush1.msra.mxu0 0.0
  %2376 = vmatprep.subr.mxu0 0.0
  %2377 = vmatpush1.msra.mxu0 0.0
  %2378 = vmatprep.subr.mxu0 0.0
  %2379 = vmatpush1.msra.mxu0 0.0
  %2380 = vmatprep.subr.mxu0 0.0
  %2381 = vmatpush1.msra.mxu0 0.0
  %2382 = vmatprep.subr.mxu0 0.0
  %2383 = vmatpush1.msra.mxu0 0.0
  %2384 = vmatprep.subr.mxu0 0.0
  %2385 = vmatpush1.msra.mxu0 0.0
  %2386 = vmatprep.subr.mxu0 0.0
  %2387 = vmatpush1.msra.mxu0 0.0
  %2388 = vmatprep.subr.mxu0 0.0
  %2389 = vmatpush1.msra.mxu0 %v569
  %2390 = vmatprep.subr.mxu0 0.0
  %2391 = vmatpush2.msra.mxu0 0.0
  %2392 = vmatprep.subr.mxu0 0.0
  %2393 = vmatpush2.msra.mxu0 0.0
  %2394 = vmatprep.subr.mxu0 0.0
  %2395 = vmatpush2.msra.mxu0 0.0
  %2396 = vmatprep.subr.mxu0 0.0
  %2397 = vmatpush2.msra.mxu0 0.0
  %2398 = vmatprep.subr.mxu0 0.0
  %2399 = vmatpush2.msra.mxu0 0.0
  %2400 = vmatprep.subr.mxu0 0.0
  %2401 = vmatpush2.msra.mxu0 0.0
  %2402 = vmatprep.subr.mxu0 0.0
  %2403 = vmatpush2.msra.mxu0 0.0
  %2404 = vmatprep.subr.mxu0 0.0
  %2405 = vmatpush2.msra.mxu0 0.0
  %2406 = vmatprep.subr.mxu0 0.0
  %2407 = vmatpush2.msra.mxu0 0.0
  %2408 = vmatprep.subr.mxu0 0.0
  %2409 = vmatpush2.msra.mxu0 0.0
  %2410 = vmatprep.subr.mxu0 0.0
  %2411 = vmatpush2.msra.mxu0 0.0
  %2412 = vmatprep.subr.mxu0 0.0
  %2413 = vmatpush2.msra.mxu0 0.0
  %2414 = vmatprep.subr.mxu0 0.0
  %2415 = vmatpush2.msra.mxu0 0.0
  %2416 = vmatprep.subr.mxu0 0.0
  %2417 = vmatpush2.msra.mxu0 0.0
  %2418 = vmatprep.subr.mxu0 0.0
  %2419 = vmatpush2.msra.mxu0 0.0
  %2420 = vmatprep.subr.mxu0 0.0
  %2421 = vmatpush2.msra.mxu0 0.0
  %2422 = vmatprep.mubr.f32.mxu0 0.0
  %2423 = vmatmul.mubr.f32.gmra.mxu0 %v2356
  %v2424 = vpop.f32.mrf.mxu0
  %v2425 = vadd.f32 %v2353, %v2424
  %v2426 = vpop.f32.mrf.mxu0
  %2427 = vdwg.mxu0
  %v2430 = vsel %vm643, %v2352, %v2343
  %v2431 = vsel %vm180, %v2430, 0
  %2433 = vmatprep.subr.mxu0 0.0
  %2434 = vmatpush1.msra.mxu0 0.0
  %2435 = vmatprep.subr.mxu0 0.0
  %2436 = vmatpush1.msra.mxu0 0.0
  %2437 = vmatprep.subr.mxu0 0.0
  %2438 = vmatpush1.msra.mxu0 0.0
  %2439 = vmatprep.subr.mxu0 0.0
  %2440 = vmatpush1.msra.mxu0 0.0
  %2441 = vmatprep.subr.mxu0 0.0
  %2442 = vmatpush1.msra.mxu0 0.0
  %2443 = vmatprep.subr.mxu0 0.0
  %2444 = vmatpush1.msra.mxu0 0.0
  %2445 = vmatprep.subr.mxu0 0.0
  %2446 = vmatpush1.msra.mxu0 0.0
  %2447 = vmatprep.subr.mxu0 0.0
  %2448 = vmatpush1.msra.mxu0 0.0
  %2449 = vmatprep.subr.mxu0 0.0
  %2450 = vmatpush1.msra.mxu0 0.0
  %2451 = vmatprep.subr.mxu0 0.0
  %2452 = vmatpush1.msra.mxu0 0.0
  %2453 = vmatprep.subr.mxu0 0.0
  %2454 = vmatpush1.msra.mxu0 0.0
  %2455 = vmatprep.subr.mxu0 0.0
  %2456 = vmatpush1.msra.mxu0 0.0
  %2457 = vmatprep.subr.mxu0 0.0
  %2458 = vmatpush1.msra.mxu0 %v65
  %2459 = vmatprep.subr.mxu0 0.0
  %2460 = vmatpush1.msra.mxu0 %v64
  %2461 = vmatprep.subr.mxu0 0.0
  %2462 = vmatpush1.msra.mxu0 %v63
  %2463 = vmatprep.subr.mxu0 0.0
  %2464 = vmatpush1.msra.mxu0 %v62
  %2465 = vmatprep.subr.mxu0 0.0
  %2466 = vmatpush2.msra.mxu0 0.0
  %2467 = vmatprep.subr.mxu0 0.0
  %2468 = vmatpush2.msra.mxu0 0.0
  %2469 = vmatprep.subr.mxu0 0.0
  %2470 = vmatpush2.msra.mxu0 0.0
  %2471 = vmatprep.subr.mxu0 0.0
  %2472 = vmatpush2.msra.mxu0 0.0
  %2473 = vmatprep.subr.mxu0 0.0
  %2474 = vmatpush2.msra.mxu0 0.0
  %2475 = vmatprep.subr.mxu0 0.0
  %2476 = vmatpush2.msra.mxu0 0.0
  %2477 = vmatprep.subr.mxu0 0.0
  %2478 = vmatpush2.msra.mxu0 0.0
  %2479 = vmatprep.subr.mxu0 0.0
  %2480 = vmatpush2.msra.mxu0 0.0
  %2481 = vmatprep.subr.mxu0 0.0
  %2482 = vmatpush2.msra.mxu0 0.0
  %2483 = vmatprep.subr.mxu0 0.0
  %2484 = vmatpush2.msra.mxu0 0.0
  %2485 = vmatprep.subr.mxu0 0.0
  %2486 = vmatpush2.msra.mxu0 0.0
  %2487 = vmatprep.subr.mxu0 0.0
  %2488 = vmatpush2.msra.mxu0 0.0
  %2489 = vmatprep.subr.mxu0 0.0
  %2490 = vmatpush2.msra.mxu0 0.0
  %2491 = vmatprep.subr.mxu0 0.0
  %2492 = vmatpush2.msra.mxu0 0.0
  %2493 = vmatprep.subr.mxu0 0.0
  %2494 = vmatpush2.msra.mxu0 0.0
  %2495 = vmatprep.subr.mxu0 0.0
  %2496 = vmatpush2.msra.mxu0 0.0
  %2497 = vmatprep.mubr.f32.mxu0 0.0
  %2498 = vmatmul.mubr.f32.gmra.mxu0 %v2431
  %v2499 = vpop.f32.mrf.mxu0
  %v2500 = vadd.f32 0.0, %v2499
  %v2501 = vpop.f32.mrf.mxu0
  %2502 = vdwg.mxu0
  %v2503 = vadd.f32 %v2425, %v2500
  %2504 = vmatprep.subr.mxu0 0.0
  %2505 = vmatpush1.msra.mxu0 0.0
  %2506 = vmatprep.subr.mxu0 0.0
  %2507 = vmatpush1.msra.mxu0 0.0
  %2508 = vmatprep.subr.mxu0 0.0
  %2509 = vmatpush1.msra.mxu0 0.0
  %2510 = vmatprep.subr.mxu0 0.0
  %2511 = vmatpush1.msra.mxu0 0.0
  %2512 = vmatprep.subr.mxu0 0.0
  %2513 = vmatpush1.msra.mxu0 0.0
  %2514 = vmatprep.subr.mxu0 0.0
  %2515 = vmatpush1.msra.mxu0 0.0
  %2516 = vmatprep.subr.mxu0 0.0
  %2517 = vmatpush1.msra.mxu0 0.0
  %2518 = vmatprep.subr.mxu0 0.0
  %2519 = vmatpush1.msra.mxu0 0.0
  %2520 = vmatprep.subr.mxu0 0.0
  %2521 = vmatpush1.msra.mxu0 0.0
  %2522 = vmatprep.subr.mxu0 0.0
  %2523 = vmatpush1.msra.mxu0 0.0
  %2524 = vmatprep.subr.mxu0 0.0
  %2525 = vmatpush1.msra.mxu0 0.0
  %2526 = vmatprep.subr.mxu0 0.0
  %2527 = vmatpush1.msra.mxu0 0.0
  %2528 = vmatprep.subr.mxu0 0.0
  %2529 = vmatpush1.msra.mxu0 %v69
  %2530 = vmatprep.subr.mxu0 0.0
  %2531 = vmatpush1.msra.mxu0 %v68
  %2532 = vmatprep.subr.mxu0 0.0
  %2533 = vmatpush1.msra.mxu0 %v67
  %2534 = vmatprep.subr.mxu0 0.0
  %2535 = vmatpush1.msra.mxu0 %v66
  %2536 = vmatprep.subr.mxu0 0.0
  %2537 = vmatpush2.msra.mxu0 0.0
  %2538 = vmatprep.subr.mxu0 0.0
  %2539 = vmatpush2.msra.mxu0 0.0
  %2540 = vmatprep.subr.mxu0 0.0
  %2541 = vmatpush2.msra.mxu0 0.0
  %2542 = vmatprep.subr.mxu0 0.0
  %2543 = vmatpush2.msra.mxu0 0.0
  %2544 = vmatprep.subr.mxu0 0.0
  %2545 = vmatpush2.msra.mxu0 0.0
  %2546 = vmatprep.subr.mxu0 0.0
  %2547 = vmatpush2.msra.mxu0 0.0
  %2548 = vmatprep.subr.mxu0 0.0
  %2549 = vmatpush2.msra.mxu0 0.0
  %2550 = vmatprep.subr.mxu0 0.0
  %2551 = vmatpush2.msra.mxu0 0.0
  %2552 = vmatprep.subr.mxu0 0.0
  %2553 = vmatpush2.msra.mxu0 0.0
  %2554 = vmatprep.subr.mxu0 0.0
  %2555 = vmatpush2.msra.mxu0 0.0
  %2556 = vmatprep.subr.mxu0 0.0
  %2557 = vmatpush2.msra.mxu0 0.0
  %2558 = vmatprep.subr.mxu0 0.0
  %2559 = vmatpush2.msra.mxu0 0.0
  %2560 = vmatprep.subr.mxu0 0.0
  %2561 = vmatpush2.msra.mxu0 0.0
  %2562 = vmatprep.subr.mxu0 0.0
  %2563 = vmatpush2.msra.mxu0 0.0
  %2564 = vmatprep.subr.mxu0 0.0
  %2565 = vmatpush2.msra.mxu0 0.0
  %2566 = vmatprep.subr.mxu0 0.0
  %2567 = vmatpush2.msra.mxu0 0.0
  %2568 = vmatprep.mubr.f32.mxu0 0.0
  %2569 = vmatmul.mubr.f32.gmra.mxu0 %v2083
  %v2570 = vpop.f32.mrf.mxu0
  %v2571 = vadd.f32 %v722, %v2570
  %v2572 = vpop.f32.mrf.mxu0
  %2573 = vdwg.mxu0
  %v2574 = vadd.f32 %v2503, %v2571
  %v2575 = vxor.u32 %v2574, 2147483648
  %v2576 = vmul.f32 %v2575, 1.442695
  %v2577 = vpow.pop %v2576
  %v2578 = vadd.f32 %v2577, 1.0
  %v2579 = vrcp.pop %v2578
  %v2580 = vmul.f32 1.0, %v2579
  %2582 = vrot.lane.b32.xlu0 %v2571, 64
  %v2583 = vpop.permute.xlu0 %2582
  %v2585 = vmul.f32 %v2580, %v2583
  %2587 = vrot.lane.b32.xlu0 %v2585, 64
  %v2588 = vpop.permute.xlu0 %2587
  %v2590 = vadd.f32 %v2503, %v2588
  %v2591 = vtanh.pop %v2590
  %v2592 = vsub.f32 1.0, %v2580
  %2594 = vrot.lane.b32.xlu0 %v2591, 96
  %v2595 = vpop.permute.xlu0 %2594
  %v2597 = vmul.f32 %v2592, %v2595
  %v2598 = vmul.f32 %v2580, %v2009
  %v2599 = vadd.f32 %v2597, %v2598
  %2600 = vmatprep.subr.mxu0 0.0
  %2601 = vmatpush1.msra.mxu0 0.0
  %2602 = vmatprep.subr.mxu0 0.0
  %2603 = vmatpush1.msra.mxu0 0.0
  %2604 = vmatprep.subr.mxu0 0.0
  %2605 = vmatpush1.msra.mxu0 0.0
  %2606 = vmatprep.subr.mxu0 0.0
  %2607 = vmatpush1.msra.mxu0 0.0
  %2608 = vmatprep.subr.mxu0 0.0
  %2609 = vmatpush1.msra.mxu0 0.0
  %2610 = vmatprep.subr.mxu0 0.0
  %2611 = vmatpush1.msra.mxu0 0.0
  %2612 = vmatprep.subr.mxu0 0.0
  %2613 = vmatpush1.msra.mxu0 0.0
  %2614 = vmatprep.subr.mxu0 0.0
  %2615 = vmatpush1.msra.mxu0 0.0
  %2616 = vmatprep.subr.mxu0 0.0
  %2617 = vmatpush1.msra.mxu0 0.0
  %2618 = vmatprep.subr.mxu0 0.0
  %2619 = vmatpush1.msra.mxu0 0.0
  %2620 = vmatprep.subr.mxu0 0.0
  %2621 = vmatpush1.msra.mxu0 0.0
  %2622 = vmatprep.subr.mxu0 0.0
  %2623 = vmatpush1.msra.mxu0 0.0
  %2624 = vmatprep.subr.mxu0 0.0
  %2625 = vmatpush1.msra.mxu0 %v78
  %2626 = vmatprep.subr.mxu0 0.0
  %2627 = vmatpush1.msra.mxu0 %v77
  %2628 = vmatprep.subr.mxu0 0.0
  %2629 = vmatpush1.msra.mxu0 %v76
  %2630 = vmatprep.subr.mxu0 0.0
  %2631 = vmatpush1.msra.mxu0 %v75
  %2632 = vmatprep.subr.mxu0 0.0
  %2633 = vmatpush2.msra.mxu0 0.0
  %2634 = vmatprep.subr.mxu0 0.0
  %2635 = vmatpush2.msra.mxu0 0.0
  %2636 = vmatprep.subr.mxu0 0.0
  %2637 = vmatpush2.msra.mxu0 0.0
  %2638 = vmatprep.subr.mxu0 0.0
  %2639 = vmatpush2.msra.mxu0 0.0
  %2640 = vmatprep.subr.mxu0 0.0
  %2641 = vmatpush2.msra.mxu0 0.0
  %2642 = vmatprep.subr.mxu0 0.0
  %2643 = vmatpush2.msra.mxu0 0.0
  %2644 = vmatprep.subr.mxu0 0.0
  %2645 = vmatpush2.msra.mxu0 0.0
  %2646 = vmatprep.subr.mxu0 0.0
  %2647 = vmatpush2.msra.mxu0 0.0
  %2648 = vmatprep.subr.mxu0 0.0
  %2649 = vmatpush2.msra.mxu0 0.0
  %2650 = vmatprep.subr.mxu0 0.0
  %2651 = vmatpush2.msra.mxu0 0.0
  %2652 = vmatprep.subr.mxu0 0.0
  %2653 = vmatpush2.msra.mxu0 0.0
  %2654 = vmatprep.subr.mxu0 0.0
  %2655 = vmatpush2.msra.mxu0 0.0
  %2656 = vmatprep.subr.mxu0 0.0
  %2657 = vmatpush2.msra.mxu0 0.0
  %2658 = vmatprep.subr.mxu0 0.0
  %2659 = vmatpush2.msra.mxu0 0.0
  %2660 = vmatprep.subr.mxu0 0.0
  %2661 = vmatpush2.msra.mxu0 0.0
  %2662 = vmatprep.subr.mxu0 0.0
  %2663 = vmatpush2.msra.mxu0 0.0
  %2664 = vmatprep.mubr.f32.mxu0 0.0
  %2665 = vmatmul.mubr.f32.gmra.mxu0 %v2431
  %v2666 = vpop.f32.mrf.mxu0
  %v2667 = vadd.f32 0.0, %v2666
  %v2668 = vpop.f32.mrf.mxu0
  %2669 = vdwg.mxu0
  %2671 = vrot.lane.b32.xlu0 %v2599, 96
  %v2672 = vpop.permute.xlu0 %2671
  %v2673 = vsel %vm180, %v2672, 0
  %2675 = vmatprep.subr.mxu0 0.0
  %2676 = vmatpush1.msra.mxu0 0.0
  %2677 = vmatprep.subr.mxu0 0.0
  %2678 = vmatpush1.msra.mxu0 0.0
  %2679 = vmatprep.subr.mxu0 0.0
  %2680 = vmatpush1.msra.mxu0 0.0
  %2681 = vmatprep.subr.mxu0 0.0
  %2682 = vmatpush1.msra.mxu0 0.0
  %2683 = vmatprep.subr.mxu0 0.0
  %2684 = vmatpush1.msra.mxu0 0.0
  %2685 = vmatprep.subr.mxu0 0.0
  %2686 = vmatpush1.msra.mxu0 0.0
  %2687 = vmatprep.subr.mxu0 0.0
  %2688 = vmatpush1.msra.mxu0 0.0
  %2689 = vmatprep.subr.mxu0 0.0
  %2690 = vmatpush1.msra.mxu0 0.0
  %2691 = vmatprep.subr.mxu0 0.0
  %2692 = vmatpush1.msra.mxu0 0.0
  %2693 = vmatprep.subr.mxu0 0.0
  %2694 = vmatpush1.msra.mxu0 0.0
  %2695 = vmatprep.subr.mxu0 0.0
  %2696 = vmatpush1.msra.mxu0 0.0
  %2697 = vmatprep.subr.mxu0 0.0
  %2698 = vmatpush1.msra.mxu0 0.0
  %2699 = vmatprep.subr.mxu0 0.0
  %2700 = vmatpush1.msra.mxu0 %v74
  %2701 = vmatprep.subr.mxu0 0.0
  %2702 = vmatpush1.msra.mxu0 %v73
  %2703 = vmatprep.subr.mxu0 0.0
  %2704 = vmatpush1.msra.mxu0 %v72
  %2705 = vmatprep.subr.mxu0 0.0
  %2706 = vmatpush1.msra.mxu0 %v71
  %2707 = vmatprep.subr.mxu0 0.0
  %2708 = vmatpush2.msra.mxu0 0.0
  %2709 = vmatprep.subr.mxu0 0.0
  %2710 = vmatpush2.msra.mxu0 0.0
  %2711 = vmatprep.subr.mxu0 0.0
  %2712 = vmatpush2.msra.mxu0 0.0
  %2713 = vmatprep.subr.mxu0 0.0
  %2714 = vmatpush2.msra.mxu0 0.0
  %2715 = vmatprep.subr.mxu0 0.0
  %2716 = vmatpush2.msra.mxu0 0.0
  %2717 = vmatprep.subr.mxu0 0.0
  %2718 = vmatpush2.msra.mxu0 0.0
  %2719 = vmatprep.subr.mxu0 0.0
  %2720 = vmatpush2.msra.mxu0 0.0
  %2721 = vmatprep.subr.mxu0 0.0
  %2722 = vmatpush2.msra.mxu0 0.0
  %2723 = vmatprep.subr.mxu0 0.0
  %2724 = vmatpush2.msra.mxu0 0.0
  %2725 = vmatprep.subr.mxu0 0.0
  %2726 = vmatpush2.msra.mxu0 0.0
  %2727 = vmatprep.subr.mxu0 0.0
  %2728 = vmatpush2.msra.mxu0 0.0
  %2729 = vmatprep.subr.mxu0 0.0
  %2730 = vmatpush2.msra.mxu0 0.0
  %2731 = vmatprep.subr.mxu0 0.0
  %2732 = vmatpush2.msra.mxu0 0.0
  %2733 = vmatprep.subr.mxu0 0.0
  %2734 = vmatpush2.msra.mxu0 0.0
  %2735 = vmatprep.subr.mxu0 0.0
  %2736 = vmatpush2.msra.mxu0 0.0
  %2737 = vmatprep.subr.mxu0 0.0
  %2738 = vmatpush2.msra.mxu0 0.0
  %2739 = vmatprep.mubr.f32.mxu0 0.0
  %2740 = vmatmul.mubr.f32.gmra.mxu0 %v2673
  %v2741 = vpop.f32.mrf.mxu0
  %v2742 = vadd.f32 %v2667, %v2741
  %v2743 = vpop.f32.mrf.mxu0
  %2744 = vdwg.mxu0
  %v2745 = vadd.f32 %v2742, %v972
  %s2746 = scalar_lea.vmem %s17, 6
  %2747 = vst.msk [vmem:[%s2746] sm:$0x3] %vm975, %v2745
  // Predicated region
  $region70: #{model_forward.5} parent=0 // pred_check
    _
  $region71: #{model_forward.5} parent=0 // pred_check_branch
    %2749 = sbr.rel (0) target = $region73
  $region72: #{model_forward.5} parent=0 // pred_region
    _
  $region73: #{model_forward.5} parent=0 // pred_fallthru
    _
  // Predicated region
  $region74: #{model_forward.5} parent=0 // pred_check
    _
  $region75: #{model_forward.5} parent=0 // pred_check_branch
    %2751 = sbr.rel (0) target = $region77
  $region76: #{model_forward.5} parent=0 // pred_region
    _
  $region77: #{model_forward.5} parent=0 // pred_fallthru
    _

</llo_original>
